<compile_context>
chip_gen: v5e
topology: v5e:2x2
jax: 0.10.0
libtpu: 0.0.40
codegen_flags: <defaults>
</compile_context>

<pallas_src>
import functools
import math

import jax
import jax.numpy as jnp
import numpy as np
from jax import lax
from jax.experimental import pallas as pl
from jax.experimental.pallas import tpu as pltpu


_VMEM_SPEC = pl.BlockSpec(memory_space=pltpu.MemorySpace.VMEM)
# Keep kernel and pure-JAX reference matmul precision identical (true f32).
_PREC = lax.Precision.HIGHEST


# ----------------------------------------------------------------------------
# Fused Pallas kernel (single pallas_call, no grid, no scratch)
# ----------------------------------------------------------------------------
def _fused_forward_kernel(*refs, T, B, lstm_sizes, num_fc):
    """Whole EnhancedUsageLSTM forward in one kernel.

    Ref layout (inputs then output):
      x_pair_ref : (T*B, 2*in0)  row i*B+b = [x[b, i, :] | x[b, T-1-i, :]]
      values_ref : (B, 3)        x[:, -1, 1:4] (batch-padded)
      per LSTM layer l: wih_pair (in_pair, 8H), whh_blk (2H, 8H), b_pair (1, 8H)
                        gate-column layout [i_f i_b f_f f_b g_f g_b o_f o_b],
                        g columns pre-scaled by 2 (tanh(x) = 2*sigmoid(2x) - 1)
      per FC layer k  : w (in, out), b (1, out)
      output layer    : w_o (in, 3), b_o (1, 3)
      out_ref    : (B, 3)
    """
    L = len(lstm_sizes)
    x_pair_ref, values_ref = refs[0], refs[1]
    pos = 2
    lstm_refs = []
    for _ in range(L):
        lstm_refs.append(refs[pos:pos + 3])
        pos += 3
    fc_refs = refs[pos:pos + 2 * num_fc]
    pos += 2 * num_fc
    w_o_ref, b_o_ref = refs[pos], refs[pos + 1]
    out_ref = refs[pos + 2]

    # "Pair" layout: row block i holds the layer's forward-direction input at
    # time i (left half) and backward-direction input at time T-1-i (right
    # half), so each interleaved fwd/bwd step reads ONE contiguous row slab
    # and never concatenates inside the time loop.
    cur_pair = x_pair_ref[...]
    h_first = None   # last layer, after step 0      : [h_f(0)   | h_b(T-1)]
    h_final = None   # last layer, after final step  : [h_f(T-1) | h_b(0)  ]

    for l in range(L):
        H = lstm_sizes[l]
        wih_r, whh_r, b_r = lstm_refs[l]
        whh_blk = whh_r[...]                                  # (2H, 8H) block-diag

        # Hoisted input projection: one (T*B, in_pair) @ (in_pair, 8H) matmul
        # + one bias add covers both directions and all timesteps.
        gx = jnp.dot(cur_pair, wih_r[...], precision=_PREC,
                     preferred_element_type=jnp.float32) + b_r[...]

        h_cat = jnp.zeros((B, 2 * H), jnp.float32)            # [h_f | h_b]
        c_cat = jnp.zeros((B, 2 * H), jnp.float32)
        last = l == L - 1
        h_steps = []

        # TODO(synk): for large T switch to lax.fori_loop(..., unroll=k) over a
        # gx scratch with pl.ds/pl.multiple_of slices to bound vreg pressure.
        for i in range(T):                                    # fully unrolled
            # Fused fwd+bwd recurrent matmul: one (B,2H)@(2H,8H) MXU push.
            gates = gx[i * B:(i + 1) * B, :] + jnp.dot(
                h_cat, whh_blk, precision=_PREC,
                preferred_element_type=jnp.float32)           # (B, 8H)
            sig = jax.nn.sigmoid(gates)       # single EUP pass over all gates
            i_cat = sig[:, 0 * H:2 * H]
            f_cat = sig[:, 2 * H:4 * H]
            g_cat = 2.0 * sig[:, 4 * H:6 * H] - 1.0   # == tanh(pre-activation)
            o_cat = sig[:, 6 * H:8 * H]
            c_cat = f_cat * c_cat + i_cat * g_cat
            h_cat = o_cat * jnp.tanh(c_cat)
            if last:
                if i == 0:
                    h_first = h_cat           # its bwd half is h_b(T-1)
            else:
                h_steps.append(h_cat)

        if last:
            h_final = h_cat                   # its fwd half is h_f(T-1)
        else:
            # Build the next layer's pair-layout input with a few lane-dense
            # concats ONCE per layer (no per-step masked stores, no scratch).
            fwd = jnp.concatenate(h_steps, axis=0)        # row i: [h_f(i)     | h_b(T-1-i)]
            rev = jnp.concatenate(h_steps[::-1], axis=0)  # row i: [h_f(T-1-i) | h_b(i)    ]
            cur_pair = jnp.concatenate([fwd, rev], axis=1)            # (T*B, 4H)

    # ---- head: dropout(out[:, -1, :]) -> FC stack -> relu(output) * values ----
    # TODO(synk): nn.Dropout(0.3) is identity in eval mode; stochastic dropout
    # is intentionally not applied here.
    H = lstm_sizes[-1]
    w0_ref, b0_ref = fc_refs[0], fc_refs[1]
    # out[:, -1, :] = [h_f(T-1) | h_b(T-1)]; feed it through a row-split first
    # FC weight instead of lane-concatenating the two halves.
    h = jnp.dot(h_final[:, 0:H], w0_ref[0:H, :], precision=_PREC,
                preferred_element_type=jnp.float32)
    h = h + jnp.dot(h_first[:, H:2 * H], w0_ref[H:2 * H, :], precision=_PREC,
                    preferred_element_type=jnp.float32)
    h = jnp.maximum(h + b0_ref[...], 0.0)
    for k in range(1, num_fc):
        w = fc_refs[2 * k][...]
        b = fc_refs[2 * k + 1][...]
        h = jnp.maximum(
            jnp.dot(h, w, precision=_PREC,
                    preferred_element_type=jnp.float32) + b, 0.0)
    o = jnp.dot(h, w_o_ref[...], precision=_PREC,
                preferred_element_type=jnp.float32) + b_o_ref[...]
    out_ref[...] = jnp.maximum(o, 0.0) * values_ref[...]


# ----------------------------------------------------------------------------
# Wrapper: single pallas_call for the whole forward
# ----------------------------------------------------------------------------
def enhanced_usage_lstm_forward(x, fused_params, *, output_size=3):
    """x: (B, T, input_size), batch_first like the PyTorch module."""
    B, T, D = x.shape
    if output_size != 3:
        # relu(output) * values relies on elementwise match with (B, 3) values.
        raise ValueError("output_size must be 3 (values = x[:, -1, 1:4])")
    # Static sizes come from weight SHAPES only (safe under jit).
    lstm_sizes = tuple(l["whh_blk"].shape[0] // 2 for l in fused_params["lstm"])
    num_fc = len(fused_params["fc"])
    if num_fc < 1:
        raise ValueError("at least one fc layer is required")

    values = x[:, -1, 1:4]
    # Pad batch to >= 8 (sublane count): fills vreg sublanes / MXU rows that
    # would otherwise be ~75% padding at B=2.
    B_pad = max(8, ((B + 7) // 8) * 8)
    if B_pad != B:
        x = jnp.pad(x, ((0, B_pad - B), (0, 0), (0, 0)))
        values = jnp.pad(values, ((0, B_pad - B), (0, 0)))

    # Pair layout for layer 0: row block i = [x(t=i) | x(t=T-1-i)], time-major.
    x_tm = jnp.transpose(x, (1, 0, 2)).reshape(T * B_pad, D)
    x_rv = jnp.transpose(x[:, ::-1, :], (1, 0, 2)).reshape(T * B_pad, D)
    x_pair = jnp.concatenate([x_tm, x_rv], axis=1)

    flat = [x_pair, values]
    for layer in fused_params["lstm"]:
        flat += [layer["wih_pair"], layer["whh_blk"], layer["b_pair"]]
    for (w, b) in fused_params["fc"]:
        flat += [w, b]
    flat += [fused_params["out"][0], fused_params["out"][1]]

    kernel = functools.partial(_fused_forward_kernel, T=T, B=B_pad,
                               lstm_sizes=lstm_sizes, num_fc=num_fc)
    # TODO(synk): at larger batch, add a batch-sharded grid with
    # dimension_semantics=("parallel",) so v7x's second TensorCore is used, and
    # time-chunk gx / stream weights from pl.ANY HBM to bound VMEM on v7x.
    # TODO(synk): weights could be cast to bf16 for MXU packing (keep
    # elementwise math f32, esp. on v5e); kept f32 to match the f32 reference.
    out = pl.pallas_call(
        kernel,
        out_shape=jax.ShapeDtypeStruct((B_pad, output_size), jnp.float32),
        in_specs=[_VMEM_SPEC] * len(flat),
        out_specs=_VMEM_SPEC,
    )(*flat)
    return out[:B]


# ----------------------------------------------------------------------------
# Parameter construction (Xavier uniform weights, zero biases) + kernel fusion
# ----------------------------------------------------------------------------
def _xavier_uniform(key, shape, fan_in, fan_out):
    bound = math.sqrt(6.0 / (fan_in + fan_out))
    return jax.random.uniform(key, shape, jnp.float32, -bound, bound)


def init_params(key, input_size, lstm_layer_sizes, linear_layer_size,
                output_size):
    """Raw per-direction weights matching the PyTorch module (eval mode)."""
    params = {"lstm": [], "fc": [], "out": None}
    in_dim = input_size
    for H in lstm_layer_sizes:
        layer = {}
        for d in ("f", "b"):
            key, k1, k2 = jax.random.split(key, 3)
            # PyTorch stores (4H, in) / (4H, H); we keep transposed for x @ W.
            w_ih = _xavier_uniform(k1, (4 * H, in_dim), in_dim, 4 * H).T
            w_hh = _xavier_uniform(k2, (4 * H, H), H, 4 * H).T
            layer[f"wih_{d}"] = jnp.asarray(w_ih)
            layer[f"whh_{d}"] = jnp.asarray(w_hh)
            layer[f"b_{d}"] = jnp.zeros((1, 4 * H), jnp.float32)  # b_ih + b_hh
        params["lstm"].append(layer)
        in_dim = 2 * H

    fc_in = 2 * lstm_layer_sizes[-1]
    for sz in linear_layer_size:
        key, k1 = jax.random.split(key)
        w = _xavier_uniform(k1, (sz, fc_in), fc_in, sz).T      # (in, out)
        params["fc"].append((jnp.asarray(w), jnp.zeros((1, sz), jnp.float32)))
        fc_in = sz

    key, k1 = jax.random.split(key)
    w_o = _xavier_uniform(k1, (output_size, fc_in), fc_in, output_size).T
    params["out"] = (jnp.asarray(w_o), jnp.zeros((1, output_size), jnp.float32))
    return params


def _gate_interleave(wf, wb, H):
    """[i f g o] columns per direction -> [i_f i_b f_f f_b g_f g_b o_f o_b]."""
    cols = []
    for g in range(4):
        cols.append(wf[:, g * H:(g + 1) * H])
        cols.append(wb[:, g * H:(g + 1) * H])
    return jnp.concatenate(cols, axis=1)


def fuse_params(params):
    """Pre-fuse both directions into the layouts the kernel consumes (done once
    outside jit): one paired input-projection matrix, one block-diagonal
    recurrent matrix and one bias per layer, with g-gate columns scaled by 2
    so the kernel can use tanh(x) = 2*sigmoid(2x) - 1."""
    fused = {"lstm": [], "fc": list(params["fc"]), "out": params["out"]}
    prev_H = None
    for li, layer in enumerate(params["lstm"]):
        wih_f, whh_f, b_f = layer["wih_f"], layer["whh_f"], layer["b_f"]
        wih_b, whh_b, b_b = layer["wih_b"], layer["whh_b"], layer["b_b"]
        H = whh_f.shape[0]
        z = lambda r: jnp.zeros((r, 4 * H), jnp.float32)
        if li == 0:
            in0 = wih_f.shape[0]
            wih_pair = jnp.concatenate([
                _gate_interleave(wih_f, z(in0), H),           # x(t)      -> fwd
                _gate_interleave(z(in0), wih_b, H),           # x(T-1-t)  -> bwd
            ], axis=0)
        else:
            Hp = prev_H
            # cur_pair columns: [h_f(t) | h_b(T-1-t) | h_f(T-1-t) | h_b(t)]
            wih_pair = jnp.concatenate([
                _gate_interleave(wih_f[0:Hp], z(Hp), H),       # h_f(t)     -> fwd
                _gate_interleave(z(Hp), wih_b[Hp:2 * Hp], H),  # h_b(T-1-t) -> bwd
                _gate_interleave(z(Hp), wih_b[0:Hp], H),       # h_f(T-1-t) -> bwd
                _gate_interleave(wih_f[Hp:2 * Hp], z(Hp), H),  # h_b(t)     -> fwd
            ], axis=0)
        whh_blk = jnp.concatenate([
            _gate_interleave(whh_f, z(H), H),                  # h_f rows
            _gate_interleave(z(H), whh_b, H),                  # h_b rows
        ], axis=0)
        b_pair = _gate_interleave(b_f, b_b, H)
        gscale = jnp.ones((1, 8 * H), jnp.float32).at[:, 4 * H:6 * H].set(2.0)
        fused["lstm"].append({"wih_pair": wih_pair * gscale,
                              "whh_blk": whh_blk * gscale,
                              "b_pair": b_pair * gscale})
        prev_H = H
    return fused


# ----------------------------------------------------------------------------
# Pure-JAX reference (for correctness check only)
# ----------------------------------------------------------------------------
def _ref_lstm_dir(x_tbd, w_ih_t, w_hh_t, b, H, reverse):
    xs = x_tbd[::-1] if reverse else x_tbd

    def step(carry, x_t):
        h, c = carry
        gates = (jnp.dot(x_t, w_ih_t, precision=_PREC)
                 + jnp.dot(h, w_hh_t, precision=_PREC) + b)
        i_g = jax.nn.sigmoid(gates[:, 0 * H:1 * H])
        f_g = jax.nn.sigmoid(gates[:, 1 * H:2 * H])
        g_g = jnp.tanh(gates[:, 2 * H:3 * H])
        o_g = jax.nn.sigmoid(gates[:, 3 * H:4 * H])
        c_new = f_g * c + i_g * g_g
        h_new = o_g * jnp.tanh(c_new)
        return (h_new, c_new), h_new

    Bsz = x_tbd.shape[1]
    init = (jnp.zeros((Bsz, H), jnp.float32), jnp.zeros((Bsz, H), jnp.float32))
    _, hs = lax.scan(step, init, xs)
    return hs[::-1] if reverse else hs


def reference_forward(x, params):
    values = x[:, -1, 1:4]
    out = jnp.transpose(x, (1, 0, 2))
    for layer in params["lstm"]:
        H = layer["whh_f"].shape[0]
        fwd = _ref_lstm_dir(out, layer["wih_f"], layer["whh_f"],
                            layer["b_f"], H, False)
        bwd = _ref_lstm_dir(out, layer["wih_b"], layer["whh_b"],
                            layer["b_b"], H, True)
        out = jnp.concatenate([fwd, bwd], axis=-1)
    h = out[-1]
    for (w, b) in params["fc"]:
        h = jnp.maximum(jnp.dot(h, w, precision=_PREC) + b, 0.0)
    w_o, b_o = params["out"]
    o = jnp.dot(h, w_o, precision=_PREC) + b_o
    return jnp.maximum(o, 0.0) * values


# ----------------------------------------------------------------------------
if __name__ == "__main__":
    # Small shapes consistent with the module's forward.
    B, T = 2, 8
    input_size = 8                 # must be >= 4 for values = x[:, -1, 1:4]
    lstm_layer_sizes = [32, 32]
    linear_layer_size = [32, 16]
    output_size = 3                # elementwise against values (B, 3)

    key = jax.random.PRNGKey(0)
    key, pkey, xkey = jax.random.split(key, 3)
    params = init_params(pkey, input_size, lstm_layer_sizes,
                         linear_layer_size, output_size)
    fused_params = fuse_params(params)          # one-time weight fusion
    x = jax.random.normal(xkey, (B, T, input_size), jnp.float32)

    fwd = jax.jit(functools.partial(enhanced_usage_lstm_forward,
                                    output_size=output_size))
    out = jax.block_until_ready(fwd(x, fused_params))

    ref = jax.block_until_ready(reference_forward(x, params))
    np.testing.assert_allclose(np.asarray(out), np.asarray(ref),
                               rtol=5e-4, atol=5e-5)
    assert out.shape == (B, output_size)
    print("KERNEL_OK")
</pallas_src>

<mosaic_0001>
module attributes {stable_mosaic.version = 11 : i64} {
  func.func @_fused_forward_kernel(%arg0: memref<64x16xf32, #tpu.memory_space<vmem>>, %arg1: memref<8x3xf32, #tpu.memory_space<vmem>>, %arg2: memref<16x256xf32, #tpu.memory_space<vmem>>, %arg3: memref<64x256xf32, #tpu.memory_space<vmem>>, %arg4: memref<1x256xf32, #tpu.memory_space<vmem>>, %arg5: memref<128x256xf32, #tpu.memory_space<vmem>>, %arg6: memref<64x256xf32, #tpu.memory_space<vmem>>, %arg7: memref<1x256xf32, #tpu.memory_space<vmem>>, %arg8: memref<64x32xf32, #tpu.memory_space<vmem>>, %arg9: memref<1x32xf32, #tpu.memory_space<vmem>>, %arg10: memref<32x16xf32, #tpu.memory_space<vmem>>, %arg11: memref<1x16xf32, #tpu.memory_space<vmem>>, %arg12: memref<16x3xf32, #tpu.memory_space<vmem>>, %arg13: memref<1x3xf32, #tpu.memory_space<vmem>>, %arg14: memref<8x3xf32, #tpu.memory_space<vmem>>) attributes {dimension_semantics = [], scalar_prefetch = 0 : i64, scratch_operands = 0 : i64, tpu.core_type = #tpu.core_type<tc>} {
    %c0 = arith.constant 0 : index
    %c0_0 = arith.constant 0 : index
    %0 = vector.load %arg0[%c0, %c0_0] : memref<64x16xf32, #tpu.memory_space<vmem>>, vector<64x16xf32>
    %c0_1 = arith.constant 0 : index
    %c0_2 = arith.constant 0 : index
    %1 = vector.load %arg3[%c0_1, %c0_2] : memref<64x256xf32, #tpu.memory_space<vmem>>, vector<64x256xf32>
    %c0_3 = arith.constant 0 : index
    %c0_4 = arith.constant 0 : index
    %2 = vector.load %arg2[%c0_3, %c0_4] : memref<16x256xf32, #tpu.memory_space<vmem>>, vector<16x256xf32>
    %cst = arith.constant dense<0.000000e+00> : vector<64x256xf32>
    %3 = tpu.matmul %0, %2, %cst {dimension_numbers = #tpu.dot_dimension_numbers<[1], [0], [0], [1], [0, 0, 1, 1], [], []>, precision = #tpu.contract_precision<fp32>} : vector<64x16xf32>, vector<16x256xf32>, vector<64x256xf32> -> vector<64x256xf32>
    %c0_5 = arith.constant 0 : index
    %c0_6 = arith.constant 0 : index
    %4 = vector.load %arg4[%c0_5, %c0_6] : memref<1x256xf32, #tpu.memory_space<vmem>>, vector<1x256xf32>
    %5 = vector.broadcast %4 : vector<1x256xf32> to vector<64x256xf32>
    %6 = arith.addf %3, %5 : vector<64x256xf32>
    %cst_7 = arith.constant 0.000000e+00 : f32
    %7 = vector.broadcast %cst_7 : f32 to vector<8x64xf32>
    %cst_8 = arith.constant 0.000000e+00 : f32
    %8 = vector.broadcast %cst_8 : f32 to vector<8x64xf32>
    %9 = vector.extract_strided_slice %6 {offsets = [0, 0], sizes = [8, 256], strides = [1, 1]} : vector<64x256xf32> to vector<8x256xf32>
    %cst_9 = arith.constant dense<0.000000e+00> : vector<8x256xf32>
    %10 = tpu.matmul %7, %1, %cst_9 {dimension_numbers = #tpu.dot_dimension_numbers<[1], [0], [0], [1], [0, 0, 1, 1], [], []>, precision = #tpu.contract_precision<fp32>} : vector<8x64xf32>, vector<64x256xf32>, vector<8x256xf32> -> vector<8x256xf32>
    %11 = arith.addf %9, %10 : vector<8x256xf32>
    %12 = arith.negf %11 : vector<8x256xf32>
    %13 = math.exp %12 : vector<8x256xf32>
    %cst_10 = arith.constant 1.000000e+00 : f32
    %14 = vector.broadcast %cst_10 : f32 to vector<8x256xf32>
    %15 = arith.addf %14, %13 : vector<8x256xf32>
    %16 = arith.divf %14, %15 : vector<8x256xf32>
    %17 = vector.extract_strided_slice %16 {offsets = [0, 0], sizes = [8, 64], strides = [1, 1]} : vector<8x256xf32> to vector<8x64xf32>
    %18 = vector.extract_strided_slice %16 {offsets = [0, 64], sizes = [8, 64], strides = [1, 1]} : vector<8x256xf32> to vector<8x64xf32>
    %19 = vector.extract_strided_slice %16 {offsets = [0, 128], sizes = [8, 64], strides = [1, 1]} : vector<8x256xf32> to vector<8x64xf32>
    %cst_11 = arith.constant 2.000000e+00 : f32
    %20 = vector.broadcast %cst_11 : f32 to vector<8x64xf32>
    %21 = arith.mulf %20, %19 : vector<8x64xf32>
    %cst_12 = arith.constant 1.000000e+00 : f32
    %22 = vector.broadcast %cst_12 : f32 to vector<8x64xf32>
    %23 = arith.subf %21, %22 : vector<8x64xf32>
    %24 = vector.extract_strided_slice %16 {offsets = [0, 192], sizes = [8, 64], strides = [1, 1]} : vector<8x256xf32> to vector<8x64xf32>
    %25 = arith.mulf %18, %8 : vector<8x64xf32>
    %26 = arith.mulf %17, %23 : vector<8x64xf32>
    %27 = arith.addf %25, %26 : vector<8x64xf32>
    %28 = math.tanh %27 : vector<8x64xf32>
    %29 = arith.mulf %24, %28 : vector<8x64xf32>
    %30 = vector.extract_strided_slice %6 {offsets = [8, 0], sizes = [8, 256], strides = [1, 1]} : vector<64x256xf32> to vector<8x256xf32>
    %cst_13 = arith.constant dense<0.000000e+00> : vector<8x256xf32>
    %31 = tpu.matmul %29, %1, %cst_13 {dimension_numbers = #tpu.dot_dimension_numbers<[1], [0], [0], [1], [0, 0, 1, 1], [], []>, precision = #tpu.contract_precision<fp32>} : vector<8x64xf32>, vector<64x256xf32>, vector<8x256xf32> -> vector<8x256xf32>
    %32 = arith.addf %30, %31 : vector<8x256xf32>
    %33 = arith.negf %32 : vector<8x256xf32>
    %34 = math.exp %33 : vector<8x256xf32>
    %cst_14 = arith.constant 1.000000e+00 : f32
    %35 = vector.broadcast %cst_14 : f32 to vector<8x256xf32>
    %36 = arith.addf %35, %34 : vector<8x256xf32>
    %37 = arith.divf %35, %36 : vector<8x256xf32>
    %38 = vector.extract_strided_slice %37 {offsets = [0, 0], sizes = [8, 64], strides = [1, 1]} : vector<8x256xf32> to vector<8x64xf32>
    %39 = vector.extract_strided_slice %37 {offsets = [0, 64], sizes = [8, 64], strides = [1, 1]} : vector<8x256xf32> to vector<8x64xf32>
    %40 = vector.extract_strided_slice %37 {offsets = [0, 128], sizes = [8, 64], strides = [1, 1]} : vector<8x256xf32> to vector<8x64xf32>
    %cst_15 = arith.constant 2.000000e+00 : f32
    %41 = vector.broadcast %cst_15 : f32 to vector<8x64xf32>
    %42 = arith.mulf %41, %40 : vector<8x64xf32>
    %cst_16 = arith.constant 1.000000e+00 : f32
    %43 = vector.broadcast %cst_16 : f32 to vector<8x64xf32>
    %44 = arith.subf %42, %43 : vector<8x64xf32>
    %45 = vector.extract_strided_slice %37 {offsets = [0, 192], sizes = [8, 64], strides = [1, 1]} : vector<8x256xf32> to vector<8x64xf32>
    %46 = arith.mulf %39, %27 : vector<8x64xf32>
    %47 = arith.mulf %38, %44 : vector<8x64xf32>
    %48 = arith.addf %46, %47 : vector<8x64xf32>
    %49 = math.tanh %48 : vector<8x64xf32>
    %50 = arith.mulf %45, %49 : vector<8x64xf32>
    %51 = vector.extract_strided_slice %6 {offsets = [16, 0], sizes = [8, 256], strides = [1, 1]} : vector<64x256xf32> to vector<8x256xf32>
    %cst_17 = arith.constant dense<0.000000e+00> : vector<8x256xf32>
    %52 = tpu.matmul %50, %1, %cst_17 {dimension_numbers = #tpu.dot_dimension_numbers<[1], [0], [0], [1], [0, 0, 1, 1], [], []>, precision = #tpu.contract_precision<fp32>} : vector<8x64xf32>, vector<64x256xf32>, vector<8x256xf32> -> vector<8x256xf32>
    %53 = arith.addf %51, %52 : vector<8x256xf32>
    %54 = arith.negf %53 : vector<8x256xf32>
    %55 = math.exp %54 : vector<8x256xf32>
    %cst_18 = arith.constant 1.000000e+00 : f32
    %56 = vector.broadcast %cst_18 : f32 to vector<8x256xf32>
    %57 = arith.addf %56, %55 : vector<8x256xf32>
    %58 = arith.divf %56, %57 : vector<8x256xf32>
    %59 = vector.extract_strided_slice %58 {offsets = [0, 0], sizes = [8, 64], strides = [1, 1]} : vector<8x256xf32> to vector<8x64xf32>
    %60 = vector.extract_strided_slice %58 {offsets = [0, 64], sizes = [8, 64], strides = [1, 1]} : vector<8x256xf32> to vector<8x64xf32>
    %61 = vector.extract_strided_slice %58 {offsets = [0, 128], sizes = [8, 64], strides = [1, 1]} : vector<8x256xf32> to vector<8x64xf32>
    %cst_19 = arith.constant 2.000000e+00 : f32
    %62 = vector.broadcast %cst_19 : f32 to vector<8x64xf32>
    %63 = arith.mulf %62, %61 : vector<8x64xf32>
    %cst_20 = arith.constant 1.000000e+00 : f32
    %64 = vector.broadcast %cst_20 : f32 to vector<8x64xf32>
    %65 = arith.subf %63, %64 : vector<8x64xf32>
    %66 = vector.extract_strided_slice %58 {offsets = [0, 192], sizes = [8, 64], strides = [1, 1]} : vector<8x256xf32> to vector<8x64xf32>
    %67 = arith.mulf %60, %48 : vector<8x64xf32>
    %68 = arith.mulf %59, %65 : vector<8x64xf32>
    %69 = arith.addf %67, %68 : vector<8x64xf32>
    %70 = math.tanh %69 : vector<8x64xf32>
    %71 = arith.mulf %66, %70 : vector<8x64xf32>
    %72 = vector.extract_strided_slice %6 {offsets = [24, 0], sizes = [8, 256], strides = [1, 1]} : vector<64x256xf32> to vector<8x256xf32>
    %cst_21 = arith.constant dense<0.000000e+00> : vector<8x256xf32>
    %73 = tpu.matmul %71, %1, %cst_21 {dimension_numbers = #tpu.dot_dimension_numbers<[1], [0], [0], [1], [0, 0, 1, 1], [], []>, precision = #tpu.contract_precision<fp32>} : vector<8x64xf32>, vector<64x256xf32>, vector<8x256xf32> -> vector<8x256xf32>
    %74 = arith.addf %72, %73 : vector<8x256xf32>
    %75 = arith.negf %74 : vector<8x256xf32>
    %76 = math.exp %75 : vector<8x256xf32>
    %cst_22 = arith.constant 1.000000e+00 : f32
    %77 = vector.broadcast %cst_22 : f32 to vector<8x256xf32>
    %78 = arith.addf %77, %76 : vector<8x256xf32>
    %79 = arith.divf %77, %78 : vector<8x256xf32>
    %80 = vector.extract_strided_slice %79 {offsets = [0, 0], sizes = [8, 64], strides = [1, 1]} : vector<8x256xf32> to vector<8x64xf32>
    %81 = vector.extract_strided_slice %79 {offsets = [0, 64], sizes = [8, 64], strides = [1, 1]} : vector<8x256xf32> to vector<8x64xf32>
    %82 = vector.extract_strided_slice %79 {offsets = [0, 128], sizes = [8, 64], strides = [1, 1]} : vector<8x256xf32> to vector<8x64xf32>
    %cst_23 = arith.constant 2.000000e+00 : f32
    %83 = vector.broadcast %cst_23 : f32 to vector<8x64xf32>
    %84 = arith.mulf %83, %82 : vector<8x64xf32>
    %cst_24 = arith.constant 1.000000e+00 : f32
    %85 = vector.broadcast %cst_24 : f32 to vector<8x64xf32>
    %86 = arith.subf %84, %85 : vector<8x64xf32>
    %87 = vector.extract_strided_slice %79 {offsets = [0, 192], sizes = [8, 64], strides = [1, 1]} : vector<8x256xf32> to vector<8x64xf32>
    %88 = arith.mulf %81, %69 : vector<8x64xf32>
    %89 = arith.mulf %80, %86 : vector<8x64xf32>
    %90 = arith.addf %88, %89 : vector<8x64xf32>
    %91 = math.tanh %90 : vector<8x64xf32>
    %92 = arith.mulf %87, %91 : vector<8x64xf32>
    %93 = vector.extract_strided_slice %6 {offsets = [32, 0], sizes = [8, 256], strides = [1, 1]} : vector<64x256xf32> to vector<8x256xf32>
    %cst_25 = arith.constant dense<0.000000e+00> : vector<8x256xf32>
    %94 = tpu.matmul %92, %1, %cst_25 {dimension_numbers = #tpu.dot_dimension_numbers<[1], [0], [0], [1], [0, 0, 1, 1], [], []>, precision = #tpu.contract_precision<fp32>} : vector<8x64xf32>, vector<64x256xf32>, vector<8x256xf32> -> vector<8x256xf32>
    %95 = arith.addf %93, %94 : vector<8x256xf32>
    %96 = arith.negf %95 : vector<8x256xf32>
    %97 = math.exp %96 : vector<8x256xf32>
    %cst_26 = arith.constant 1.000000e+00 : f32
    %98 = vector.broadcast %cst_26 : f32 to vector<8x256xf32>
    %99 = arith.addf %98, %97 : vector<8x256xf32>
    %100 = arith.divf %98, %99 : vector<8x256xf32>
    %101 = vector.extract_strided_slice %100 {offsets = [0, 0], sizes = [8, 64], strides = [1, 1]} : vector<8x256xf32> to vector<8x64xf32>
    %102 = vector.extract_strided_slice %100 {offsets = [0, 64], sizes = [8, 64], strides = [1, 1]} : vector<8x256xf32> to vector<8x64xf32>
    %103 = vector.extract_strided_slice %100 {offsets = [0, 128], sizes = [8, 64], strides = [1, 1]} : vector<8x256xf32> to vector<8x64xf32>
    %cst_27 = arith.constant 2.000000e+00 : f32
    %104 = vector.broadcast %cst_27 : f32 to vector<8x64xf32>
    %105 = arith.mulf %104, %103 : vector<8x64xf32>
    %cst_28 = arith.constant 1.000000e+00 : f32
    %106 = vector.broadcast %cst_28 : f32 to vector<8x64xf32>
    %107 = arith.subf %105, %106 : vector<8x64xf32>
    %108 = vector.extract_strided_slice %100 {offsets = [0, 192], sizes = [8, 64], strides = [1, 1]} : vector<8x256xf32> to vector<8x64xf32>
    %109 = arith.mulf %102, %90 : vector<8x64xf32>
    %110 = arith.mulf %101, %107 : vector<8x64xf32>
    %111 = arith.addf %109, %110 : vector<8x64xf32>
    %112 = math.tanh %111 : vector<8x64xf32>
    %113 = arith.mulf %108, %112 : vector<8x64xf32>
    %114 = vector.extract_strided_slice %6 {offsets = [40, 0], sizes = [8, 256], strides = [1, 1]} : vector<64x256xf32> to vector<8x256xf32>
    %cst_29 = arith.constant dense<0.000000e+00> : vector<8x256xf32>
    %115 = tpu.matmul %113, %1, %cst_29 {dimension_numbers = #tpu.dot_dimension_numbers<[1], [0], [0], [1], [0, 0, 1, 1], [], []>, precision = #tpu.contract_precision<fp32>} : vector<8x64xf32>, vector<64x256xf32>, vector<8x256xf32> -> vector<8x256xf32>
    %116 = arith.addf %114, %115 : vector<8x256xf32>
    %117 = arith.negf %116 : vector<8x256xf32>
    %118 = math.exp %117 : vector<8x256xf32>
    %cst_30 = arith.constant 1.000000e+00 : f32
    %119 = vector.broadcast %cst_30 : f32 to vector<8x256xf32>
    %120 = arith.addf %119, %118 : vector<8x256xf32>
    %121 = arith.divf %119, %120 : vector<8x256xf32>
    %122 = vector.extract_strided_slice %121 {offsets = [0, 0], sizes = [8, 64], strides = [1, 1]} : vector<8x256xf32> to vector<8x64xf32>
    %123 = vector.extract_strided_slice %121 {offsets = [0, 64], sizes = [8, 64], strides = [1, 1]} : vector<8x256xf32> to vector<8x64xf32>
    %124 = vector.extract_strided_slice %121 {offsets = [0, 128], sizes = [8, 64], strides = [1, 1]} : vector<8x256xf32> to vector<8x64xf32>
    %cst_31 = arith.constant 2.000000e+00 : f32
    %125 = vector.broadcast %cst_31 : f32 to vector<8x64xf32>
    %126 = arith.mulf %125, %124 : vector<8x64xf32>
    %cst_32 = arith.constant 1.000000e+00 : f32
    %127 = vector.broadcast %cst_32 : f32 to vector<8x64xf32>
    %128 = arith.subf %126, %127 : vector<8x64xf32>
    %129 = vector.extract_strided_slice %121 {offsets = [0, 192], sizes = [8, 64], strides = [1, 1]} : vector<8x256xf32> to vector<8x64xf32>
    %130 = arith.mulf %123, %111 : vector<8x64xf32>
    %131 = arith.mulf %122, %128 : vector<8x64xf32>
    %132 = arith.addf %130, %131 : vector<8x64xf32>
    %133 = math.tanh %132 : vector<8x64xf32>
    %134 = arith.mulf %129, %133 : vector<8x64xf32>
    %135 = vector.extract_strided_slice %6 {offsets = [48, 0], sizes = [8, 256], strides = [1, 1]} : vector<64x256xf32> to vector<8x256xf32>
    %cst_33 = arith.constant dense<0.000000e+00> : vector<8x256xf32>
    %136 = tpu.matmul %134, %1, %cst_33 {dimension_numbers = #tpu.dot_dimension_numbers<[1], [0], [0], [1], [0, 0, 1, 1], [], []>, precision = #tpu.contract_precision<fp32>} : vector<8x64xf32>, vector<64x256xf32>, vector<8x256xf32> -> vector<8x256xf32>
    %137 = arith.addf %135, %136 : vector<8x256xf32>
    %138 = arith.negf %137 : vector<8x256xf32>
    %139 = math.exp %138 : vector<8x256xf32>
    %cst_34 = arith.constant 1.000000e+00 : f32
    %140 = vector.broadcast %cst_34 : f32 to vector<8x256xf32>
    %141 = arith.addf %140, %139 : vector<8x256xf32>
    %142 = arith.divf %140, %141 : vector<8x256xf32>
    %143 = vector.extract_strided_slice %142 {offsets = [0, 0], sizes = [8, 64], strides = [1, 1]} : vector<8x256xf32> to vector<8x64xf32>
    %144 = vector.extract_strided_slice %142 {offsets = [0, 64], sizes = [8, 64], strides = [1, 1]} : vector<8x256xf32> to vector<8x64xf32>
    %145 = vector.extract_strided_slice %142 {offsets = [0, 128], sizes = [8, 64], strides = [1, 1]} : vector<8x256xf32> to vector<8x64xf32>
    %cst_35 = arith.constant 2.000000e+00 : f32
    %146 = vector.broadcast %cst_35 : f32 to vector<8x64xf32>
    %147 = arith.mulf %146, %145 : vector<8x64xf32>
    %cst_36 = arith.constant 1.000000e+00 : f32
    %148 = vector.broadcast %cst_36 : f32 to vector<8x64xf32>
    %149 = arith.subf %147, %148 : vector<8x64xf32>
    %150 = vector.extract_strided_slice %142 {offsets = [0, 192], sizes = [8, 64], strides = [1, 1]} : vector<8x256xf32> to vector<8x64xf32>
    %151 = arith.mulf %144, %132 : vector<8x64xf32>
    %152 = arith.mulf %143, %149 : vector<8x64xf32>
    %153 = arith.addf %151, %152 : vector<8x64xf32>
    %154 = math.tanh %153 : vector<8x64xf32>
    %155 = arith.mulf %150, %154 : vector<8x64xf32>
    %156 = vector.extract_strided_slice %6 {offsets = [56, 0], sizes = [8, 256], strides = [1, 1]} : vector<64x256xf32> to vector<8x256xf32>
    %cst_37 = arith.constant dense<0.000000e+00> : vector<8x256xf32>
    %157 = tpu.matmul %155, %1, %cst_37 {dimension_numbers = #tpu.dot_dimension_numbers<[1], [0], [0], [1], [0, 0, 1, 1], [], []>, precision = #tpu.contract_precision<fp32>} : vector<8x64xf32>, vector<64x256xf32>, vector<8x256xf32> -> vector<8x256xf32>
    %158 = arith.addf %156, %157 : vector<8x256xf32>
    %159 = arith.negf %158 : vector<8x256xf32>
    %160 = math.exp %159 : vector<8x256xf32>
    %cst_38 = arith.constant 1.000000e+00 : f32
    %161 = vector.broadcast %cst_38 : f32 to vector<8x256xf32>
    %162 = arith.addf %161, %160 : vector<8x256xf32>
    %163 = arith.divf %161, %162 : vector<8x256xf32>
    %164 = vector.extract_strided_slice %163 {offsets = [0, 0], sizes = [8, 64], strides = [1, 1]} : vector<8x256xf32> to vector<8x64xf32>
    %165 = vector.extract_strided_slice %163 {offsets = [0, 64], sizes = [8, 64], strides = [1, 1]} : vector<8x256xf32> to vector<8x64xf32>
    %166 = vector.extract_strided_slice %163 {offsets = [0, 128], sizes = [8, 64], strides = [1, 1]} : vector<8x256xf32> to vector<8x64xf32>
    %cst_39 = arith.constant 2.000000e+00 : f32
    %167 = vector.broadcast %cst_39 : f32 to vector<8x64xf32>
    %168 = arith.mulf %167, %166 : vector<8x64xf32>
    %cst_40 = arith.constant 1.000000e+00 : f32
    %169 = vector.broadcast %cst_40 : f32 to vector<8x64xf32>
    %170 = arith.subf %168, %169 : vector<8x64xf32>
    %171 = vector.extract_strided_slice %163 {offsets = [0, 192], sizes = [8, 64], strides = [1, 1]} : vector<8x256xf32> to vector<8x64xf32>
    %172 = arith.mulf %165, %153 : vector<8x64xf32>
    %173 = arith.mulf %164, %170 : vector<8x64xf32>
    %174 = arith.addf %172, %173 : vector<8x64xf32>
    %175 = math.tanh %174 : vector<8x64xf32>
    %176 = arith.mulf %171, %175 : vector<8x64xf32>
    %177 = tpu.concatenate %29, %50, %71, %92, %113, %134, %155, %176 in 0 : vector<8x64xf32>, vector<8x64xf32>, vector<8x64xf32>, vector<8x64xf32>, vector<8x64xf32>, vector<8x64xf32>, vector<8x64xf32>, vector<8x64xf32> -> vector<64x64xf32>
    %178 = tpu.concatenate %176, %155, %134, %113, %92, %71, %50, %29 in 0 : vector<8x64xf32>, vector<8x64xf32>, vector<8x64xf32>, vector<8x64xf32>, vector<8x64xf32>, vector<8x64xf32>, vector<8x64xf32>, vector<8x64xf32> -> vector<64x64xf32>
    %179 = tpu.concatenate %177, %178 in 1 : vector<64x64xf32>, vector<64x64xf32> -> vector<64x128xf32>
    %c0_41 = arith.constant 0 : index
    %c0_42 = arith.constant 0 : index
    %180 = vector.load %arg6[%c0_41, %c0_42] : memref<64x256xf32, #tpu.memory_space<vmem>>, vector<64x256xf32>
    %c0_43 = arith.constant 0 : index
    %c0_44 = arith.constant 0 : index
    %181 = vector.load %arg5[%c0_43, %c0_44] : memref<128x256xf32, #tpu.memory_space<vmem>>, vector<128x256xf32>
    %cst_45 = arith.constant dense<0.000000e+00> : vector<64x256xf32>
    %182 = tpu.matmul %179, %181, %cst_45 {dimension_numbers = #tpu.dot_dimension_numbers<[1], [0], [0], [1], [0, 0, 1, 1], [], []>, precision = #tpu.contract_precision<fp32>} : vector<64x128xf32>, vector<128x256xf32>, vector<64x256xf32> -> vector<64x256xf32>
    %c0_46 = arith.constant 0 : index
    %c0_47 = arith.constant 0 : index
    %183 = vector.load %arg7[%c0_46, %c0_47] : memref<1x256xf32, #tpu.memory_space<vmem>>, vector<1x256xf32>
    %184 = vector.broadcast %183 : vector<1x256xf32> to vector<64x256xf32>
    %185 = arith.addf %182, %184 : vector<64x256xf32>
    %cst_48 = arith.constant 0.000000e+00 : f32
    %186 = vector.broadcast %cst_48 : f32 to vector<8x64xf32>
    %cst_49 = arith.constant 0.000000e+00 : f32
    %187 = vector.broadcast %cst_49 : f32 to vector<8x64xf32>
    %188 = vector.extract_strided_slice %185 {offsets = [0, 0], sizes = [8, 256], strides = [1, 1]} : vector<64x256xf32> to vector<8x256xf32>
    %cst_50 = arith.constant dense<0.000000e+00> : vector<8x256xf32>
    %189 = tpu.matmul %186, %180, %cst_50 {dimension_numbers = #tpu.dot_dimension_numbers<[1], [0], [0], [1], [0, 0, 1, 1], [], []>, precision = #tpu.contract_precision<fp32>} : vector<8x64xf32>, vector<64x256xf32>, vector<8x256xf32> -> vector<8x256xf32>
    %190 = arith.addf %188, %189 : vector<8x256xf32>
    %191 = arith.negf %190 : vector<8x256xf32>
    %192 = math.exp %191 : vector<8x256xf32>
    %cst_51 = arith.constant 1.000000e+00 : f32
    %193 = vector.broadcast %cst_51 : f32 to vector<8x256xf32>
    %194 = arith.addf %193, %192 : vector<8x256xf32>
    %195 = arith.divf %193, %194 : vector<8x256xf32>
    %196 = vector.extract_strided_slice %195 {offsets = [0, 0], sizes = [8, 64], strides = [1, 1]} : vector<8x256xf32> to vector<8x64xf32>
    %197 = vector.extract_strided_slice %195 {offsets = [0, 64], sizes = [8, 64], strides = [1, 1]} : vector<8x256xf32> to vector<8x64xf32>
    %198 = vector.extract_strided_slice %195 {offsets = [0, 128], sizes = [8, 64], strides = [1, 1]} : vector<8x256xf32> to vector<8x64xf32>
    %cst_52 = arith.constant 2.000000e+00 : f32
    %199 = vector.broadcast %cst_52 : f32 to vector<8x64xf32>
    %200 = arith.mulf %199, %198 : vector<8x64xf32>
    %cst_53 = arith.constant 1.000000e+00 : f32
    %201 = vector.broadcast %cst_53 : f32 to vector<8x64xf32>
    %202 = arith.subf %200, %201 : vector<8x64xf32>
    %203 = vector.extract_strided_slice %195 {offsets = [0, 192], sizes = [8, 64], strides = [1, 1]} : vector<8x256xf32> to vector<8x64xf32>
    %204 = arith.mulf %197, %187 : vector<8x64xf32>
    %205 = arith.mulf %196, %202 : vector<8x64xf32>
    %206 = arith.addf %204, %205 : vector<8x64xf32>
    %207 = math.tanh %206 : vector<8x64xf32>
    %208 = arith.mulf %203, %207 : vector<8x64xf32>
    %209 = vector.extract_strided_slice %185 {offsets = [8, 0], sizes = [8, 256], strides = [1, 1]} : vector<64x256xf32> to vector<8x256xf32>
    %cst_54 = arith.constant dense<0.000000e+00> : vector<8x256xf32>
    %210 = tpu.matmul %208, %180, %cst_54 {dimension_numbers = #tpu.dot_dimension_numbers<[1], [0], [0], [1], [0, 0, 1, 1], [], []>, precision = #tpu.contract_precision<fp32>} : vector<8x64xf32>, vector<64x256xf32>, vector<8x256xf32> -> vector<8x256xf32>
    %211 = arith.addf %209, %210 : vector<8x256xf32>
    %212 = arith.negf %211 : vector<8x256xf32>
    %213 = math.exp %212 : vector<8x256xf32>
    %cst_55 = arith.constant 1.000000e+00 : f32
    %214 = vector.broadcast %cst_55 : f32 to vector<8x256xf32>
    %215 = arith.addf %214, %213 : vector<8x256xf32>
    %216 = arith.divf %214, %215 : vector<8x256xf32>
    %217 = vector.extract_strided_slice %216 {offsets = [0, 0], sizes = [8, 64], strides = [1, 1]} : vector<8x256xf32> to vector<8x64xf32>
    %218 = vector.extract_strided_slice %216 {offsets = [0, 64], sizes = [8, 64], strides = [1, 1]} : vector<8x256xf32> to vector<8x64xf32>
    %219 = vector.extract_strided_slice %216 {offsets = [0, 128], sizes = [8, 64], strides = [1, 1]} : vector<8x256xf32> to vector<8x64xf32>
    %cst_56 = arith.constant 2.000000e+00 : f32
    %220 = vector.broadcast %cst_56 : f32 to vector<8x64xf32>
    %221 = arith.mulf %220, %219 : vector<8x64xf32>
    %cst_57 = arith.constant 1.000000e+00 : f32
    %222 = vector.broadcast %cst_57 : f32 to vector<8x64xf32>
    %223 = arith.subf %221, %222 : vector<8x64xf32>
    %224 = vector.extract_strided_slice %216 {offsets = [0, 192], sizes = [8, 64], strides = [1, 1]} : vector<8x256xf32> to vector<8x64xf32>
    %225 = arith.mulf %218, %206 : vector<8x64xf32>
    %226 = arith.mulf %217, %223 : vector<8x64xf32>
    %227 = arith.addf %225, %226 : vector<8x64xf32>
    %228 = math.tanh %227 : vector<8x64xf32>
    %229 = arith.mulf %224, %228 : vector<8x64xf32>
    %230 = vector.extract_strided_slice %185 {offsets = [16, 0], sizes = [8, 256], strides = [1, 1]} : vector<64x256xf32> to vector<8x256xf32>
    %cst_58 = arith.constant dense<0.000000e+00> : vector<8x256xf32>
    %231 = tpu.matmul %229, %180, %cst_58 {dimension_numbers = #tpu.dot_dimension_numbers<[1], [0], [0], [1], [0, 0, 1, 1], [], []>, precision = #tpu.contract_precision<fp32>} : vector<8x64xf32>, vector<64x256xf32>, vector<8x256xf32> -> vector<8x256xf32>
    %232 = arith.addf %230, %231 : vector<8x256xf32>
    %233 = arith.negf %232 : vector<8x256xf32>
    %234 = math.exp %233 : vector<8x256xf32>
    %cst_59 = arith.constant 1.000000e+00 : f32
    %235 = vector.broadcast %cst_59 : f32 to vector<8x256xf32>
    %236 = arith.addf %235, %234 : vector<8x256xf32>
    %237 = arith.divf %235, %236 : vector<8x256xf32>
    %238 = vector.extract_strided_slice %237 {offsets = [0, 0], sizes = [8, 64], strides = [1, 1]} : vector<8x256xf32> to vector<8x64xf32>
    %239 = vector.extract_strided_slice %237 {offsets = [0, 64], sizes = [8, 64], strides = [1, 1]} : vector<8x256xf32> to vector<8x64xf32>
    %240 = vector.extract_strided_slice %237 {offsets = [0, 128], sizes = [8, 64], strides = [1, 1]} : vector<8x256xf32> to vector<8x64xf32>
    %cst_60 = arith.constant 2.000000e+00 : f32
    %241 = vector.broadcast %cst_60 : f32 to vector<8x64xf32>
    %242 = arith.mulf %241, %240 : vector<8x64xf32>
    %cst_61 = arith.constant 1.000000e+00 : f32
    %243 = vector.broadcast %cst_61 : f32 to vector<8x64xf32>
    %244 = arith.subf %242, %243 : vector<8x64xf32>
    %245 = vector.extract_strided_slice %237 {offsets = [0, 192], sizes = [8, 64], strides = [1, 1]} : vector<8x256xf32> to vector<8x64xf32>
    %246 = arith.mulf %239, %227 : vector<8x64xf32>
    %247 = arith.mulf %238, %244 : vector<8x64xf32>
    %248 = arith.addf %246, %247 : vector<8x64xf32>
    %249 = math.tanh %248 : vector<8x64xf32>
    %250 = arith.mulf %245, %249 : vector<8x64xf32>
    %251 = vector.extract_strided_slice %185 {offsets = [24, 0], sizes = [8, 256], strides = [1, 1]} : vector<64x256xf32> to vector<8x256xf32>
    %cst_62 = arith.constant dense<0.000000e+00> : vector<8x256xf32>
    %252 = tpu.matmul %250, %180, %cst_62 {dimension_numbers = #tpu.dot_dimension_numbers<[1], [0], [0], [1], [0, 0, 1, 1], [], []>, precision = #tpu.contract_precision<fp32>} : vector<8x64xf32>, vector<64x256xf32>, vector<8x256xf32> -> vector<8x256xf32>
    %253 = arith.addf %251, %252 : vector<8x256xf32>
    %254 = arith.negf %253 : vector<8x256xf32>
    %255 = math.exp %254 : vector<8x256xf32>
    %cst_63 = arith.constant 1.000000e+00 : f32
    %256 = vector.broadcast %cst_63 : f32 to vector<8x256xf32>
    %257 = arith.addf %256, %255 : vector<8x256xf32>
    %258 = arith.divf %256, %257 : vector<8x256xf32>
    %259 = vector.extract_strided_slice %258 {offsets = [0, 0], sizes = [8, 64], strides = [1, 1]} : vector<8x256xf32> to vector<8x64xf32>
    %260 = vector.extract_strided_slice %258 {offsets = [0, 64], sizes = [8, 64], strides = [1, 1]} : vector<8x256xf32> to vector<8x64xf32>
    %261 = vector.extract_strided_slice %258 {offsets = [0, 128], sizes = [8, 64], strides = [1, 1]} : vector<8x256xf32> to vector<8x64xf32>
    %cst_64 = arith.constant 2.000000e+00 : f32
    %262 = vector.broadcast %cst_64 : f32 to vector<8x64xf32>
    %263 = arith.mulf %262, %261 : vector<8x64xf32>
    %cst_65 = arith.constant 1.000000e+00 : f32
    %264 = vector.broadcast %cst_65 : f32 to vector<8x64xf32>
    %265 = arith.subf %263, %264 : vector<8x64xf32>
    %266 = vector.extract_strided_slice %258 {offsets = [0, 192], sizes = [8, 64], strides = [1, 1]} : vector<8x256xf32> to vector<8x64xf32>
    %267 = arith.mulf %260, %248 : vector<8x64xf32>
    %268 = arith.mulf %259, %265 : vector<8x64xf32>
    %269 = arith.addf %267, %268 : vector<8x64xf32>
    %270 = math.tanh %269 : vector<8x64xf32>
    %271 = arith.mulf %266, %270 : vector<8x64xf32>
    %272 = vector.extract_strided_slice %185 {offsets = [32, 0], sizes = [8, 256], strides = [1, 1]} : vector<64x256xf32> to vector<8x256xf32>
    %cst_66 = arith.constant dense<0.000000e+00> : vector<8x256xf32>
    %273 = tpu.matmul %271, %180, %cst_66 {dimension_numbers = #tpu.dot_dimension_numbers<[1], [0], [0], [1], [0, 0, 1, 1], [], []>, precision = #tpu.contract_precision<fp32>} : vector<8x64xf32>, vector<64x256xf32>, vector<8x256xf32> -> vector<8x256xf32>
    %274 = arith.addf %272, %273 : vector<8x256xf32>
    %275 = arith.negf %274 : vector<8x256xf32>
    %276 = math.exp %275 : vector<8x256xf32>
    %cst_67 = arith.constant 1.000000e+00 : f32
    %277 = vector.broadcast %cst_67 : f32 to vector<8x256xf32>
    %278 = arith.addf %277, %276 : vector<8x256xf32>
    %279 = arith.divf %277, %278 : vector<8x256xf32>
    %280 = vector.extract_strided_slice %279 {offsets = [0, 0], sizes = [8, 64], strides = [1, 1]} : vector<8x256xf32> to vector<8x64xf32>
    %281 = vector.extract_strided_slice %279 {offsets = [0, 64], sizes = [8, 64], strides = [1, 1]} : vector<8x256xf32> to vector<8x64xf32>
    %282 = vector.extract_strided_slice %279 {offsets = [0, 128], sizes = [8, 64], strides = [1, 1]} : vector<8x256xf32> to vector<8x64xf32>
    %cst_68 = arith.constant 2.000000e+00 : f32
    %283 = vector.broadcast %cst_68 : f32 to vector<8x64xf32>
    %284 = arith.mulf %283, %282 : vector<8x64xf32>
    %cst_69 = arith.constant 1.000000e+00 : f32
    %285 = vector.broadcast %cst_69 : f32 to vector<8x64xf32>
    %286 = arith.subf %284, %285 : vector<8x64xf32>
    %287 = vector.extract_strided_slice %279 {offsets = [0, 192], sizes = [8, 64], strides = [1, 1]} : vector<8x256xf32> to vector<8x64xf32>
    %288 = arith.mulf %281, %269 : vector<8x64xf32>
    %289 = arith.mulf %280, %286 : vector<8x64xf32>
    %290 = arith.addf %288, %289 : vector<8x64xf32>
    %291 = math.tanh %290 : vector<8x64xf32>
    %292 = arith.mulf %287, %291 : vector<8x64xf32>
    %293 = vector.extract_strided_slice %185 {offsets = [40, 0], sizes = [8, 256], strides = [1, 1]} : vector<64x256xf32> to vector<8x256xf32>
    %cst_70 = arith.constant dense<0.000000e+00> : vector<8x256xf32>
    %294 = tpu.matmul %292, %180, %cst_70 {dimension_numbers = #tpu.dot_dimension_numbers<[1], [0], [0], [1], [0, 0, 1, 1], [], []>, precision = #tpu.contract_precision<fp32>} : vector<8x64xf32>, vector<64x256xf32>, vector<8x256xf32> -> vector<8x256xf32>
    %295 = arith.addf %293, %294 : vector<8x256xf32>
    %296 = arith.negf %295 : vector<8x256xf32>
    %297 = math.exp %296 : vector<8x256xf32>
    %cst_71 = arith.constant 1.000000e+00 : f32
    %298 = vector.broadcast %cst_71 : f32 to vector<8x256xf32>
    %299 = arith.addf %298, %297 : vector<8x256xf32>
    %300 = arith.divf %298, %299 : vector<8x256xf32>
    %301 = vector.extract_strided_slice %300 {offsets = [0, 0], sizes = [8, 64], strides = [1, 1]} : vector<8x256xf32> to vector<8x64xf32>
    %302 = vector.extract_strided_slice %300 {offsets = [0, 64], sizes = [8, 64], strides = [1, 1]} : vector<8x256xf32> to vector<8x64xf32>
    %303 = vector.extract_strided_slice %300 {offsets = [0, 128], sizes = [8, 64], strides = [1, 1]} : vector<8x256xf32> to vector<8x64xf32>
    %cst_72 = arith.constant 2.000000e+00 : f32
    %304 = vector.broadcast %cst_72 : f32 to vector<8x64xf32>
    %305 = arith.mulf %304, %303 : vector<8x64xf32>
    %cst_73 = arith.constant 1.000000e+00 : f32
    %306 = vector.broadcast %cst_73 : f32 to vector<8x64xf32>
    %307 = arith.subf %305, %306 : vector<8x64xf32>
    %308 = vector.extract_strided_slice %300 {offsets = [0, 192], sizes = [8, 64], strides = [1, 1]} : vector<8x256xf32> to vector<8x64xf32>
    %309 = arith.mulf %302, %290 : vector<8x64xf32>
    %310 = arith.mulf %301, %307 : vector<8x64xf32>
    %311 = arith.addf %309, %310 : vector<8x64xf32>
    %312 = math.tanh %311 : vector<8x64xf32>
    %313 = arith.mulf %308, %312 : vector<8x64xf32>
    %314 = vector.extract_strided_slice %185 {offsets = [48, 0], sizes = [8, 256], strides = [1, 1]} : vector<64x256xf32> to vector<8x256xf32>
    %cst_74 = arith.constant dense<0.000000e+00> : vector<8x256xf32>
    %315 = tpu.matmul %313, %180, %cst_74 {dimension_numbers = #tpu.dot_dimension_numbers<[1], [0], [0], [1], [0, 0, 1, 1], [], []>, precision = #tpu.contract_precision<fp32>} : vector<8x64xf32>, vector<64x256xf32>, vector<8x256xf32> -> vector<8x256xf32>
    %316 = arith.addf %314, %315 : vector<8x256xf32>
    %317 = arith.negf %316 : vector<8x256xf32>
    %318 = math.exp %317 : vector<8x256xf32>
    %cst_75 = arith.constant 1.000000e+00 : f32
    %319 = vector.broadcast %cst_75 : f32 to vector<8x256xf32>
    %320 = arith.addf %319, %318 : vector<8x256xf32>
    %321 = arith.divf %319, %320 : vector<8x256xf32>
    %322 = vector.extract_strided_slice %321 {offsets = [0, 0], sizes = [8, 64], strides = [1, 1]} : vector<8x256xf32> to vector<8x64xf32>
    %323 = vector.extract_strided_slice %321 {offsets = [0, 64], sizes = [8, 64], strides = [1, 1]} : vector<8x256xf32> to vector<8x64xf32>
    %324 = vector.extract_strided_slice %321 {offsets = [0, 128], sizes = [8, 64], strides = [1, 1]} : vector<8x256xf32> to vector<8x64xf32>
    %cst_76 = arith.constant 2.000000e+00 : f32
    %325 = vector.broadcast %cst_76 : f32 to vector<8x64xf32>
    %326 = arith.mulf %325, %324 : vector<8x64xf32>
    %cst_77 = arith.constant 1.000000e+00 : f32
    %327 = vector.broadcast %cst_77 : f32 to vector<8x64xf32>
    %328 = arith.subf %326, %327 : vector<8x64xf32>
    %329 = vector.extract_strided_slice %321 {offsets = [0, 192], sizes = [8, 64], strides = [1, 1]} : vector<8x256xf32> to vector<8x64xf32>
    %330 = arith.mulf %323, %311 : vector<8x64xf32>
    %331 = arith.mulf %322, %328 : vector<8x64xf32>
    %332 = arith.addf %330, %331 : vector<8x64xf32>
    %333 = math.tanh %332 : vector<8x64xf32>
    %334 = arith.mulf %329, %333 : vector<8x64xf32>
    %335 = vector.extract_strided_slice %185 {offsets = [56, 0], sizes = [8, 256], strides = [1, 1]} : vector<64x256xf32> to vector<8x256xf32>
    %cst_78 = arith.constant dense<0.000000e+00> : vector<8x256xf32>
    %336 = tpu.matmul %334, %180, %cst_78 {dimension_numbers = #tpu.dot_dimension_numbers<[1], [0], [0], [1], [0, 0, 1, 1], [], []>, precision = #tpu.contract_precision<fp32>} : vector<8x64xf32>, vector<64x256xf32>, vector<8x256xf32> -> vector<8x256xf32>
    %337 = arith.addf %335, %336 : vector<8x256xf32>
    %338 = arith.negf %337 : vector<8x256xf32>
    %339 = math.exp %338 : vector<8x256xf32>
    %cst_79 = arith.constant 1.000000e+00 : f32
    %340 = vector.broadcast %cst_79 : f32 to vector<8x256xf32>
    %341 = arith.addf %340, %339 : vector<8x256xf32>
    %342 = arith.divf %340, %341 : vector<8x256xf32>
    %343 = vector.extract_strided_slice %342 {offsets = [0, 0], sizes = [8, 64], strides = [1, 1]} : vector<8x256xf32> to vector<8x64xf32>
    %344 = vector.extract_strided_slice %342 {offsets = [0, 64], sizes = [8, 64], strides = [1, 1]} : vector<8x256xf32> to vector<8x64xf32>
    %345 = vector.extract_strided_slice %342 {offsets = [0, 128], sizes = [8, 64], strides = [1, 1]} : vector<8x256xf32> to vector<8x64xf32>
    %cst_80 = arith.constant 2.000000e+00 : f32
    %346 = vector.broadcast %cst_80 : f32 to vector<8x64xf32>
    %347 = arith.mulf %346, %345 : vector<8x64xf32>
    %cst_81 = arith.constant 1.000000e+00 : f32
    %348 = vector.broadcast %cst_81 : f32 to vector<8x64xf32>
    %349 = arith.subf %347, %348 : vector<8x64xf32>
    %350 = vector.extract_strided_slice %342 {offsets = [0, 192], sizes = [8, 64], strides = [1, 1]} : vector<8x256xf32> to vector<8x64xf32>
    %351 = arith.mulf %344, %332 : vector<8x64xf32>
    %352 = arith.mulf %343, %349 : vector<8x64xf32>
    %353 = arith.addf %351, %352 : vector<8x64xf32>
    %354 = math.tanh %353 : vector<8x64xf32>
    %355 = arith.mulf %350, %354 : vector<8x64xf32>
    %356 = vector.extract_strided_slice %355 {offsets = [0, 0], sizes = [8, 32], strides = [1, 1]} : vector<8x64xf32> to vector<8x32xf32>
    %c0_82 = arith.constant 0 : index
    %c0_83 = arith.constant 0 : index
    %357 = vector.load %arg8[%c0_82, %c0_83] : memref<64x32xf32, #tpu.memory_space<vmem>>, vector<32x32xf32>
    %cst_84 = arith.constant dense<0.000000e+00> : vector<8x32xf32>
    %358 = tpu.matmul %356, %357, %cst_84 {dimension_numbers = #tpu.dot_dimension_numbers<[1], [0], [0], [1], [0, 0, 1, 1], [], []>, precision = #tpu.contract_precision<fp32>} : vector<8x32xf32>, vector<32x32xf32>, vector<8x32xf32> -> vector<8x32xf32>
    %359 = vector.extract_strided_slice %208 {offsets = [0, 32], sizes = [8, 32], strides = [1, 1]} : vector<8x64xf32> to vector<8x32xf32>
    %c32 = arith.constant 32 : index
    %c0_85 = arith.constant 0 : index
    %360 = vector.load %arg8[%c32, %c0_85] : memref<64x32xf32, #tpu.memory_space<vmem>>, vector<32x32xf32>
    %cst_86 = arith.constant dense<0.000000e+00> : vector<8x32xf32>
    %361 = tpu.matmul %359, %360, %cst_86 {dimension_numbers = #tpu.dot_dimension_numbers<[1], [0], [0], [1], [0, 0, 1, 1], [], []>, precision = #tpu.contract_precision<fp32>} : vector<8x32xf32>, vector<32x32xf32>, vector<8x32xf32> -> vector<8x32xf32>
    %362 = arith.addf %358, %361 : vector<8x32xf32>
    %c0_87 = arith.constant 0 : index
    %c0_88 = arith.constant 0 : index
    %363 = vector.load %arg9[%c0_87, %c0_88] : memref<1x32xf32, #tpu.memory_space<vmem>>, vector<1x32xf32>
    %364 = vector.broadcast %363 : vector<1x32xf32> to vector<8x32xf32>
    %365 = arith.addf %362, %364 : vector<8x32xf32>
    %cst_89 = arith.constant 0.000000e+00 : f32
    %366 = vector.broadcast %cst_89 : f32 to vector<8x32xf32>
    %367 = arith.maximumf %365, %366 : vector<8x32xf32>
    %c0_90 = arith.constant 0 : index
    %c0_91 = arith.constant 0 : index
    %368 = vector.load %arg10[%c0_90, %c0_91] : memref<32x16xf32, #tpu.memory_space<vmem>>, vector<32x16xf32>
    %c0_92 = arith.constant 0 : index
    %c0_93 = arith.constant 0 : index
    %369 = vector.load %arg11[%c0_92, %c0_93] : memref<1x16xf32, #tpu.memory_space<vmem>>, vector<1x16xf32>
    %cst_94 = arith.constant dense<0.000000e+00> : vector<8x16xf32>
    %370 = tpu.matmul %367, %368, %cst_94 {dimension_numbers = #tpu.dot_dimension_numbers<[1], [0], [0], [1], [0, 0, 1, 1], [], []>, precision = #tpu.contract_precision<fp32>} : vector<8x32xf32>, vector<32x16xf32>, vector<8x16xf32> -> vector<8x16xf32>
    %371 = vector.broadcast %369 : vector<1x16xf32> to vector<8x16xf32>
    %372 = arith.addf %370, %371 : vector<8x16xf32>
    %cst_95 = arith.constant 0.000000e+00 : f32
    %373 = vector.broadcast %cst_95 : f32 to vector<8x16xf32>
    %374 = arith.maximumf %372, %373 : vector<8x16xf32>
    %c0_96 = arith.constant 0 : index
    %c0_97 = arith.constant 0 : index
    %375 = vector.load %arg12[%c0_96, %c0_97] : memref<16x3xf32, #tpu.memory_space<vmem>>, vector<16x3xf32>
    %cst_98 = arith.constant dense<0.000000e+00> : vector<8x3xf32>
    %376 = tpu.matmul %374, %375, %cst_98 {dimension_numbers = #tpu.dot_dimension_numbers<[1], [0], [0], [1], [0, 0, 1, 1], [], []>, precision = #tpu.contract_precision<fp32>} : vector<8x16xf32>, vector<16x3xf32>, vector<8x3xf32> -> vector<8x3xf32>
    %c0_99 = arith.constant 0 : index
    %c0_100 = arith.constant 0 : index
    %377 = vector.load %arg13[%c0_99, %c0_100] : memref<1x3xf32, #tpu.memory_space<vmem>>, vector<1x3xf32>
    %378 = vector.broadcast %377 : vector<1x3xf32> to vector<8x3xf32>
    %379 = arith.addf %376, %378 : vector<8x3xf32>
    %cst_101 = arith.constant 0.000000e+00 : f32
    %380 = vector.broadcast %cst_101 : f32 to vector<8x3xf32>
    %381 = arith.maximumf %379, %380 : vector<8x3xf32>
    %c0_102 = arith.constant 0 : index
    %c0_103 = arith.constant 0 : index
    %382 = vector.load %arg1[%c0_102, %c0_103] : memref<8x3xf32, #tpu.memory_space<vmem>>, vector<8x3xf32>
    %383 = arith.mulf %381, %382 : vector<8x3xf32>
    %c0_104 = arith.constant 0 : index
    %c0_105 = arith.constant 0 : index
    %384 = vector.load %arg14[%c0_104, %c0_105] : memref<8x3xf32, #tpu.memory_space<vmem>>, vector<8x3xf32>
    tpu.vector_store %arg14[%c0_104, %c0_105], %383 {strides = array<i32>} : memref<8x3xf32, #tpu.memory_space<vmem>>, vector<8x3xf32>,
    return
  }
}

</mosaic_0001>

<llo_original>
// kernel: enhanced_usage_lstm_forward.1
$region0: #{enhanced_usage_lstm_forward.1}
  #allocation0 [shape = 'u32[]', space=smem, size = 0x4, offset = 0x4, fixed_abs, tag = 'smem constant byte address 0x4 - core index']
  #allocation1 [shape = 'u32[72,128]{1,0:T(1,128)}', space=vmem, size = 0x9000, scoped, tag = 'internal scratch']
  %s0 = inlined_call_operand.vmem [shape: f32[64,16], index: 0, kind: input, shape index: {}]
  %s1 = inlined_call_operand.vmem [shape: f32[8,3], index: 1, kind: input, shape index: {}]
  %s2 = inlined_call_operand.vmem [shape: f32[16,256], index: 2, kind: input, shape index: {}]
  %s3 = inlined_call_operand.vmem [shape: f32[64,256], index: 3, kind: input, shape index: {}]
  %s4 = inlined_call_operand.vmem [shape: f32[1,256], index: 4, kind: input, shape index: {}]
  %s5 = inlined_call_operand.vmem [shape: f32[128,256], index: 5, kind: input, shape index: {}]
  %s6 = inlined_call_operand.vmem [shape: f32[64,256], index: 6, kind: input, shape index: {}]
  %s7 = inlined_call_operand.vmem [shape: f32[1,256], index: 7, kind: input, shape index: {}]
  %s8 = inlined_call_operand.vmem [shape: f32[64,32], index: 8, kind: input, shape index: {}]
  %s9 = inlined_call_operand.vmem [shape: f32[1,32], index: 9, kind: input, shape index: {}]
  %s10 = inlined_call_operand.vmem [shape: f32[32,16], index: 10, kind: input, shape index: {}]
  %s11 = inlined_call_operand.vmem [shape: f32[1,16], index: 11, kind: input, shape index: {}]
  %s12 = inlined_call_operand.vmem [shape: f32[16,3], index: 12, kind: input, shape index: {}]
  %s13 = inlined_call_operand.vmem [shape: f32[1,3], index: 13, kind: input, shape index: {}]
  %s14 = inlined_call_operand.vmem [shape: f32[8,3], index: 14, kind: output, shape index: {}]
  %s15 = sld [smem:[#allocation0]]
  $region66: #{enhanced_usage_lstm_forward.1} parent=0
    _
  %s17 = ssub.s32 1, %s15
  %s18 = scalar_select 0, %s17, %s15
  // Predicated region
  $region2: #{enhanced_usage_lstm_forward.1} parent=0 // pred_check
    _
  $region3: #{enhanced_usage_lstm_forward.1} parent=0 // pred_check_branch
    %20 = sbr.rel (0) target = $region5
  $region4: #{enhanced_usage_lstm_forward.1} parent=0 // pred_region
    _
  $region5: #{enhanced_usage_lstm_forward.1} parent=0 // pred_fallthru
    _
  // Predicated region
  $region6: #{enhanced_usage_lstm_forward.1} parent=0 // pred_check
    _
  $region7: #{enhanced_usage_lstm_forward.1} parent=0 // pred_check_branch
    %22 = sbr.rel (0) target = $region9
  $region8: #{enhanced_usage_lstm_forward.1} parent=0 // pred_region
    _
  $region9: #{enhanced_usage_lstm_forward.1} parent=0 // pred_fallthru
    _
  // Predicated region
  $region10: #{enhanced_usage_lstm_forward.1} parent=0 // pred_check
    _
  $region11: #{enhanced_usage_lstm_forward.1} parent=0 // pred_check_branch
    %24 = sbr.rel (0) target = $region13
  $region12: #{enhanced_usage_lstm_forward.1} parent=0 // pred_region
    _
  $region13: #{enhanced_usage_lstm_forward.1} parent=0 // pred_fallthru
    _
  // Predicated region
  $region14: #{enhanced_usage_lstm_forward.1} parent=0 // pred_check
    _
  $region15: #{enhanced_usage_lstm_forward.1} parent=0 // pred_check_branch
    %26 = sbr.rel (0) target = $region17
  $region16: #{enhanced_usage_lstm_forward.1} parent=0 // pred_region
    _
  $region17: #{enhanced_usage_lstm_forward.1} parent=0 // pred_fallthru
    _
  // Predicated region
  $region18: #{enhanced_usage_lstm_forward.1} parent=0 // pred_check
    _
  $region19: #{enhanced_usage_lstm_forward.1} parent=0 // pred_check_branch
    %28 = sbr.rel (0) target = $region21
  $region20: #{enhanced_usage_lstm_forward.1} parent=0 // pred_region
    _
  $region21: #{enhanced_usage_lstm_forward.1} parent=0 // pred_fallthru
    _
  // Predicated region
  $region22: #{enhanced_usage_lstm_forward.1} parent=0 // pred_check
    _
  $region23: #{enhanced_usage_lstm_forward.1} parent=0 // pred_check_branch
    %30 = sbr.rel (0) target = $region25
  $region24: #{enhanced_usage_lstm_forward.1} parent=0 // pred_region
    _
  $region25: #{enhanced_usage_lstm_forward.1} parent=0 // pred_fallthru
    _
  // Predicated region
  $region26: #{enhanced_usage_lstm_forward.1} parent=0 // pred_check
    _
  $region27: #{enhanced_usage_lstm_forward.1} parent=0 // pred_check_branch
    %32 = sbr.rel (0) target = $region29
  $region28: #{enhanced_usage_lstm_forward.1} parent=0 // pred_region
    _
  $region29: #{enhanced_usage_lstm_forward.1} parent=0 // pred_fallthru
    _
  // Predicated region
  $region30: #{enhanced_usage_lstm_forward.1} parent=0 // pred_check
    _
  $region31: #{enhanced_usage_lstm_forward.1} parent=0 // pred_check_branch
    %34 = sbr.rel (0) target = $region33
  $region32: #{enhanced_usage_lstm_forward.1} parent=0 // pred_region
    _
  $region33: #{enhanced_usage_lstm_forward.1} parent=0 // pred_fallthru
    _
  // Predicated region
  $region34: #{enhanced_usage_lstm_forward.1} parent=0 // pred_check
    _
  $region35: #{enhanced_usage_lstm_forward.1} parent=0 // pred_check_branch
    %36 = sbr.rel (0) target = $region37
  $region36: #{enhanced_usage_lstm_forward.1} parent=0 // pred_region
    _
  $region37: #{enhanced_usage_lstm_forward.1} parent=0 // pred_fallthru
    _
  // Predicated region
  $region38: #{enhanced_usage_lstm_forward.1} parent=0 // pred_check
    _
  $region39: #{enhanced_usage_lstm_forward.1} parent=0 // pred_check_branch
    %38 = sbr.rel (0) target = $region41
  $region40: #{enhanced_usage_lstm_forward.1} parent=0 // pred_region
    _
  $region41: #{enhanced_usage_lstm_forward.1} parent=0 // pred_fallthru
    _
  // Predicated region
  $region42: #{enhanced_usage_lstm_forward.1} parent=0 // pred_check
    _
  $region43: #{enhanced_usage_lstm_forward.1} parent=0 // pred_check_branch
    %40 = sbr.rel (0) target = $region45
  $region44: #{enhanced_usage_lstm_forward.1} parent=0 // pred_region
    _
  $region45: #{enhanced_usage_lstm_forward.1} parent=0 // pred_fallthru
    _
  // Predicated region
  $region46: #{enhanced_usage_lstm_forward.1} parent=0 // pred_check
    _
  $region47: #{enhanced_usage_lstm_forward.1} parent=0 // pred_check_branch
    %42 = sbr.rel (0) target = $region49
  $region48: #{enhanced_usage_lstm_forward.1} parent=0 // pred_region
    _
  $region49: #{enhanced_usage_lstm_forward.1} parent=0 // pred_fallthru
    _
  // Predicated region
  $region50: #{enhanced_usage_lstm_forward.1} parent=0 // pred_check
    _
  $region51: #{enhanced_usage_lstm_forward.1} parent=0 // pred_check_branch
    %44 = sbr.rel (0) target = $region53
  $region52: #{enhanced_usage_lstm_forward.1} parent=0 // pred_region
    _
  $region53: #{enhanced_usage_lstm_forward.1} parent=0 // pred_fallthru
    _
  // Predicated region
  $region54: #{enhanced_usage_lstm_forward.1} parent=0 // pred_check
    _
  $region55: #{enhanced_usage_lstm_forward.1} parent=0 // pred_check_branch
    %46 = sbr.rel (0) target = $region57
  $region56: #{enhanced_usage_lstm_forward.1} parent=0 // pred_region
    _
  $region57: #{enhanced_usage_lstm_forward.1} parent=0 // pred_fallthru
    _
  %v47 = vld [vmem:[%s0] sm:$0xff]
  %v48 = vld [vmem:[%s0 + $0x8] sm:$0xff]
  %v49 = vld [vmem:[%s0 + $0x10] sm:$0xff]
  %v50 = vld [vmem:[%s0 + $0x18] sm:$0xff]
  %v51 = vld [vmem:[%s0 + $0x20] sm:$0xff]
  %v52 = vld [vmem:[%s0 + $0x28] sm:$0xff]
  %v53 = vld [vmem:[%s0 + $0x30] sm:$0xff]
  %v54 = vld [vmem:[%s0 + $0x38] sm:$0xff]
  %v55 = vld [vmem:[%s3] sm:$0xff]
  %v56 = vld [vmem:[%s3 + $0x8] sm:$0xff]
  %v57 = vld [vmem:[%s3 + $0x10] sm:$0xff]
  %v58 = vld [vmem:[%s3 + $0x18] sm:$0xff]
  %v59 = vld [vmem:[%s3 + $0x20] sm:$0xff]
  %v60 = vld [vmem:[%s3 + $0x28] sm:$0xff]
  %v61 = vld [vmem:[%s3 + $0x30] sm:$0xff]
  %v62 = vld [vmem:[%s3 + $0x38] sm:$0xff]
  %v63 = vld [vmem:[%s3 + $0x40] sm:$0xff]
  %v64 = vld [vmem:[%s3 + $0x48] sm:$0xff]
  %v65 = vld [vmem:[%s3 + $0x50] sm:$0xff]
  %v66 = vld [vmem:[%s3 + $0x58] sm:$0xff]
  %v67 = vld [vmem:[%s3 + $0x60] sm:$0xff]
  %v68 = vld [vmem:[%s3 + $0x68] sm:$0xff]
  %v69 = vld [vmem:[%s3 + $0x70] sm:$0xff]
  %v70 = vld [vmem:[%s3 + $0x78] sm:$0xff]
  %v71 = vld [vmem:[%s2] sm:$0xff]
  %v72 = vld [vmem:[%s2 + $0x8] sm:$0xff]
  %v73 = vld [vmem:[%s2 + $0x10] sm:$0xff]
  %v74 = vld [vmem:[%s2 + $0x18] sm:$0xff]
  %v75 = vld [vmem:[%s4] sm:$0x3]
  %v77 = vperm.slane %v75, 0
  %v78 = vperm.slane %v75, 1
  %vm81 = vcmask 130048
  %v83 = vsel %vm81, %v47, 0
  %v86 = vsel %vm81, %v48, 0
  %v89 = vsel %vm81, %v49, 0
  %v92 = vsel %vm81, %v50, 0
  %v95 = vsel %vm81, %v51, 0
  %v98 = vsel %vm81, %v52, 0
  %v101 = vsel %vm81, %v53, 0
  %v104 = vsel %vm81, %v54, 0
  %106 = vmatpush.msra.mxu0 0.0
  %107 = vmatpush.msra.mxu0 0.0
  %108 = vmatpush.msra.mxu0 0.0
  %109 = vmatpush.msra.mxu0 0.0
  %110 = vmatpush.msra.mxu0 0.0
  %111 = vmatpush.msra.mxu0 0.0
  %112 = vmatpush.msra.mxu0 0.0
  %113 = vmatpush.msra.mxu0 0.0
  %114 = vmatpush.msra.mxu0 0.0
  %115 = vmatpush.msra.mxu0 0.0
  %116 = vmatpush.msra.mxu0 0.0
  %117 = vmatpush.msra.mxu0 0.0
  %118 = vmatpush.msra.mxu0 0.0
  %119 = vmatpush.msra.mxu0 0.0
  %v120 = vand.u32 %v73, 4294901760
  %121 = vmatpush.msra.mxu0 %v120
  %v122 = vand.u32 %v71, 4294901760
  %123 = vmatpush.msra.mxu0 %v122
  %v124 = vand.u32 %v83, 4294901760
  %v125 = vsub.f32 %v83, %v124
  %v126 = vand.u32 %v125, 4294901760
  %v127 = vsub.f32 %v125, %v126
  %v128 = vand.u32 %v127, 4294901760
  %129 = vmatmul.f32.gmra.mxu0 %v128
  %v130 = vpop.f32.mrf.mxu0
  %v131 = vadd.f32 %v77, %v130
  %v132 = vand.u32 %v86, 4294901760
  %v133 = vsub.f32 %v86, %v132
  %v134 = vand.u32 %v133, 4294901760
  %v135 = vsub.f32 %v133, %v134
  %v136 = vand.u32 %v135, 4294901760
  %137 = vmatmul.f32.gmra.mxu0 %v136
  %v138 = vpop.f32.mrf.mxu0
  %v139 = vadd.f32 %v77, %v138
  %v140 = vand.u32 %v89, 4294901760
  %v141 = vsub.f32 %v89, %v140
  %v142 = vand.u32 %v141, 4294901760
  %v143 = vsub.f32 %v141, %v142
  %v144 = vand.u32 %v143, 4294901760
  %145 = vmatmul.f32.gmra.mxu0 %v144
  %v146 = vpop.f32.mrf.mxu0
  %v147 = vadd.f32 %v77, %v146
  %v148 = vand.u32 %v92, 4294901760
  %v149 = vsub.f32 %v92, %v148
  %v150 = vand.u32 %v149, 4294901760
  %v151 = vsub.f32 %v149, %v150
  %v152 = vand.u32 %v151, 4294901760
  %153 = vmatmul.f32.gmra.mxu0 %v152
  %v154 = vpop.f32.mrf.mxu0
  %v155 = vadd.f32 %v77, %v154
  %v156 = vand.u32 %v95, 4294901760
  %v157 = vsub.f32 %v95, %v156
  %v158 = vand.u32 %v157, 4294901760
  %v159 = vsub.f32 %v157, %v158
  %v160 = vand.u32 %v159, 4294901760
  %161 = vmatmul.f32.gmra.mxu0 %v160
  %v162 = vpop.f32.mrf.mxu0
  %v163 = vadd.f32 %v77, %v162
  %v164 = vand.u32 %v98, 4294901760
  %v165 = vsub.f32 %v98, %v164
  %v166 = vand.u32 %v165, 4294901760
  %v167 = vsub.f32 %v165, %v166
  %v168 = vand.u32 %v167, 4294901760
  %169 = vmatmul.f32.gmra.mxu0 %v168
  %v170 = vpop.f32.mrf.mxu0
  %v171 = vadd.f32 %v77, %v170
  %v172 = vand.u32 %v101, 4294901760
  %v173 = vsub.f32 %v101, %v172
  %v174 = vand.u32 %v173, 4294901760
  %v175 = vsub.f32 %v173, %v174
  %v176 = vand.u32 %v175, 4294901760
  %177 = vmatmul.f32.gmra.mxu0 %v176
  %v178 = vpop.f32.mrf.mxu0
  %v179 = vadd.f32 %v77, %v178
  %v180 = vand.u32 %v104, 4294901760
  %v181 = vsub.f32 %v104, %v180
  %v182 = vand.u32 %v181, 4294901760
  %v183 = vsub.f32 %v181, %v182
  %v184 = vand.u32 %v183, 4294901760
  %185 = vmatmul.f32.gmra.mxu0 %v184
  %v186 = vpop.f32.mrf.mxu0
  %v187 = vadd.f32 %v77, %v186
  %188 = vdwg.mxu0
  %189 = vmatpush.msra.mxu0 0.0
  %190 = vmatpush.msra.mxu0 0.0
  %191 = vmatpush.msra.mxu0 0.0
  %192 = vmatpush.msra.mxu0 0.0
  %193 = vmatpush.msra.mxu0 0.0
  %194 = vmatpush.msra.mxu0 0.0
  %195 = vmatpush.msra.mxu0 0.0
  %196 = vmatpush.msra.mxu0 0.0
  %197 = vmatpush.msra.mxu0 0.0
  %198 = vmatpush.msra.mxu0 0.0
  %199 = vmatpush.msra.mxu0 0.0
  %200 = vmatpush.msra.mxu0 0.0
  %201 = vmatpush.msra.mxu0 0.0
  %202 = vmatpush.msra.mxu0 0.0
  %v203 = vand.u32 %v73, 4294901760
  %v204 = vsub.f32 %v73, %v203
  %v205 = vand.u32 %v204, 4294901760
  %v206 = vsub.f32 %v204, %v205
  %v207 = vand.u32 %v206, 4294901760
  %208 = vmatpush.msra.mxu0 %v207
  %v209 = vand.u32 %v71, 4294901760
  %v210 = vsub.f32 %v71, %v209
  %v211 = vand.u32 %v210, 4294901760
  %v212 = vsub.f32 %v210, %v211
  %v213 = vand.u32 %v212, 4294901760
  %214 = vmatpush.msra.mxu0 %v213
  %v215 = vand.u32 %v83, 4294901760
  %216 = vmatmul.f32.gmra.mxu0 %v215
  %v217 = vpop.f32.mrf.mxu0
  %v218 = vadd.f32 %v131, %v217
  %v219 = vand.u32 %v86, 4294901760
  %220 = vmatmul.f32.gmra.mxu0 %v219
  %v221 = vpop.f32.mrf.mxu0
  %v222 = vadd.f32 %v139, %v221
  %v223 = vand.u32 %v89, 4294901760
  %224 = vmatmul.f32.gmra.mxu0 %v223
  %v225 = vpop.f32.mrf.mxu0
  %v226 = vadd.f32 %v147, %v225
  %v227 = vand.u32 %v92, 4294901760
  %228 = vmatmul.f32.gmra.mxu0 %v227
  %v229 = vpop.f32.mrf.mxu0
  %v230 = vadd.f32 %v155, %v229
  %v231 = vand.u32 %v95, 4294901760
  %232 = vmatmul.f32.gmra.mxu0 %v231
  %v233 = vpop.f32.mrf.mxu0
  %v234 = vadd.f32 %v163, %v233
  %v235 = vand.u32 %v98, 4294901760
  %236 = vmatmul.f32.gmra.mxu0 %v235
  %v237 = vpop.f32.mrf.mxu0
  %v238 = vadd.f32 %v171, %v237
  %v239 = vand.u32 %v101, 4294901760
  %240 = vmatmul.f32.gmra.mxu0 %v239
  %v241 = vpop.f32.mrf.mxu0
  %v242 = vadd.f32 %v179, %v241
  %v243 = vand.u32 %v104, 4294901760
  %244 = vmatmul.f32.gmra.mxu0 %v243
  %v245 = vpop.f32.mrf.mxu0
  %v246 = vadd.f32 %v187, %v245
  %247 = vdwg.mxu0
  %248 = vmatpush.msra.mxu0 0.0
  %249 = vmatpush.msra.mxu0 0.0
  %250 = vmatpush.msra.mxu0 0.0
  %251 = vmatpush.msra.mxu0 0.0
  %252 = vmatpush.msra.mxu0 0.0
  %253 = vmatpush.msra.mxu0 0.0
  %254 = vmatpush.msra.mxu0 0.0
  %255 = vmatpush.msra.mxu0 0.0
  %256 = vmatpush.msra.mxu0 0.0
  %257 = vmatpush.msra.mxu0 0.0
  %258 = vmatpush.msra.mxu0 0.0
  %259 = vmatpush.msra.mxu0 0.0
  %260 = vmatpush.msra.mxu0 0.0
  %261 = vmatpush.msra.mxu0 0.0
  %v262 = vand.u32 %v73, 4294901760
  %v263 = vsub.f32 %v73, %v262
  %264 = vmatpush.msra.mxu0 %v263
  %v265 = vand.u32 %v71, 4294901760
  %v266 = vsub.f32 %v71, %v265
  %267 = vmatpush.msra.mxu0 %v266
  %v268 = vand.u32 %v83, 4294901760
  %v269 = vsub.f32 %v83, %v268
  %270 = vmatmul.f32.gmra.mxu0 %v269
  %v271 = vpop.f32.mrf.mxu0
  %v272 = vadd.f32 %v218, %v271
  %v273 = vand.u32 %v86, 4294901760
  %v274 = vsub.f32 %v86, %v273
  %275 = vmatmul.f32.gmra.mxu0 %v274
  %v276 = vpop.f32.mrf.mxu0
  %v277 = vadd.f32 %v222, %v276
  %v278 = vand.u32 %v89, 4294901760
  %v279 = vsub.f32 %v89, %v278
  %280 = vmatmul.f32.gmra.mxu0 %v279
  %v281 = vpop.f32.mrf.mxu0
  %v282 = vadd.f32 %v226, %v281
  %v283 = vand.u32 %v92, 4294901760
  %v284 = vsub.f32 %v92, %v283
  %285 = vmatmul.f32.gmra.mxu0 %v284
  %v286 = vpop.f32.mrf.mxu0
  %v287 = vadd.f32 %v230, %v286
  %v288 = vand.u32 %v95, 4294901760
  %v289 = vsub.f32 %v95, %v288
  %290 = vmatmul.f32.gmra.mxu0 %v289
  %v291 = vpop.f32.mrf.mxu0
  %v292 = vadd.f32 %v234, %v291
  %v293 = vand.u32 %v98, 4294901760
  %v294 = vsub.f32 %v98, %v293
  %295 = vmatmul.f32.gmra.mxu0 %v294
  %v296 = vpop.f32.mrf.mxu0
  %v297 = vadd.f32 %v238, %v296
  %v298 = vand.u32 %v101, 4294901760
  %v299 = vsub.f32 %v101, %v298
  %300 = vmatmul.f32.gmra.mxu0 %v299
  %v301 = vpop.f32.mrf.mxu0
  %v302 = vadd.f32 %v242, %v301
  %v303 = vand.u32 %v104, 4294901760
  %v304 = vsub.f32 %v104, %v303
  %305 = vmatmul.f32.gmra.mxu0 %v304
  %v306 = vpop.f32.mrf.mxu0
  %v307 = vadd.f32 %v246, %v306
  %308 = vdwg.mxu0
  %309 = vmatpush.msra.mxu0 0.0
  %310 = vmatpush.msra.mxu0 0.0
  %311 = vmatpush.msra.mxu0 0.0
  %312 = vmatpush.msra.mxu0 0.0
  %313 = vmatpush.msra.mxu0 0.0
  %314 = vmatpush.msra.mxu0 0.0
  %315 = vmatpush.msra.mxu0 0.0
  %316 = vmatpush.msra.mxu0 0.0
  %317 = vmatpush.msra.mxu0 0.0
  %318 = vmatpush.msra.mxu0 0.0
  %319 = vmatpush.msra.mxu0 0.0
  %320 = vmatpush.msra.mxu0 0.0
  %321 = vmatpush.msra.mxu0 0.0
  %322 = vmatpush.msra.mxu0 0.0
  %v323 = vand.u32 %v73, 4294901760
  %324 = vmatpush.msra.mxu0 %v323
  %v325 = vand.u32 %v71, 4294901760
  %326 = vmatpush.msra.mxu0 %v325
  %v327 = vand.u32 %v83, 4294901760
  %v328 = vsub.f32 %v83, %v327
  %v329 = vand.u32 %v328, 4294901760
  %330 = vmatmul.f32.gmra.mxu0 %v329
  %v331 = vpop.f32.mrf.mxu0
  %v332 = vadd.f32 %v272, %v331
  %v333 = vand.u32 %v86, 4294901760
  %v334 = vsub.f32 %v86, %v333
  %v335 = vand.u32 %v334, 4294901760
  %336 = vmatmul.f32.gmra.mxu0 %v335
  %v337 = vpop.f32.mrf.mxu0
  %v338 = vadd.f32 %v277, %v337
  %v339 = vand.u32 %v89, 4294901760
  %v340 = vsub.f32 %v89, %v339
  %v341 = vand.u32 %v340, 4294901760
  %342 = vmatmul.f32.gmra.mxu0 %v341
  %v343 = vpop.f32.mrf.mxu0
  %v344 = vadd.f32 %v282, %v343
  %v345 = vand.u32 %v92, 4294901760
  %v346 = vsub.f32 %v92, %v345
  %v347 = vand.u32 %v346, 4294901760
  %348 = vmatmul.f32.gmra.mxu0 %v347
  %v349 = vpop.f32.mrf.mxu0
  %v350 = vadd.f32 %v287, %v349
  %v351 = vand.u32 %v95, 4294901760
  %v352 = vsub.f32 %v95, %v351
  %v353 = vand.u32 %v352, 4294901760
  %354 = vmatmul.f32.gmra.mxu0 %v353
  %v355 = vpop.f32.mrf.mxu0
  %v356 = vadd.f32 %v292, %v355
  %v357 = vand.u32 %v98, 4294901760
  %v358 = vsub.f32 %v98, %v357
  %v359 = vand.u32 %v358, 4294901760
  %360 = vmatmul.f32.gmra.mxu0 %v359
  %v361 = vpop.f32.mrf.mxu0
  %v362 = vadd.f32 %v297, %v361
  %v363 = vand.u32 %v101, 4294901760
  %v364 = vsub.f32 %v101, %v363
  %v365 = vand.u32 %v364, 4294901760
  %366 = vmatmul.f32.gmra.mxu0 %v365
  %v367 = vpop.f32.mrf.mxu0
  %v368 = vadd.f32 %v302, %v367
  %v369 = vand.u32 %v104, 4294901760
  %v370 = vsub.f32 %v104, %v369
  %v371 = vand.u32 %v370, 4294901760
  %372 = vmatmul.f32.gmra.mxu0 %v371
  %v373 = vpop.f32.mrf.mxu0
  %v374 = vadd.f32 %v307, %v373
  %375 = vdwg.mxu0
  %376 = vmatpush.msra.mxu0 0.0
  %377 = vmatpush.msra.mxu0 0.0
  %378 = vmatpush.msra.mxu0 0.0
  %379 = vmatpush.msra.mxu0 0.0
  %380 = vmatpush.msra.mxu0 0.0
  %381 = vmatpush.msra.mxu0 0.0
  %382 = vmatpush.msra.mxu0 0.0
  %383 = vmatpush.msra.mxu0 0.0
  %384 = vmatpush.msra.mxu0 0.0
  %385 = vmatpush.msra.mxu0 0.0
  %386 = vmatpush.msra.mxu0 0.0
  %387 = vmatpush.msra.mxu0 0.0
  %388 = vmatpush.msra.mxu0 0.0
  %389 = vmatpush.msra.mxu0 0.0
  %v390 = vand.u32 %v73, 4294901760
  %v391 = vsub.f32 %v73, %v390
  %v392 = vand.u32 %v391, 4294901760
  %393 = vmatpush.msra.mxu0 %v392
  %v394 = vand.u32 %v71, 4294901760
  %v395 = vsub.f32 %v71, %v394
  %v396 = vand.u32 %v395, 4294901760
  %397 = vmatpush.msra.mxu0 %v396
  %v398 = vand.u32 %v83, 4294901760
  %399 = vmatmul.f32.gmra.mxu0 %v398
  %v400 = vpop.f32.mrf.mxu0
  %v401 = vadd.f32 %v332, %v400
  %v402 = vand.u32 %v86, 4294901760
  %403 = vmatmul.f32.gmra.mxu0 %v402
  %v404 = vpop.f32.mrf.mxu0
  %v405 = vadd.f32 %v338, %v404
  %v406 = vand.u32 %v89, 4294901760
  %407 = vmatmul.f32.gmra.mxu0 %v406
  %v408 = vpop.f32.mrf.mxu0
  %v409 = vadd.f32 %v344, %v408
  %v410 = vand.u32 %v92, 4294901760
  %411 = vmatmul.f32.gmra.mxu0 %v410
  %v412 = vpop.f32.mrf.mxu0
  %v413 = vadd.f32 %v350, %v412
  %v414 = vand.u32 %v95, 4294901760
  %415 = vmatmul.f32.gmra.mxu0 %v414
  %v416 = vpop.f32.mrf.mxu0
  %v417 = vadd.f32 %v356, %v416
  %v418 = vand.u32 %v98, 4294901760
  %419 = vmatmul.f32.gmra.mxu0 %v418
  %v420 = vpop.f32.mrf.mxu0
  %v421 = vadd.f32 %v362, %v420
  %v422 = vand.u32 %v101, 4294901760
  %423 = vmatmul.f32.gmra.mxu0 %v422
  %v424 = vpop.f32.mrf.mxu0
  %v425 = vadd.f32 %v368, %v424
  %v426 = vand.u32 %v104, 4294901760
  %427 = vmatmul.f32.gmra.mxu0 %v426
  %v428 = vpop.f32.mrf.mxu0
  %v429 = vadd.f32 %v374, %v428
  %430 = vdwg.mxu0
  %431 = vmatpush.msra.mxu0 0.0
  %432 = vmatpush.msra.mxu0 0.0
  %433 = vmatpush.msra.mxu0 0.0
  %434 = vmatpush.msra.mxu0 0.0
  %435 = vmatpush.msra.mxu0 0.0
  %436 = vmatpush.msra.mxu0 0.0
  %437 = vmatpush.msra.mxu0 0.0
  %438 = vmatpush.msra.mxu0 0.0
  %439 = vmatpush.msra.mxu0 0.0
  %440 = vmatpush.msra.mxu0 0.0
  %441 = vmatpush.msra.mxu0 0.0
  %442 = vmatpush.msra.mxu0 0.0
  %443 = vmatpush.msra.mxu0 0.0
  %444 = vmatpush.msra.mxu0 0.0
  %v445 = vand.u32 %v73, 4294901760
  %446 = vmatpush.msra.mxu0 %v445
  %v447 = vand.u32 %v71, 4294901760
  %448 = vmatpush.msra.mxu0 %v447
  %v449 = vand.u32 %v83, 4294901760
  %450 = vmatmul.f32.gmra.mxu0 %v449
  %v451 = vpop.f32.mrf.mxu0
  %v452 = vadd.f32 %v401, %v451
  %v453 = vand.u32 %v86, 4294901760
  %454 = vmatmul.f32.gmra.mxu0 %v453
  %v455 = vpop.f32.mrf.mxu0
  %v456 = vadd.f32 %v405, %v455
  %v457 = vand.u32 %v89, 4294901760
  %458 = vmatmul.f32.gmra.mxu0 %v457
  %v459 = vpop.f32.mrf.mxu0
  %v460 = vadd.f32 %v409, %v459
  %v461 = vand.u32 %v92, 4294901760
  %462 = vmatmul.f32.gmra.mxu0 %v461
  %v463 = vpop.f32.mrf.mxu0
  %v464 = vadd.f32 %v413, %v463
  %v465 = vand.u32 %v95, 4294901760
  %466 = vmatmul.f32.gmra.mxu0 %v465
  %v467 = vpop.f32.mrf.mxu0
  %v468 = vadd.f32 %v417, %v467
  %v469 = vand.u32 %v98, 4294901760
  %470 = vmatmul.f32.gmra.mxu0 %v469
  %v471 = vpop.f32.mrf.mxu0
  %v472 = vadd.f32 %v421, %v471
  %v473 = vand.u32 %v101, 4294901760
  %474 = vmatmul.f32.gmra.mxu0 %v473
  %v475 = vpop.f32.mrf.mxu0
  %v476 = vadd.f32 %v425, %v475
  %v477 = vand.u32 %v104, 4294901760
  %478 = vmatmul.f32.gmra.mxu0 %v477
  %v479 = vpop.f32.mrf.mxu0
  %v480 = vadd.f32 %v429, %v479
  %481 = vdwg.mxu0
  %482 = vmatpush.msra.mxu0 0.0
  %483 = vmatpush.msra.mxu0 0.0
  %484 = vmatpush.msra.mxu0 0.0
  %485 = vmatpush.msra.mxu0 0.0
  %486 = vmatpush.msra.mxu0 0.0
  %487 = vmatpush.msra.mxu0 0.0
  %488 = vmatpush.msra.mxu0 0.0
  %489 = vmatpush.msra.mxu0 0.0
  %490 = vmatpush.msra.mxu0 0.0
  %491 = vmatpush.msra.mxu0 0.0
  %492 = vmatpush.msra.mxu0 0.0
  %493 = vmatpush.msra.mxu0 0.0
  %494 = vmatpush.msra.mxu0 0.0
  %495 = vmatpush.msra.mxu0 0.0
  %v496 = vand.u32 %v74, 4294901760
  %497 = vmatpush.msra.mxu0 %v496
  %v498 = vand.u32 %v72, 4294901760
  %499 = vmatpush.msra.mxu0 %v498
  %v500 = vand.u32 %v83, 4294901760
  %v501 = vsub.f32 %v83, %v500
  %v502 = vand.u32 %v501, 4294901760
  %v503 = vsub.f32 %v501, %v502
  %v504 = vand.u32 %v503, 4294901760
  %505 = vmatmul.f32.gmra.mxu0 %v504
  %v506 = vpop.f32.mrf.mxu0
  %v507 = vadd.f32 %v78, %v506
  %v508 = vand.u32 %v86, 4294901760
  %v509 = vsub.f32 %v86, %v508
  %v510 = vand.u32 %v509, 4294901760
  %v511 = vsub.f32 %v509, %v510
  %v512 = vand.u32 %v511, 4294901760
  %513 = vmatmul.f32.gmra.mxu0 %v512
  %v514 = vpop.f32.mrf.mxu0
  %v515 = vadd.f32 %v78, %v514
  %v516 = vand.u32 %v89, 4294901760
  %v517 = vsub.f32 %v89, %v516
  %v518 = vand.u32 %v517, 4294901760
  %v519 = vsub.f32 %v517, %v518
  %v520 = vand.u32 %v519, 4294901760
  %521 = vmatmul.f32.gmra.mxu0 %v520
  %v522 = vpop.f32.mrf.mxu0
  %v523 = vadd.f32 %v78, %v522
  %v524 = vand.u32 %v92, 4294901760
  %v525 = vsub.f32 %v92, %v524
  %v526 = vand.u32 %v525, 4294901760
  %v527 = vsub.f32 %v525, %v526
  %v528 = vand.u32 %v527, 4294901760
  %529 = vmatmul.f32.gmra.mxu0 %v528
  %v530 = vpop.f32.mrf.mxu0
  %v531 = vadd.f32 %v78, %v530
  %v532 = vand.u32 %v95, 4294901760
  %v533 = vsub.f32 %v95, %v532
  %v534 = vand.u32 %v533, 4294901760
  %v535 = vsub.f32 %v533, %v534
  %v536 = vand.u32 %v535, 4294901760
  %537 = vmatmul.f32.gmra.mxu0 %v536
  %v538 = vpop.f32.mrf.mxu0
  %v539 = vadd.f32 %v78, %v538
  %v540 = vand.u32 %v98, 4294901760
  %v541 = vsub.f32 %v98, %v540
  %v542 = vand.u32 %v541, 4294901760
  %v543 = vsub.f32 %v541, %v542
  %v544 = vand.u32 %v543, 4294901760
  %545 = vmatmul.f32.gmra.mxu0 %v544
  %v546 = vpop.f32.mrf.mxu0
  %v547 = vadd.f32 %v78, %v546
  %v548 = vand.u32 %v101, 4294901760
  %v549 = vsub.f32 %v101, %v548
  %v550 = vand.u32 %v549, 4294901760
  %v551 = vsub.f32 %v549, %v550
  %v552 = vand.u32 %v551, 4294901760
  %553 = vmatmul.f32.gmra.mxu0 %v552
  %v554 = vpop.f32.mrf.mxu0
  %v555 = vadd.f32 %v78, %v554
  %v556 = vand.u32 %v104, 4294901760
  %v557 = vsub.f32 %v104, %v556
  %v558 = vand.u32 %v557, 4294901760
  %v559 = vsub.f32 %v557, %v558
  %v560 = vand.u32 %v559, 4294901760
  %561 = vmatmul.f32.gmra.mxu0 %v560
  %v562 = vpop.f32.mrf.mxu0
  %v563 = vadd.f32 %v78, %v562
  %564 = vdwg.mxu0
  %565 = vmatpush.msra.mxu0 0.0
  %566 = vmatpush.msra.mxu0 0.0
  %567 = vmatpush.msra.mxu0 0.0
  %568 = vmatpush.msra.mxu0 0.0
  %569 = vmatpush.msra.mxu0 0.0
  %570 = vmatpush.msra.mxu0 0.0
  %571 = vmatpush.msra.mxu0 0.0
  %572 = vmatpush.msra.mxu0 0.0
  %573 = vmatpush.msra.mxu0 0.0
  %574 = vmatpush.msra.mxu0 0.0
  %575 = vmatpush.msra.mxu0 0.0
  %576 = vmatpush.msra.mxu0 0.0
  %577 = vmatpush.msra.mxu0 0.0
  %578 = vmatpush.msra.mxu0 0.0
  %v579 = vand.u32 %v74, 4294901760
  %v580 = vsub.f32 %v74, %v579
  %v581 = vand.u32 %v580, 4294901760
  %v582 = vsub.f32 %v580, %v581
  %v583 = vand.u32 %v582, 4294901760
  %584 = vmatpush.msra.mxu0 %v583
  %v585 = vand.u32 %v72, 4294901760
  %v586 = vsub.f32 %v72, %v585
  %v587 = vand.u32 %v586, 4294901760
  %v588 = vsub.f32 %v586, %v587
  %v589 = vand.u32 %v588, 4294901760
  %590 = vmatpush.msra.mxu0 %v589
  %v591 = vand.u32 %v83, 4294901760
  %592 = vmatmul.f32.gmra.mxu0 %v591
  %v593 = vpop.f32.mrf.mxu0
  %v594 = vadd.f32 %v507, %v593
  %v595 = vand.u32 %v86, 4294901760
  %596 = vmatmul.f32.gmra.mxu0 %v595
  %v597 = vpop.f32.mrf.mxu0
  %v598 = vadd.f32 %v515, %v597
  %v599 = vand.u32 %v89, 4294901760
  %600 = vmatmul.f32.gmra.mxu0 %v599
  %v601 = vpop.f32.mrf.mxu0
  %v602 = vadd.f32 %v523, %v601
  %v603 = vand.u32 %v92, 4294901760
  %604 = vmatmul.f32.gmra.mxu0 %v603
  %v605 = vpop.f32.mrf.mxu0
  %v606 = vadd.f32 %v531, %v605
  %v607 = vand.u32 %v95, 4294901760
  %608 = vmatmul.f32.gmra.mxu0 %v607
  %v609 = vpop.f32.mrf.mxu0
  %v610 = vadd.f32 %v539, %v609
  %v611 = vand.u32 %v98, 4294901760
  %612 = vmatmul.f32.gmra.mxu0 %v611
  %v613 = vpop.f32.mrf.mxu0
  %v614 = vadd.f32 %v547, %v613
  %v615 = vand.u32 %v101, 4294901760
  %616 = vmatmul.f32.gmra.mxu0 %v615
  %v617 = vpop.f32.mrf.mxu0
  %v618 = vadd.f32 %v555, %v617
  %v619 = vand.u32 %v104, 4294901760
  %620 = vmatmul.f32.gmra.mxu0 %v619
  %v621 = vpop.f32.mrf.mxu0
  %v622 = vadd.f32 %v563, %v621
  %623 = vdwg.mxu0
  %624 = vmatpush.msra.mxu0 0.0
  %625 = vmatpush.msra.mxu0 0.0
  %626 = vmatpush.msra.mxu0 0.0
  %627 = vmatpush.msra.mxu0 0.0
  %628 = vmatpush.msra.mxu0 0.0
  %629 = vmatpush.msra.mxu0 0.0
  %630 = vmatpush.msra.mxu0 0.0
  %631 = vmatpush.msra.mxu0 0.0
  %632 = vmatpush.msra.mxu0 0.0
  %633 = vmatpush.msra.mxu0 0.0
  %634 = vmatpush.msra.mxu0 0.0
  %635 = vmatpush.msra.mxu0 0.0
  %636 = vmatpush.msra.mxu0 0.0
  %637 = vmatpush.msra.mxu0 0.0
  %v638 = vand.u32 %v74, 4294901760
  %v639 = vsub.f32 %v74, %v638
  %640 = vmatpush.msra.mxu0 %v639
  %v641 = vand.u32 %v72, 4294901760
  %v642 = vsub.f32 %v72, %v641
  %643 = vmatpush.msra.mxu0 %v642
  %v644 = vand.u32 %v83, 4294901760
  %v645 = vsub.f32 %v83, %v644
  %646 = vmatmul.f32.gmra.mxu0 %v645
  %v647 = vpop.f32.mrf.mxu0
  %v648 = vadd.f32 %v594, %v647
  %v649 = vand.u32 %v86, 4294901760
  %v650 = vsub.f32 %v86, %v649
  %651 = vmatmul.f32.gmra.mxu0 %v650
  %v652 = vpop.f32.mrf.mxu0
  %v653 = vadd.f32 %v598, %v652
  %v654 = vand.u32 %v89, 4294901760
  %v655 = vsub.f32 %v89, %v654
  %656 = vmatmul.f32.gmra.mxu0 %v655
  %v657 = vpop.f32.mrf.mxu0
  %v658 = vadd.f32 %v602, %v657
  %v659 = vand.u32 %v92, 4294901760
  %v660 = vsub.f32 %v92, %v659
  %661 = vmatmul.f32.gmra.mxu0 %v660
  %v662 = vpop.f32.mrf.mxu0
  %v663 = vadd.f32 %v606, %v662
  %v664 = vand.u32 %v95, 4294901760
  %v665 = vsub.f32 %v95, %v664
  %666 = vmatmul.f32.gmra.mxu0 %v665
  %v667 = vpop.f32.mrf.mxu0
  %v668 = vadd.f32 %v610, %v667
  %v669 = vand.u32 %v98, 4294901760
  %v670 = vsub.f32 %v98, %v669
  %671 = vmatmul.f32.gmra.mxu0 %v670
  %v672 = vpop.f32.mrf.mxu0
  %v673 = vadd.f32 %v614, %v672
  %v674 = vand.u32 %v101, 4294901760
  %v675 = vsub.f32 %v101, %v674
  %676 = vmatmul.f32.gmra.mxu0 %v675
  %v677 = vpop.f32.mrf.mxu0
  %v678 = vadd.f32 %v618, %v677
  %v679 = vand.u32 %v104, 4294901760
  %v680 = vsub.f32 %v104, %v679
  %681 = vmatmul.f32.gmra.mxu0 %v680
  %v682 = vpop.f32.mrf.mxu0
  %v683 = vadd.f32 %v622, %v682
  %684 = vdwg.mxu0
  %685 = vmatpush.msra.mxu0 0.0
  %686 = vmatpush.msra.mxu0 0.0
  %687 = vmatpush.msra.mxu0 0.0
  %688 = vmatpush.msra.mxu0 0.0
  %689 = vmatpush.msra.mxu0 0.0
  %690 = vmatpush.msra.mxu0 0.0
  %691 = vmatpush.msra.mxu0 0.0
  %692 = vmatpush.msra.mxu0 0.0
  %693 = vmatpush.msra.mxu0 0.0
  %694 = vmatpush.msra.mxu0 0.0
  %695 = vmatpush.msra.mxu0 0.0
  %696 = vmatpush.msra.mxu0 0.0
  %697 = vmatpush.msra.mxu0 0.0
  %698 = vmatpush.msra.mxu0 0.0
  %v699 = vand.u32 %v74, 4294901760
  %700 = vmatpush.msra.mxu0 %v699
  %v701 = vand.u32 %v72, 4294901760
  %702 = vmatpush.msra.mxu0 %v701
  %v703 = vand.u32 %v83, 4294901760
  %v704 = vsub.f32 %v83, %v703
  %v705 = vand.u32 %v704, 4294901760
  %706 = vmatmul.f32.gmra.mxu0 %v705
  %v707 = vpop.f32.mrf.mxu0
  %v708 = vadd.f32 %v648, %v707
  %v709 = vand.u32 %v86, 4294901760
  %v710 = vsub.f32 %v86, %v709
  %v711 = vand.u32 %v710, 4294901760
  %712 = vmatmul.f32.gmra.mxu0 %v711
  %v713 = vpop.f32.mrf.mxu0
  %v714 = vadd.f32 %v653, %v713
  %v715 = vand.u32 %v89, 4294901760
  %v716 = vsub.f32 %v89, %v715
  %v717 = vand.u32 %v716, 4294901760
  %718 = vmatmul.f32.gmra.mxu0 %v717
  %v719 = vpop.f32.mrf.mxu0
  %v720 = vadd.f32 %v658, %v719
  %v721 = vand.u32 %v92, 4294901760
  %v722 = vsub.f32 %v92, %v721
  %v723 = vand.u32 %v722, 4294901760
  %724 = vmatmul.f32.gmra.mxu0 %v723
  %v725 = vpop.f32.mrf.mxu0
  %v726 = vadd.f32 %v663, %v725
  %v727 = vand.u32 %v95, 4294901760
  %v728 = vsub.f32 %v95, %v727
  %v729 = vand.u32 %v728, 4294901760
  %730 = vmatmul.f32.gmra.mxu0 %v729
  %v731 = vpop.f32.mrf.mxu0
  %v732 = vadd.f32 %v668, %v731
  %v733 = vand.u32 %v98, 4294901760
  %v734 = vsub.f32 %v98, %v733
  %v735 = vand.u32 %v734, 4294901760
  %736 = vmatmul.f32.gmra.mxu0 %v735
  %v737 = vpop.f32.mrf.mxu0
  %v738 = vadd.f32 %v673, %v737
  %v739 = vand.u32 %v101, 4294901760
  %v740 = vsub.f32 %v101, %v739
  %v741 = vand.u32 %v740, 4294901760
  %742 = vmatmul.f32.gmra.mxu0 %v741
  %v743 = vpop.f32.mrf.mxu0
  %v744 = vadd.f32 %v678, %v743
  %v745 = vand.u32 %v104, 4294901760
  %v746 = vsub.f32 %v104, %v745
  %v747 = vand.u32 %v746, 4294901760
  %748 = vmatmul.f32.gmra.mxu0 %v747
  %v749 = vpop.f32.mrf.mxu0
  %v750 = vadd.f32 %v683, %v749
  %751 = vdwg.mxu0
  %752 = vmatpush.msra.mxu0 0.0
  %753 = vmatpush.msra.mxu0 0.0
  %754 = vmatpush.msra.mxu0 0.0
  %755 = vmatpush.msra.mxu0 0.0
  %756 = vmatpush.msra.mxu0 0.0
  %757 = vmatpush.msra.mxu0 0.0
  %758 = vmatpush.msra.mxu0 0.0
  %759 = vmatpush.msra.mxu0 0.0
  %760 = vmatpush.msra.mxu0 0.0
  %761 = vmatpush.msra.mxu0 0.0
  %762 = vmatpush.msra.mxu0 0.0
  %763 = vmatpush.msra.mxu0 0.0
  %764 = vmatpush.msra.mxu0 0.0
  %765 = vmatpush.msra.mxu0 0.0
  %v766 = vand.u32 %v74, 4294901760
  %v767 = vsub.f32 %v74, %v766
  %v768 = vand.u32 %v767, 4294901760
  %769 = vmatpush.msra.mxu0 %v768
  %v770 = vand.u32 %v72, 4294901760
  %v771 = vsub.f32 %v72, %v770
  %v772 = vand.u32 %v771, 4294901760
  %773 = vmatpush.msra.mxu0 %v772
  %v774 = vand.u32 %v83, 4294901760
  %775 = vmatmul.f32.gmra.mxu0 %v774
  %v776 = vpop.f32.mrf.mxu0
  %v777 = vadd.f32 %v708, %v776
  %v778 = vand.u32 %v86, 4294901760
  %779 = vmatmul.f32.gmra.mxu0 %v778
  %v780 = vpop.f32.mrf.mxu0
  %v781 = vadd.f32 %v714, %v780
  %v782 = vand.u32 %v89, 4294901760
  %783 = vmatmul.f32.gmra.mxu0 %v782
  %v784 = vpop.f32.mrf.mxu0
  %v785 = vadd.f32 %v720, %v784
  %v786 = vand.u32 %v92, 4294901760
  %787 = vmatmul.f32.gmra.mxu0 %v786
  %v788 = vpop.f32.mrf.mxu0
  %v789 = vadd.f32 %v726, %v788
  %v790 = vand.u32 %v95, 4294901760
  %791 = vmatmul.f32.gmra.mxu0 %v790
  %v792 = vpop.f32.mrf.mxu0
  %v793 = vadd.f32 %v732, %v792
  %v794 = vand.u32 %v98, 4294901760
  %795 = vmatmul.f32.gmra.mxu0 %v794
  %v796 = vpop.f32.mrf.mxu0
  %v797 = vadd.f32 %v738, %v796
  %v798 = vand.u32 %v101, 4294901760
  %799 = vmatmul.f32.gmra.mxu0 %v798
  %v800 = vpop.f32.mrf.mxu0
  %v801 = vadd.f32 %v744, %v800
  %v802 = vand.u32 %v104, 4294901760
  %803 = vmatmul.f32.gmra.mxu0 %v802
  %v804 = vpop.f32.mrf.mxu0
  %v805 = vadd.f32 %v750, %v804
  %806 = vdwg.mxu0
  %807 = vmatpush.msra.mxu0 0.0
  %808 = vmatpush.msra.mxu0 0.0
  %809 = vmatpush.msra.mxu0 0.0
  %810 = vmatpush.msra.mxu0 0.0
  %811 = vmatpush.msra.mxu0 0.0
  %812 = vmatpush.msra.mxu0 0.0
  %813 = vmatpush.msra.mxu0 0.0
  %814 = vmatpush.msra.mxu0 0.0
  %815 = vmatpush.msra.mxu0 0.0
  %816 = vmatpush.msra.mxu0 0.0
  %817 = vmatpush.msra.mxu0 0.0
  %818 = vmatpush.msra.mxu0 0.0
  %819 = vmatpush.msra.mxu0 0.0
  %820 = vmatpush.msra.mxu0 0.0
  %v821 = vand.u32 %v74, 4294901760
  %822 = vmatpush.msra.mxu0 %v821
  %v823 = vand.u32 %v72, 4294901760
  %824 = vmatpush.msra.mxu0 %v823
  %v825 = vand.u32 %v83, 4294901760
  %826 = vmatmul.f32.gmra.mxu0 %v825
  %v827 = vpop.f32.mrf.mxu0
  %v828 = vadd.f32 %v777, %v827
  %v829 = vand.u32 %v86, 4294901760
  %830 = vmatmul.f32.gmra.mxu0 %v829
  %v831 = vpop.f32.mrf.mxu0
  %v832 = vadd.f32 %v781, %v831
  %v833 = vand.u32 %v89, 4294901760
  %834 = vmatmul.f32.gmra.mxu0 %v833
  %v835 = vpop.f32.mrf.mxu0
  %v836 = vadd.f32 %v785, %v835
  %v837 = vand.u32 %v92, 4294901760
  %838 = vmatmul.f32.gmra.mxu0 %v837
  %v839 = vpop.f32.mrf.mxu0
  %v840 = vadd.f32 %v789, %v839
  %v841 = vand.u32 %v95, 4294901760
  %842 = vmatmul.f32.gmra.mxu0 %v841
  %v843 = vpop.f32.mrf.mxu0
  %v844 = vadd.f32 %v793, %v843
  %v845 = vand.u32 %v98, 4294901760
  %846 = vmatmul.f32.gmra.mxu0 %v845
  %v847 = vpop.f32.mrf.mxu0
  %v848 = vadd.f32 %v797, %v847
  %v849 = vand.u32 %v101, 4294901760
  %850 = vmatmul.f32.gmra.mxu0 %v849
  %v851 = vpop.f32.mrf.mxu0
  %v852 = vadd.f32 %v801, %v851
  %v853 = vand.u32 %v104, 4294901760
  %854 = vmatmul.f32.gmra.mxu0 %v853
  %v855 = vpop.f32.mrf.mxu0
  %v856 = vadd.f32 %v805, %v855
  %857 = vdwg.mxu0
  %vm858 = vcmask 523264
  %v860 = vsel %vm858, 0.0, 0
  %862 = vmatpush.msra.mxu0 0.0
  %863 = vmatpush.msra.mxu0 0.0
  %864 = vmatpush.msra.mxu0 0.0
  %865 = vmatpush.msra.mxu0 0.0
  %866 = vmatpush.msra.mxu0 0.0
  %867 = vmatpush.msra.mxu0 0.0
  %868 = vmatpush.msra.mxu0 0.0
  %869 = vmatpush.msra.mxu0 0.0
  %v870 = vand.u32 %v69, 4294901760
  %871 = vmatpush.msra.mxu0 %v870
  %v872 = vand.u32 %v67, 4294901760
  %873 = vmatpush.msra.mxu0 %v872
  %v874 = vand.u32 %v65, 4294901760
  %875 = vmatpush.msra.mxu0 %v874
  %v876 = vand.u32 %v63, 4294901760
  %877 = vmatpush.msra.mxu0 %v876
  %v878 = vand.u32 %v61, 4294901760
  %879 = vmatpush.msra.mxu0 %v878
  %v880 = vand.u32 %v59, 4294901760
  %881 = vmatpush.msra.mxu0 %v880
  %v882 = vand.u32 %v57, 4294901760
  %883 = vmatpush.msra.mxu0 %v882
  %v884 = vand.u32 %v55, 4294901760
  %885 = vmatpush.msra.mxu0 %v884
  %v886 = vand.u32 %v860, 4294901760
  %v887 = vsub.f32 %v860, %v886
  %v888 = vand.u32 %v887, 4294901760
  %v889 = vsub.f32 %v887, %v888
  %v890 = vand.u32 %v889, 4294901760
  %891 = vmatmul.f32.gmra.mxu0 %v890
  %v892 = vpop.f32.mrf.mxu0
  %v893 = vadd.f32 0.0, %v892
  %894 = vdwg.mxu0
  %895 = vmatpush.msra.mxu0 0.0
  %896 = vmatpush.msra.mxu0 0.0
  %897 = vmatpush.msra.mxu0 0.0
  %898 = vmatpush.msra.mxu0 0.0
  %899 = vmatpush.msra.mxu0 0.0
  %900 = vmatpush.msra.mxu0 0.0
  %901 = vmatpush.msra.mxu0 0.0
  %902 = vmatpush.msra.mxu0 0.0
  %v903 = vand.u32 %v69, 4294901760
  %v904 = vsub.f32 %v69, %v903
  %v905 = vand.u32 %v904, 4294901760
  %v906 = vsub.f32 %v904, %v905
  %v907 = vand.u32 %v906, 4294901760
  %908 = vmatpush.msra.mxu0 %v907
  %v909 = vand.u32 %v67, 4294901760
  %v910 = vsub.f32 %v67, %v909
  %v911 = vand.u32 %v910, 4294901760
  %v912 = vsub.f32 %v910, %v911
  %v913 = vand.u32 %v912, 4294901760
  %914 = vmatpush.msra.mxu0 %v913
  %v915 = vand.u32 %v65, 4294901760
  %v916 = vsub.f32 %v65, %v915
  %v917 = vand.u32 %v916, 4294901760
  %v918 = vsub.f32 %v916, %v917
  %v919 = vand.u32 %v918, 4294901760
  %920 = vmatpush.msra.mxu0 %v919
  %v921 = vand.u32 %v63, 4294901760
  %v922 = vsub.f32 %v63, %v921
  %v923 = vand.u32 %v922, 4294901760
  %v924 = vsub.f32 %v922, %v923
  %v925 = vand.u32 %v924, 4294901760
  %926 = vmatpush.msra.mxu0 %v925
  %v927 = vand.u32 %v61, 4294901760
  %v928 = vsub.f32 %v61, %v927
  %v929 = vand.u32 %v928, 4294901760
  %v930 = vsub.f32 %v928, %v929
  %v931 = vand.u32 %v930, 4294901760
  %932 = vmatpush.msra.mxu0 %v931
  %v933 = vand.u32 %v59, 4294901760
  %v934 = vsub.f32 %v59, %v933
  %v935 = vand.u32 %v934, 4294901760
  %v936 = vsub.f32 %v934, %v935
  %v937 = vand.u32 %v936, 4294901760
  %938 = vmatpush.msra.mxu0 %v937
  %v939 = vand.u32 %v57, 4294901760
  %v940 = vsub.f32 %v57, %v939
  %v941 = vand.u32 %v940, 4294901760
  %v942 = vsub.f32 %v940, %v941
  %v943 = vand.u32 %v942, 4294901760
  %944 = vmatpush.msra.mxu0 %v943
  %v945 = vand.u32 %v55, 4294901760
  %v946 = vsub.f32 %v55, %v945
  %v947 = vand.u32 %v946, 4294901760
  %v948 = vsub.f32 %v946, %v947
  %v949 = vand.u32 %v948, 4294901760
  %950 = vmatpush.msra.mxu0 %v949
  %v951 = vand.u32 %v860, 4294901760
  %952 = vmatmul.f32.gmra.mxu0 %v951
  %v953 = vpop.f32.mrf.mxu0
  %v954 = vadd.f32 %v893, %v953
  %955 = vdwg.mxu0
  %956 = vmatpush.msra.mxu0 0.0
  %957 = vmatpush.msra.mxu0 0.0
  %958 = vmatpush.msra.mxu0 0.0
  %959 = vmatpush.msra.mxu0 0.0
  %960 = vmatpush.msra.mxu0 0.0
  %961 = vmatpush.msra.mxu0 0.0
  %962 = vmatpush.msra.mxu0 0.0
  %963 = vmatpush.msra.mxu0 0.0
  %v964 = vand.u32 %v69, 4294901760
  %v965 = vsub.f32 %v69, %v964
  %966 = vmatpush.msra.mxu0 %v965
  %v967 = vand.u32 %v67, 4294901760
  %v968 = vsub.f32 %v67, %v967
  %969 = vmatpush.msra.mxu0 %v968
  %v970 = vand.u32 %v65, 4294901760
  %v971 = vsub.f32 %v65, %v970
  %972 = vmatpush.msra.mxu0 %v971
  %v973 = vand.u32 %v63, 4294901760
  %v974 = vsub.f32 %v63, %v973
  %975 = vmatpush.msra.mxu0 %v974
  %v976 = vand.u32 %v61, 4294901760
  %v977 = vsub.f32 %v61, %v976
  %978 = vmatpush.msra.mxu0 %v977
  %v979 = vand.u32 %v59, 4294901760
  %v980 = vsub.f32 %v59, %v979
  %981 = vmatpush.msra.mxu0 %v980
  %v982 = vand.u32 %v57, 4294901760
  %v983 = vsub.f32 %v57, %v982
  %984 = vmatpush.msra.mxu0 %v983
  %v985 = vand.u32 %v55, 4294901760
  %v986 = vsub.f32 %v55, %v985
  %987 = vmatpush.msra.mxu0 %v986
  %v988 = vand.u32 %v860, 4294901760
  %v989 = vsub.f32 %v860, %v988
  %990 = vmatmul.f32.gmra.mxu0 %v989
  %v991 = vpop.f32.mrf.mxu0
  %v992 = vadd.f32 %v954, %v991
  %993 = vdwg.mxu0
  %994 = vmatpush.msra.mxu0 0.0
  %995 = vmatpush.msra.mxu0 0.0
  %996 = vmatpush.msra.mxu0 0.0
  %997 = vmatpush.msra.mxu0 0.0
  %998 = vmatpush.msra.mxu0 0.0
  %999 = vmatpush.msra.mxu0 0.0
  %1000 = vmatpush.msra.mxu0 0.0
  %1001 = vmatpush.msra.mxu0 0.0
  %v1002 = vand.u32 %v69, 4294901760
  %1003 = vmatpush.msra.mxu0 %v1002
  %v1004 = vand.u32 %v67, 4294901760
  %1005 = vmatpush.msra.mxu0 %v1004
  %v1006 = vand.u32 %v65, 4294901760
  %1007 = vmatpush.msra.mxu0 %v1006
  %v1008 = vand.u32 %v63, 4294901760
  %1009 = vmatpush.msra.mxu0 %v1008
  %v1010 = vand.u32 %v61, 4294901760
  %1011 = vmatpush.msra.mxu0 %v1010
  %v1012 = vand.u32 %v59, 4294901760
  %1013 = vmatpush.msra.mxu0 %v1012
  %v1014 = vand.u32 %v57, 4294901760
  %1015 = vmatpush.msra.mxu0 %v1014
  %v1016 = vand.u32 %v55, 4294901760
  %1017 = vmatpush.msra.mxu0 %v1016
  %v1018 = vand.u32 %v860, 4294901760
  %v1019 = vsub.f32 %v860, %v1018
  %v1020 = vand.u32 %v1019, 4294901760
  %1021 = vmatmul.f32.gmra.mxu0 %v1020
  %v1022 = vpop.f32.mrf.mxu0
  %v1023 = vadd.f32 %v992, %v1022
  %1024 = vdwg.mxu0
  %1025 = vmatpush.msra.mxu0 0.0
  %1026 = vmatpush.msra.mxu0 0.0
  %1027 = vmatpush.msra.mxu0 0.0
  %1028 = vmatpush.msra.mxu0 0.0
  %1029 = vmatpush.msra.mxu0 0.0
  %1030 = vmatpush.msra.mxu0 0.0
  %1031 = vmatpush.msra.mxu0 0.0
  %1032 = vmatpush.msra.mxu0 0.0
  %v1033 = vand.u32 %v69, 4294901760
  %v1034 = vsub.f32 %v69, %v1033
  %v1035 = vand.u32 %v1034, 4294901760
  %1036 = vmatpush.msra.mxu0 %v1035
  %v1037 = vand.u32 %v67, 4294901760
  %v1038 = vsub.f32 %v67, %v1037
  %v1039 = vand.u32 %v1038, 4294901760
  %1040 = vmatpush.msra.mxu0 %v1039
  %v1041 = vand.u32 %v65, 4294901760
  %v1042 = vsub.f32 %v65, %v1041
  %v1043 = vand.u32 %v1042, 4294901760
  %1044 = vmatpush.msra.mxu0 %v1043
  %v1045 = vand.u32 %v63, 4294901760
  %v1046 = vsub.f32 %v63, %v1045
  %v1047 = vand.u32 %v1046, 4294901760
  %1048 = vmatpush.msra.mxu0 %v1047
  %v1049 = vand.u32 %v61, 4294901760
  %v1050 = vsub.f32 %v61, %v1049
  %v1051 = vand.u32 %v1050, 4294901760
  %1052 = vmatpush.msra.mxu0 %v1051
  %v1053 = vand.u32 %v59, 4294901760
  %v1054 = vsub.f32 %v59, %v1053
  %v1055 = vand.u32 %v1054, 4294901760
  %1056 = vmatpush.msra.mxu0 %v1055
  %v1057 = vand.u32 %v57, 4294901760
  %v1058 = vsub.f32 %v57, %v1057
  %v1059 = vand.u32 %v1058, 4294901760
  %1060 = vmatpush.msra.mxu0 %v1059
  %v1061 = vand.u32 %v55, 4294901760
  %v1062 = vsub.f32 %v55, %v1061
  %v1063 = vand.u32 %v1062, 4294901760
  %1064 = vmatpush.msra.mxu0 %v1063
  %v1065 = vand.u32 %v860, 4294901760
  %1066 = vmatmul.f32.gmra.mxu0 %v1065
  %v1067 = vpop.f32.mrf.mxu0
  %v1068 = vadd.f32 %v1023, %v1067
  %1069 = vdwg.mxu0
  %1070 = vmatpush.msra.mxu0 0.0
  %1071 = vmatpush.msra.mxu0 0.0
  %1072 = vmatpush.msra.mxu0 0.0
  %1073 = vmatpush.msra.mxu0 0.0
  %1074 = vmatpush.msra.mxu0 0.0
  %1075 = vmatpush.msra.mxu0 0.0
  %1076 = vmatpush.msra.mxu0 0.0
  %1077 = vmatpush.msra.mxu0 0.0
  %v1078 = vand.u32 %v69, 4294901760
  %1079 = vmatpush.msra.mxu0 %v1078
  %v1080 = vand.u32 %v67, 4294901760
  %1081 = vmatpush.msra.mxu0 %v1080
  %v1082 = vand.u32 %v65, 4294901760
  %1083 = vmatpush.msra.mxu0 %v1082
  %v1084 = vand.u32 %v63, 4294901760
  %1085 = vmatpush.msra.mxu0 %v1084
  %v1086 = vand.u32 %v61, 4294901760
  %1087 = vmatpush.msra.mxu0 %v1086
  %v1088 = vand.u32 %v59, 4294901760
  %1089 = vmatpush.msra.mxu0 %v1088
  %v1090 = vand.u32 %v57, 4294901760
  %1091 = vmatpush.msra.mxu0 %v1090
  %v1092 = vand.u32 %v55, 4294901760
  %1093 = vmatpush.msra.mxu0 %v1092
  %v1094 = vand.u32 %v860, 4294901760
  %1095 = vmatmul.f32.gmra.mxu0 %v1094
  %v1096 = vpop.f32.mrf.mxu0
  %v1097 = vadd.f32 %v1068, %v1096
  %1098 = vdwg.mxu0
  %1099 = vmatpush.msra.mxu0 0.0
  %1100 = vmatpush.msra.mxu0 0.0
  %1101 = vmatpush.msra.mxu0 0.0
  %1102 = vmatpush.msra.mxu0 0.0
  %1103 = vmatpush.msra.mxu0 0.0
  %1104 = vmatpush.msra.mxu0 0.0
  %1105 = vmatpush.msra.mxu0 0.0
  %1106 = vmatpush.msra.mxu0 0.0
  %v1107 = vand.u32 %v70, 4294901760
  %1108 = vmatpush.msra.mxu0 %v1107
  %v1109 = vand.u32 %v68, 4294901760
  %1110 = vmatpush.msra.mxu0 %v1109
  %v1111 = vand.u32 %v66, 4294901760
  %1112 = vmatpush.msra.mxu0 %v1111
  %v1113 = vand.u32 %v64, 4294901760
  %1114 = vmatpush.msra.mxu0 %v1113
  %v1115 = vand.u32 %v62, 4294901760
  %1116 = vmatpush.msra.mxu0 %v1115
  %v1117 = vand.u32 %v60, 4294901760
  %1118 = vmatpush.msra.mxu0 %v1117
  %v1119 = vand.u32 %v58, 4294901760
  %1120 = vmatpush.msra.mxu0 %v1119
  %v1121 = vand.u32 %v56, 4294901760
  %1122 = vmatpush.msra.mxu0 %v1121
  %v1123 = vand.u32 %v860, 4294901760
  %v1124 = vsub.f32 %v860, %v1123
  %v1125 = vand.u32 %v1124, 4294901760
  %v1126 = vsub.f32 %v1124, %v1125
  %v1127 = vand.u32 %v1126, 4294901760
  %1128 = vmatmul.f32.gmra.mxu0 %v1127
  %v1129 = vpop.f32.mrf.mxu0
  %v1130 = vadd.f32 0.0, %v1129
  %1131 = vdwg.mxu0
  %1132 = vmatpush.msra.mxu0 0.0
  %1133 = vmatpush.msra.mxu0 0.0
  %1134 = vmatpush.msra.mxu0 0.0
  %1135 = vmatpush.msra.mxu0 0.0
  %1136 = vmatpush.msra.mxu0 0.0
  %1137 = vmatpush.msra.mxu0 0.0
  %1138 = vmatpush.msra.mxu0 0.0
  %1139 = vmatpush.msra.mxu0 0.0
  %v1140 = vand.u32 %v70, 4294901760
  %v1141 = vsub.f32 %v70, %v1140
  %v1142 = vand.u32 %v1141, 4294901760
  %v1143 = vsub.f32 %v1141, %v1142
  %v1144 = vand.u32 %v1143, 4294901760
  %1145 = vmatpush.msra.mxu0 %v1144
  %v1146 = vand.u32 %v68, 4294901760
  %v1147 = vsub.f32 %v68, %v1146
  %v1148 = vand.u32 %v1147, 4294901760
  %v1149 = vsub.f32 %v1147, %v1148
  %v1150 = vand.u32 %v1149, 4294901760
  %1151 = vmatpush.msra.mxu0 %v1150
  %v1152 = vand.u32 %v66, 4294901760
  %v1153 = vsub.f32 %v66, %v1152
  %v1154 = vand.u32 %v1153, 4294901760
  %v1155 = vsub.f32 %v1153, %v1154
  %v1156 = vand.u32 %v1155, 4294901760
  %1157 = vmatpush.msra.mxu0 %v1156
  %v1158 = vand.u32 %v64, 4294901760
  %v1159 = vsub.f32 %v64, %v1158
  %v1160 = vand.u32 %v1159, 4294901760
  %v1161 = vsub.f32 %v1159, %v1160
  %v1162 = vand.u32 %v1161, 4294901760
  %1163 = vmatpush.msra.mxu0 %v1162
  %v1164 = vand.u32 %v62, 4294901760
  %v1165 = vsub.f32 %v62, %v1164
  %v1166 = vand.u32 %v1165, 4294901760
  %v1167 = vsub.f32 %v1165, %v1166
  %v1168 = vand.u32 %v1167, 4294901760
  %1169 = vmatpush.msra.mxu0 %v1168
  %v1170 = vand.u32 %v60, 4294901760
  %v1171 = vsub.f32 %v60, %v1170
  %v1172 = vand.u32 %v1171, 4294901760
  %v1173 = vsub.f32 %v1171, %v1172
  %v1174 = vand.u32 %v1173, 4294901760
  %1175 = vmatpush.msra.mxu0 %v1174
  %v1176 = vand.u32 %v58, 4294901760
  %v1177 = vsub.f32 %v58, %v1176
  %v1178 = vand.u32 %v1177, 4294901760
  %v1179 = vsub.f32 %v1177, %v1178
  %v1180 = vand.u32 %v1179, 4294901760
  %1181 = vmatpush.msra.mxu0 %v1180
  %v1182 = vand.u32 %v56, 4294901760
  %v1183 = vsub.f32 %v56, %v1182
  %v1184 = vand.u32 %v1183, 4294901760
  %v1185 = vsub.f32 %v1183, %v1184
  %v1186 = vand.u32 %v1185, 4294901760
  %1187 = vmatpush.msra.mxu0 %v1186
  %v1188 = vand.u32 %v860, 4294901760
  %1189 = vmatmul.f32.gmra.mxu0 %v1188
  %v1190 = vpop.f32.mrf.mxu0
  %v1191 = vadd.f32 %v1130, %v1190
  %1192 = vdwg.mxu0
  %1193 = vmatpush.msra.mxu0 0.0
  %1194 = vmatpush.msra.mxu0 0.0
  %1195 = vmatpush.msra.mxu0 0.0
  %1196 = vmatpush.msra.mxu0 0.0
  %1197 = vmatpush.msra.mxu0 0.0
  %1198 = vmatpush.msra.mxu0 0.0
  %1199 = vmatpush.msra.mxu0 0.0
  %1200 = vmatpush.msra.mxu0 0.0
  %v1201 = vand.u32 %v70, 4294901760
  %v1202 = vsub.f32 %v70, %v1201
  %1203 = vmatpush.msra.mxu0 %v1202
  %v1204 = vand.u32 %v68, 4294901760
  %v1205 = vsub.f32 %v68, %v1204
  %1206 = vmatpush.msra.mxu0 %v1205
  %v1207 = vand.u32 %v66, 4294901760
  %v1208 = vsub.f32 %v66, %v1207
  %1209 = vmatpush.msra.mxu0 %v1208
  %v1210 = vand.u32 %v64, 4294901760
  %v1211 = vsub.f32 %v64, %v1210
  %1212 = vmatpush.msra.mxu0 %v1211
  %v1213 = vand.u32 %v62, 4294901760
  %v1214 = vsub.f32 %v62, %v1213
  %1215 = vmatpush.msra.mxu0 %v1214
  %v1216 = vand.u32 %v60, 4294901760
  %v1217 = vsub.f32 %v60, %v1216
  %1218 = vmatpush.msra.mxu0 %v1217
  %v1219 = vand.u32 %v58, 4294901760
  %v1220 = vsub.f32 %v58, %v1219
  %1221 = vmatpush.msra.mxu0 %v1220
  %v1222 = vand.u32 %v56, 4294901760
  %v1223 = vsub.f32 %v56, %v1222
  %1224 = vmatpush.msra.mxu0 %v1223
  %v1225 = vand.u32 %v860, 4294901760
  %v1226 = vsub.f32 %v860, %v1225
  %1227 = vmatmul.f32.gmra.mxu0 %v1226
  %v1228 = vpop.f32.mrf.mxu0
  %v1229 = vadd.f32 %v1191, %v1228
  %1230 = vdwg.mxu0
  %1231 = vmatpush.msra.mxu0 0.0
  %1232 = vmatpush.msra.mxu0 0.0
  %1233 = vmatpush.msra.mxu0 0.0
  %1234 = vmatpush.msra.mxu0 0.0
  %1235 = vmatpush.msra.mxu0 0.0
  %1236 = vmatpush.msra.mxu0 0.0
  %1237 = vmatpush.msra.mxu0 0.0
  %1238 = vmatpush.msra.mxu0 0.0
  %v1239 = vand.u32 %v70, 4294901760
  %1240 = vmatpush.msra.mxu0 %v1239
  %v1241 = vand.u32 %v68, 4294901760
  %1242 = vmatpush.msra.mxu0 %v1241
  %v1243 = vand.u32 %v66, 4294901760
  %1244 = vmatpush.msra.mxu0 %v1243
  %v1245 = vand.u32 %v64, 4294901760
  %1246 = vmatpush.msra.mxu0 %v1245
  %v1247 = vand.u32 %v62, 4294901760
  %1248 = vmatpush.msra.mxu0 %v1247
  %v1249 = vand.u32 %v60, 4294901760
  %1250 = vmatpush.msra.mxu0 %v1249
  %v1251 = vand.u32 %v58, 4294901760
  %1252 = vmatpush.msra.mxu0 %v1251
  %v1253 = vand.u32 %v56, 4294901760
  %1254 = vmatpush.msra.mxu0 %v1253
  %v1255 = vand.u32 %v860, 4294901760
  %v1256 = vsub.f32 %v860, %v1255
  %v1257 = vand.u32 %v1256, 4294901760
  %1258 = vmatmul.f32.gmra.mxu0 %v1257
  %v1259 = vpop.f32.mrf.mxu0
  %v1260 = vadd.f32 %v1229, %v1259
  %1261 = vdwg.mxu0
  %1262 = vmatpush.msra.mxu0 0.0
  %1263 = vmatpush.msra.mxu0 0.0
  %1264 = vmatpush.msra.mxu0 0.0
  %1265 = vmatpush.msra.mxu0 0.0
  %1266 = vmatpush.msra.mxu0 0.0
  %1267 = vmatpush.msra.mxu0 0.0
  %1268 = vmatpush.msra.mxu0 0.0
  %1269 = vmatpush.msra.mxu0 0.0
  %v1270 = vand.u32 %v70, 4294901760
  %v1271 = vsub.f32 %v70, %v1270
  %v1272 = vand.u32 %v1271, 4294901760
  %1273 = vmatpush.msra.mxu0 %v1272
  %v1274 = vand.u32 %v68, 4294901760
  %v1275 = vsub.f32 %v68, %v1274
  %v1276 = vand.u32 %v1275, 4294901760
  %1277 = vmatpush.msra.mxu0 %v1276
  %v1278 = vand.u32 %v66, 4294901760
  %v1279 = vsub.f32 %v66, %v1278
  %v1280 = vand.u32 %v1279, 4294901760
  %1281 = vmatpush.msra.mxu0 %v1280
  %v1282 = vand.u32 %v64, 4294901760
  %v1283 = vsub.f32 %v64, %v1282
  %v1284 = vand.u32 %v1283, 4294901760
  %1285 = vmatpush.msra.mxu0 %v1284
  %v1286 = vand.u32 %v62, 4294901760
  %v1287 = vsub.f32 %v62, %v1286
  %v1288 = vand.u32 %v1287, 4294901760
  %1289 = vmatpush.msra.mxu0 %v1288
  %v1290 = vand.u32 %v60, 4294901760
  %v1291 = vsub.f32 %v60, %v1290
  %v1292 = vand.u32 %v1291, 4294901760
  %1293 = vmatpush.msra.mxu0 %v1292
  %v1294 = vand.u32 %v58, 4294901760
  %v1295 = vsub.f32 %v58, %v1294
  %v1296 = vand.u32 %v1295, 4294901760
  %1297 = vmatpush.msra.mxu0 %v1296
  %v1298 = vand.u32 %v56, 4294901760
  %v1299 = vsub.f32 %v56, %v1298
  %v1300 = vand.u32 %v1299, 4294901760
  %1301 = vmatpush.msra.mxu0 %v1300
  %v1302 = vand.u32 %v860, 4294901760
  %1303 = vmatmul.f32.gmra.mxu0 %v1302
  %v1304 = vpop.f32.mrf.mxu0
  %v1305 = vadd.f32 %v1260, %v1304
  %1306 = vdwg.mxu0
  %1307 = vmatpush.msra.mxu0 0.0
  %1308 = vmatpush.msra.mxu0 0.0
  %1309 = vmatpush.msra.mxu0 0.0
  %1310 = vmatpush.msra.mxu0 0.0
  %1311 = vmatpush.msra.mxu0 0.0
  %1312 = vmatpush.msra.mxu0 0.0
  %1313 = vmatpush.msra.mxu0 0.0
  %1314 = vmatpush.msra.mxu0 0.0
  %v1315 = vand.u32 %v70, 4294901760
  %1316 = vmatpush.msra.mxu0 %v1315
  %v1317 = vand.u32 %v68, 4294901760
  %1318 = vmatpush.msra.mxu0 %v1317
  %v1319 = vand.u32 %v66, 4294901760
  %1320 = vmatpush.msra.mxu0 %v1319
  %v1321 = vand.u32 %v64, 4294901760
  %1322 = vmatpush.msra.mxu0 %v1321
  %v1323 = vand.u32 %v62, 4294901760
  %1324 = vmatpush.msra.mxu0 %v1323
  %v1325 = vand.u32 %v60, 4294901760
  %1326 = vmatpush.msra.mxu0 %v1325
  %v1327 = vand.u32 %v58, 4294901760
  %1328 = vmatpush.msra.mxu0 %v1327
  %v1329 = vand.u32 %v56, 4294901760
  %1330 = vmatpush.msra.mxu0 %v1329
  %v1331 = vand.u32 %v860, 4294901760
  %1332 = vmatmul.f32.gmra.mxu0 %v1331
  %v1333 = vpop.f32.mrf.mxu0
  %v1334 = vadd.f32 %v1305, %v1333
  %1335 = vdwg.mxu0
  %v1336 = vadd.f32 %v452, %v1097
  %v1337 = vadd.f32 %v828, %v1334
  %v1338 = vxor.u32 %v1336, 2147483648
  %v1339 = vxor.u32 %v1337, 2147483648
  %v1340 = vmul.f32 %v1338, 1.442695
  %v1341 = vpow.pop %v1340
  %v1342 = vmul.f32 %v1339, 1.442695
  %v1343 = vpow.pop %v1342
  %v1344 = vadd.f32 %v1341, 1.0
  %v1345 = vadd.f32 %v1343, 1.0
  %v1346 = vrcp.pop %v1344
  %v1347 = vmul.f32 %v1344, %v1346
  %v1348 = vsub.f32 1.0, %v1347
  %v1349 = vmul.f32 %v1346, %v1348
  %v1350 = vadd.f32 %v1346, %v1349
  %vm1351 = vweird.f32 %v1344
  %vm1352 = vweird.f32 %v1346
  %vm1353 = vmor %vm1351, %vm1352
  %v1354 = vsel %vm1353, %v1346, %v1350
  %v1355 = vand.u32 2147483647, %v1344
  %vm1356 = vcmp.eq.f32.partialorder %v1355, 8.507059e+37
  %v1357 = vand.u32 %v1344, 2147483648
  %v1358 = vor.u32 1.1754944e-38, %v1357
  %v1359 = vsel %vm1356, %v1358, %v1354
  %v1360 = vmul.f32 1.0, %v1359
  %v1361 = vrcp.pop %v1345
  %v1362 = vmul.f32 %v1345, %v1361
  %v1363 = vsub.f32 1.0, %v1362
  %v1364 = vmul.f32 %v1361, %v1363
  %v1365 = vadd.f32 %v1361, %v1364
  %vm1366 = vweird.f32 %v1345
  %vm1367 = vweird.f32 %v1361
  %vm1368 = vmor %vm1366, %vm1367
  %v1369 = vsel %vm1368, %v1361, %v1365
  %v1370 = vand.u32 2147483647, %v1345
  %vm1371 = vcmp.eq.f32.partialorder %v1370, 8.507059e+37
  %v1372 = vand.u32 %v1345, 2147483648
  %v1373 = vor.u32 1.1754944e-38, %v1372
  %v1374 = vsel %vm1371, %v1373, %v1369
  %v1375 = vmul.f32 1.0, %v1374
  %v1376 = vmul.f32 %v1375, 2.0
  %v1377 = vsub.f32 %v1376, 1.0
  %v1378 = vmul.f32 %v1360, 0.0
  %v1379 = vmul.f32 %v1360, %v1377
  %1381 = vrot.lane.b32.xlu0 %v1379, 64
  %v1382 = vpop.permute.xlu0 %1381
  %v1384 = vadd.f32 %v1378, %v1382
  %v1385 = vtanh.pop %v1384
  %v1386 = vmul.f32 %v1375, %v1385
  %1388 = vrot.lane.b32.xlu0 %v1386, 64
  %v1389 = vpop.permute.xlu0 %1388
  %v1390 = vsel %vm858, %v1389, 0
  %1392 = vmatpush.msra.mxu0 0.0
  %1393 = vmatpush.msra.mxu0 0.0
  %1394 = vmatpush.msra.mxu0 0.0
  %1395 = vmatpush.msra.mxu0 0.0
  %1396 = vmatpush.msra.mxu0 0.0
  %1397 = vmatpush.msra.mxu0 0.0
  %1398 = vmatpush.msra.mxu0 0.0
  %1399 = vmatpush.msra.mxu0 0.0
  %v1400 = vand.u32 %v69, 4294901760
  %1401 = vmatpush.msra.mxu0 %v1400
  %v1402 = vand.u32 %v67, 4294901760
  %1403 = vmatpush.msra.mxu0 %v1402
  %v1404 = vand.u32 %v65, 4294901760
  %1405 = vmatpush.msra.mxu0 %v1404
  %v1406 = vand.u32 %v63, 4294901760
  %1407 = vmatpush.msra.mxu0 %v1406
  %v1408 = vand.u32 %v61, 4294901760
  %1409 = vmatpush.msra.mxu0 %v1408
  %v1410 = vand.u32 %v59, 4294901760
  %1411 = vmatpush.msra.mxu0 %v1410
  %v1412 = vand.u32 %v57, 4294901760
  %1413 = vmatpush.msra.mxu0 %v1412
  %v1414 = vand.u32 %v55, 4294901760
  %1415 = vmatpush.msra.mxu0 %v1414
  %v1416 = vand.u32 %v1390, 4294901760
  %v1417 = vsub.f32 %v1390, %v1416
  %v1418 = vand.u32 %v1417, 4294901760
  %v1419 = vsub.f32 %v1417, %v1418
  %v1420 = vand.u32 %v1419, 4294901760
  %1421 = vmatmul.f32.gmra.mxu0 %v1420
  %v1422 = vpop.f32.mrf.mxu0
  %v1423 = vadd.f32 0.0, %v1422
  %1424 = vdwg.mxu0
  %1425 = vmatpush.msra.mxu0 0.0
  %1426 = vmatpush.msra.mxu0 0.0
  %1427 = vmatpush.msra.mxu0 0.0
  %1428 = vmatpush.msra.mxu0 0.0
  %1429 = vmatpush.msra.mxu0 0.0
  %1430 = vmatpush.msra.mxu0 0.0
  %1431 = vmatpush.msra.mxu0 0.0
  %1432 = vmatpush.msra.mxu0 0.0
  %v1433 = vand.u32 %v69, 4294901760
  %v1434 = vsub.f32 %v69, %v1433
  %v1435 = vand.u32 %v1434, 4294901760
  %v1436 = vsub.f32 %v1434, %v1435
  %v1437 = vand.u32 %v1436, 4294901760
  %1438 = vmatpush.msra.mxu0 %v1437
  %v1439 = vand.u32 %v67, 4294901760
  %v1440 = vsub.f32 %v67, %v1439
  %v1441 = vand.u32 %v1440, 4294901760
  %v1442 = vsub.f32 %v1440, %v1441
  %v1443 = vand.u32 %v1442, 4294901760
  %1444 = vmatpush.msra.mxu0 %v1443
  %v1445 = vand.u32 %v65, 4294901760
  %v1446 = vsub.f32 %v65, %v1445
  %v1447 = vand.u32 %v1446, 4294901760
  %v1448 = vsub.f32 %v1446, %v1447
  %v1449 = vand.u32 %v1448, 4294901760
  %1450 = vmatpush.msra.mxu0 %v1449
  %v1451 = vand.u32 %v63, 4294901760
  %v1452 = vsub.f32 %v63, %v1451
  %v1453 = vand.u32 %v1452, 4294901760
  %v1454 = vsub.f32 %v1452, %v1453
  %v1455 = vand.u32 %v1454, 4294901760
  %1456 = vmatpush.msra.mxu0 %v1455
  %v1457 = vand.u32 %v61, 4294901760
  %v1458 = vsub.f32 %v61, %v1457
  %v1459 = vand.u32 %v1458, 4294901760
  %v1460 = vsub.f32 %v1458, %v1459
  %v1461 = vand.u32 %v1460, 4294901760
  %1462 = vmatpush.msra.mxu0 %v1461
  %v1463 = vand.u32 %v59, 4294901760
  %v1464 = vsub.f32 %v59, %v1463
  %v1465 = vand.u32 %v1464, 4294901760
  %v1466 = vsub.f32 %v1464, %v1465
  %v1467 = vand.u32 %v1466, 4294901760
  %1468 = vmatpush.msra.mxu0 %v1467
  %v1469 = vand.u32 %v57, 4294901760
  %v1470 = vsub.f32 %v57, %v1469
  %v1471 = vand.u32 %v1470, 4294901760
  %v1472 = vsub.f32 %v1470, %v1471
  %v1473 = vand.u32 %v1472, 4294901760
  %1474 = vmatpush.msra.mxu0 %v1473
  %v1475 = vand.u32 %v55, 4294901760
  %v1476 = vsub.f32 %v55, %v1475
  %v1477 = vand.u32 %v1476, 4294901760
  %v1478 = vsub.f32 %v1476, %v1477
  %v1479 = vand.u32 %v1478, 4294901760
  %1480 = vmatpush.msra.mxu0 %v1479
  %v1481 = vand.u32 %v1390, 4294901760
  %1482 = vmatmul.f32.gmra.mxu0 %v1481
  %v1483 = vpop.f32.mrf.mxu0
  %v1484 = vadd.f32 %v1423, %v1483
  %1485 = vdwg.mxu0
  %1486 = vmatpush.msra.mxu0 0.0
  %1487 = vmatpush.msra.mxu0 0.0
  %1488 = vmatpush.msra.mxu0 0.0
  %1489 = vmatpush.msra.mxu0 0.0
  %1490 = vmatpush.msra.mxu0 0.0
  %1491 = vmatpush.msra.mxu0 0.0
  %1492 = vmatpush.msra.mxu0 0.0
  %1493 = vmatpush.msra.mxu0 0.0
  %v1494 = vand.u32 %v69, 4294901760
  %v1495 = vsub.f32 %v69, %v1494
  %1496 = vmatpush.msra.mxu0 %v1495
  %v1497 = vand.u32 %v67, 4294901760
  %v1498 = vsub.f32 %v67, %v1497
  %1499 = vmatpush.msra.mxu0 %v1498
  %v1500 = vand.u32 %v65, 4294901760
  %v1501 = vsub.f32 %v65, %v1500
  %1502 = vmatpush.msra.mxu0 %v1501
  %v1503 = vand.u32 %v63, 4294901760
  %v1504 = vsub.f32 %v63, %v1503
  %1505 = vmatpush.msra.mxu0 %v1504
  %v1506 = vand.u32 %v61, 4294901760
  %v1507 = vsub.f32 %v61, %v1506
  %1508 = vmatpush.msra.mxu0 %v1507
  %v1509 = vand.u32 %v59, 4294901760
  %v1510 = vsub.f32 %v59, %v1509
  %1511 = vmatpush.msra.mxu0 %v1510
  %v1512 = vand.u32 %v57, 4294901760
  %v1513 = vsub.f32 %v57, %v1512
  %1514 = vmatpush.msra.mxu0 %v1513
  %v1515 = vand.u32 %v55, 4294901760
  %v1516 = vsub.f32 %v55, %v1515
  %1517 = vmatpush.msra.mxu0 %v1516
  %v1518 = vand.u32 %v1390, 4294901760
  %v1519 = vsub.f32 %v1390, %v1518
  %1520 = vmatmul.f32.gmra.mxu0 %v1519
  %v1521 = vpop.f32.mrf.mxu0
  %v1522 = vadd.f32 %v1484, %v1521
  %1523 = vdwg.mxu0
  %1524 = vmatpush.msra.mxu0 0.0
  %1525 = vmatpush.msra.mxu0 0.0
  %1526 = vmatpush.msra.mxu0 0.0
  %1527 = vmatpush.msra.mxu0 0.0
  %1528 = vmatpush.msra.mxu0 0.0
  %1529 = vmatpush.msra.mxu0 0.0
  %1530 = vmatpush.msra.mxu0 0.0
  %1531 = vmatpush.msra.mxu0 0.0
  %v1532 = vand.u32 %v69, 4294901760
  %1533 = vmatpush.msra.mxu0 %v1532
  %v1534 = vand.u32 %v67, 4294901760
  %1535 = vmatpush.msra.mxu0 %v1534
  %v1536 = vand.u32 %v65, 4294901760
  %1537 = vmatpush.msra.mxu0 %v1536
  %v1538 = vand.u32 %v63, 4294901760
  %1539 = vmatpush.msra.mxu0 %v1538
  %v1540 = vand.u32 %v61, 4294901760
  %1541 = vmatpush.msra.mxu0 %v1540
  %v1542 = vand.u32 %v59, 4294901760
  %1543 = vmatpush.msra.mxu0 %v1542
  %v1544 = vand.u32 %v57, 4294901760
  %1545 = vmatpush.msra.mxu0 %v1544
  %v1546 = vand.u32 %v55, 4294901760
  %1547 = vmatpush.msra.mxu0 %v1546
  %v1548 = vand.u32 %v1390, 4294901760
  %v1549 = vsub.f32 %v1390, %v1548
  %v1550 = vand.u32 %v1549, 4294901760
  %1551 = vmatmul.f32.gmra.mxu0 %v1550
  %v1552 = vpop.f32.mrf.mxu0
  %v1553 = vadd.f32 %v1522, %v1552
  %1554 = vdwg.mxu0
  %1555 = vmatpush.msra.mxu0 0.0
  %1556 = vmatpush.msra.mxu0 0.0
  %1557 = vmatpush.msra.mxu0 0.0
  %1558 = vmatpush.msra.mxu0 0.0
  %1559 = vmatpush.msra.mxu0 0.0
  %1560 = vmatpush.msra.mxu0 0.0
  %1561 = vmatpush.msra.mxu0 0.0
  %1562 = vmatpush.msra.mxu0 0.0
  %v1563 = vand.u32 %v69, 4294901760
  %v1564 = vsub.f32 %v69, %v1563
  %v1565 = vand.u32 %v1564, 4294901760
  %1566 = vmatpush.msra.mxu0 %v1565
  %v1567 = vand.u32 %v67, 4294901760
  %v1568 = vsub.f32 %v67, %v1567
  %v1569 = vand.u32 %v1568, 4294901760
  %1570 = vmatpush.msra.mxu0 %v1569
  %v1571 = vand.u32 %v65, 4294901760
  %v1572 = vsub.f32 %v65, %v1571
  %v1573 = vand.u32 %v1572, 4294901760
  %1574 = vmatpush.msra.mxu0 %v1573
  %v1575 = vand.u32 %v63, 4294901760
  %v1576 = vsub.f32 %v63, %v1575
  %v1577 = vand.u32 %v1576, 4294901760
  %1578 = vmatpush.msra.mxu0 %v1577
  %v1579 = vand.u32 %v61, 4294901760
  %v1580 = vsub.f32 %v61, %v1579
  %v1581 = vand.u32 %v1580, 4294901760
  %1582 = vmatpush.msra.mxu0 %v1581
  %v1583 = vand.u32 %v59, 4294901760
  %v1584 = vsub.f32 %v59, %v1583
  %v1585 = vand.u32 %v1584, 4294901760
  %1586 = vmatpush.msra.mxu0 %v1585
  %v1587 = vand.u32 %v57, 4294901760
  %v1588 = vsub.f32 %v57, %v1587
  %v1589 = vand.u32 %v1588, 4294901760
  %1590 = vmatpush.msra.mxu0 %v1589
  %v1591 = vand.u32 %v55, 4294901760
  %v1592 = vsub.f32 %v55, %v1591
  %v1593 = vand.u32 %v1592, 4294901760
  %1594 = vmatpush.msra.mxu0 %v1593
  %v1595 = vand.u32 %v1390, 4294901760
  %1596 = vmatmul.f32.gmra.mxu0 %v1595
  %v1597 = vpop.f32.mrf.mxu0
  %v1598 = vadd.f32 %v1553, %v1597
  %1599 = vdwg.mxu0
  %1600 = vmatpush.msra.mxu0 0.0
  %1601 = vmatpush.msra.mxu0 0.0
  %1602 = vmatpush.msra.mxu0 0.0
  %1603 = vmatpush.msra.mxu0 0.0
  %1604 = vmatpush.msra.mxu0 0.0
  %1605 = vmatpush.msra.mxu0 0.0
  %1606 = vmatpush.msra.mxu0 0.0
  %1607 = vmatpush.msra.mxu0 0.0
  %v1608 = vand.u32 %v69, 4294901760
  %1609 = vmatpush.msra.mxu0 %v1608
  %v1610 = vand.u32 %v67, 4294901760
  %1611 = vmatpush.msra.mxu0 %v1610
  %v1612 = vand.u32 %v65, 4294901760
  %1613 = vmatpush.msra.mxu0 %v1612
  %v1614 = vand.u32 %v63, 4294901760
  %1615 = vmatpush.msra.mxu0 %v1614
  %v1616 = vand.u32 %v61, 4294901760
  %1617 = vmatpush.msra.mxu0 %v1616
  %v1618 = vand.u32 %v59, 4294901760
  %1619 = vmatpush.msra.mxu0 %v1618
  %v1620 = vand.u32 %v57, 4294901760
  %1621 = vmatpush.msra.mxu0 %v1620
  %v1622 = vand.u32 %v55, 4294901760
  %1623 = vmatpush.msra.mxu0 %v1622
  %v1624 = vand.u32 %v1390, 4294901760
  %1625 = vmatmul.f32.gmra.mxu0 %v1624
  %v1626 = vpop.f32.mrf.mxu0
  %v1627 = vadd.f32 %v1598, %v1626
  %1628 = vdwg.mxu0
  %1629 = vmatpush.msra.mxu0 0.0
  %1630 = vmatpush.msra.mxu0 0.0
  %1631 = vmatpush.msra.mxu0 0.0
  %1632 = vmatpush.msra.mxu0 0.0
  %1633 = vmatpush.msra.mxu0 0.0
  %1634 = vmatpush.msra.mxu0 0.0
  %1635 = vmatpush.msra.mxu0 0.0
  %1636 = vmatpush.msra.mxu0 0.0
  %v1637 = vand.u32 %v70, 4294901760
  %1638 = vmatpush.msra.mxu0 %v1637
  %v1639 = vand.u32 %v68, 4294901760
  %1640 = vmatpush.msra.mxu0 %v1639
  %v1641 = vand.u32 %v66, 4294901760
  %1642 = vmatpush.msra.mxu0 %v1641
  %v1643 = vand.u32 %v64, 4294901760
  %1644 = vmatpush.msra.mxu0 %v1643
  %v1645 = vand.u32 %v62, 4294901760
  %1646 = vmatpush.msra.mxu0 %v1645
  %v1647 = vand.u32 %v60, 4294901760
  %1648 = vmatpush.msra.mxu0 %v1647
  %v1649 = vand.u32 %v58, 4294901760
  %1650 = vmatpush.msra.mxu0 %v1649
  %v1651 = vand.u32 %v56, 4294901760
  %1652 = vmatpush.msra.mxu0 %v1651
  %v1653 = vand.u32 %v1390, 4294901760
  %v1654 = vsub.f32 %v1390, %v1653
  %v1655 = vand.u32 %v1654, 4294901760
  %v1656 = vsub.f32 %v1654, %v1655
  %v1657 = vand.u32 %v1656, 4294901760
  %1658 = vmatmul.f32.gmra.mxu0 %v1657
  %v1659 = vpop.f32.mrf.mxu0
  %v1660 = vadd.f32 0.0, %v1659
  %1661 = vdwg.mxu0
  %1662 = vmatpush.msra.mxu0 0.0
  %1663 = vmatpush.msra.mxu0 0.0
  %1664 = vmatpush.msra.mxu0 0.0
  %1665 = vmatpush.msra.mxu0 0.0
  %1666 = vmatpush.msra.mxu0 0.0
  %1667 = vmatpush.msra.mxu0 0.0
  %1668 = vmatpush.msra.mxu0 0.0
  %1669 = vmatpush.msra.mxu0 0.0
  %v1670 = vand.u32 %v70, 4294901760
  %v1671 = vsub.f32 %v70, %v1670
  %v1672 = vand.u32 %v1671, 4294901760
  %v1673 = vsub.f32 %v1671, %v1672
  %v1674 = vand.u32 %v1673, 4294901760
  %1675 = vmatpush.msra.mxu0 %v1674
  %v1676 = vand.u32 %v68, 4294901760
  %v1677 = vsub.f32 %v68, %v1676
  %v1678 = vand.u32 %v1677, 4294901760
  %v1679 = vsub.f32 %v1677, %v1678
  %v1680 = vand.u32 %v1679, 4294901760
  %1681 = vmatpush.msra.mxu0 %v1680
  %v1682 = vand.u32 %v66, 4294901760
  %v1683 = vsub.f32 %v66, %v1682
  %v1684 = vand.u32 %v1683, 4294901760
  %v1685 = vsub.f32 %v1683, %v1684
  %v1686 = vand.u32 %v1685, 4294901760
  %1687 = vmatpush.msra.mxu0 %v1686
  %v1688 = vand.u32 %v64, 4294901760
  %v1689 = vsub.f32 %v64, %v1688
  %v1690 = vand.u32 %v1689, 4294901760
  %v1691 = vsub.f32 %v1689, %v1690
  %v1692 = vand.u32 %v1691, 4294901760
  %1693 = vmatpush.msra.mxu0 %v1692
  %v1694 = vand.u32 %v62, 4294901760
  %v1695 = vsub.f32 %v62, %v1694
  %v1696 = vand.u32 %v1695, 4294901760
  %v1697 = vsub.f32 %v1695, %v1696
  %v1698 = vand.u32 %v1697, 4294901760
  %1699 = vmatpush.msra.mxu0 %v1698
  %v1700 = vand.u32 %v60, 4294901760
  %v1701 = vsub.f32 %v60, %v1700
  %v1702 = vand.u32 %v1701, 4294901760
  %v1703 = vsub.f32 %v1701, %v1702
  %v1704 = vand.u32 %v1703, 4294901760
  %1705 = vmatpush.msra.mxu0 %v1704
  %v1706 = vand.u32 %v58, 4294901760
  %v1707 = vsub.f32 %v58, %v1706
  %v1708 = vand.u32 %v1707, 4294901760
  %v1709 = vsub.f32 %v1707, %v1708
  %v1710 = vand.u32 %v1709, 4294901760
  %1711 = vmatpush.msra.mxu0 %v1710
  %v1712 = vand.u32 %v56, 4294901760
  %v1713 = vsub.f32 %v56, %v1712
  %v1714 = vand.u32 %v1713, 4294901760
  %v1715 = vsub.f32 %v1713, %v1714
  %v1716 = vand.u32 %v1715, 4294901760
  %1717 = vmatpush.msra.mxu0 %v1716
  %v1718 = vand.u32 %v1390, 4294901760
  %1719 = vmatmul.f32.gmra.mxu0 %v1718
  %v1720 = vpop.f32.mrf.mxu0
  %v1721 = vadd.f32 %v1660, %v1720
  %1722 = vdwg.mxu0
  %1723 = vmatpush.msra.mxu0 0.0
  %1724 = vmatpush.msra.mxu0 0.0
  %1725 = vmatpush.msra.mxu0 0.0
  %1726 = vmatpush.msra.mxu0 0.0
  %1727 = vmatpush.msra.mxu0 0.0
  %1728 = vmatpush.msra.mxu0 0.0
  %1729 = vmatpush.msra.mxu0 0.0
  %1730 = vmatpush.msra.mxu0 0.0
  %v1731 = vand.u32 %v70, 4294901760
  %v1732 = vsub.f32 %v70, %v1731
  %1733 = vmatpush.msra.mxu0 %v1732
  %v1734 = vand.u32 %v68, 4294901760
  %v1735 = vsub.f32 %v68, %v1734
  %1736 = vmatpush.msra.mxu0 %v1735
  %v1737 = vand.u32 %v66, 4294901760
  %v1738 = vsub.f32 %v66, %v1737
  %1739 = vmatpush.msra.mxu0 %v1738
  %v1740 = vand.u32 %v64, 4294901760
  %v1741 = vsub.f32 %v64, %v1740
  %1742 = vmatpush.msra.mxu0 %v1741
  %v1743 = vand.u32 %v62, 4294901760
  %v1744 = vsub.f32 %v62, %v1743
  %1745 = vmatpush.msra.mxu0 %v1744
  %v1746 = vand.u32 %v60, 4294901760
  %v1747 = vsub.f32 %v60, %v1746
  %1748 = vmatpush.msra.mxu0 %v1747
  %v1749 = vand.u32 %v58, 4294901760
  %v1750 = vsub.f32 %v58, %v1749
  %1751 = vmatpush.msra.mxu0 %v1750
  %v1752 = vand.u32 %v56, 4294901760
  %v1753 = vsub.f32 %v56, %v1752
  %1754 = vmatpush.msra.mxu0 %v1753
  %v1755 = vand.u32 %v1390, 4294901760
  %v1756 = vsub.f32 %v1390, %v1755
  %1757 = vmatmul.f32.gmra.mxu0 %v1756
  %v1758 = vpop.f32.mrf.mxu0
  %v1759 = vadd.f32 %v1721, %v1758
  %1760 = vdwg.mxu0
  %1761 = vmatpush.msra.mxu0 0.0
  %1762 = vmatpush.msra.mxu0 0.0
  %1763 = vmatpush.msra.mxu0 0.0
  %1764 = vmatpush.msra.mxu0 0.0
  %1765 = vmatpush.msra.mxu0 0.0
  %1766 = vmatpush.msra.mxu0 0.0
  %1767 = vmatpush.msra.mxu0 0.0
  %1768 = vmatpush.msra.mxu0 0.0
  %v1769 = vand.u32 %v70, 4294901760
  %1770 = vmatpush.msra.mxu0 %v1769
  %v1771 = vand.u32 %v68, 4294901760
  %1772 = vmatpush.msra.mxu0 %v1771
  %v1773 = vand.u32 %v66, 4294901760
  %1774 = vmatpush.msra.mxu0 %v1773
  %v1775 = vand.u32 %v64, 4294901760
  %1776 = vmatpush.msra.mxu0 %v1775
  %v1777 = vand.u32 %v62, 4294901760
  %1778 = vmatpush.msra.mxu0 %v1777
  %v1779 = vand.u32 %v60, 4294901760
  %1780 = vmatpush.msra.mxu0 %v1779
  %v1781 = vand.u32 %v58, 4294901760
  %1782 = vmatpush.msra.mxu0 %v1781
  %v1783 = vand.u32 %v56, 4294901760
  %1784 = vmatpush.msra.mxu0 %v1783
  %v1785 = vand.u32 %v1390, 4294901760
  %v1786 = vsub.f32 %v1390, %v1785
  %v1787 = vand.u32 %v1786, 4294901760
  %1788 = vmatmul.f32.gmra.mxu0 %v1787
  %v1789 = vpop.f32.mrf.mxu0
  %v1790 = vadd.f32 %v1759, %v1789
  %1791 = vdwg.mxu0
  %1792 = vmatpush.msra.mxu0 0.0
  %1793 = vmatpush.msra.mxu0 0.0
  %1794 = vmatpush.msra.mxu0 0.0
  %1795 = vmatpush.msra.mxu0 0.0
  %1796 = vmatpush.msra.mxu0 0.0
  %1797 = vmatpush.msra.mxu0 0.0
  %1798 = vmatpush.msra.mxu0 0.0
  %1799 = vmatpush.msra.mxu0 0.0
  %v1800 = vand.u32 %v70, 4294901760
  %v1801 = vsub.f32 %v70, %v1800
  %v1802 = vand.u32 %v1801, 4294901760
  %1803 = vmatpush.msra.mxu0 %v1802
  %v1804 = vand.u32 %v68, 4294901760
  %v1805 = vsub.f32 %v68, %v1804
  %v1806 = vand.u32 %v1805, 4294901760
  %1807 = vmatpush.msra.mxu0 %v1806
  %v1808 = vand.u32 %v66, 4294901760
  %v1809 = vsub.f32 %v66, %v1808
  %v1810 = vand.u32 %v1809, 4294901760
  %1811 = vmatpush.msra.mxu0 %v1810
  %v1812 = vand.u32 %v64, 4294901760
  %v1813 = vsub.f32 %v64, %v1812
  %v1814 = vand.u32 %v1813, 4294901760
  %1815 = vmatpush.msra.mxu0 %v1814
  %v1816 = vand.u32 %v62, 4294901760
  %v1817 = vsub.f32 %v62, %v1816
  %v1818 = vand.u32 %v1817, 4294901760
  %1819 = vmatpush.msra.mxu0 %v1818
  %v1820 = vand.u32 %v60, 4294901760
  %v1821 = vsub.f32 %v60, %v1820
  %v1822 = vand.u32 %v1821, 4294901760
  %1823 = vmatpush.msra.mxu0 %v1822
  %v1824 = vand.u32 %v58, 4294901760
  %v1825 = vsub.f32 %v58, %v1824
  %v1826 = vand.u32 %v1825, 4294901760
  %1827 = vmatpush.msra.mxu0 %v1826
  %v1828 = vand.u32 %v56, 4294901760
  %v1829 = vsub.f32 %v56, %v1828
  %v1830 = vand.u32 %v1829, 4294901760
  %1831 = vmatpush.msra.mxu0 %v1830
  %v1832 = vand.u32 %v1390, 4294901760
  %1833 = vmatmul.f32.gmra.mxu0 %v1832
  %v1834 = vpop.f32.mrf.mxu0
  %v1835 = vadd.f32 %v1790, %v1834
  %1836 = vdwg.mxu0
  %1837 = vmatpush.msra.mxu0 0.0
  %1838 = vmatpush.msra.mxu0 0.0
  %1839 = vmatpush.msra.mxu0 0.0
  %1840 = vmatpush.msra.mxu0 0.0
  %1841 = vmatpush.msra.mxu0 0.0
  %1842 = vmatpush.msra.mxu0 0.0
  %1843 = vmatpush.msra.mxu0 0.0
  %1844 = vmatpush.msra.mxu0 0.0
  %v1845 = vand.u32 %v70, 4294901760
  %1846 = vmatpush.msra.mxu0 %v1845
  %v1847 = vand.u32 %v68, 4294901760
  %1848 = vmatpush.msra.mxu0 %v1847
  %v1849 = vand.u32 %v66, 4294901760
  %1850 = vmatpush.msra.mxu0 %v1849
  %v1851 = vand.u32 %v64, 4294901760
  %1852 = vmatpush.msra.mxu0 %v1851
  %v1853 = vand.u32 %v62, 4294901760
  %1854 = vmatpush.msra.mxu0 %v1853
  %v1855 = vand.u32 %v60, 4294901760
  %1856 = vmatpush.msra.mxu0 %v1855
  %v1857 = vand.u32 %v58, 4294901760
  %1858 = vmatpush.msra.mxu0 %v1857
  %v1859 = vand.u32 %v56, 4294901760
  %1860 = vmatpush.msra.mxu0 %v1859
  %v1861 = vand.u32 %v1390, 4294901760
  %1862 = vmatmul.f32.gmra.mxu0 %v1861
  %v1863 = vpop.f32.mrf.mxu0
  %v1864 = vadd.f32 %v1835, %v1863
  %1865 = vdwg.mxu0
  %v1866 = vadd.f32 %v456, %v1627
  %v1867 = vadd.f32 %v832, %v1864
  %v1868 = vxor.u32 %v1866, 2147483648
  %v1869 = vxor.u32 %v1867, 2147483648
  %v1870 = vmul.f32 %v1868, 1.442695
  %v1871 = vpow.pop %v1870
  %v1872 = vmul.f32 %v1869, 1.442695
  %v1873 = vpow.pop %v1872
  %v1874 = vadd.f32 %v1871, 1.0
  %v1875 = vadd.f32 %v1873, 1.0
  %v1876 = vrcp.pop %v1874
  %v1877 = vmul.f32 %v1874, %v1876
  %v1878 = vsub.f32 1.0, %v1877
  %v1879 = vmul.f32 %v1876, %v1878
  %v1880 = vadd.f32 %v1876, %v1879
  %vm1881 = vweird.f32 %v1874
  %vm1882 = vweird.f32 %v1876
  %vm1883 = vmor %vm1881, %vm1882
  %v1884 = vsel %vm1883, %v1876, %v1880
  %v1885 = vand.u32 2147483647, %v1874
  %vm1886 = vcmp.eq.f32.partialorder %v1885, 8.507059e+37
  %v1887 = vand.u32 %v1874, 2147483648
  %v1888 = vor.u32 1.1754944e-38, %v1887
  %v1889 = vsel %vm1886, %v1888, %v1884
  %v1890 = vmul.f32 1.0, %v1889
  %v1891 = vrcp.pop %v1875
  %v1892 = vmul.f32 %v1875, %v1891
  %v1893 = vsub.f32 1.0, %v1892
  %v1894 = vmul.f32 %v1891, %v1893
  %v1895 = vadd.f32 %v1891, %v1894
  %vm1896 = vweird.f32 %v1875
  %vm1897 = vweird.f32 %v1891
  %vm1898 = vmor %vm1896, %vm1897
  %v1899 = vsel %vm1898, %v1891, %v1895
  %v1900 = vand.u32 2147483647, %v1875
  %vm1901 = vcmp.eq.f32.partialorder %v1900, 8.507059e+37
  %v1902 = vand.u32 %v1875, 2147483648
  %v1903 = vor.u32 1.1754944e-38, %v1902
  %v1904 = vsel %vm1901, %v1903, %v1899
  %v1905 = vmul.f32 1.0, %v1904
  %v1906 = vmul.f32 %v1905, 2.0
  %v1907 = vsub.f32 %v1906, 1.0
  %v1908 = vmul.f32 %v1890, %v1384
  %v1909 = vmul.f32 %v1890, %v1907
  %1911 = vrot.lane.b32.xlu0 %v1909, 64
  %v1912 = vpop.permute.xlu0 %1911
  %v1914 = vadd.f32 %v1908, %v1912
  %v1915 = vtanh.pop %v1914
  %v1916 = vmul.f32 %v1905, %v1915
  %1918 = vrot.lane.b32.xlu0 %v1916, 64
  %v1919 = vpop.permute.xlu0 %1918
  %v1920 = vsel %vm858, %v1919, 0
  %1922 = vmatpush.msra.mxu0 0.0
  %1923 = vmatpush.msra.mxu0 0.0
  %1924 = vmatpush.msra.mxu0 0.0
  %1925 = vmatpush.msra.mxu0 0.0
  %1926 = vmatpush.msra.mxu0 0.0
  %1927 = vmatpush.msra.mxu0 0.0
  %1928 = vmatpush.msra.mxu0 0.0
  %1929 = vmatpush.msra.mxu0 0.0
  %v1930 = vand.u32 %v69, 4294901760
  %1931 = vmatpush.msra.mxu0 %v1930
  %v1932 = vand.u32 %v67, 4294901760
  %1933 = vmatpush.msra.mxu0 %v1932
  %v1934 = vand.u32 %v65, 4294901760
  %1935 = vmatpush.msra.mxu0 %v1934
  %v1936 = vand.u32 %v63, 4294901760
  %1937 = vmatpush.msra.mxu0 %v1936
  %v1938 = vand.u32 %v61, 4294901760
  %1939 = vmatpush.msra.mxu0 %v1938
  %v1940 = vand.u32 %v59, 4294901760
  %1941 = vmatpush.msra.mxu0 %v1940
  %v1942 = vand.u32 %v57, 4294901760
  %1943 = vmatpush.msra.mxu0 %v1942
  %v1944 = vand.u32 %v55, 4294901760
  %1945 = vmatpush.msra.mxu0 %v1944
  %v1946 = vand.u32 %v1920, 4294901760
  %v1947 = vsub.f32 %v1920, %v1946
  %v1948 = vand.u32 %v1947, 4294901760
  %v1949 = vsub.f32 %v1947, %v1948
  %v1950 = vand.u32 %v1949, 4294901760
  %1951 = vmatmul.f32.gmra.mxu0 %v1950
  %v1952 = vpop.f32.mrf.mxu0
  %v1953 = vadd.f32 0.0, %v1952
  %1954 = vdwg.mxu0
  %1955 = vmatpush.msra.mxu0 0.0
  %1956 = vmatpush.msra.mxu0 0.0
  %1957 = vmatpush.msra.mxu0 0.0
  %1958 = vmatpush.msra.mxu0 0.0
  %1959 = vmatpush.msra.mxu0 0.0
  %1960 = vmatpush.msra.mxu0 0.0
  %1961 = vmatpush.msra.mxu0 0.0
  %1962 = vmatpush.msra.mxu0 0.0
  %v1963 = vand.u32 %v69, 4294901760
  %v1964 = vsub.f32 %v69, %v1963
  %v1965 = vand.u32 %v1964, 4294901760
  %v1966 = vsub.f32 %v1964, %v1965
  %v1967 = vand.u32 %v1966, 4294901760
  %1968 = vmatpush.msra.mxu0 %v1967
  %v1969 = vand.u32 %v67, 4294901760
  %v1970 = vsub.f32 %v67, %v1969
  %v1971 = vand.u32 %v1970, 4294901760
  %v1972 = vsub.f32 %v1970, %v1971
  %v1973 = vand.u32 %v1972, 4294901760
  %1974 = vmatpush.msra.mxu0 %v1973
  %v1975 = vand.u32 %v65, 4294901760
  %v1976 = vsub.f32 %v65, %v1975
  %v1977 = vand.u32 %v1976, 4294901760
  %v1978 = vsub.f32 %v1976, %v1977
  %v1979 = vand.u32 %v1978, 4294901760
  %1980 = vmatpush.msra.mxu0 %v1979
  %v1981 = vand.u32 %v63, 4294901760
  %v1982 = vsub.f32 %v63, %v1981
  %v1983 = vand.u32 %v1982, 4294901760
  %v1984 = vsub.f32 %v1982, %v1983
  %v1985 = vand.u32 %v1984, 4294901760
  %1986 = vmatpush.msra.mxu0 %v1985
  %v1987 = vand.u32 %v61, 4294901760
  %v1988 = vsub.f32 %v61, %v1987
  %v1989 = vand.u32 %v1988, 4294901760
  %v1990 = vsub.f32 %v1988, %v1989
  %v1991 = vand.u32 %v1990, 4294901760
  %1992 = vmatpush.msra.mxu0 %v1991
  %v1993 = vand.u32 %v59, 4294901760
  %v1994 = vsub.f32 %v59, %v1993
  %v1995 = vand.u32 %v1994, 4294901760
  %v1996 = vsub.f32 %v1994, %v1995
  %v1997 = vand.u32 %v1996, 4294901760
  %1998 = vmatpush.msra.mxu0 %v1997
  %v1999 = vand.u32 %v57, 4294901760
  %v2000 = vsub.f32 %v57, %v1999
  %v2001 = vand.u32 %v2000, 4294901760
  %v2002 = vsub.f32 %v2000, %v2001
  %v2003 = vand.u32 %v2002, 4294901760
  %2004 = vmatpush.msra.mxu0 %v2003
  %v2005 = vand.u32 %v55, 4294901760
  %v2006 = vsub.f32 %v55, %v2005
  %v2007 = vand.u32 %v2006, 4294901760
  %v2008 = vsub.f32 %v2006, %v2007
  %v2009 = vand.u32 %v2008, 4294901760
  %2010 = vmatpush.msra.mxu0 %v2009
  %v2011 = vand.u32 %v1920, 4294901760
  %2012 = vmatmul.f32.gmra.mxu0 %v2011
  %v2013 = vpop.f32.mrf.mxu0
  %v2014 = vadd.f32 %v1953, %v2013
  %2015 = vdwg.mxu0
  %2016 = vmatpush.msra.mxu0 0.0
  %2017 = vmatpush.msra.mxu0 0.0
  %2018 = vmatpush.msra.mxu0 0.0
  %2019 = vmatpush.msra.mxu0 0.0
  %2020 = vmatpush.msra.mxu0 0.0
  %2021 = vmatpush.msra.mxu0 0.0
  %2022 = vmatpush.msra.mxu0 0.0
  %2023 = vmatpush.msra.mxu0 0.0
  %v2024 = vand.u32 %v69, 4294901760
  %v2025 = vsub.f32 %v69, %v2024
  %2026 = vmatpush.msra.mxu0 %v2025
  %v2027 = vand.u32 %v67, 4294901760
  %v2028 = vsub.f32 %v67, %v2027
  %2029 = vmatpush.msra.mxu0 %v2028
  %v2030 = vand.u32 %v65, 4294901760
  %v2031 = vsub.f32 %v65, %v2030
  %2032 = vmatpush.msra.mxu0 %v2031
  %v2033 = vand.u32 %v63, 4294901760
  %v2034 = vsub.f32 %v63, %v2033
  %2035 = vmatpush.msra.mxu0 %v2034
  %v2036 = vand.u32 %v61, 4294901760
  %v2037 = vsub.f32 %v61, %v2036
  %2038 = vmatpush.msra.mxu0 %v2037
  %v2039 = vand.u32 %v59, 4294901760
  %v2040 = vsub.f32 %v59, %v2039
  %2041 = vmatpush.msra.mxu0 %v2040
  %v2042 = vand.u32 %v57, 4294901760
  %v2043 = vsub.f32 %v57, %v2042
  %2044 = vmatpush.msra.mxu0 %v2043
  %v2045 = vand.u32 %v55, 4294901760
  %v2046 = vsub.f32 %v55, %v2045
  %2047 = vmatpush.msra.mxu0 %v2046
  %v2048 = vand.u32 %v1920, 4294901760
  %v2049 = vsub.f32 %v1920, %v2048
  %2050 = vmatmul.f32.gmra.mxu0 %v2049
  %v2051 = vpop.f32.mrf.mxu0
  %v2052 = vadd.f32 %v2014, %v2051
  %2053 = vdwg.mxu0
  %2054 = vmatpush.msra.mxu0 0.0
  %2055 = vmatpush.msra.mxu0 0.0
  %2056 = vmatpush.msra.mxu0 0.0
  %2057 = vmatpush.msra.mxu0 0.0
  %2058 = vmatpush.msra.mxu0 0.0
  %2059 = vmatpush.msra.mxu0 0.0
  %2060 = vmatpush.msra.mxu0 0.0
  %2061 = vmatpush.msra.mxu0 0.0
  %v2062 = vand.u32 %v69, 4294901760
  %2063 = vmatpush.msra.mxu0 %v2062
  %v2064 = vand.u32 %v67, 4294901760
  %2065 = vmatpush.msra.mxu0 %v2064
  %v2066 = vand.u32 %v65, 4294901760
  %2067 = vmatpush.msra.mxu0 %v2066
  %v2068 = vand.u32 %v63, 4294901760
  %2069 = vmatpush.msra.mxu0 %v2068
  %v2070 = vand.u32 %v61, 4294901760
  %2071 = vmatpush.msra.mxu0 %v2070
  %v2072 = vand.u32 %v59, 4294901760
  %2073 = vmatpush.msra.mxu0 %v2072
  %v2074 = vand.u32 %v57, 4294901760
  %2075 = vmatpush.msra.mxu0 %v2074
  %v2076 = vand.u32 %v55, 4294901760
  %2077 = vmatpush.msra.mxu0 %v2076
  %v2078 = vand.u32 %v1920, 4294901760
  %v2079 = vsub.f32 %v1920, %v2078
  %v2080 = vand.u32 %v2079, 4294901760
  %2081 = vmatmul.f32.gmra.mxu0 %v2080
  %v2082 = vpop.f32.mrf.mxu0
  %v2083 = vadd.f32 %v2052, %v2082
  %2084 = vdwg.mxu0
  %2085 = vmatpush.msra.mxu0 0.0
  %2086 = vmatpush.msra.mxu0 0.0
  %2087 = vmatpush.msra.mxu0 0.0
  %2088 = vmatpush.msra.mxu0 0.0
  %2089 = vmatpush.msra.mxu0 0.0
  %2090 = vmatpush.msra.mxu0 0.0
  %2091 = vmatpush.msra.mxu0 0.0
  %2092 = vmatpush.msra.mxu0 0.0
  %v2093 = vand.u32 %v69, 4294901760
  %v2094 = vsub.f32 %v69, %v2093
  %v2095 = vand.u32 %v2094, 4294901760
  %2096 = vmatpush.msra.mxu0 %v2095
  %v2097 = vand.u32 %v67, 4294901760
  %v2098 = vsub.f32 %v67, %v2097
  %v2099 = vand.u32 %v2098, 4294901760
  %2100 = vmatpush.msra.mxu0 %v2099
  %v2101 = vand.u32 %v65, 4294901760
  %v2102 = vsub.f32 %v65, %v2101
  %v2103 = vand.u32 %v2102, 4294901760
  %2104 = vmatpush.msra.mxu0 %v2103
  %v2105 = vand.u32 %v63, 4294901760
  %v2106 = vsub.f32 %v63, %v2105
  %v2107 = vand.u32 %v2106, 4294901760
  %2108 = vmatpush.msra.mxu0 %v2107
  %v2109 = vand.u32 %v61, 4294901760
  %v2110 = vsub.f32 %v61, %v2109
  %v2111 = vand.u32 %v2110, 4294901760
  %2112 = vmatpush.msra.mxu0 %v2111
  %v2113 = vand.u32 %v59, 4294901760
  %v2114 = vsub.f32 %v59, %v2113
  %v2115 = vand.u32 %v2114, 4294901760
  %2116 = vmatpush.msra.mxu0 %v2115
  %v2117 = vand.u32 %v57, 4294901760
  %v2118 = vsub.f32 %v57, %v2117
  %v2119 = vand.u32 %v2118, 4294901760
  %2120 = vmatpush.msra.mxu0 %v2119
  %v2121 = vand.u32 %v55, 4294901760
  %v2122 = vsub.f32 %v55, %v2121
  %v2123 = vand.u32 %v2122, 4294901760
  %2124 = vmatpush.msra.mxu0 %v2123
  %v2125 = vand.u32 %v1920, 4294901760
  %2126 = vmatmul.f32.gmra.mxu0 %v2125
  %v2127 = vpop.f32.mrf.mxu0
  %v2128 = vadd.f32 %v2083, %v2127
  %2129 = vdwg.mxu0
  %2130 = vmatpush.msra.mxu0 0.0
  %2131 = vmatpush.msra.mxu0 0.0
  %2132 = vmatpush.msra.mxu0 0.0
  %2133 = vmatpush.msra.mxu0 0.0
  %2134 = vmatpush.msra.mxu0 0.0
  %2135 = vmatpush.msra.mxu0 0.0
  %2136 = vmatpush.msra.mxu0 0.0
  %2137 = vmatpush.msra.mxu0 0.0
  %v2138 = vand.u32 %v69, 4294901760
  %2139 = vmatpush.msra.mxu0 %v2138
  %v2140 = vand.u32 %v67, 4294901760
  %2141 = vmatpush.msra.mxu0 %v2140
  %v2142 = vand.u32 %v65, 4294901760
  %2143 = vmatpush.msra.mxu0 %v2142
  %v2144 = vand.u32 %v63, 4294901760
  %2145 = vmatpush.msra.mxu0 %v2144
  %v2146 = vand.u32 %v61, 4294901760
  %2147 = vmatpush.msra.mxu0 %v2146
  %v2148 = vand.u32 %v59, 4294901760
  %2149 = vmatpush.msra.mxu0 %v2148
  %v2150 = vand.u32 %v57, 4294901760
  %2151 = vmatpush.msra.mxu0 %v2150
  %v2152 = vand.u32 %v55, 4294901760
  %2153 = vmatpush.msra.mxu0 %v2152
  %v2154 = vand.u32 %v1920, 4294901760
  %2155 = vmatmul.f32.gmra.mxu0 %v2154
  %v2156 = vpop.f32.mrf.mxu0
  %v2157 = vadd.f32 %v2128, %v2156
  %2158 = vdwg.mxu0
  %2159 = vmatpush.msra.mxu0 0.0
  %2160 = vmatpush.msra.mxu0 0.0
  %2161 = vmatpush.msra.mxu0 0.0
  %2162 = vmatpush.msra.mxu0 0.0
  %2163 = vmatpush.msra.mxu0 0.0
  %2164 = vmatpush.msra.mxu0 0.0
  %2165 = vmatpush.msra.mxu0 0.0
  %2166 = vmatpush.msra.mxu0 0.0
  %v2167 = vand.u32 %v70, 4294901760
  %2168 = vmatpush.msra.mxu0 %v2167
  %v2169 = vand.u32 %v68, 4294901760
  %2170 = vmatpush.msra.mxu0 %v2169
  %v2171 = vand.u32 %v66, 4294901760
  %2172 = vmatpush.msra.mxu0 %v2171
  %v2173 = vand.u32 %v64, 4294901760
  %2174 = vmatpush.msra.mxu0 %v2173
  %v2175 = vand.u32 %v62, 4294901760
  %2176 = vmatpush.msra.mxu0 %v2175
  %v2177 = vand.u32 %v60, 4294901760
  %2178 = vmatpush.msra.mxu0 %v2177
  %v2179 = vand.u32 %v58, 4294901760
  %2180 = vmatpush.msra.mxu0 %v2179
  %v2181 = vand.u32 %v56, 4294901760
  %2182 = vmatpush.msra.mxu0 %v2181
  %v2183 = vand.u32 %v1920, 4294901760
  %v2184 = vsub.f32 %v1920, %v2183
  %v2185 = vand.u32 %v2184, 4294901760
  %v2186 = vsub.f32 %v2184, %v2185
  %v2187 = vand.u32 %v2186, 4294901760
  %2188 = vmatmul.f32.gmra.mxu0 %v2187
  %v2189 = vpop.f32.mrf.mxu0
  %v2190 = vadd.f32 0.0, %v2189
  %2191 = vdwg.mxu0
  %2192 = vmatpush.msra.mxu0 0.0
  %2193 = vmatpush.msra.mxu0 0.0
  %2194 = vmatpush.msra.mxu0 0.0
  %2195 = vmatpush.msra.mxu0 0.0
  %2196 = vmatpush.msra.mxu0 0.0
  %2197 = vmatpush.msra.mxu0 0.0
  %2198 = vmatpush.msra.mxu0 0.0
  %2199 = vmatpush.msra.mxu0 0.0
  %v2200 = vand.u32 %v70, 4294901760
  %v2201 = vsub.f32 %v70, %v2200
  %v2202 = vand.u32 %v2201, 4294901760
  %v2203 = vsub.f32 %v2201, %v2202
  %v2204 = vand.u32 %v2203, 4294901760
  %2205 = vmatpush.msra.mxu0 %v2204
  %v2206 = vand.u32 %v68, 4294901760
  %v2207 = vsub.f32 %v68, %v2206
  %v2208 = vand.u32 %v2207, 4294901760
  %v2209 = vsub.f32 %v2207, %v2208
  %v2210 = vand.u32 %v2209, 4294901760
  %2211 = vmatpush.msra.mxu0 %v2210
  %v2212 = vand.u32 %v66, 4294901760
  %v2213 = vsub.f32 %v66, %v2212
  %v2214 = vand.u32 %v2213, 4294901760
  %v2215 = vsub.f32 %v2213, %v2214
  %v2216 = vand.u32 %v2215, 4294901760
  %2217 = vmatpush.msra.mxu0 %v2216
  %v2218 = vand.u32 %v64, 4294901760
  %v2219 = vsub.f32 %v64, %v2218
  %v2220 = vand.u32 %v2219, 4294901760
  %v2221 = vsub.f32 %v2219, %v2220
  %v2222 = vand.u32 %v2221, 4294901760
  %2223 = vmatpush.msra.mxu0 %v2222
  %v2224 = vand.u32 %v62, 4294901760
  %v2225 = vsub.f32 %v62, %v2224
  %v2226 = vand.u32 %v2225, 4294901760
  %v2227 = vsub.f32 %v2225, %v2226
  %v2228 = vand.u32 %v2227, 4294901760
  %2229 = vmatpush.msra.mxu0 %v2228
  %v2230 = vand.u32 %v60, 4294901760
  %v2231 = vsub.f32 %v60, %v2230
  %v2232 = vand.u32 %v2231, 4294901760
  %v2233 = vsub.f32 %v2231, %v2232
  %v2234 = vand.u32 %v2233, 4294901760
  %2235 = vmatpush.msra.mxu0 %v2234
  %v2236 = vand.u32 %v58, 4294901760
  %v2237 = vsub.f32 %v58, %v2236
  %v2238 = vand.u32 %v2237, 4294901760
  %v2239 = vsub.f32 %v2237, %v2238
  %v2240 = vand.u32 %v2239, 4294901760
  %2241 = vmatpush.msra.mxu0 %v2240
  %v2242 = vand.u32 %v56, 4294901760
  %v2243 = vsub.f32 %v56, %v2242
  %v2244 = vand.u32 %v2243, 4294901760
  %v2245 = vsub.f32 %v2243, %v2244
  %v2246 = vand.u32 %v2245, 4294901760
  %2247 = vmatpush.msra.mxu0 %v2246
  %v2248 = vand.u32 %v1920, 4294901760
  %2249 = vmatmul.f32.gmra.mxu0 %v2248
  %v2250 = vpop.f32.mrf.mxu0
  %v2251 = vadd.f32 %v2190, %v2250
  %2252 = vdwg.mxu0
  %2253 = vmatpush.msra.mxu0 0.0
  %2254 = vmatpush.msra.mxu0 0.0
  %2255 = vmatpush.msra.mxu0 0.0
  %2256 = vmatpush.msra.mxu0 0.0
  %2257 = vmatpush.msra.mxu0 0.0
  %2258 = vmatpush.msra.mxu0 0.0
  %2259 = vmatpush.msra.mxu0 0.0
  %2260 = vmatpush.msra.mxu0 0.0
  %v2261 = vand.u32 %v70, 4294901760
  %v2262 = vsub.f32 %v70, %v2261
  %2263 = vmatpush.msra.mxu0 %v2262
  %v2264 = vand.u32 %v68, 4294901760
  %v2265 = vsub.f32 %v68, %v2264
  %2266 = vmatpush.msra.mxu0 %v2265
  %v2267 = vand.u32 %v66, 4294901760
  %v2268 = vsub.f32 %v66, %v2267
  %2269 = vmatpush.msra.mxu0 %v2268
  %v2270 = vand.u32 %v64, 4294901760
  %v2271 = vsub.f32 %v64, %v2270
  %2272 = vmatpush.msra.mxu0 %v2271
  %v2273 = vand.u32 %v62, 4294901760
  %v2274 = vsub.f32 %v62, %v2273
  %2275 = vmatpush.msra.mxu0 %v2274
  %v2276 = vand.u32 %v60, 4294901760
  %v2277 = vsub.f32 %v60, %v2276
  %2278 = vmatpush.msra.mxu0 %v2277
  %v2279 = vand.u32 %v58, 4294901760
  %v2280 = vsub.f32 %v58, %v2279
  %2281 = vmatpush.msra.mxu0 %v2280
  %v2282 = vand.u32 %v56, 4294901760
  %v2283 = vsub.f32 %v56, %v2282
  %2284 = vmatpush.msra.mxu0 %v2283
  %v2285 = vand.u32 %v1920, 4294901760
  %v2286 = vsub.f32 %v1920, %v2285
  %2287 = vmatmul.f32.gmra.mxu0 %v2286
  %v2288 = vpop.f32.mrf.mxu0
  %v2289 = vadd.f32 %v2251, %v2288
  %2290 = vdwg.mxu0
  %2291 = vmatpush.msra.mxu0 0.0
  %2292 = vmatpush.msra.mxu0 0.0
  %2293 = vmatpush.msra.mxu0 0.0
  %2294 = vmatpush.msra.mxu0 0.0
  %2295 = vmatpush.msra.mxu0 0.0
  %2296 = vmatpush.msra.mxu0 0.0
  %2297 = vmatpush.msra.mxu0 0.0
  %2298 = vmatpush.msra.mxu0 0.0
  %v2299 = vand.u32 %v70, 4294901760
  %2300 = vmatpush.msra.mxu0 %v2299
  %v2301 = vand.u32 %v68, 4294901760
  %2302 = vmatpush.msra.mxu0 %v2301
  %v2303 = vand.u32 %v66, 4294901760
  %2304 = vmatpush.msra.mxu0 %v2303
  %v2305 = vand.u32 %v64, 4294901760
  %2306 = vmatpush.msra.mxu0 %v2305
  %v2307 = vand.u32 %v62, 4294901760
  %2308 = vmatpush.msra.mxu0 %v2307
  %v2309 = vand.u32 %v60, 4294901760
  %2310 = vmatpush.msra.mxu0 %v2309
  %v2311 = vand.u32 %v58, 4294901760
  %2312 = vmatpush.msra.mxu0 %v2311
  %v2313 = vand.u32 %v56, 4294901760
  %2314 = vmatpush.msra.mxu0 %v2313
  %v2315 = vand.u32 %v1920, 4294901760
  %v2316 = vsub.f32 %v1920, %v2315
  %v2317 = vand.u32 %v2316, 4294901760
  %2318 = vmatmul.f32.gmra.mxu0 %v2317
  %v2319 = vpop.f32.mrf.mxu0
  %v2320 = vadd.f32 %v2289, %v2319
  %2321 = vdwg.mxu0
  %2322 = vmatpush.msra.mxu0 0.0
  %2323 = vmatpush.msra.mxu0 0.0
  %2324 = vmatpush.msra.mxu0 0.0
  %2325 = vmatpush.msra.mxu0 0.0
  %2326 = vmatpush.msra.mxu0 0.0
  %2327 = vmatpush.msra.mxu0 0.0
  %2328 = vmatpush.msra.mxu0 0.0
  %2329 = vmatpush.msra.mxu0 0.0
  %v2330 = vand.u32 %v70, 4294901760
  %v2331 = vsub.f32 %v70, %v2330
  %v2332 = vand.u32 %v2331, 4294901760
  %2333 = vmatpush.msra.mxu0 %v2332
  %v2334 = vand.u32 %v68, 4294901760
  %v2335 = vsub.f32 %v68, %v2334
  %v2336 = vand.u32 %v2335, 4294901760
  %2337 = vmatpush.msra.mxu0 %v2336
  %v2338 = vand.u32 %v66, 4294901760
  %v2339 = vsub.f32 %v66, %v2338
  %v2340 = vand.u32 %v2339, 4294901760
  %2341 = vmatpush.msra.mxu0 %v2340
  %v2342 = vand.u32 %v64, 4294901760
  %v2343 = vsub.f32 %v64, %v2342
  %v2344 = vand.u32 %v2343, 4294901760
  %2345 = vmatpush.msra.mxu0 %v2344
  %v2346 = vand.u32 %v62, 4294901760
  %v2347 = vsub.f32 %v62, %v2346
  %v2348 = vand.u32 %v2347, 4294901760
  %2349 = vmatpush.msra.mxu0 %v2348
  %v2350 = vand.u32 %v60, 4294901760
  %v2351 = vsub.f32 %v60, %v2350
  %v2352 = vand.u32 %v2351, 4294901760
  %2353 = vmatpush.msra.mxu0 %v2352
  %v2354 = vand.u32 %v58, 4294901760
  %v2355 = vsub.f32 %v58, %v2354
  %v2356 = vand.u32 %v2355, 4294901760
  %2357 = vmatpush.msra.mxu0 %v2356
  %v2358 = vand.u32 %v56, 4294901760
  %v2359 = vsub.f32 %v56, %v2358
  %v2360 = vand.u32 %v2359, 4294901760
  %2361 = vmatpush.msra.mxu0 %v2360
  %v2362 = vand.u32 %v1920, 4294901760
  %2363 = vmatmul.f32.gmra.mxu0 %v2362
  %v2364 = vpop.f32.mrf.mxu0
  %v2365 = vadd.f32 %v2320, %v2364
  %2366 = vdwg.mxu0
  %2367 = vmatpush.msra.mxu0 0.0
  %2368 = vmatpush.msra.mxu0 0.0
  %2369 = vmatpush.msra.mxu0 0.0
  %2370 = vmatpush.msra.mxu0 0.0
  %2371 = vmatpush.msra.mxu0 0.0
  %2372 = vmatpush.msra.mxu0 0.0
  %2373 = vmatpush.msra.mxu0 0.0
  %2374 = vmatpush.msra.mxu0 0.0
  %v2375 = vand.u32 %v70, 4294901760
  %2376 = vmatpush.msra.mxu0 %v2375
  %v2377 = vand.u32 %v68, 4294901760
  %2378 = vmatpush.msra.mxu0 %v2377
  %v2379 = vand.u32 %v66, 4294901760
  %2380 = vmatpush.msra.mxu0 %v2379
  %v2381 = vand.u32 %v64, 4294901760
  %2382 = vmatpush.msra.mxu0 %v2381
  %v2383 = vand.u32 %v62, 4294901760
  %2384 = vmatpush.msra.mxu0 %v2383
  %v2385 = vand.u32 %v60, 4294901760
  %2386 = vmatpush.msra.mxu0 %v2385
  %v2387 = vand.u32 %v58, 4294901760
  %2388 = vmatpush.msra.mxu0 %v2387
  %v2389 = vand.u32 %v56, 4294901760
  %2390 = vmatpush.msra.mxu0 %v2389
  %v2391 = vand.u32 %v1920, 4294901760
  %2392 = vmatmul.f32.gmra.mxu0 %v2391
  %v2393 = vpop.f32.mrf.mxu0
  %v2394 = vadd.f32 %v2365, %v2393
  %2395 = vdwg.mxu0
  %v2396 = vadd.f32 %v460, %v2157
  %v2397 = vadd.f32 %v836, %v2394
  %v2398 = vxor.u32 %v2396, 2147483648
  %v2399 = vxor.u32 %v2397, 2147483648
  %v2400 = vmul.f32 %v2398, 1.442695
  %v2401 = vpow.pop %v2400
  %v2402 = vmul.f32 %v2399, 1.442695
  %v2403 = vpow.pop %v2402
  %v2404 = vadd.f32 %v2401, 1.0
  %v2405 = vadd.f32 %v2403, 1.0
  %v2406 = vrcp.pop %v2404
  %v2407 = vmul.f32 %v2404, %v2406
  %v2408 = vsub.f32 1.0, %v2407
  %v2409 = vmul.f32 %v2406, %v2408
  %v2410 = vadd.f32 %v2406, %v2409
  %vm2411 = vweird.f32 %v2404
  %vm2412 = vweird.f32 %v2406
  %vm2413 = vmor %vm2411, %vm2412
  %v2414 = vsel %vm2413, %v2406, %v2410
  %v2415 = vand.u32 2147483647, %v2404
  %vm2416 = vcmp.eq.f32.partialorder %v2415, 8.507059e+37
  %v2417 = vand.u32 %v2404, 2147483648
  %v2418 = vor.u32 1.1754944e-38, %v2417
  %v2419 = vsel %vm2416, %v2418, %v2414
  %v2420 = vmul.f32 1.0, %v2419
  %v2421 = vrcp.pop %v2405
  %v2422 = vmul.f32 %v2405, %v2421
  %v2423 = vsub.f32 1.0, %v2422
  %v2424 = vmul.f32 %v2421, %v2423
  %v2425 = vadd.f32 %v2421, %v2424
  %vm2426 = vweird.f32 %v2405
  %vm2427 = vweird.f32 %v2421
  %vm2428 = vmor %vm2426, %vm2427
  %v2429 = vsel %vm2428, %v2421, %v2425
  %v2430 = vand.u32 2147483647, %v2405
  %vm2431 = vcmp.eq.f32.partialorder %v2430, 8.507059e+37
  %v2432 = vand.u32 %v2405, 2147483648
  %v2433 = vor.u32 1.1754944e-38, %v2432
  %v2434 = vsel %vm2431, %v2433, %v2429
  %v2435 = vmul.f32 1.0, %v2434
  %v2436 = vmul.f32 %v2435, 2.0
  %v2437 = vsub.f32 %v2436, 1.0
  %v2438 = vmul.f32 %v2420, %v1914
  %v2439 = vmul.f32 %v2420, %v2437
  %2441 = vrot.lane.b32.xlu0 %v2439, 64
  %v2442 = vpop.permute.xlu0 %2441
  %v2444 = vadd.f32 %v2438, %v2442
  %v2445 = vtanh.pop %v2444
  %v2446 = vmul.f32 %v2435, %v2445
  %2448 = vrot.lane.b32.xlu0 %v2446, 64
  %v2449 = vpop.permute.xlu0 %2448
  %v2450 = vsel %vm858, %v2449, 0
  %2452 = vmatpush.msra.mxu0 0.0
  %2453 = vmatpush.msra.mxu0 0.0
  %2454 = vmatpush.msra.mxu0 0.0
  %2455 = vmatpush.msra.mxu0 0.0
  %2456 = vmatpush.msra.mxu0 0.0
  %2457 = vmatpush.msra.mxu0 0.0
  %2458 = vmatpush.msra.mxu0 0.0
  %2459 = vmatpush.msra.mxu0 0.0
  %v2460 = vand.u32 %v69, 4294901760
  %2461 = vmatpush.msra.mxu0 %v2460
  %v2462 = vand.u32 %v67, 4294901760
  %2463 = vmatpush.msra.mxu0 %v2462
  %v2464 = vand.u32 %v65, 4294901760
  %2465 = vmatpush.msra.mxu0 %v2464
  %v2466 = vand.u32 %v63, 4294901760
  %2467 = vmatpush.msra.mxu0 %v2466
  %v2468 = vand.u32 %v61, 4294901760
  %2469 = vmatpush.msra.mxu0 %v2468
  %v2470 = vand.u32 %v59, 4294901760
  %2471 = vmatpush.msra.mxu0 %v2470
  %v2472 = vand.u32 %v57, 4294901760
  %2473 = vmatpush.msra.mxu0 %v2472
  %v2474 = vand.u32 %v55, 4294901760
  %2475 = vmatpush.msra.mxu0 %v2474
  %v2476 = vand.u32 %v2450, 4294901760
  %v2477 = vsub.f32 %v2450, %v2476
  %v2478 = vand.u32 %v2477, 4294901760
  %v2479 = vsub.f32 %v2477, %v2478
  %v2480 = vand.u32 %v2479, 4294901760
  %2481 = vmatmul.f32.gmra.mxu0 %v2480
  %v2482 = vpop.f32.mrf.mxu0
  %v2483 = vadd.f32 0.0, %v2482
  %2484 = vdwg.mxu0
  %2485 = vmatpush.msra.mxu0 0.0
  %2486 = vmatpush.msra.mxu0 0.0
  %2487 = vmatpush.msra.mxu0 0.0
  %2488 = vmatpush.msra.mxu0 0.0
  %2489 = vmatpush.msra.mxu0 0.0
  %2490 = vmatpush.msra.mxu0 0.0
  %2491 = vmatpush.msra.mxu0 0.0
  %2492 = vmatpush.msra.mxu0 0.0
  %v2493 = vand.u32 %v69, 4294901760
  %v2494 = vsub.f32 %v69, %v2493
  %v2495 = vand.u32 %v2494, 4294901760
  %v2496 = vsub.f32 %v2494, %v2495
  %v2497 = vand.u32 %v2496, 4294901760
  %2498 = vmatpush.msra.mxu0 %v2497
  %v2499 = vand.u32 %v67, 4294901760
  %v2500 = vsub.f32 %v67, %v2499
  %v2501 = vand.u32 %v2500, 4294901760
  %v2502 = vsub.f32 %v2500, %v2501
  %v2503 = vand.u32 %v2502, 4294901760
  %2504 = vmatpush.msra.mxu0 %v2503
  %v2505 = vand.u32 %v65, 4294901760
  %v2506 = vsub.f32 %v65, %v2505
  %v2507 = vand.u32 %v2506, 4294901760
  %v2508 = vsub.f32 %v2506, %v2507
  %v2509 = vand.u32 %v2508, 4294901760
  %2510 = vmatpush.msra.mxu0 %v2509
  %v2511 = vand.u32 %v63, 4294901760
  %v2512 = vsub.f32 %v63, %v2511
  %v2513 = vand.u32 %v2512, 4294901760
  %v2514 = vsub.f32 %v2512, %v2513
  %v2515 = vand.u32 %v2514, 4294901760
  %2516 = vmatpush.msra.mxu0 %v2515
  %v2517 = vand.u32 %v61, 4294901760
  %v2518 = vsub.f32 %v61, %v2517
  %v2519 = vand.u32 %v2518, 4294901760
  %v2520 = vsub.f32 %v2518, %v2519
  %v2521 = vand.u32 %v2520, 4294901760
  %2522 = vmatpush.msra.mxu0 %v2521
  %v2523 = vand.u32 %v59, 4294901760
  %v2524 = vsub.f32 %v59, %v2523
  %v2525 = vand.u32 %v2524, 4294901760
  %v2526 = vsub.f32 %v2524, %v2525
  %v2527 = vand.u32 %v2526, 4294901760
  %2528 = vmatpush.msra.mxu0 %v2527
  %v2529 = vand.u32 %v57, 4294901760
  %v2530 = vsub.f32 %v57, %v2529
  %v2531 = vand.u32 %v2530, 4294901760
  %v2532 = vsub.f32 %v2530, %v2531
  %v2533 = vand.u32 %v2532, 4294901760
  %2534 = vmatpush.msra.mxu0 %v2533
  %v2535 = vand.u32 %v55, 4294901760
  %v2536 = vsub.f32 %v55, %v2535
  %v2537 = vand.u32 %v2536, 4294901760
  %v2538 = vsub.f32 %v2536, %v2537
  %v2539 = vand.u32 %v2538, 4294901760
  %2540 = vmatpush.msra.mxu0 %v2539
  %v2541 = vand.u32 %v2450, 4294901760
  %2542 = vmatmul.f32.gmra.mxu0 %v2541
  %v2543 = vpop.f32.mrf.mxu0
  %v2544 = vadd.f32 %v2483, %v2543
  %2545 = vdwg.mxu0
  %2546 = vmatpush.msra.mxu0 0.0
  %2547 = vmatpush.msra.mxu0 0.0
  %2548 = vmatpush.msra.mxu0 0.0
  %2549 = vmatpush.msra.mxu0 0.0
  %2550 = vmatpush.msra.mxu0 0.0
  %2551 = vmatpush.msra.mxu0 0.0
  %2552 = vmatpush.msra.mxu0 0.0
  %2553 = vmatpush.msra.mxu0 0.0
  %v2554 = vand.u32 %v69, 4294901760
  %v2555 = vsub.f32 %v69, %v2554
  %2556 = vmatpush.msra.mxu0 %v2555
  %v2557 = vand.u32 %v67, 4294901760
  %v2558 = vsub.f32 %v67, %v2557
  %2559 = vmatpush.msra.mxu0 %v2558
  %v2560 = vand.u32 %v65, 4294901760
  %v2561 = vsub.f32 %v65, %v2560
  %2562 = vmatpush.msra.mxu0 %v2561
  %v2563 = vand.u32 %v63, 4294901760
  %v2564 = vsub.f32 %v63, %v2563
  %2565 = vmatpush.msra.mxu0 %v2564
  %v2566 = vand.u32 %v61, 4294901760
  %v2567 = vsub.f32 %v61, %v2566
  %2568 = vmatpush.msra.mxu0 %v2567
  %v2569 = vand.u32 %v59, 4294901760
  %v2570 = vsub.f32 %v59, %v2569
  %2571 = vmatpush.msra.mxu0 %v2570
  %v2572 = vand.u32 %v57, 4294901760
  %v2573 = vsub.f32 %v57, %v2572
  %2574 = vmatpush.msra.mxu0 %v2573
  %v2575 = vand.u32 %v55, 4294901760
  %v2576 = vsub.f32 %v55, %v2575
  %2577 = vmatpush.msra.mxu0 %v2576
  %v2578 = vand.u32 %v2450, 4294901760
  %v2579 = vsub.f32 %v2450, %v2578
  %2580 = vmatmul.f32.gmra.mxu0 %v2579
  %v2581 = vpop.f32.mrf.mxu0
  %v2582 = vadd.f32 %v2544, %v2581
  %2583 = vdwg.mxu0
  %2584 = vmatpush.msra.mxu0 0.0
  %2585 = vmatpush.msra.mxu0 0.0
  %2586 = vmatpush.msra.mxu0 0.0
  %2587 = vmatpush.msra.mxu0 0.0
  %2588 = vmatpush.msra.mxu0 0.0
  %2589 = vmatpush.msra.mxu0 0.0
  %2590 = vmatpush.msra.mxu0 0.0
  %2591 = vmatpush.msra.mxu0 0.0
  %v2592 = vand.u32 %v69, 4294901760
  %2593 = vmatpush.msra.mxu0 %v2592
  %v2594 = vand.u32 %v67, 4294901760
  %2595 = vmatpush.msra.mxu0 %v2594
  %v2596 = vand.u32 %v65, 4294901760
  %2597 = vmatpush.msra.mxu0 %v2596
  %v2598 = vand.u32 %v63, 4294901760
  %2599 = vmatpush.msra.mxu0 %v2598
  %v2600 = vand.u32 %v61, 4294901760
  %2601 = vmatpush.msra.mxu0 %v2600
  %v2602 = vand.u32 %v59, 4294901760
  %2603 = vmatpush.msra.mxu0 %v2602
  %v2604 = vand.u32 %v57, 4294901760
  %2605 = vmatpush.msra.mxu0 %v2604
  %v2606 = vand.u32 %v55, 4294901760
  %2607 = vmatpush.msra.mxu0 %v2606
  %v2608 = vand.u32 %v2450, 4294901760
  %v2609 = vsub.f32 %v2450, %v2608
  %v2610 = vand.u32 %v2609, 4294901760
  %2611 = vmatmul.f32.gmra.mxu0 %v2610
  %v2612 = vpop.f32.mrf.mxu0
  %v2613 = vadd.f32 %v2582, %v2612
  %2614 = vdwg.mxu0
  %2615 = vmatpush.msra.mxu0 0.0
  %2616 = vmatpush.msra.mxu0 0.0
  %2617 = vmatpush.msra.mxu0 0.0
  %2618 = vmatpush.msra.mxu0 0.0
  %2619 = vmatpush.msra.mxu0 0.0
  %2620 = vmatpush.msra.mxu0 0.0
  %2621 = vmatpush.msra.mxu0 0.0
  %2622 = vmatpush.msra.mxu0 0.0
  %v2623 = vand.u32 %v69, 4294901760
  %v2624 = vsub.f32 %v69, %v2623
  %v2625 = vand.u32 %v2624, 4294901760
  %2626 = vmatpush.msra.mxu0 %v2625
  %v2627 = vand.u32 %v67, 4294901760
  %v2628 = vsub.f32 %v67, %v2627
  %v2629 = vand.u32 %v2628, 4294901760
  %2630 = vmatpush.msra.mxu0 %v2629
  %v2631 = vand.u32 %v65, 4294901760
  %v2632 = vsub.f32 %v65, %v2631
  %v2633 = vand.u32 %v2632, 4294901760
  %2634 = vmatpush.msra.mxu0 %v2633
  %v2635 = vand.u32 %v63, 4294901760
  %v2636 = vsub.f32 %v63, %v2635
  %v2637 = vand.u32 %v2636, 4294901760
  %2638 = vmatpush.msra.mxu0 %v2637
  %v2639 = vand.u32 %v61, 4294901760
  %v2640 = vsub.f32 %v61, %v2639
  %v2641 = vand.u32 %v2640, 4294901760
  %2642 = vmatpush.msra.mxu0 %v2641
  %v2643 = vand.u32 %v59, 4294901760
  %v2644 = vsub.f32 %v59, %v2643
  %v2645 = vand.u32 %v2644, 4294901760
  %2646 = vmatpush.msra.mxu0 %v2645
  %v2647 = vand.u32 %v57, 4294901760
  %v2648 = vsub.f32 %v57, %v2647
  %v2649 = vand.u32 %v2648, 4294901760
  %2650 = vmatpush.msra.mxu0 %v2649
  %v2651 = vand.u32 %v55, 4294901760
  %v2652 = vsub.f32 %v55, %v2651
  %v2653 = vand.u32 %v2652, 4294901760
  %2654 = vmatpush.msra.mxu0 %v2653
  %v2655 = vand.u32 %v2450, 4294901760
  %2656 = vmatmul.f32.gmra.mxu0 %v2655
  %v2657 = vpop.f32.mrf.mxu0
  %v2658 = vadd.f32 %v2613, %v2657
  %2659 = vdwg.mxu0
  %2660 = vmatpush.msra.mxu0 0.0
  %2661 = vmatpush.msra.mxu0 0.0
  %2662 = vmatpush.msra.mxu0 0.0
  %2663 = vmatpush.msra.mxu0 0.0
  %2664 = vmatpush.msra.mxu0 0.0
  %2665 = vmatpush.msra.mxu0 0.0
  %2666 = vmatpush.msra.mxu0 0.0
  %2667 = vmatpush.msra.mxu0 0.0
  %v2668 = vand.u32 %v69, 4294901760
  %2669 = vmatpush.msra.mxu0 %v2668
  %v2670 = vand.u32 %v67, 4294901760
  %2671 = vmatpush.msra.mxu0 %v2670
  %v2672 = vand.u32 %v65, 4294901760
  %2673 = vmatpush.msra.mxu0 %v2672
  %v2674 = vand.u32 %v63, 4294901760
  %2675 = vmatpush.msra.mxu0 %v2674
  %v2676 = vand.u32 %v61, 4294901760
  %2677 = vmatpush.msra.mxu0 %v2676
  %v2678 = vand.u32 %v59, 4294901760
  %2679 = vmatpush.msra.mxu0 %v2678
  %v2680 = vand.u32 %v57, 4294901760
  %2681 = vmatpush.msra.mxu0 %v2680
  %v2682 = vand.u32 %v55, 4294901760
  %2683 = vmatpush.msra.mxu0 %v2682
  %v2684 = vand.u32 %v2450, 4294901760
  %2685 = vmatmul.f32.gmra.mxu0 %v2684
  %v2686 = vpop.f32.mrf.mxu0
  %v2687 = vadd.f32 %v2658, %v2686
  %2688 = vdwg.mxu0
  %2689 = vmatpush.msra.mxu0 0.0
  %2690 = vmatpush.msra.mxu0 0.0
  %2691 = vmatpush.msra.mxu0 0.0
  %2692 = vmatpush.msra.mxu0 0.0
  %2693 = vmatpush.msra.mxu0 0.0
  %2694 = vmatpush.msra.mxu0 0.0
  %2695 = vmatpush.msra.mxu0 0.0
  %2696 = vmatpush.msra.mxu0 0.0
  %v2697 = vand.u32 %v70, 4294901760
  %2698 = vmatpush.msra.mxu0 %v2697
  %v2699 = vand.u32 %v68, 4294901760
  %2700 = vmatpush.msra.mxu0 %v2699
  %v2701 = vand.u32 %v66, 4294901760
  %2702 = vmatpush.msra.mxu0 %v2701
  %v2703 = vand.u32 %v64, 4294901760
  %2704 = vmatpush.msra.mxu0 %v2703
  %v2705 = vand.u32 %v62, 4294901760
  %2706 = vmatpush.msra.mxu0 %v2705
  %v2707 = vand.u32 %v60, 4294901760
  %2708 = vmatpush.msra.mxu0 %v2707
  %v2709 = vand.u32 %v58, 4294901760
  %2710 = vmatpush.msra.mxu0 %v2709
  %v2711 = vand.u32 %v56, 4294901760
  %2712 = vmatpush.msra.mxu0 %v2711
  %v2713 = vand.u32 %v2450, 4294901760
  %v2714 = vsub.f32 %v2450, %v2713
  %v2715 = vand.u32 %v2714, 4294901760
  %v2716 = vsub.f32 %v2714, %v2715
  %v2717 = vand.u32 %v2716, 4294901760
  %2718 = vmatmul.f32.gmra.mxu0 %v2717
  %v2719 = vpop.f32.mrf.mxu0
  %v2720 = vadd.f32 0.0, %v2719
  %2721 = vdwg.mxu0
  %2722 = vmatpush.msra.mxu0 0.0
  %2723 = vmatpush.msra.mxu0 0.0
  %2724 = vmatpush.msra.mxu0 0.0
  %2725 = vmatpush.msra.mxu0 0.0
  %2726 = vmatpush.msra.mxu0 0.0
  %2727 = vmatpush.msra.mxu0 0.0
  %2728 = vmatpush.msra.mxu0 0.0
  %2729 = vmatpush.msra.mxu0 0.0
  %v2730 = vand.u32 %v70, 4294901760
  %v2731 = vsub.f32 %v70, %v2730
  %v2732 = vand.u32 %v2731, 4294901760
  %v2733 = vsub.f32 %v2731, %v2732
  %v2734 = vand.u32 %v2733, 4294901760
  %2735 = vmatpush.msra.mxu0 %v2734
  %v2736 = vand.u32 %v68, 4294901760
  %v2737 = vsub.f32 %v68, %v2736
  %v2738 = vand.u32 %v2737, 4294901760
  %v2739 = vsub.f32 %v2737, %v2738
  %v2740 = vand.u32 %v2739, 4294901760
  %2741 = vmatpush.msra.mxu0 %v2740
  %v2742 = vand.u32 %v66, 4294901760
  %v2743 = vsub.f32 %v66, %v2742
  %v2744 = vand.u32 %v2743, 4294901760
  %v2745 = vsub.f32 %v2743, %v2744
  %v2746 = vand.u32 %v2745, 4294901760
  %2747 = vmatpush.msra.mxu0 %v2746
  %v2748 = vand.u32 %v64, 4294901760
  %v2749 = vsub.f32 %v64, %v2748
  %v2750 = vand.u32 %v2749, 4294901760
  %v2751 = vsub.f32 %v2749, %v2750
  %v2752 = vand.u32 %v2751, 4294901760
  %2753 = vmatpush.msra.mxu0 %v2752
  %v2754 = vand.u32 %v62, 4294901760
  %v2755 = vsub.f32 %v62, %v2754
  %v2756 = vand.u32 %v2755, 4294901760
  %v2757 = vsub.f32 %v2755, %v2756
  %v2758 = vand.u32 %v2757, 4294901760
  %2759 = vmatpush.msra.mxu0 %v2758
  %v2760 = vand.u32 %v60, 4294901760
  %v2761 = vsub.f32 %v60, %v2760
  %v2762 = vand.u32 %v2761, 4294901760
  %v2763 = vsub.f32 %v2761, %v2762
  %v2764 = vand.u32 %v2763, 4294901760
  %2765 = vmatpush.msra.mxu0 %v2764
  %v2766 = vand.u32 %v58, 4294901760
  %v2767 = vsub.f32 %v58, %v2766
  %v2768 = vand.u32 %v2767, 4294901760
  %v2769 = vsub.f32 %v2767, %v2768
  %v2770 = vand.u32 %v2769, 4294901760
  %2771 = vmatpush.msra.mxu0 %v2770
  %v2772 = vand.u32 %v56, 4294901760
  %v2773 = vsub.f32 %v56, %v2772
  %v2774 = vand.u32 %v2773, 4294901760
  %v2775 = vsub.f32 %v2773, %v2774
  %v2776 = vand.u32 %v2775, 4294901760
  %2777 = vmatpush.msra.mxu0 %v2776
  %v2778 = vand.u32 %v2450, 4294901760
  %2779 = vmatmul.f32.gmra.mxu0 %v2778
  %v2780 = vpop.f32.mrf.mxu0
  %v2781 = vadd.f32 %v2720, %v2780
  %2782 = vdwg.mxu0
  %2783 = vmatpush.msra.mxu0 0.0
  %2784 = vmatpush.msra.mxu0 0.0
  %2785 = vmatpush.msra.mxu0 0.0
  %2786 = vmatpush.msra.mxu0 0.0
  %2787 = vmatpush.msra.mxu0 0.0
  %2788 = vmatpush.msra.mxu0 0.0
  %2789 = vmatpush.msra.mxu0 0.0
  %2790 = vmatpush.msra.mxu0 0.0
  %v2791 = vand.u32 %v70, 4294901760
  %v2792 = vsub.f32 %v70, %v2791
  %2793 = vmatpush.msra.mxu0 %v2792
  %v2794 = vand.u32 %v68, 4294901760
  %v2795 = vsub.f32 %v68, %v2794
  %2796 = vmatpush.msra.mxu0 %v2795
  %v2797 = vand.u32 %v66, 4294901760
  %v2798 = vsub.f32 %v66, %v2797
  %2799 = vmatpush.msra.mxu0 %v2798
  %v2800 = vand.u32 %v64, 4294901760
  %v2801 = vsub.f32 %v64, %v2800
  %2802 = vmatpush.msra.mxu0 %v2801
  %v2803 = vand.u32 %v62, 4294901760
  %v2804 = vsub.f32 %v62, %v2803
  %2805 = vmatpush.msra.mxu0 %v2804
  %v2806 = vand.u32 %v60, 4294901760
  %v2807 = vsub.f32 %v60, %v2806
  %2808 = vmatpush.msra.mxu0 %v2807
  %v2809 = vand.u32 %v58, 4294901760
  %v2810 = vsub.f32 %v58, %v2809
  %2811 = vmatpush.msra.mxu0 %v2810
  %v2812 = vand.u32 %v56, 4294901760
  %v2813 = vsub.f32 %v56, %v2812
  %2814 = vmatpush.msra.mxu0 %v2813
  %v2815 = vand.u32 %v2450, 4294901760
  %v2816 = vsub.f32 %v2450, %v2815
  %2817 = vmatmul.f32.gmra.mxu0 %v2816
  %v2818 = vpop.f32.mrf.mxu0
  %v2819 = vadd.f32 %v2781, %v2818
  %2820 = vdwg.mxu0
  %2821 = vmatpush.msra.mxu0 0.0
  %2822 = vmatpush.msra.mxu0 0.0
  %2823 = vmatpush.msra.mxu0 0.0
  %2824 = vmatpush.msra.mxu0 0.0
  %2825 = vmatpush.msra.mxu0 0.0
  %2826 = vmatpush.msra.mxu0 0.0
  %2827 = vmatpush.msra.mxu0 0.0
  %2828 = vmatpush.msra.mxu0 0.0
  %v2829 = vand.u32 %v70, 4294901760
  %2830 = vmatpush.msra.mxu0 %v2829
  %v2831 = vand.u32 %v68, 4294901760
  %2832 = vmatpush.msra.mxu0 %v2831
  %v2833 = vand.u32 %v66, 4294901760
  %2834 = vmatpush.msra.mxu0 %v2833
  %v2835 = vand.u32 %v64, 4294901760
  %2836 = vmatpush.msra.mxu0 %v2835
  %v2837 = vand.u32 %v62, 4294901760
  %2838 = vmatpush.msra.mxu0 %v2837
  %v2839 = vand.u32 %v60, 4294901760
  %2840 = vmatpush.msra.mxu0 %v2839
  %v2841 = vand.u32 %v58, 4294901760
  %2842 = vmatpush.msra.mxu0 %v2841
  %v2843 = vand.u32 %v56, 4294901760
  %2844 = vmatpush.msra.mxu0 %v2843
  %v2845 = vand.u32 %v2450, 4294901760
  %v2846 = vsub.f32 %v2450, %v2845
  %v2847 = vand.u32 %v2846, 4294901760
  %2848 = vmatmul.f32.gmra.mxu0 %v2847
  %v2849 = vpop.f32.mrf.mxu0
  %v2850 = vadd.f32 %v2819, %v2849
  %2851 = vdwg.mxu0
  %2852 = vmatpush.msra.mxu0 0.0
  %2853 = vmatpush.msra.mxu0 0.0
  %2854 = vmatpush.msra.mxu0 0.0
  %2855 = vmatpush.msra.mxu0 0.0
  %2856 = vmatpush.msra.mxu0 0.0
  %2857 = vmatpush.msra.mxu0 0.0
  %2858 = vmatpush.msra.mxu0 0.0
  %2859 = vmatpush.msra.mxu0 0.0
  %v2860 = vand.u32 %v70, 4294901760
  %v2861 = vsub.f32 %v70, %v2860
  %v2862 = vand.u32 %v2861, 4294901760
  %2863 = vmatpush.msra.mxu0 %v2862
  %v2864 = vand.u32 %v68, 4294901760
  %v2865 = vsub.f32 %v68, %v2864
  %v2866 = vand.u32 %v2865, 4294901760
  %2867 = vmatpush.msra.mxu0 %v2866
  %v2868 = vand.u32 %v66, 4294901760
  %v2869 = vsub.f32 %v66, %v2868
  %v2870 = vand.u32 %v2869, 4294901760
  %2871 = vmatpush.msra.mxu0 %v2870
  %v2872 = vand.u32 %v64, 4294901760
  %v2873 = vsub.f32 %v64, %v2872
  %v2874 = vand.u32 %v2873, 4294901760
  %2875 = vmatpush.msra.mxu0 %v2874
  %v2876 = vand.u32 %v62, 4294901760
  %v2877 = vsub.f32 %v62, %v2876
  %v2878 = vand.u32 %v2877, 4294901760
  %2879 = vmatpush.msra.mxu0 %v2878
  %v2880 = vand.u32 %v60, 4294901760
  %v2881 = vsub.f32 %v60, %v2880
  %v2882 = vand.u32 %v2881, 4294901760
  %2883 = vmatpush.msra.mxu0 %v2882
  %v2884 = vand.u32 %v58, 4294901760
  %v2885 = vsub.f32 %v58, %v2884
  %v2886 = vand.u32 %v2885, 4294901760
  %2887 = vmatpush.msra.mxu0 %v2886
  %v2888 = vand.u32 %v56, 4294901760
  %v2889 = vsub.f32 %v56, %v2888
  %v2890 = vand.u32 %v2889, 4294901760
  %2891 = vmatpush.msra.mxu0 %v2890
  %v2892 = vand.u32 %v2450, 4294901760
  %2893 = vmatmul.f32.gmra.mxu0 %v2892
  %v2894 = vpop.f32.mrf.mxu0
  %v2895 = vadd.f32 %v2850, %v2894
  %2896 = vdwg.mxu0
  %2897 = vmatpush.msra.mxu0 0.0
  %2898 = vmatpush.msra.mxu0 0.0
  %2899 = vmatpush.msra.mxu0 0.0
  %2900 = vmatpush.msra.mxu0 0.0
  %2901 = vmatpush.msra.mxu0 0.0
  %2902 = vmatpush.msra.mxu0 0.0
  %2903 = vmatpush.msra.mxu0 0.0
  %2904 = vmatpush.msra.mxu0 0.0
  %v2905 = vand.u32 %v70, 4294901760
  %2906 = vmatpush.msra.mxu0 %v2905
  %v2907 = vand.u32 %v68, 4294901760
  %2908 = vmatpush.msra.mxu0 %v2907
  %v2909 = vand.u32 %v66, 4294901760
  %2910 = vmatpush.msra.mxu0 %v2909
  %v2911 = vand.u32 %v64, 4294901760
  %2912 = vmatpush.msra.mxu0 %v2911
  %v2913 = vand.u32 %v62, 4294901760
  %2914 = vmatpush.msra.mxu0 %v2913
  %v2915 = vand.u32 %v60, 4294901760
  %2916 = vmatpush.msra.mxu0 %v2915
  %v2917 = vand.u32 %v58, 4294901760
  %2918 = vmatpush.msra.mxu0 %v2917
  %v2919 = vand.u32 %v56, 4294901760
  %2920 = vmatpush.msra.mxu0 %v2919
  %v2921 = vand.u32 %v2450, 4294901760
  %2922 = vmatmul.f32.gmra.mxu0 %v2921
  %v2923 = vpop.f32.mrf.mxu0
  %v2924 = vadd.f32 %v2895, %v2923
  %2925 = vdwg.mxu0
  %v2926 = vadd.f32 %v464, %v2687
  %v2927 = vadd.f32 %v840, %v2924
  %v2928 = vxor.u32 %v2926, 2147483648
  %v2929 = vxor.u32 %v2927, 2147483648
  %v2930 = vmul.f32 %v2928, 1.442695
  %v2931 = vpow.pop %v2930
  %v2932 = vmul.f32 %v2929, 1.442695
  %v2933 = vpow.pop %v2932
  %v2934 = vadd.f32 %v2931, 1.0
  %v2935 = vadd.f32 %v2933, 1.0
  %v2936 = vrcp.pop %v2934
  %v2937 = vmul.f32 %v2934, %v2936
  %v2938 = vsub.f32 1.0, %v2937
  %v2939 = vmul.f32 %v2936, %v2938
  %v2940 = vadd.f32 %v2936, %v2939
  %vm2941 = vweird.f32 %v2934
  %vm2942 = vweird.f32 %v2936
  %vm2943 = vmor %vm2941, %vm2942
  %v2944 = vsel %vm2943, %v2936, %v2940
  %v2945 = vand.u32 2147483647, %v2934
  %vm2946 = vcmp.eq.f32.partialorder %v2945, 8.507059e+37
  %v2947 = vand.u32 %v2934, 2147483648
  %v2948 = vor.u32 1.1754944e-38, %v2947
  %v2949 = vsel %vm2946, %v2948, %v2944
  %v2950 = vmul.f32 1.0, %v2949
  %v2951 = vrcp.pop %v2935
  %v2952 = vmul.f32 %v2935, %v2951
  %v2953 = vsub.f32 1.0, %v2952
  %v2954 = vmul.f32 %v2951, %v2953
  %v2955 = vadd.f32 %v2951, %v2954
  %vm2956 = vweird.f32 %v2935
  %vm2957 = vweird.f32 %v2951
  %vm2958 = vmor %vm2956, %vm2957
  %v2959 = vsel %vm2958, %v2951, %v2955
  %v2960 = vand.u32 2147483647, %v2935
  %vm2961 = vcmp.eq.f32.partialorder %v2960, 8.507059e+37
  %v2962 = vand.u32 %v2935, 2147483648
  %v2963 = vor.u32 1.1754944e-38, %v2962
  %v2964 = vsel %vm2961, %v2963, %v2959
  %v2965 = vmul.f32 1.0, %v2964
  %v2966 = vmul.f32 %v2965, 2.0
  %v2967 = vsub.f32 %v2966, 1.0
  %v2968 = vmul.f32 %v2950, %v2444
  %v2969 = vmul.f32 %v2950, %v2967
  %2971 = vrot.lane.b32.xlu0 %v2969, 64
  %v2972 = vpop.permute.xlu0 %2971
  %v2974 = vadd.f32 %v2968, %v2972
  %v2975 = vtanh.pop %v2974
  %v2976 = vmul.f32 %v2965, %v2975
  %2978 = vrot.lane.b32.xlu0 %v2976, 64
  %v2979 = vpop.permute.xlu0 %2978
  %v2980 = vsel %vm858, %v2979, 0
  %2982 = vmatpush.msra.mxu0 0.0
  %2983 = vmatpush.msra.mxu0 0.0
  %2984 = vmatpush.msra.mxu0 0.0
  %2985 = vmatpush.msra.mxu0 0.0
  %2986 = vmatpush.msra.mxu0 0.0
  %2987 = vmatpush.msra.mxu0 0.0
  %2988 = vmatpush.msra.mxu0 0.0
  %2989 = vmatpush.msra.mxu0 0.0
  %v2990 = vand.u32 %v69, 4294901760
  %2991 = vmatpush.msra.mxu0 %v2990
  %v2992 = vand.u32 %v67, 4294901760
  %2993 = vmatpush.msra.mxu0 %v2992
  %v2994 = vand.u32 %v65, 4294901760
  %2995 = vmatpush.msra.mxu0 %v2994
  %v2996 = vand.u32 %v63, 4294901760
  %2997 = vmatpush.msra.mxu0 %v2996
  %v2998 = vand.u32 %v61, 4294901760
  %2999 = vmatpush.msra.mxu0 %v2998
  %v3000 = vand.u32 %v59, 4294901760
  %3001 = vmatpush.msra.mxu0 %v3000
  %v3002 = vand.u32 %v57, 4294901760
  %3003 = vmatpush.msra.mxu0 %v3002
  %v3004 = vand.u32 %v55, 4294901760
  %3005 = vmatpush.msra.mxu0 %v3004
  %v3006 = vand.u32 %v2980, 4294901760
  %v3007 = vsub.f32 %v2980, %v3006
  %v3008 = vand.u32 %v3007, 4294901760
  %v3009 = vsub.f32 %v3007, %v3008
  %v3010 = vand.u32 %v3009, 4294901760
  %3011 = vmatmul.f32.gmra.mxu0 %v3010
  %v3012 = vpop.f32.mrf.mxu0
  %v3013 = vadd.f32 0.0, %v3012
  %3014 = vdwg.mxu0
  %3015 = vmatpush.msra.mxu0 0.0
  %3016 = vmatpush.msra.mxu0 0.0
  %3017 = vmatpush.msra.mxu0 0.0
  %3018 = vmatpush.msra.mxu0 0.0
  %3019 = vmatpush.msra.mxu0 0.0
  %3020 = vmatpush.msra.mxu0 0.0
  %3021 = vmatpush.msra.mxu0 0.0
  %3022 = vmatpush.msra.mxu0 0.0
  %v3023 = vand.u32 %v69, 4294901760
  %v3024 = vsub.f32 %v69, %v3023
  %v3025 = vand.u32 %v3024, 4294901760
  %v3026 = vsub.f32 %v3024, %v3025
  %v3027 = vand.u32 %v3026, 4294901760
  %3028 = vmatpush.msra.mxu0 %v3027
  %v3029 = vand.u32 %v67, 4294901760
  %v3030 = vsub.f32 %v67, %v3029
  %v3031 = vand.u32 %v3030, 4294901760
  %v3032 = vsub.f32 %v3030, %v3031
  %v3033 = vand.u32 %v3032, 4294901760
  %3034 = vmatpush.msra.mxu0 %v3033
  %v3035 = vand.u32 %v65, 4294901760
  %v3036 = vsub.f32 %v65, %v3035
  %v3037 = vand.u32 %v3036, 4294901760
  %v3038 = vsub.f32 %v3036, %v3037
  %v3039 = vand.u32 %v3038, 4294901760
  %3040 = vmatpush.msra.mxu0 %v3039
  %v3041 = vand.u32 %v63, 4294901760
  %v3042 = vsub.f32 %v63, %v3041
  %v3043 = vand.u32 %v3042, 4294901760
  %v3044 = vsub.f32 %v3042, %v3043
  %v3045 = vand.u32 %v3044, 4294901760
  %3046 = vmatpush.msra.mxu0 %v3045
  %v3047 = vand.u32 %v61, 4294901760
  %v3048 = vsub.f32 %v61, %v3047
  %v3049 = vand.u32 %v3048, 4294901760
  %v3050 = vsub.f32 %v3048, %v3049
  %v3051 = vand.u32 %v3050, 4294901760
  %3052 = vmatpush.msra.mxu0 %v3051
  %v3053 = vand.u32 %v59, 4294901760
  %v3054 = vsub.f32 %v59, %v3053
  %v3055 = vand.u32 %v3054, 4294901760
  %v3056 = vsub.f32 %v3054, %v3055
  %v3057 = vand.u32 %v3056, 4294901760
  %3058 = vmatpush.msra.mxu0 %v3057
  %v3059 = vand.u32 %v57, 4294901760
  %v3060 = vsub.f32 %v57, %v3059
  %v3061 = vand.u32 %v3060, 4294901760
  %v3062 = vsub.f32 %v3060, %v3061
  %v3063 = vand.u32 %v3062, 4294901760
  %3064 = vmatpush.msra.mxu0 %v3063
  %v3065 = vand.u32 %v55, 4294901760
  %v3066 = vsub.f32 %v55, %v3065
  %v3067 = vand.u32 %v3066, 4294901760
  %v3068 = vsub.f32 %v3066, %v3067
  %v3069 = vand.u32 %v3068, 4294901760
  %3070 = vmatpush.msra.mxu0 %v3069
  %v3071 = vand.u32 %v2980, 4294901760
  %3072 = vmatmul.f32.gmra.mxu0 %v3071
  %v3073 = vpop.f32.mrf.mxu0
  %v3074 = vadd.f32 %v3013, %v3073
  %3075 = vdwg.mxu0
  %3076 = vmatpush.msra.mxu0 0.0
  %3077 = vmatpush.msra.mxu0 0.0
  %3078 = vmatpush.msra.mxu0 0.0
  %3079 = vmatpush.msra.mxu0 0.0
  %3080 = vmatpush.msra.mxu0 0.0
  %3081 = vmatpush.msra.mxu0 0.0
  %3082 = vmatpush.msra.mxu0 0.0
  %3083 = vmatpush.msra.mxu0 0.0
  %v3084 = vand.u32 %v69, 4294901760
  %v3085 = vsub.f32 %v69, %v3084
  %3086 = vmatpush.msra.mxu0 %v3085
  %v3087 = vand.u32 %v67, 4294901760
  %v3088 = vsub.f32 %v67, %v3087
  %3089 = vmatpush.msra.mxu0 %v3088
  %v3090 = vand.u32 %v65, 4294901760
  %v3091 = vsub.f32 %v65, %v3090
  %3092 = vmatpush.msra.mxu0 %v3091
  %v3093 = vand.u32 %v63, 4294901760
  %v3094 = vsub.f32 %v63, %v3093
  %3095 = vmatpush.msra.mxu0 %v3094
  %v3096 = vand.u32 %v61, 4294901760
  %v3097 = vsub.f32 %v61, %v3096
  %3098 = vmatpush.msra.mxu0 %v3097
  %v3099 = vand.u32 %v59, 4294901760
  %v3100 = vsub.f32 %v59, %v3099
  %3101 = vmatpush.msra.mxu0 %v3100
  %v3102 = vand.u32 %v57, 4294901760
  %v3103 = vsub.f32 %v57, %v3102
  %3104 = vmatpush.msra.mxu0 %v3103
  %v3105 = vand.u32 %v55, 4294901760
  %v3106 = vsub.f32 %v55, %v3105
  %3107 = vmatpush.msra.mxu0 %v3106
  %v3108 = vand.u32 %v2980, 4294901760
  %v3109 = vsub.f32 %v2980, %v3108
  %3110 = vmatmul.f32.gmra.mxu0 %v3109
  %v3111 = vpop.f32.mrf.mxu0
  %v3112 = vadd.f32 %v3074, %v3111
  %3113 = vdwg.mxu0
  %3114 = vmatpush.msra.mxu0 0.0
  %3115 = vmatpush.msra.mxu0 0.0
  %3116 = vmatpush.msra.mxu0 0.0
  %3117 = vmatpush.msra.mxu0 0.0
  %3118 = vmatpush.msra.mxu0 0.0
  %3119 = vmatpush.msra.mxu0 0.0
  %3120 = vmatpush.msra.mxu0 0.0
  %3121 = vmatpush.msra.mxu0 0.0
  %v3122 = vand.u32 %v69, 4294901760
  %3123 = vmatpush.msra.mxu0 %v3122
  %v3124 = vand.u32 %v67, 4294901760
  %3125 = vmatpush.msra.mxu0 %v3124
  %v3126 = vand.u32 %v65, 4294901760
  %3127 = vmatpush.msra.mxu0 %v3126
  %v3128 = vand.u32 %v63, 4294901760
  %3129 = vmatpush.msra.mxu0 %v3128
  %v3130 = vand.u32 %v61, 4294901760
  %3131 = vmatpush.msra.mxu0 %v3130
  %v3132 = vand.u32 %v59, 4294901760
  %3133 = vmatpush.msra.mxu0 %v3132
  %v3134 = vand.u32 %v57, 4294901760
  %3135 = vmatpush.msra.mxu0 %v3134
  %v3136 = vand.u32 %v55, 4294901760
  %3137 = vmatpush.msra.mxu0 %v3136
  %v3138 = vand.u32 %v2980, 4294901760
  %v3139 = vsub.f32 %v2980, %v3138
  %v3140 = vand.u32 %v3139, 4294901760
  %3141 = vmatmul.f32.gmra.mxu0 %v3140
  %v3142 = vpop.f32.mrf.mxu0
  %v3143 = vadd.f32 %v3112, %v3142
  %3144 = vdwg.mxu0
  %3145 = vmatpush.msra.mxu0 0.0
  %3146 = vmatpush.msra.mxu0 0.0
  %3147 = vmatpush.msra.mxu0 0.0
  %3148 = vmatpush.msra.mxu0 0.0
  %3149 = vmatpush.msra.mxu0 0.0
  %3150 = vmatpush.msra.mxu0 0.0
  %3151 = vmatpush.msra.mxu0 0.0
  %3152 = vmatpush.msra.mxu0 0.0
  %v3153 = vand.u32 %v69, 4294901760
  %v3154 = vsub.f32 %v69, %v3153
  %v3155 = vand.u32 %v3154, 4294901760
  %3156 = vmatpush.msra.mxu0 %v3155
  %v3157 = vand.u32 %v67, 4294901760
  %v3158 = vsub.f32 %v67, %v3157
  %v3159 = vand.u32 %v3158, 4294901760
  %3160 = vmatpush.msra.mxu0 %v3159
  %v3161 = vand.u32 %v65, 4294901760
  %v3162 = vsub.f32 %v65, %v3161
  %v3163 = vand.u32 %v3162, 4294901760
  %3164 = vmatpush.msra.mxu0 %v3163
  %v3165 = vand.u32 %v63, 4294901760
  %v3166 = vsub.f32 %v63, %v3165
  %v3167 = vand.u32 %v3166, 4294901760
  %3168 = vmatpush.msra.mxu0 %v3167
  %v3169 = vand.u32 %v61, 4294901760
  %v3170 = vsub.f32 %v61, %v3169
  %v3171 = vand.u32 %v3170, 4294901760
  %3172 = vmatpush.msra.mxu0 %v3171
  %v3173 = vand.u32 %v59, 4294901760
  %v3174 = vsub.f32 %v59, %v3173
  %v3175 = vand.u32 %v3174, 4294901760
  %3176 = vmatpush.msra.mxu0 %v3175
  %v3177 = vand.u32 %v57, 4294901760
  %v3178 = vsub.f32 %v57, %v3177
  %v3179 = vand.u32 %v3178, 4294901760
  %3180 = vmatpush.msra.mxu0 %v3179
  %v3181 = vand.u32 %v55, 4294901760
  %v3182 = vsub.f32 %v55, %v3181
  %v3183 = vand.u32 %v3182, 4294901760
  %3184 = vmatpush.msra.mxu0 %v3183
  %v3185 = vand.u32 %v2980, 4294901760
  %3186 = vmatmul.f32.gmra.mxu0 %v3185
  %v3187 = vpop.f32.mrf.mxu0
  %v3188 = vadd.f32 %v3143, %v3187
  %3189 = vdwg.mxu0
  %3190 = vmatpush.msra.mxu0 0.0
  %3191 = vmatpush.msra.mxu0 0.0
  %3192 = vmatpush.msra.mxu0 0.0
  %3193 = vmatpush.msra.mxu0 0.0
  %3194 = vmatpush.msra.mxu0 0.0
  %3195 = vmatpush.msra.mxu0 0.0
  %3196 = vmatpush.msra.mxu0 0.0
  %3197 = vmatpush.msra.mxu0 0.0
  %v3198 = vand.u32 %v69, 4294901760
  %3199 = vmatpush.msra.mxu0 %v3198
  %v3200 = vand.u32 %v67, 4294901760
  %3201 = vmatpush.msra.mxu0 %v3200
  %v3202 = vand.u32 %v65, 4294901760
  %3203 = vmatpush.msra.mxu0 %v3202
  %v3204 = vand.u32 %v63, 4294901760
  %3205 = vmatpush.msra.mxu0 %v3204
  %v3206 = vand.u32 %v61, 4294901760
  %3207 = vmatpush.msra.mxu0 %v3206
  %v3208 = vand.u32 %v59, 4294901760
  %3209 = vmatpush.msra.mxu0 %v3208
  %v3210 = vand.u32 %v57, 4294901760
  %3211 = vmatpush.msra.mxu0 %v3210
  %v3212 = vand.u32 %v55, 4294901760
  %3213 = vmatpush.msra.mxu0 %v3212
  %v3214 = vand.u32 %v2980, 4294901760
  %3215 = vmatmul.f32.gmra.mxu0 %v3214
  %v3216 = vpop.f32.mrf.mxu0
  %v3217 = vadd.f32 %v3188, %v3216
  %3218 = vdwg.mxu0
  %3219 = vmatpush.msra.mxu0 0.0
  %3220 = vmatpush.msra.mxu0 0.0
  %3221 = vmatpush.msra.mxu0 0.0
  %3222 = vmatpush.msra.mxu0 0.0
  %3223 = vmatpush.msra.mxu0 0.0
  %3224 = vmatpush.msra.mxu0 0.0
  %3225 = vmatpush.msra.mxu0 0.0
  %3226 = vmatpush.msra.mxu0 0.0
  %v3227 = vand.u32 %v70, 4294901760
  %3228 = vmatpush.msra.mxu0 %v3227
  %v3229 = vand.u32 %v68, 4294901760
  %3230 = vmatpush.msra.mxu0 %v3229
  %v3231 = vand.u32 %v66, 4294901760
  %3232 = vmatpush.msra.mxu0 %v3231
  %v3233 = vand.u32 %v64, 4294901760
  %3234 = vmatpush.msra.mxu0 %v3233
  %v3235 = vand.u32 %v62, 4294901760
  %3236 = vmatpush.msra.mxu0 %v3235
  %v3237 = vand.u32 %v60, 4294901760
  %3238 = vmatpush.msra.mxu0 %v3237
  %v3239 = vand.u32 %v58, 4294901760
  %3240 = vmatpush.msra.mxu0 %v3239
  %v3241 = vand.u32 %v56, 4294901760
  %3242 = vmatpush.msra.mxu0 %v3241
  %v3243 = vand.u32 %v2980, 4294901760
  %v3244 = vsub.f32 %v2980, %v3243
  %v3245 = vand.u32 %v3244, 4294901760
  %v3246 = vsub.f32 %v3244, %v3245
  %v3247 = vand.u32 %v3246, 4294901760
  %3248 = vmatmul.f32.gmra.mxu0 %v3247
  %v3249 = vpop.f32.mrf.mxu0
  %v3250 = vadd.f32 0.0, %v3249
  %3251 = vdwg.mxu0
  %3252 = vmatpush.msra.mxu0 0.0
  %3253 = vmatpush.msra.mxu0 0.0
  %3254 = vmatpush.msra.mxu0 0.0
  %3255 = vmatpush.msra.mxu0 0.0
  %3256 = vmatpush.msra.mxu0 0.0
  %3257 = vmatpush.msra.mxu0 0.0
  %3258 = vmatpush.msra.mxu0 0.0
  %3259 = vmatpush.msra.mxu0 0.0
  %v3260 = vand.u32 %v70, 4294901760
  %v3261 = vsub.f32 %v70, %v3260
  %v3262 = vand.u32 %v3261, 4294901760
  %v3263 = vsub.f32 %v3261, %v3262
  %v3264 = vand.u32 %v3263, 4294901760
  %3265 = vmatpush.msra.mxu0 %v3264
  %v3266 = vand.u32 %v68, 4294901760
  %v3267 = vsub.f32 %v68, %v3266
  %v3268 = vand.u32 %v3267, 4294901760
  %v3269 = vsub.f32 %v3267, %v3268
  %v3270 = vand.u32 %v3269, 4294901760
  %3271 = vmatpush.msra.mxu0 %v3270
  %v3272 = vand.u32 %v66, 4294901760
  %v3273 = vsub.f32 %v66, %v3272
  %v3274 = vand.u32 %v3273, 4294901760
  %v3275 = vsub.f32 %v3273, %v3274
  %v3276 = vand.u32 %v3275, 4294901760
  %3277 = vmatpush.msra.mxu0 %v3276
  %v3278 = vand.u32 %v64, 4294901760
  %v3279 = vsub.f32 %v64, %v3278
  %v3280 = vand.u32 %v3279, 4294901760
  %v3281 = vsub.f32 %v3279, %v3280
  %v3282 = vand.u32 %v3281, 4294901760
  %3283 = vmatpush.msra.mxu0 %v3282
  %v3284 = vand.u32 %v62, 4294901760
  %v3285 = vsub.f32 %v62, %v3284
  %v3286 = vand.u32 %v3285, 4294901760
  %v3287 = vsub.f32 %v3285, %v3286
  %v3288 = vand.u32 %v3287, 4294901760
  %3289 = vmatpush.msra.mxu0 %v3288
  %v3290 = vand.u32 %v60, 4294901760
  %v3291 = vsub.f32 %v60, %v3290
  %v3292 = vand.u32 %v3291, 4294901760
  %v3293 = vsub.f32 %v3291, %v3292
  %v3294 = vand.u32 %v3293, 4294901760
  %3295 = vmatpush.msra.mxu0 %v3294
  %v3296 = vand.u32 %v58, 4294901760
  %v3297 = vsub.f32 %v58, %v3296
  %v3298 = vand.u32 %v3297, 4294901760
  %v3299 = vsub.f32 %v3297, %v3298
  %v3300 = vand.u32 %v3299, 4294901760
  %3301 = vmatpush.msra.mxu0 %v3300
  %v3302 = vand.u32 %v56, 4294901760
  %v3303 = vsub.f32 %v56, %v3302
  %v3304 = vand.u32 %v3303, 4294901760
  %v3305 = vsub.f32 %v3303, %v3304
  %v3306 = vand.u32 %v3305, 4294901760
  %3307 = vmatpush.msra.mxu0 %v3306
  %v3308 = vand.u32 %v2980, 4294901760
  %3309 = vmatmul.f32.gmra.mxu0 %v3308
  %v3310 = vpop.f32.mrf.mxu0
  %v3311 = vadd.f32 %v3250, %v3310
  %3312 = vdwg.mxu0
  %3313 = vmatpush.msra.mxu0 0.0
  %3314 = vmatpush.msra.mxu0 0.0
  %3315 = vmatpush.msra.mxu0 0.0
  %3316 = vmatpush.msra.mxu0 0.0
  %3317 = vmatpush.msra.mxu0 0.0
  %3318 = vmatpush.msra.mxu0 0.0
  %3319 = vmatpush.msra.mxu0 0.0
  %3320 = vmatpush.msra.mxu0 0.0
  %v3321 = vand.u32 %v70, 4294901760
  %v3322 = vsub.f32 %v70, %v3321
  %3323 = vmatpush.msra.mxu0 %v3322
  %v3324 = vand.u32 %v68, 4294901760
  %v3325 = vsub.f32 %v68, %v3324
  %3326 = vmatpush.msra.mxu0 %v3325
  %v3327 = vand.u32 %v66, 4294901760
  %v3328 = vsub.f32 %v66, %v3327
  %3329 = vmatpush.msra.mxu0 %v3328
  %v3330 = vand.u32 %v64, 4294901760
  %v3331 = vsub.f32 %v64, %v3330
  %3332 = vmatpush.msra.mxu0 %v3331
  %v3333 = vand.u32 %v62, 4294901760
  %v3334 = vsub.f32 %v62, %v3333
  %3335 = vmatpush.msra.mxu0 %v3334
  %v3336 = vand.u32 %v60, 4294901760
  %v3337 = vsub.f32 %v60, %v3336
  %3338 = vmatpush.msra.mxu0 %v3337
  %v3339 = vand.u32 %v58, 4294901760
  %v3340 = vsub.f32 %v58, %v3339
  %3341 = vmatpush.msra.mxu0 %v3340
  %v3342 = vand.u32 %v56, 4294901760
  %v3343 = vsub.f32 %v56, %v3342
  %3344 = vmatpush.msra.mxu0 %v3343
  %v3345 = vand.u32 %v2980, 4294901760
  %v3346 = vsub.f32 %v2980, %v3345
  %3347 = vmatmul.f32.gmra.mxu0 %v3346
  %v3348 = vpop.f32.mrf.mxu0
  %v3349 = vadd.f32 %v3311, %v3348
  %3350 = vdwg.mxu0
  %3351 = vmatpush.msra.mxu0 0.0
  %3352 = vmatpush.msra.mxu0 0.0
  %3353 = vmatpush.msra.mxu0 0.0
  %3354 = vmatpush.msra.mxu0 0.0
  %3355 = vmatpush.msra.mxu0 0.0
  %3356 = vmatpush.msra.mxu0 0.0
  %3357 = vmatpush.msra.mxu0 0.0
  %3358 = vmatpush.msra.mxu0 0.0
  %v3359 = vand.u32 %v70, 4294901760
  %3360 = vmatpush.msra.mxu0 %v3359
  %v3361 = vand.u32 %v68, 4294901760
  %3362 = vmatpush.msra.mxu0 %v3361
  %v3363 = vand.u32 %v66, 4294901760
  %3364 = vmatpush.msra.mxu0 %v3363
  %v3365 = vand.u32 %v64, 4294901760
  %3366 = vmatpush.msra.mxu0 %v3365
  %v3367 = vand.u32 %v62, 4294901760
  %3368 = vmatpush.msra.mxu0 %v3367
  %v3369 = vand.u32 %v60, 4294901760
  %3370 = vmatpush.msra.mxu0 %v3369
  %v3371 = vand.u32 %v58, 4294901760
  %3372 = vmatpush.msra.mxu0 %v3371
  %v3373 = vand.u32 %v56, 4294901760
  %3374 = vmatpush.msra.mxu0 %v3373
  %v3375 = vand.u32 %v2980, 4294901760
  %v3376 = vsub.f32 %v2980, %v3375
  %v3377 = vand.u32 %v3376, 4294901760
  %3378 = vmatmul.f32.gmra.mxu0 %v3377
  %v3379 = vpop.f32.mrf.mxu0
  %v3380 = vadd.f32 %v3349, %v3379
  %3381 = vdwg.mxu0
  %3382 = vmatpush.msra.mxu0 0.0
  %3383 = vmatpush.msra.mxu0 0.0
  %3384 = vmatpush.msra.mxu0 0.0
  %3385 = vmatpush.msra.mxu0 0.0
  %3386 = vmatpush.msra.mxu0 0.0
  %3387 = vmatpush.msra.mxu0 0.0
  %3388 = vmatpush.msra.mxu0 0.0
  %3389 = vmatpush.msra.mxu0 0.0
  %v3390 = vand.u32 %v70, 4294901760
  %v3391 = vsub.f32 %v70, %v3390
  %v3392 = vand.u32 %v3391, 4294901760
  %3393 = vmatpush.msra.mxu0 %v3392
  %v3394 = vand.u32 %v68, 4294901760
  %v3395 = vsub.f32 %v68, %v3394
  %v3396 = vand.u32 %v3395, 4294901760
  %3397 = vmatpush.msra.mxu0 %v3396
  %v3398 = vand.u32 %v66, 4294901760
  %v3399 = vsub.f32 %v66, %v3398
  %v3400 = vand.u32 %v3399, 4294901760
  %3401 = vmatpush.msra.mxu0 %v3400
  %v3402 = vand.u32 %v64, 4294901760
  %v3403 = vsub.f32 %v64, %v3402
  %v3404 = vand.u32 %v3403, 4294901760
  %3405 = vmatpush.msra.mxu0 %v3404
  %v3406 = vand.u32 %v62, 4294901760
  %v3407 = vsub.f32 %v62, %v3406
  %v3408 = vand.u32 %v3407, 4294901760
  %3409 = vmatpush.msra.mxu0 %v3408
  %v3410 = vand.u32 %v60, 4294901760
  %v3411 = vsub.f32 %v60, %v3410
  %v3412 = vand.u32 %v3411, 4294901760
  %3413 = vmatpush.msra.mxu0 %v3412
  %v3414 = vand.u32 %v58, 4294901760
  %v3415 = vsub.f32 %v58, %v3414
  %v3416 = vand.u32 %v3415, 4294901760
  %3417 = vmatpush.msra.mxu0 %v3416
  %v3418 = vand.u32 %v56, 4294901760
  %v3419 = vsub.f32 %v56, %v3418
  %v3420 = vand.u32 %v3419, 4294901760
  %3421 = vmatpush.msra.mxu0 %v3420
  %v3422 = vand.u32 %v2980, 4294901760
  %3423 = vmatmul.f32.gmra.mxu0 %v3422
  %v3424 = vpop.f32.mrf.mxu0
  %v3425 = vadd.f32 %v3380, %v3424
  %3426 = vdwg.mxu0
  %3427 = vmatpush.msra.mxu0 0.0
  %3428 = vmatpush.msra.mxu0 0.0
  %3429 = vmatpush.msra.mxu0 0.0
  %3430 = vmatpush.msra.mxu0 0.0
  %3431 = vmatpush.msra.mxu0 0.0
  %3432 = vmatpush.msra.mxu0 0.0
  %3433 = vmatpush.msra.mxu0 0.0
  %3434 = vmatpush.msra.mxu0 0.0
  %v3435 = vand.u32 %v70, 4294901760
  %3436 = vmatpush.msra.mxu0 %v3435
  %v3437 = vand.u32 %v68, 4294901760
  %3438 = vmatpush.msra.mxu0 %v3437
  %v3439 = vand.u32 %v66, 4294901760
  %3440 = vmatpush.msra.mxu0 %v3439
  %v3441 = vand.u32 %v64, 4294901760
  %3442 = vmatpush.msra.mxu0 %v3441
  %v3443 = vand.u32 %v62, 4294901760
  %3444 = vmatpush.msra.mxu0 %v3443
  %v3445 = vand.u32 %v60, 4294901760
  %3446 = vmatpush.msra.mxu0 %v3445
  %v3447 = vand.u32 %v58, 4294901760
  %3448 = vmatpush.msra.mxu0 %v3447
  %v3449 = vand.u32 %v56, 4294901760
  %3450 = vmatpush.msra.mxu0 %v3449
  %v3451 = vand.u32 %v2980, 4294901760
  %3452 = vmatmul.f32.gmra.mxu0 %v3451
  %v3453 = vpop.f32.mrf.mxu0
  %v3454 = vadd.f32 %v3425, %v3453
  %3455 = vdwg.mxu0
  %v3456 = vadd.f32 %v468, %v3217
  %v3457 = vadd.f32 %v844, %v3454
  %v3458 = vxor.u32 %v3456, 2147483648
  %v3459 = vxor.u32 %v3457, 2147483648
  %v3460 = vmul.f32 %v3458, 1.442695
  %v3461 = vpow.pop %v3460
  %v3462 = vmul.f32 %v3459, 1.442695
  %v3463 = vpow.pop %v3462
  %v3464 = vadd.f32 %v3461, 1.0
  %v3465 = vadd.f32 %v3463, 1.0
  %v3466 = vrcp.pop %v3464
  %v3467 = vmul.f32 %v3464, %v3466
  %v3468 = vsub.f32 1.0, %v3467
  %v3469 = vmul.f32 %v3466, %v3468
  %v3470 = vadd.f32 %v3466, %v3469
  %vm3471 = vweird.f32 %v3464
  %vm3472 = vweird.f32 %v3466
  %vm3473 = vmor %vm3471, %vm3472
  %v3474 = vsel %vm3473, %v3466, %v3470
  %v3475 = vand.u32 2147483647, %v3464
  %vm3476 = vcmp.eq.f32.partialorder %v3475, 8.507059e+37
  %v3477 = vand.u32 %v3464, 2147483648
  %v3478 = vor.u32 1.1754944e-38, %v3477
  %v3479 = vsel %vm3476, %v3478, %v3474
  %v3480 = vmul.f32 1.0, %v3479
  %v3481 = vrcp.pop %v3465
  %v3482 = vmul.f32 %v3465, %v3481
  %v3483 = vsub.f32 1.0, %v3482
  %v3484 = vmul.f32 %v3481, %v3483
  %v3485 = vadd.f32 %v3481, %v3484
  %vm3486 = vweird.f32 %v3465
  %vm3487 = vweird.f32 %v3481
  %vm3488 = vmor %vm3486, %vm3487
  %v3489 = vsel %vm3488, %v3481, %v3485
  %v3490 = vand.u32 2147483647, %v3465
  %vm3491 = vcmp.eq.f32.partialorder %v3490, 8.507059e+37
  %v3492 = vand.u32 %v3465, 2147483648
  %v3493 = vor.u32 1.1754944e-38, %v3492
  %v3494 = vsel %vm3491, %v3493, %v3489
  %v3495 = vmul.f32 1.0, %v3494
  %v3496 = vmul.f32 %v3495, 2.0
  %v3497 = vsub.f32 %v3496, 1.0
  %v3498 = vmul.f32 %v3480, %v2974
  %v3499 = vmul.f32 %v3480, %v3497
  %3501 = vrot.lane.b32.xlu0 %v3499, 64
  %v3502 = vpop.permute.xlu0 %3501
  %v3504 = vadd.f32 %v3498, %v3502
  %v3505 = vtanh.pop %v3504
  %v3506 = vmul.f32 %v3495, %v3505
  %3508 = vrot.lane.b32.xlu0 %v3506, 64
  %v3509 = vpop.permute.xlu0 %3508
  %v3510 = vsel %vm858, %v3509, 0
  %3512 = vmatpush.msra.mxu0 0.0
  %3513 = vmatpush.msra.mxu0 0.0
  %3514 = vmatpush.msra.mxu0 0.0
  %3515 = vmatpush.msra.mxu0 0.0
  %3516 = vmatpush.msra.mxu0 0.0
  %3517 = vmatpush.msra.mxu0 0.0
  %3518 = vmatpush.msra.mxu0 0.0
  %3519 = vmatpush.msra.mxu0 0.0
  %v3520 = vand.u32 %v69, 4294901760
  %3521 = vmatpush.msra.mxu0 %v3520
  %v3522 = vand.u32 %v67, 4294901760
  %3523 = vmatpush.msra.mxu0 %v3522
  %v3524 = vand.u32 %v65, 4294901760
  %3525 = vmatpush.msra.mxu0 %v3524
  %v3526 = vand.u32 %v63, 4294901760
  %3527 = vmatpush.msra.mxu0 %v3526
  %v3528 = vand.u32 %v61, 4294901760
  %3529 = vmatpush.msra.mxu0 %v3528
  %v3530 = vand.u32 %v59, 4294901760
  %3531 = vmatpush.msra.mxu0 %v3530
  %v3532 = vand.u32 %v57, 4294901760
  %3533 = vmatpush.msra.mxu0 %v3532
  %v3534 = vand.u32 %v55, 4294901760
  %3535 = vmatpush.msra.mxu0 %v3534
  %v3536 = vand.u32 %v3510, 4294901760
  %v3537 = vsub.f32 %v3510, %v3536
  %v3538 = vand.u32 %v3537, 4294901760
  %v3539 = vsub.f32 %v3537, %v3538
  %v3540 = vand.u32 %v3539, 4294901760
  %3541 = vmatmul.f32.gmra.mxu0 %v3540
  %v3542 = vpop.f32.mrf.mxu0
  %v3543 = vadd.f32 0.0, %v3542
  %3544 = vdwg.mxu0
  %3545 = vmatpush.msra.mxu0 0.0
  %3546 = vmatpush.msra.mxu0 0.0
  %3547 = vmatpush.msra.mxu0 0.0
  %3548 = vmatpush.msra.mxu0 0.0
  %3549 = vmatpush.msra.mxu0 0.0
  %3550 = vmatpush.msra.mxu0 0.0
  %3551 = vmatpush.msra.mxu0 0.0
  %3552 = vmatpush.msra.mxu0 0.0
  %v3553 = vand.u32 %v69, 4294901760
  %v3554 = vsub.f32 %v69, %v3553
  %v3555 = vand.u32 %v3554, 4294901760
  %v3556 = vsub.f32 %v3554, %v3555
  %v3557 = vand.u32 %v3556, 4294901760
  %3558 = vmatpush.msra.mxu0 %v3557
  %v3559 = vand.u32 %v67, 4294901760
  %v3560 = vsub.f32 %v67, %v3559
  %v3561 = vand.u32 %v3560, 4294901760
  %v3562 = vsub.f32 %v3560, %v3561
  %v3563 = vand.u32 %v3562, 4294901760
  %3564 = vmatpush.msra.mxu0 %v3563
  %v3565 = vand.u32 %v65, 4294901760
  %v3566 = vsub.f32 %v65, %v3565
  %v3567 = vand.u32 %v3566, 4294901760
  %v3568 = vsub.f32 %v3566, %v3567
  %v3569 = vand.u32 %v3568, 4294901760
  %3570 = vmatpush.msra.mxu0 %v3569
  %v3571 = vand.u32 %v63, 4294901760
  %v3572 = vsub.f32 %v63, %v3571
  %v3573 = vand.u32 %v3572, 4294901760
  %v3574 = vsub.f32 %v3572, %v3573
  %v3575 = vand.u32 %v3574, 4294901760
  %3576 = vmatpush.msra.mxu0 %v3575
  %v3577 = vand.u32 %v61, 4294901760
  %v3578 = vsub.f32 %v61, %v3577
  %v3579 = vand.u32 %v3578, 4294901760
  %v3580 = vsub.f32 %v3578, %v3579
  %v3581 = vand.u32 %v3580, 4294901760
  %3582 = vmatpush.msra.mxu0 %v3581
  %v3583 = vand.u32 %v59, 4294901760
  %v3584 = vsub.f32 %v59, %v3583
  %v3585 = vand.u32 %v3584, 4294901760
  %v3586 = vsub.f32 %v3584, %v3585
  %v3587 = vand.u32 %v3586, 4294901760
  %3588 = vmatpush.msra.mxu0 %v3587
  %v3589 = vand.u32 %v57, 4294901760
  %v3590 = vsub.f32 %v57, %v3589
  %v3591 = vand.u32 %v3590, 4294901760
  %v3592 = vsub.f32 %v3590, %v3591
  %v3593 = vand.u32 %v3592, 4294901760
  %3594 = vmatpush.msra.mxu0 %v3593
  %v3595 = vand.u32 %v55, 4294901760
  %v3596 = vsub.f32 %v55, %v3595
  %v3597 = vand.u32 %v3596, 4294901760
  %v3598 = vsub.f32 %v3596, %v3597
  %v3599 = vand.u32 %v3598, 4294901760
  %3600 = vmatpush.msra.mxu0 %v3599
  %v3601 = vand.u32 %v3510, 4294901760
  %3602 = vmatmul.f32.gmra.mxu0 %v3601
  %v3603 = vpop.f32.mrf.mxu0
  %v3604 = vadd.f32 %v3543, %v3603
  %3605 = vdwg.mxu0
  %3606 = vmatpush.msra.mxu0 0.0
  %3607 = vmatpush.msra.mxu0 0.0
  %3608 = vmatpush.msra.mxu0 0.0
  %3609 = vmatpush.msra.mxu0 0.0
  %3610 = vmatpush.msra.mxu0 0.0
  %3611 = vmatpush.msra.mxu0 0.0
  %3612 = vmatpush.msra.mxu0 0.0
  %3613 = vmatpush.msra.mxu0 0.0
  %v3614 = vand.u32 %v69, 4294901760
  %v3615 = vsub.f32 %v69, %v3614
  %3616 = vmatpush.msra.mxu0 %v3615
  %v3617 = vand.u32 %v67, 4294901760
  %v3618 = vsub.f32 %v67, %v3617
  %3619 = vmatpush.msra.mxu0 %v3618
  %v3620 = vand.u32 %v65, 4294901760
  %v3621 = vsub.f32 %v65, %v3620
  %3622 = vmatpush.msra.mxu0 %v3621
  %v3623 = vand.u32 %v63, 4294901760
  %v3624 = vsub.f32 %v63, %v3623
  %3625 = vmatpush.msra.mxu0 %v3624
  %v3626 = vand.u32 %v61, 4294901760
  %v3627 = vsub.f32 %v61, %v3626
  %3628 = vmatpush.msra.mxu0 %v3627
  %v3629 = vand.u32 %v59, 4294901760
  %v3630 = vsub.f32 %v59, %v3629
  %3631 = vmatpush.msra.mxu0 %v3630
  %v3632 = vand.u32 %v57, 4294901760
  %v3633 = vsub.f32 %v57, %v3632
  %3634 = vmatpush.msra.mxu0 %v3633
  %v3635 = vand.u32 %v55, 4294901760
  %v3636 = vsub.f32 %v55, %v3635
  %3637 = vmatpush.msra.mxu0 %v3636
  %v3638 = vand.u32 %v3510, 4294901760
  %v3639 = vsub.f32 %v3510, %v3638
  %3640 = vmatmul.f32.gmra.mxu0 %v3639
  %v3641 = vpop.f32.mrf.mxu0
  %v3642 = vadd.f32 %v3604, %v3641
  %3643 = vdwg.mxu0
  %3644 = vmatpush.msra.mxu0 0.0
  %3645 = vmatpush.msra.mxu0 0.0
  %3646 = vmatpush.msra.mxu0 0.0
  %3647 = vmatpush.msra.mxu0 0.0
  %3648 = vmatpush.msra.mxu0 0.0
  %3649 = vmatpush.msra.mxu0 0.0
  %3650 = vmatpush.msra.mxu0 0.0
  %3651 = vmatpush.msra.mxu0 0.0
  %v3652 = vand.u32 %v69, 4294901760
  %3653 = vmatpush.msra.mxu0 %v3652
  %v3654 = vand.u32 %v67, 4294901760
  %3655 = vmatpush.msra.mxu0 %v3654
  %v3656 = vand.u32 %v65, 4294901760
  %3657 = vmatpush.msra.mxu0 %v3656
  %v3658 = vand.u32 %v63, 4294901760
  %3659 = vmatpush.msra.mxu0 %v3658
  %v3660 = vand.u32 %v61, 4294901760
  %3661 = vmatpush.msra.mxu0 %v3660
  %v3662 = vand.u32 %v59, 4294901760
  %3663 = vmatpush.msra.mxu0 %v3662
  %v3664 = vand.u32 %v57, 4294901760
  %3665 = vmatpush.msra.mxu0 %v3664
  %v3666 = vand.u32 %v55, 4294901760
  %3667 = vmatpush.msra.mxu0 %v3666
  %v3668 = vand.u32 %v3510, 4294901760
  %v3669 = vsub.f32 %v3510, %v3668
  %v3670 = vand.u32 %v3669, 4294901760
  %3671 = vmatmul.f32.gmra.mxu0 %v3670
  %v3672 = vpop.f32.mrf.mxu0
  %v3673 = vadd.f32 %v3642, %v3672
  %3674 = vdwg.mxu0
  %3675 = vmatpush.msra.mxu0 0.0
  %3676 = vmatpush.msra.mxu0 0.0
  %3677 = vmatpush.msra.mxu0 0.0
  %3678 = vmatpush.msra.mxu0 0.0
  %3679 = vmatpush.msra.mxu0 0.0
  %3680 = vmatpush.msra.mxu0 0.0
  %3681 = vmatpush.msra.mxu0 0.0
  %3682 = vmatpush.msra.mxu0 0.0
  %v3683 = vand.u32 %v69, 4294901760
  %v3684 = vsub.f32 %v69, %v3683
  %v3685 = vand.u32 %v3684, 4294901760
  %3686 = vmatpush.msra.mxu0 %v3685
  %v3687 = vand.u32 %v67, 4294901760
  %v3688 = vsub.f32 %v67, %v3687
  %v3689 = vand.u32 %v3688, 4294901760
  %3690 = vmatpush.msra.mxu0 %v3689
  %v3691 = vand.u32 %v65, 4294901760
  %v3692 = vsub.f32 %v65, %v3691
  %v3693 = vand.u32 %v3692, 4294901760
  %3694 = vmatpush.msra.mxu0 %v3693
  %v3695 = vand.u32 %v63, 4294901760
  %v3696 = vsub.f32 %v63, %v3695
  %v3697 = vand.u32 %v3696, 4294901760
  %3698 = vmatpush.msra.mxu0 %v3697
  %v3699 = vand.u32 %v61, 4294901760
  %v3700 = vsub.f32 %v61, %v3699
  %v3701 = vand.u32 %v3700, 4294901760
  %3702 = vmatpush.msra.mxu0 %v3701
  %v3703 = vand.u32 %v59, 4294901760
  %v3704 = vsub.f32 %v59, %v3703
  %v3705 = vand.u32 %v3704, 4294901760
  %3706 = vmatpush.msra.mxu0 %v3705
  %v3707 = vand.u32 %v57, 4294901760
  %v3708 = vsub.f32 %v57, %v3707
  %v3709 = vand.u32 %v3708, 4294901760
  %3710 = vmatpush.msra.mxu0 %v3709
  %v3711 = vand.u32 %v55, 4294901760
  %v3712 = vsub.f32 %v55, %v3711
  %v3713 = vand.u32 %v3712, 4294901760
  %3714 = vmatpush.msra.mxu0 %v3713
  %v3715 = vand.u32 %v3510, 4294901760
  %3716 = vmatmul.f32.gmra.mxu0 %v3715
  %v3717 = vpop.f32.mrf.mxu0
  %v3718 = vadd.f32 %v3673, %v3717
  %3719 = vdwg.mxu0
  %3720 = vmatpush.msra.mxu0 0.0
  %3721 = vmatpush.msra.mxu0 0.0
  %3722 = vmatpush.msra.mxu0 0.0
  %3723 = vmatpush.msra.mxu0 0.0
  %3724 = vmatpush.msra.mxu0 0.0
  %3725 = vmatpush.msra.mxu0 0.0
  %3726 = vmatpush.msra.mxu0 0.0
  %3727 = vmatpush.msra.mxu0 0.0
  %v3728 = vand.u32 %v69, 4294901760
  %3729 = vmatpush.msra.mxu0 %v3728
  %v3730 = vand.u32 %v67, 4294901760
  %3731 = vmatpush.msra.mxu0 %v3730
  %v3732 = vand.u32 %v65, 4294901760
  %3733 = vmatpush.msra.mxu0 %v3732
  %v3734 = vand.u32 %v63, 4294901760
  %3735 = vmatpush.msra.mxu0 %v3734
  %v3736 = vand.u32 %v61, 4294901760
  %3737 = vmatpush.msra.mxu0 %v3736
  %v3738 = vand.u32 %v59, 4294901760
  %3739 = vmatpush.msra.mxu0 %v3738
  %v3740 = vand.u32 %v57, 4294901760
  %3741 = vmatpush.msra.mxu0 %v3740
  %v3742 = vand.u32 %v55, 4294901760
  %3743 = vmatpush.msra.mxu0 %v3742
  %v3744 = vand.u32 %v3510, 4294901760
  %3745 = vmatmul.f32.gmra.mxu0 %v3744
  %v3746 = vpop.f32.mrf.mxu0
  %v3747 = vadd.f32 %v3718, %v3746
  %3748 = vdwg.mxu0
  %3749 = vmatpush.msra.mxu0 0.0
  %3750 = vmatpush.msra.mxu0 0.0
  %3751 = vmatpush.msra.mxu0 0.0
  %3752 = vmatpush.msra.mxu0 0.0
  %3753 = vmatpush.msra.mxu0 0.0
  %3754 = vmatpush.msra.mxu0 0.0
  %3755 = vmatpush.msra.mxu0 0.0
  %3756 = vmatpush.msra.mxu0 0.0
  %v3757 = vand.u32 %v70, 4294901760
  %3758 = vmatpush.msra.mxu0 %v3757
  %v3759 = vand.u32 %v68, 4294901760
  %3760 = vmatpush.msra.mxu0 %v3759
  %v3761 = vand.u32 %v66, 4294901760
  %3762 = vmatpush.msra.mxu0 %v3761
  %v3763 = vand.u32 %v64, 4294901760
  %3764 = vmatpush.msra.mxu0 %v3763
  %v3765 = vand.u32 %v62, 4294901760
  %3766 = vmatpush.msra.mxu0 %v3765
  %v3767 = vand.u32 %v60, 4294901760
  %3768 = vmatpush.msra.mxu0 %v3767
  %v3769 = vand.u32 %v58, 4294901760
  %3770 = vmatpush.msra.mxu0 %v3769
  %v3771 = vand.u32 %v56, 4294901760
  %3772 = vmatpush.msra.mxu0 %v3771
  %v3773 = vand.u32 %v3510, 4294901760
  %v3774 = vsub.f32 %v3510, %v3773
  %v3775 = vand.u32 %v3774, 4294901760
  %v3776 = vsub.f32 %v3774, %v3775
  %v3777 = vand.u32 %v3776, 4294901760
  %3778 = vmatmul.f32.gmra.mxu0 %v3777
  %v3779 = vpop.f32.mrf.mxu0
  %v3780 = vadd.f32 0.0, %v3779
  %3781 = vdwg.mxu0
  %3782 = vmatpush.msra.mxu0 0.0
  %3783 = vmatpush.msra.mxu0 0.0
  %3784 = vmatpush.msra.mxu0 0.0
  %3785 = vmatpush.msra.mxu0 0.0
  %3786 = vmatpush.msra.mxu0 0.0
  %3787 = vmatpush.msra.mxu0 0.0
  %3788 = vmatpush.msra.mxu0 0.0
  %3789 = vmatpush.msra.mxu0 0.0
  %v3790 = vand.u32 %v70, 4294901760
  %v3791 = vsub.f32 %v70, %v3790
  %v3792 = vand.u32 %v3791, 4294901760
  %v3793 = vsub.f32 %v3791, %v3792
  %v3794 = vand.u32 %v3793, 4294901760
  %3795 = vmatpush.msra.mxu0 %v3794
  %v3796 = vand.u32 %v68, 4294901760
  %v3797 = vsub.f32 %v68, %v3796
  %v3798 = vand.u32 %v3797, 4294901760
  %v3799 = vsub.f32 %v3797, %v3798
  %v3800 = vand.u32 %v3799, 4294901760
  %3801 = vmatpush.msra.mxu0 %v3800
  %v3802 = vand.u32 %v66, 4294901760
  %v3803 = vsub.f32 %v66, %v3802
  %v3804 = vand.u32 %v3803, 4294901760
  %v3805 = vsub.f32 %v3803, %v3804
  %v3806 = vand.u32 %v3805, 4294901760
  %3807 = vmatpush.msra.mxu0 %v3806
  %v3808 = vand.u32 %v64, 4294901760
  %v3809 = vsub.f32 %v64, %v3808
  %v3810 = vand.u32 %v3809, 4294901760
  %v3811 = vsub.f32 %v3809, %v3810
  %v3812 = vand.u32 %v3811, 4294901760
  %3813 = vmatpush.msra.mxu0 %v3812
  %v3814 = vand.u32 %v62, 4294901760
  %v3815 = vsub.f32 %v62, %v3814
  %v3816 = vand.u32 %v3815, 4294901760
  %v3817 = vsub.f32 %v3815, %v3816
  %v3818 = vand.u32 %v3817, 4294901760
  %3819 = vmatpush.msra.mxu0 %v3818
  %v3820 = vand.u32 %v60, 4294901760
  %v3821 = vsub.f32 %v60, %v3820
  %v3822 = vand.u32 %v3821, 4294901760
  %v3823 = vsub.f32 %v3821, %v3822
  %v3824 = vand.u32 %v3823, 4294901760
  %3825 = vmatpush.msra.mxu0 %v3824
  %v3826 = vand.u32 %v58, 4294901760
  %v3827 = vsub.f32 %v58, %v3826
  %v3828 = vand.u32 %v3827, 4294901760
  %v3829 = vsub.f32 %v3827, %v3828
  %v3830 = vand.u32 %v3829, 4294901760
  %3831 = vmatpush.msra.mxu0 %v3830
  %v3832 = vand.u32 %v56, 4294901760
  %v3833 = vsub.f32 %v56, %v3832
  %v3834 = vand.u32 %v3833, 4294901760
  %v3835 = vsub.f32 %v3833, %v3834
  %v3836 = vand.u32 %v3835, 4294901760
  %3837 = vmatpush.msra.mxu0 %v3836
  %v3838 = vand.u32 %v3510, 4294901760
  %3839 = vmatmul.f32.gmra.mxu0 %v3838
  %v3840 = vpop.f32.mrf.mxu0
  %v3841 = vadd.f32 %v3780, %v3840
  %3842 = vdwg.mxu0
  %3843 = vmatpush.msra.mxu0 0.0
  %3844 = vmatpush.msra.mxu0 0.0
  %3845 = vmatpush.msra.mxu0 0.0
  %3846 = vmatpush.msra.mxu0 0.0
  %3847 = vmatpush.msra.mxu0 0.0
  %3848 = vmatpush.msra.mxu0 0.0
  %3849 = vmatpush.msra.mxu0 0.0
  %3850 = vmatpush.msra.mxu0 0.0
  %v3851 = vand.u32 %v70, 4294901760
  %v3852 = vsub.f32 %v70, %v3851
  %3853 = vmatpush.msra.mxu0 %v3852
  %v3854 = vand.u32 %v68, 4294901760
  %v3855 = vsub.f32 %v68, %v3854
  %3856 = vmatpush.msra.mxu0 %v3855
  %v3857 = vand.u32 %v66, 4294901760
  %v3858 = vsub.f32 %v66, %v3857
  %3859 = vmatpush.msra.mxu0 %v3858
  %v3860 = vand.u32 %v64, 4294901760
  %v3861 = vsub.f32 %v64, %v3860
  %3862 = vmatpush.msra.mxu0 %v3861
  %v3863 = vand.u32 %v62, 4294901760
  %v3864 = vsub.f32 %v62, %v3863
  %3865 = vmatpush.msra.mxu0 %v3864
  %v3866 = vand.u32 %v60, 4294901760
  %v3867 = vsub.f32 %v60, %v3866
  %3868 = vmatpush.msra.mxu0 %v3867
  %v3869 = vand.u32 %v58, 4294901760
  %v3870 = vsub.f32 %v58, %v3869
  %3871 = vmatpush.msra.mxu0 %v3870
  %v3872 = vand.u32 %v56, 4294901760
  %v3873 = vsub.f32 %v56, %v3872
  %3874 = vmatpush.msra.mxu0 %v3873
  %v3875 = vand.u32 %v3510, 4294901760
  %v3876 = vsub.f32 %v3510, %v3875
  %3877 = vmatmul.f32.gmra.mxu0 %v3876
  %v3878 = vpop.f32.mrf.mxu0
  %v3879 = vadd.f32 %v3841, %v3878
  %3880 = vdwg.mxu0
  %3881 = vmatpush.msra.mxu0 0.0
  %3882 = vmatpush.msra.mxu0 0.0
  %3883 = vmatpush.msra.mxu0 0.0
  %3884 = vmatpush.msra.mxu0 0.0
  %3885 = vmatpush.msra.mxu0 0.0
  %3886 = vmatpush.msra.mxu0 0.0
  %3887 = vmatpush.msra.mxu0 0.0
  %3888 = vmatpush.msra.mxu0 0.0
  %v3889 = vand.u32 %v70, 4294901760
  %3890 = vmatpush.msra.mxu0 %v3889
  %v3891 = vand.u32 %v68, 4294901760
  %3892 = vmatpush.msra.mxu0 %v3891
  %v3893 = vand.u32 %v66, 4294901760
  %3894 = vmatpush.msra.mxu0 %v3893
  %v3895 = vand.u32 %v64, 4294901760
  %3896 = vmatpush.msra.mxu0 %v3895
  %v3897 = vand.u32 %v62, 4294901760
  %3898 = vmatpush.msra.mxu0 %v3897
  %v3899 = vand.u32 %v60, 4294901760
  %3900 = vmatpush.msra.mxu0 %v3899
  %v3901 = vand.u32 %v58, 4294901760
  %3902 = vmatpush.msra.mxu0 %v3901
  %v3903 = vand.u32 %v56, 4294901760
  %3904 = vmatpush.msra.mxu0 %v3903
  %v3905 = vand.u32 %v3510, 4294901760
  %v3906 = vsub.f32 %v3510, %v3905
  %v3907 = vand.u32 %v3906, 4294901760
  %3908 = vmatmul.f32.gmra.mxu0 %v3907
  %v3909 = vpop.f32.mrf.mxu0
  %v3910 = vadd.f32 %v3879, %v3909
  %3911 = vdwg.mxu0
  %3912 = vmatpush.msra.mxu0 0.0
  %3913 = vmatpush.msra.mxu0 0.0
  %3914 = vmatpush.msra.mxu0 0.0
  %3915 = vmatpush.msra.mxu0 0.0
  %3916 = vmatpush.msra.mxu0 0.0
  %3917 = vmatpush.msra.mxu0 0.0
  %3918 = vmatpush.msra.mxu0 0.0
  %3919 = vmatpush.msra.mxu0 0.0
  %v3920 = vand.u32 %v70, 4294901760
  %v3921 = vsub.f32 %v70, %v3920
  %v3922 = vand.u32 %v3921, 4294901760
  %3923 = vmatpush.msra.mxu0 %v3922
  %v3924 = vand.u32 %v68, 4294901760
  %v3925 = vsub.f32 %v68, %v3924
  %v3926 = vand.u32 %v3925, 4294901760
  %3927 = vmatpush.msra.mxu0 %v3926
  %v3928 = vand.u32 %v66, 4294901760
  %v3929 = vsub.f32 %v66, %v3928
  %v3930 = vand.u32 %v3929, 4294901760
  %3931 = vmatpush.msra.mxu0 %v3930
  %v3932 = vand.u32 %v64, 4294901760
  %v3933 = vsub.f32 %v64, %v3932
  %v3934 = vand.u32 %v3933, 4294901760
  %3935 = vmatpush.msra.mxu0 %v3934
  %v3936 = vand.u32 %v62, 4294901760
  %v3937 = vsub.f32 %v62, %v3936
  %v3938 = vand.u32 %v3937, 4294901760
  %3939 = vmatpush.msra.mxu0 %v3938
  %v3940 = vand.u32 %v60, 4294901760
  %v3941 = vsub.f32 %v60, %v3940
  %v3942 = vand.u32 %v3941, 4294901760
  %3943 = vmatpush.msra.mxu0 %v3942
  %v3944 = vand.u32 %v58, 4294901760
  %v3945 = vsub.f32 %v58, %v3944
  %v3946 = vand.u32 %v3945, 4294901760
  %3947 = vmatpush.msra.mxu0 %v3946
  %v3948 = vand.u32 %v56, 4294901760
  %v3949 = vsub.f32 %v56, %v3948
  %v3950 = vand.u32 %v3949, 4294901760
  %3951 = vmatpush.msra.mxu0 %v3950
  %v3952 = vand.u32 %v3510, 4294901760
  %3953 = vmatmul.f32.gmra.mxu0 %v3952
  %v3954 = vpop.f32.mrf.mxu0
  %v3955 = vadd.f32 %v3910, %v3954
  %3956 = vdwg.mxu0
  %3957 = vmatpush.msra.mxu0 0.0
  %3958 = vmatpush.msra.mxu0 0.0
  %3959 = vmatpush.msra.mxu0 0.0
  %3960 = vmatpush.msra.mxu0 0.0
  %3961 = vmatpush.msra.mxu0 0.0
  %3962 = vmatpush.msra.mxu0 0.0
  %3963 = vmatpush.msra.mxu0 0.0
  %3964 = vmatpush.msra.mxu0 0.0
  %v3965 = vand.u32 %v70, 4294901760
  %3966 = vmatpush.msra.mxu0 %v3965
  %v3967 = vand.u32 %v68, 4294901760
  %3968 = vmatpush.msra.mxu0 %v3967
  %v3969 = vand.u32 %v66, 4294901760
  %3970 = vmatpush.msra.mxu0 %v3969
  %v3971 = vand.u32 %v64, 4294901760
  %3972 = vmatpush.msra.mxu0 %v3971
  %v3973 = vand.u32 %v62, 4294901760
  %3974 = vmatpush.msra.mxu0 %v3973
  %v3975 = vand.u32 %v60, 4294901760
  %3976 = vmatpush.msra.mxu0 %v3975
  %v3977 = vand.u32 %v58, 4294901760
  %3978 = vmatpush.msra.mxu0 %v3977
  %v3979 = vand.u32 %v56, 4294901760
  %3980 = vmatpush.msra.mxu0 %v3979
  %v3981 = vand.u32 %v3510, 4294901760
  %3982 = vmatmul.f32.gmra.mxu0 %v3981
  %v3983 = vpop.f32.mrf.mxu0
  %v3984 = vadd.f32 %v3955, %v3983
  %3985 = vdwg.mxu0
  %v3986 = vadd.f32 %v472, %v3747
  %v3987 = vadd.f32 %v848, %v3984
  %v3988 = vxor.u32 %v3986, 2147483648
  %v3989 = vxor.u32 %v3987, 2147483648
  %v3990 = vmul.f32 %v3988, 1.442695
  %v3991 = vpow.pop %v3990
  %v3992 = vmul.f32 %v3989, 1.442695
  %v3993 = vpow.pop %v3992
  %v3994 = vadd.f32 %v3991, 1.0
  %v3995 = vadd.f32 %v3993, 1.0
  %v3996 = vrcp.pop %v3994
  %v3997 = vmul.f32 %v3994, %v3996
  %v3998 = vsub.f32 1.0, %v3997
  %v3999 = vmul.f32 %v3996, %v3998
  %v4000 = vadd.f32 %v3996, %v3999
  %vm4001 = vweird.f32 %v3994
  %vm4002 = vweird.f32 %v3996
  %vm4003 = vmor %vm4001, %vm4002
  %v4004 = vsel %vm4003, %v3996, %v4000
  %v4005 = vand.u32 2147483647, %v3994
  %vm4006 = vcmp.eq.f32.partialorder %v4005, 8.507059e+37
  %v4007 = vand.u32 %v3994, 2147483648
  %v4008 = vor.u32 1.1754944e-38, %v4007
  %v4009 = vsel %vm4006, %v4008, %v4004
  %v4010 = vmul.f32 1.0, %v4009
  %v4011 = vrcp.pop %v3995
  %v4012 = vmul.f32 %v3995, %v4011
  %v4013 = vsub.f32 1.0, %v4012
  %v4014 = vmul.f32 %v4011, %v4013
  %v4015 = vadd.f32 %v4011, %v4014
  %vm4016 = vweird.f32 %v3995
  %vm4017 = vweird.f32 %v4011
  %vm4018 = vmor %vm4016, %vm4017
  %v4019 = vsel %vm4018, %v4011, %v4015
  %v4020 = vand.u32 2147483647, %v3995
  %vm4021 = vcmp.eq.f32.partialorder %v4020, 8.507059e+37
  %v4022 = vand.u32 %v3995, 2147483648
  %v4023 = vor.u32 1.1754944e-38, %v4022
  %v4024 = vsel %vm4021, %v4023, %v4019
  %v4025 = vmul.f32 1.0, %v4024
  %v4026 = vmul.f32 %v4025, 2.0
  %v4027 = vsub.f32 %v4026, 1.0
  %v4028 = vmul.f32 %v4010, %v3504
  %v4029 = vmul.f32 %v4010, %v4027
  %4031 = vrot.lane.b32.xlu0 %v4029, 64
  %v4032 = vpop.permute.xlu0 %4031
  %v4034 = vadd.f32 %v4028, %v4032
  %v4035 = vtanh.pop %v4034
  %v4036 = vmul.f32 %v4025, %v4035
  %4038 = vrot.lane.b32.xlu0 %v4036, 64
  %v4039 = vpop.permute.xlu0 %4038
  %v4040 = vsel %vm858, %v4039, 0
  %4042 = vmatpush.msra.mxu0 0.0
  %4043 = vmatpush.msra.mxu0 0.0
  %4044 = vmatpush.msra.mxu0 0.0
  %4045 = vmatpush.msra.mxu0 0.0
  %4046 = vmatpush.msra.mxu0 0.0
  %4047 = vmatpush.msra.mxu0 0.0
  %4048 = vmatpush.msra.mxu0 0.0
  %4049 = vmatpush.msra.mxu0 0.0
  %v4050 = vand.u32 %v69, 4294901760
  %4051 = vmatpush.msra.mxu0 %v4050
  %v4052 = vand.u32 %v67, 4294901760
  %4053 = vmatpush.msra.mxu0 %v4052
  %v4054 = vand.u32 %v65, 4294901760
  %4055 = vmatpush.msra.mxu0 %v4054
  %v4056 = vand.u32 %v63, 4294901760
  %4057 = vmatpush.msra.mxu0 %v4056
  %v4058 = vand.u32 %v61, 4294901760
  %4059 = vmatpush.msra.mxu0 %v4058
  %v4060 = vand.u32 %v59, 4294901760
  %4061 = vmatpush.msra.mxu0 %v4060
  %v4062 = vand.u32 %v57, 4294901760
  %4063 = vmatpush.msra.mxu0 %v4062
  %v4064 = vand.u32 %v55, 4294901760
  %4065 = vmatpush.msra.mxu0 %v4064
  %v4066 = vand.u32 %v4040, 4294901760
  %v4067 = vsub.f32 %v4040, %v4066
  %v4068 = vand.u32 %v4067, 4294901760
  %v4069 = vsub.f32 %v4067, %v4068
  %v4070 = vand.u32 %v4069, 4294901760
  %4071 = vmatmul.f32.gmra.mxu0 %v4070
  %v4072 = vpop.f32.mrf.mxu0
  %v4073 = vadd.f32 0.0, %v4072
  %4074 = vdwg.mxu0
  %4075 = vmatpush.msra.mxu0 0.0
  %4076 = vmatpush.msra.mxu0 0.0
  %4077 = vmatpush.msra.mxu0 0.0
  %4078 = vmatpush.msra.mxu0 0.0
  %4079 = vmatpush.msra.mxu0 0.0
  %4080 = vmatpush.msra.mxu0 0.0
  %4081 = vmatpush.msra.mxu0 0.0
  %4082 = vmatpush.msra.mxu0 0.0
  %v4083 = vand.u32 %v69, 4294901760
  %v4084 = vsub.f32 %v69, %v4083
  %v4085 = vand.u32 %v4084, 4294901760
  %v4086 = vsub.f32 %v4084, %v4085
  %v4087 = vand.u32 %v4086, 4294901760
  %4088 = vmatpush.msra.mxu0 %v4087
  %v4089 = vand.u32 %v67, 4294901760
  %v4090 = vsub.f32 %v67, %v4089
  %v4091 = vand.u32 %v4090, 4294901760
  %v4092 = vsub.f32 %v4090, %v4091
  %v4093 = vand.u32 %v4092, 4294901760
  %4094 = vmatpush.msra.mxu0 %v4093
  %v4095 = vand.u32 %v65, 4294901760
  %v4096 = vsub.f32 %v65, %v4095
  %v4097 = vand.u32 %v4096, 4294901760
  %v4098 = vsub.f32 %v4096, %v4097
  %v4099 = vand.u32 %v4098, 4294901760
  %4100 = vmatpush.msra.mxu0 %v4099
  %v4101 = vand.u32 %v63, 4294901760
  %v4102 = vsub.f32 %v63, %v4101
  %v4103 = vand.u32 %v4102, 4294901760
  %v4104 = vsub.f32 %v4102, %v4103
  %v4105 = vand.u32 %v4104, 4294901760
  %4106 = vmatpush.msra.mxu0 %v4105
  %v4107 = vand.u32 %v61, 4294901760
  %v4108 = vsub.f32 %v61, %v4107
  %v4109 = vand.u32 %v4108, 4294901760
  %v4110 = vsub.f32 %v4108, %v4109
  %v4111 = vand.u32 %v4110, 4294901760
  %4112 = vmatpush.msra.mxu0 %v4111
  %v4113 = vand.u32 %v59, 4294901760
  %v4114 = vsub.f32 %v59, %v4113
  %v4115 = vand.u32 %v4114, 4294901760
  %v4116 = vsub.f32 %v4114, %v4115
  %v4117 = vand.u32 %v4116, 4294901760
  %4118 = vmatpush.msra.mxu0 %v4117
  %v4119 = vand.u32 %v57, 4294901760
  %v4120 = vsub.f32 %v57, %v4119
  %v4121 = vand.u32 %v4120, 4294901760
  %v4122 = vsub.f32 %v4120, %v4121
  %v4123 = vand.u32 %v4122, 4294901760
  %4124 = vmatpush.msra.mxu0 %v4123
  %v4125 = vand.u32 %v55, 4294901760
  %v4126 = vsub.f32 %v55, %v4125
  %v4127 = vand.u32 %v4126, 4294901760
  %v4128 = vsub.f32 %v4126, %v4127
  %v4129 = vand.u32 %v4128, 4294901760
  %4130 = vmatpush.msra.mxu0 %v4129
  %v4131 = vand.u32 %v4040, 4294901760
  %4132 = vmatmul.f32.gmra.mxu0 %v4131
  %v4133 = vpop.f32.mrf.mxu0
  %v4134 = vadd.f32 %v4073, %v4133
  %4135 = vdwg.mxu0
  %4136 = vmatpush.msra.mxu0 0.0
  %4137 = vmatpush.msra.mxu0 0.0
  %4138 = vmatpush.msra.mxu0 0.0
  %4139 = vmatpush.msra.mxu0 0.0
  %4140 = vmatpush.msra.mxu0 0.0
  %4141 = vmatpush.msra.mxu0 0.0
  %4142 = vmatpush.msra.mxu0 0.0
  %4143 = vmatpush.msra.mxu0 0.0
  %v4144 = vand.u32 %v69, 4294901760
  %v4145 = vsub.f32 %v69, %v4144
  %4146 = vmatpush.msra.mxu0 %v4145
  %v4147 = vand.u32 %v67, 4294901760
  %v4148 = vsub.f32 %v67, %v4147
  %4149 = vmatpush.msra.mxu0 %v4148
  %v4150 = vand.u32 %v65, 4294901760
  %v4151 = vsub.f32 %v65, %v4150
  %4152 = vmatpush.msra.mxu0 %v4151
  %v4153 = vand.u32 %v63, 4294901760
  %v4154 = vsub.f32 %v63, %v4153
  %4155 = vmatpush.msra.mxu0 %v4154
  %v4156 = vand.u32 %v61, 4294901760
  %v4157 = vsub.f32 %v61, %v4156
  %4158 = vmatpush.msra.mxu0 %v4157
  %v4159 = vand.u32 %v59, 4294901760
  %v4160 = vsub.f32 %v59, %v4159
  %4161 = vmatpush.msra.mxu0 %v4160
  %v4162 = vand.u32 %v57, 4294901760
  %v4163 = vsub.f32 %v57, %v4162
  %4164 = vmatpush.msra.mxu0 %v4163
  %v4165 = vand.u32 %v55, 4294901760
  %v4166 = vsub.f32 %v55, %v4165
  %4167 = vmatpush.msra.mxu0 %v4166
  %v4168 = vand.u32 %v4040, 4294901760
  %v4169 = vsub.f32 %v4040, %v4168
  %4170 = vmatmul.f32.gmra.mxu0 %v4169
  %v4171 = vpop.f32.mrf.mxu0
  %v4172 = vadd.f32 %v4134, %v4171
  %4173 = vdwg.mxu0
  %4174 = vmatpush.msra.mxu0 0.0
  %4175 = vmatpush.msra.mxu0 0.0
  %4176 = vmatpush.msra.mxu0 0.0
  %4177 = vmatpush.msra.mxu0 0.0
  %4178 = vmatpush.msra.mxu0 0.0
  %4179 = vmatpush.msra.mxu0 0.0
  %4180 = vmatpush.msra.mxu0 0.0
  %4181 = vmatpush.msra.mxu0 0.0
  %v4182 = vand.u32 %v69, 4294901760
  %4183 = vmatpush.msra.mxu0 %v4182
  %v4184 = vand.u32 %v67, 4294901760
  %4185 = vmatpush.msra.mxu0 %v4184
  %v4186 = vand.u32 %v65, 4294901760
  %4187 = vmatpush.msra.mxu0 %v4186
  %v4188 = vand.u32 %v63, 4294901760
  %4189 = vmatpush.msra.mxu0 %v4188
  %v4190 = vand.u32 %v61, 4294901760
  %4191 = vmatpush.msra.mxu0 %v4190
  %v4192 = vand.u32 %v59, 4294901760
  %4193 = vmatpush.msra.mxu0 %v4192
  %v4194 = vand.u32 %v57, 4294901760
  %4195 = vmatpush.msra.mxu0 %v4194
  %v4196 = vand.u32 %v55, 4294901760
  %4197 = vmatpush.msra.mxu0 %v4196
  %v4198 = vand.u32 %v4040, 4294901760
  %v4199 = vsub.f32 %v4040, %v4198
  %v4200 = vand.u32 %v4199, 4294901760
  %4201 = vmatmul.f32.gmra.mxu0 %v4200
  %v4202 = vpop.f32.mrf.mxu0
  %v4203 = vadd.f32 %v4172, %v4202
  %4204 = vdwg.mxu0
  %4205 = vmatpush.msra.mxu0 0.0
  %4206 = vmatpush.msra.mxu0 0.0
  %4207 = vmatpush.msra.mxu0 0.0
  %4208 = vmatpush.msra.mxu0 0.0
  %4209 = vmatpush.msra.mxu0 0.0
  %4210 = vmatpush.msra.mxu0 0.0
  %4211 = vmatpush.msra.mxu0 0.0
  %4212 = vmatpush.msra.mxu0 0.0
  %v4213 = vand.u32 %v69, 4294901760
  %v4214 = vsub.f32 %v69, %v4213
  %v4215 = vand.u32 %v4214, 4294901760
  %4216 = vmatpush.msra.mxu0 %v4215
  %v4217 = vand.u32 %v67, 4294901760
  %v4218 = vsub.f32 %v67, %v4217
  %v4219 = vand.u32 %v4218, 4294901760
  %4220 = vmatpush.msra.mxu0 %v4219
  %v4221 = vand.u32 %v65, 4294901760
  %v4222 = vsub.f32 %v65, %v4221
  %v4223 = vand.u32 %v4222, 4294901760
  %4224 = vmatpush.msra.mxu0 %v4223
  %v4225 = vand.u32 %v63, 4294901760
  %v4226 = vsub.f32 %v63, %v4225
  %v4227 = vand.u32 %v4226, 4294901760
  %4228 = vmatpush.msra.mxu0 %v4227
  %v4229 = vand.u32 %v61, 4294901760
  %v4230 = vsub.f32 %v61, %v4229
  %v4231 = vand.u32 %v4230, 4294901760
  %4232 = vmatpush.msra.mxu0 %v4231
  %v4233 = vand.u32 %v59, 4294901760
  %v4234 = vsub.f32 %v59, %v4233
  %v4235 = vand.u32 %v4234, 4294901760
  %4236 = vmatpush.msra.mxu0 %v4235
  %v4237 = vand.u32 %v57, 4294901760
  %v4238 = vsub.f32 %v57, %v4237
  %v4239 = vand.u32 %v4238, 4294901760
  %4240 = vmatpush.msra.mxu0 %v4239
  %v4241 = vand.u32 %v55, 4294901760
  %v4242 = vsub.f32 %v55, %v4241
  %v4243 = vand.u32 %v4242, 4294901760
  %4244 = vmatpush.msra.mxu0 %v4243
  %v4245 = vand.u32 %v4040, 4294901760
  %4246 = vmatmul.f32.gmra.mxu0 %v4245
  %v4247 = vpop.f32.mrf.mxu0
  %v4248 = vadd.f32 %v4203, %v4247
  %4249 = vdwg.mxu0
  %4250 = vmatpush.msra.mxu0 0.0
  %4251 = vmatpush.msra.mxu0 0.0
  %4252 = vmatpush.msra.mxu0 0.0
  %4253 = vmatpush.msra.mxu0 0.0
  %4254 = vmatpush.msra.mxu0 0.0
  %4255 = vmatpush.msra.mxu0 0.0
  %4256 = vmatpush.msra.mxu0 0.0
  %4257 = vmatpush.msra.mxu0 0.0
  %v4258 = vand.u32 %v69, 4294901760
  %4259 = vmatpush.msra.mxu0 %v4258
  %v4260 = vand.u32 %v67, 4294901760
  %4261 = vmatpush.msra.mxu0 %v4260
  %v4262 = vand.u32 %v65, 4294901760
  %4263 = vmatpush.msra.mxu0 %v4262
  %v4264 = vand.u32 %v63, 4294901760
  %4265 = vmatpush.msra.mxu0 %v4264
  %v4266 = vand.u32 %v61, 4294901760
  %4267 = vmatpush.msra.mxu0 %v4266
  %v4268 = vand.u32 %v59, 4294901760
  %4269 = vmatpush.msra.mxu0 %v4268
  %v4270 = vand.u32 %v57, 4294901760
  %4271 = vmatpush.msra.mxu0 %v4270
  %v4272 = vand.u32 %v55, 4294901760
  %4273 = vmatpush.msra.mxu0 %v4272
  %v4274 = vand.u32 %v4040, 4294901760
  %4275 = vmatmul.f32.gmra.mxu0 %v4274
  %v4276 = vpop.f32.mrf.mxu0
  %v4277 = vadd.f32 %v4248, %v4276
  %4278 = vdwg.mxu0
  %4279 = vmatpush.msra.mxu0 0.0
  %4280 = vmatpush.msra.mxu0 0.0
  %4281 = vmatpush.msra.mxu0 0.0
  %4282 = vmatpush.msra.mxu0 0.0
  %4283 = vmatpush.msra.mxu0 0.0
  %4284 = vmatpush.msra.mxu0 0.0
  %4285 = vmatpush.msra.mxu0 0.0
  %4286 = vmatpush.msra.mxu0 0.0
  %v4287 = vand.u32 %v70, 4294901760
  %4288 = vmatpush.msra.mxu0 %v4287
  %v4289 = vand.u32 %v68, 4294901760
  %4290 = vmatpush.msra.mxu0 %v4289
  %v4291 = vand.u32 %v66, 4294901760
  %4292 = vmatpush.msra.mxu0 %v4291
  %v4293 = vand.u32 %v64, 4294901760
  %4294 = vmatpush.msra.mxu0 %v4293
  %v4295 = vand.u32 %v62, 4294901760
  %4296 = vmatpush.msra.mxu0 %v4295
  %v4297 = vand.u32 %v60, 4294901760
  %4298 = vmatpush.msra.mxu0 %v4297
  %v4299 = vand.u32 %v58, 4294901760
  %4300 = vmatpush.msra.mxu0 %v4299
  %v4301 = vand.u32 %v56, 4294901760
  %4302 = vmatpush.msra.mxu0 %v4301
  %v4303 = vand.u32 %v4040, 4294901760
  %v4304 = vsub.f32 %v4040, %v4303
  %v4305 = vand.u32 %v4304, 4294901760
  %v4306 = vsub.f32 %v4304, %v4305
  %v4307 = vand.u32 %v4306, 4294901760
  %4308 = vmatmul.f32.gmra.mxu0 %v4307
  %v4309 = vpop.f32.mrf.mxu0
  %v4310 = vadd.f32 0.0, %v4309
  %4311 = vdwg.mxu0
  %4312 = vmatpush.msra.mxu0 0.0
  %4313 = vmatpush.msra.mxu0 0.0
  %4314 = vmatpush.msra.mxu0 0.0
  %4315 = vmatpush.msra.mxu0 0.0
  %4316 = vmatpush.msra.mxu0 0.0
  %4317 = vmatpush.msra.mxu0 0.0
  %4318 = vmatpush.msra.mxu0 0.0
  %4319 = vmatpush.msra.mxu0 0.0
  %v4320 = vand.u32 %v70, 4294901760
  %v4321 = vsub.f32 %v70, %v4320
  %v4322 = vand.u32 %v4321, 4294901760
  %v4323 = vsub.f32 %v4321, %v4322
  %v4324 = vand.u32 %v4323, 4294901760
  %4325 = vmatpush.msra.mxu0 %v4324
  %v4326 = vand.u32 %v68, 4294901760
  %v4327 = vsub.f32 %v68, %v4326
  %v4328 = vand.u32 %v4327, 4294901760
  %v4329 = vsub.f32 %v4327, %v4328
  %v4330 = vand.u32 %v4329, 4294901760
  %4331 = vmatpush.msra.mxu0 %v4330
  %v4332 = vand.u32 %v66, 4294901760
  %v4333 = vsub.f32 %v66, %v4332
  %v4334 = vand.u32 %v4333, 4294901760
  %v4335 = vsub.f32 %v4333, %v4334
  %v4336 = vand.u32 %v4335, 4294901760
  %4337 = vmatpush.msra.mxu0 %v4336
  %v4338 = vand.u32 %v64, 4294901760
  %v4339 = vsub.f32 %v64, %v4338
  %v4340 = vand.u32 %v4339, 4294901760
  %v4341 = vsub.f32 %v4339, %v4340
  %v4342 = vand.u32 %v4341, 4294901760
  %4343 = vmatpush.msra.mxu0 %v4342
  %v4344 = vand.u32 %v62, 4294901760
  %v4345 = vsub.f32 %v62, %v4344
  %v4346 = vand.u32 %v4345, 4294901760
  %v4347 = vsub.f32 %v4345, %v4346
  %v4348 = vand.u32 %v4347, 4294901760
  %4349 = vmatpush.msra.mxu0 %v4348
  %v4350 = vand.u32 %v60, 4294901760
  %v4351 = vsub.f32 %v60, %v4350
  %v4352 = vand.u32 %v4351, 4294901760
  %v4353 = vsub.f32 %v4351, %v4352
  %v4354 = vand.u32 %v4353, 4294901760
  %4355 = vmatpush.msra.mxu0 %v4354
  %v4356 = vand.u32 %v58, 4294901760
  %v4357 = vsub.f32 %v58, %v4356
  %v4358 = vand.u32 %v4357, 4294901760
  %v4359 = vsub.f32 %v4357, %v4358
  %v4360 = vand.u32 %v4359, 4294901760
  %4361 = vmatpush.msra.mxu0 %v4360
  %v4362 = vand.u32 %v56, 4294901760
  %v4363 = vsub.f32 %v56, %v4362
  %v4364 = vand.u32 %v4363, 4294901760
  %v4365 = vsub.f32 %v4363, %v4364
  %v4366 = vand.u32 %v4365, 4294901760
  %4367 = vmatpush.msra.mxu0 %v4366
  %v4368 = vand.u32 %v4040, 4294901760
  %4369 = vmatmul.f32.gmra.mxu0 %v4368
  %v4370 = vpop.f32.mrf.mxu0
  %v4371 = vadd.f32 %v4310, %v4370
  %4372 = vdwg.mxu0
  %4373 = vmatpush.msra.mxu0 0.0
  %4374 = vmatpush.msra.mxu0 0.0
  %4375 = vmatpush.msra.mxu0 0.0
  %4376 = vmatpush.msra.mxu0 0.0
  %4377 = vmatpush.msra.mxu0 0.0
  %4378 = vmatpush.msra.mxu0 0.0
  %4379 = vmatpush.msra.mxu0 0.0
  %4380 = vmatpush.msra.mxu0 0.0
  %v4381 = vand.u32 %v70, 4294901760
  %v4382 = vsub.f32 %v70, %v4381
  %4383 = vmatpush.msra.mxu0 %v4382
  %v4384 = vand.u32 %v68, 4294901760
  %v4385 = vsub.f32 %v68, %v4384
  %4386 = vmatpush.msra.mxu0 %v4385
  %v4387 = vand.u32 %v66, 4294901760
  %v4388 = vsub.f32 %v66, %v4387
  %4389 = vmatpush.msra.mxu0 %v4388
  %v4390 = vand.u32 %v64, 4294901760
  %v4391 = vsub.f32 %v64, %v4390
  %4392 = vmatpush.msra.mxu0 %v4391
  %v4393 = vand.u32 %v62, 4294901760
  %v4394 = vsub.f32 %v62, %v4393
  %4395 = vmatpush.msra.mxu0 %v4394
  %v4396 = vand.u32 %v60, 4294901760
  %v4397 = vsub.f32 %v60, %v4396
  %4398 = vmatpush.msra.mxu0 %v4397
  %v4399 = vand.u32 %v58, 4294901760
  %v4400 = vsub.f32 %v58, %v4399
  %4401 = vmatpush.msra.mxu0 %v4400
  %v4402 = vand.u32 %v56, 4294901760
  %v4403 = vsub.f32 %v56, %v4402
  %4404 = vmatpush.msra.mxu0 %v4403
  %v4405 = vand.u32 %v4040, 4294901760
  %v4406 = vsub.f32 %v4040, %v4405
  %4407 = vmatmul.f32.gmra.mxu0 %v4406
  %v4408 = vpop.f32.mrf.mxu0
  %v4409 = vadd.f32 %v4371, %v4408
  %4410 = vdwg.mxu0
  %4411 = vmatpush.msra.mxu0 0.0
  %4412 = vmatpush.msra.mxu0 0.0
  %4413 = vmatpush.msra.mxu0 0.0
  %4414 = vmatpush.msra.mxu0 0.0
  %4415 = vmatpush.msra.mxu0 0.0
  %4416 = vmatpush.msra.mxu0 0.0
  %4417 = vmatpush.msra.mxu0 0.0
  %4418 = vmatpush.msra.mxu0 0.0
  %v4419 = vand.u32 %v70, 4294901760
  %4420 = vmatpush.msra.mxu0 %v4419
  %v4421 = vand.u32 %v68, 4294901760
  %4422 = vmatpush.msra.mxu0 %v4421
  %v4423 = vand.u32 %v66, 4294901760
  %4424 = vmatpush.msra.mxu0 %v4423
  %v4425 = vand.u32 %v64, 4294901760
  %4426 = vmatpush.msra.mxu0 %v4425
  %v4427 = vand.u32 %v62, 4294901760
  %4428 = vmatpush.msra.mxu0 %v4427
  %v4429 = vand.u32 %v60, 4294901760
  %4430 = vmatpush.msra.mxu0 %v4429
  %v4431 = vand.u32 %v58, 4294901760
  %4432 = vmatpush.msra.mxu0 %v4431
  %v4433 = vand.u32 %v56, 4294901760
  %4434 = vmatpush.msra.mxu0 %v4433
  %v4435 = vand.u32 %v4040, 4294901760
  %v4436 = vsub.f32 %v4040, %v4435
  %v4437 = vand.u32 %v4436, 4294901760
  %4438 = vmatmul.f32.gmra.mxu0 %v4437
  %v4439 = vpop.f32.mrf.mxu0
  %v4440 = vadd.f32 %v4409, %v4439
  %4441 = vdwg.mxu0
  %4442 = vmatpush.msra.mxu0 0.0
  %4443 = vmatpush.msra.mxu0 0.0
  %4444 = vmatpush.msra.mxu0 0.0
  %4445 = vmatpush.msra.mxu0 0.0
  %4446 = vmatpush.msra.mxu0 0.0
  %4447 = vmatpush.msra.mxu0 0.0
  %4448 = vmatpush.msra.mxu0 0.0
  %4449 = vmatpush.msra.mxu0 0.0
  %v4450 = vand.u32 %v70, 4294901760
  %v4451 = vsub.f32 %v70, %v4450
  %v4452 = vand.u32 %v4451, 4294901760
  %4453 = vmatpush.msra.mxu0 %v4452
  %v4454 = vand.u32 %v68, 4294901760
  %v4455 = vsub.f32 %v68, %v4454
  %v4456 = vand.u32 %v4455, 4294901760
  %4457 = vmatpush.msra.mxu0 %v4456
  %v4458 = vand.u32 %v66, 4294901760
  %v4459 = vsub.f32 %v66, %v4458
  %v4460 = vand.u32 %v4459, 4294901760
  %4461 = vmatpush.msra.mxu0 %v4460
  %v4462 = vand.u32 %v64, 4294901760
  %v4463 = vsub.f32 %v64, %v4462
  %v4464 = vand.u32 %v4463, 4294901760
  %4465 = vmatpush.msra.mxu0 %v4464
  %v4466 = vand.u32 %v62, 4294901760
  %v4467 = vsub.f32 %v62, %v4466
  %v4468 = vand.u32 %v4467, 4294901760
  %4469 = vmatpush.msra.mxu0 %v4468
  %v4470 = vand.u32 %v60, 4294901760
  %v4471 = vsub.f32 %v60, %v4470
  %v4472 = vand.u32 %v4471, 4294901760
  %4473 = vmatpush.msra.mxu0 %v4472
  %v4474 = vand.u32 %v58, 4294901760
  %v4475 = vsub.f32 %v58, %v4474
  %v4476 = vand.u32 %v4475, 4294901760
  %4477 = vmatpush.msra.mxu0 %v4476
  %v4478 = vand.u32 %v56, 4294901760
  %v4479 = vsub.f32 %v56, %v4478
  %v4480 = vand.u32 %v4479, 4294901760
  %4481 = vmatpush.msra.mxu0 %v4480
  %v4482 = vand.u32 %v4040, 4294901760
  %4483 = vmatmul.f32.gmra.mxu0 %v4482
  %v4484 = vpop.f32.mrf.mxu0
  %v4485 = vadd.f32 %v4440, %v4484
  %4486 = vdwg.mxu0
  %4487 = vmatpush.msra.mxu0 0.0
  %4488 = vmatpush.msra.mxu0 0.0
  %4489 = vmatpush.msra.mxu0 0.0
  %4490 = vmatpush.msra.mxu0 0.0
  %4491 = vmatpush.msra.mxu0 0.0
  %4492 = vmatpush.msra.mxu0 0.0
  %4493 = vmatpush.msra.mxu0 0.0
  %4494 = vmatpush.msra.mxu0 0.0
  %v4495 = vand.u32 %v70, 4294901760
  %4496 = vmatpush.msra.mxu0 %v4495
  %v4497 = vand.u32 %v68, 4294901760
  %4498 = vmatpush.msra.mxu0 %v4497
  %v4499 = vand.u32 %v66, 4294901760
  %4500 = vmatpush.msra.mxu0 %v4499
  %v4501 = vand.u32 %v64, 4294901760
  %4502 = vmatpush.msra.mxu0 %v4501
  %v4503 = vand.u32 %v62, 4294901760
  %4504 = vmatpush.msra.mxu0 %v4503
  %v4505 = vand.u32 %v60, 4294901760
  %4506 = vmatpush.msra.mxu0 %v4505
  %v4507 = vand.u32 %v58, 4294901760
  %4508 = vmatpush.msra.mxu0 %v4507
  %v4509 = vand.u32 %v56, 4294901760
  %4510 = vmatpush.msra.mxu0 %v4509
  %v4511 = vand.u32 %v4040, 4294901760
  %4512 = vmatmul.f32.gmra.mxu0 %v4511
  %v4513 = vpop.f32.mrf.mxu0
  %v4514 = vadd.f32 %v4485, %v4513
  %4515 = vdwg.mxu0
  %v4516 = vadd.f32 %v476, %v4277
  %v4517 = vadd.f32 %v852, %v4514
  %v4518 = vxor.u32 %v4516, 2147483648
  %v4519 = vxor.u32 %v4517, 2147483648
  %v4520 = vmul.f32 %v4518, 1.442695
  %v4521 = vpow.pop %v4520
  %v4522 = vmul.f32 %v4519, 1.442695
  %v4523 = vpow.pop %v4522
  %v4524 = vadd.f32 %v4521, 1.0
  %v4525 = vadd.f32 %v4523, 1.0
  %v4526 = vrcp.pop %v4524
  %v4527 = vmul.f32 %v4524, %v4526
  %v4528 = vsub.f32 1.0, %v4527
  %v4529 = vmul.f32 %v4526, %v4528
  %v4530 = vadd.f32 %v4526, %v4529
  %vm4531 = vweird.f32 %v4524
  %vm4532 = vweird.f32 %v4526
  %vm4533 = vmor %vm4531, %vm4532
  %v4534 = vsel %vm4533, %v4526, %v4530
  %v4535 = vand.u32 2147483647, %v4524
  %vm4536 = vcmp.eq.f32.partialorder %v4535, 8.507059e+37
  %v4537 = vand.u32 %v4524, 2147483648
  %v4538 = vor.u32 1.1754944e-38, %v4537
  %v4539 = vsel %vm4536, %v4538, %v4534
  %v4540 = vmul.f32 1.0, %v4539
  %v4541 = vrcp.pop %v4525
  %v4542 = vmul.f32 %v4525, %v4541
  %v4543 = vsub.f32 1.0, %v4542
  %v4544 = vmul.f32 %v4541, %v4543
  %v4545 = vadd.f32 %v4541, %v4544
  %vm4546 = vweird.f32 %v4525
  %vm4547 = vweird.f32 %v4541
  %vm4548 = vmor %vm4546, %vm4547
  %v4549 = vsel %vm4548, %v4541, %v4545
  %v4550 = vand.u32 2147483647, %v4525
  %vm4551 = vcmp.eq.f32.partialorder %v4550, 8.507059e+37
  %v4552 = vand.u32 %v4525, 2147483648
  %v4553 = vor.u32 1.1754944e-38, %v4552
  %v4554 = vsel %vm4551, %v4553, %v4549
  %v4555 = vmul.f32 1.0, %v4554
  %v4556 = vmul.f32 %v4555, 2.0
  %v4557 = vsub.f32 %v4556, 1.0
  %v4558 = vmul.f32 %v4540, %v4034
  %v4559 = vmul.f32 %v4540, %v4557
  %4561 = vrot.lane.b32.xlu0 %v4559, 64
  %v4562 = vpop.permute.xlu0 %4561
  %v4564 = vadd.f32 %v4558, %v4562
  %v4565 = vtanh.pop %v4564
  %v4566 = vmul.f32 %v4555, %v4565
  %4568 = vrot.lane.b32.xlu0 %v4566, 64
  %v4569 = vpop.permute.xlu0 %4568
  %v4570 = vsel %vm858, %v4569, 0
  %4572 = vmatpush.msra.mxu0 0.0
  %4573 = vmatpush.msra.mxu0 0.0
  %4574 = vmatpush.msra.mxu0 0.0
  %4575 = vmatpush.msra.mxu0 0.0
  %4576 = vmatpush.msra.mxu0 0.0
  %4577 = vmatpush.msra.mxu0 0.0
  %4578 = vmatpush.msra.mxu0 0.0
  %4579 = vmatpush.msra.mxu0 0.0
  %v4580 = vand.u32 %v69, 4294901760
  %4581 = vmatpush.msra.mxu0 %v4580
  %v4582 = vand.u32 %v67, 4294901760
  %4583 = vmatpush.msra.mxu0 %v4582
  %v4584 = vand.u32 %v65, 4294901760
  %4585 = vmatpush.msra.mxu0 %v4584
  %v4586 = vand.u32 %v63, 4294901760
  %4587 = vmatpush.msra.mxu0 %v4586
  %v4588 = vand.u32 %v61, 4294901760
  %4589 = vmatpush.msra.mxu0 %v4588
  %v4590 = vand.u32 %v59, 4294901760
  %4591 = vmatpush.msra.mxu0 %v4590
  %v4592 = vand.u32 %v57, 4294901760
  %4593 = vmatpush.msra.mxu0 %v4592
  %v4594 = vand.u32 %v55, 4294901760
  %4595 = vmatpush.msra.mxu0 %v4594
  %v4596 = vand.u32 %v4570, 4294901760
  %v4597 = vsub.f32 %v4570, %v4596
  %v4598 = vand.u32 %v4597, 4294901760
  %v4599 = vsub.f32 %v4597, %v4598
  %v4600 = vand.u32 %v4599, 4294901760
  %4601 = vmatmul.f32.gmra.mxu0 %v4600
  %v4602 = vpop.f32.mrf.mxu0
  %v4603 = vadd.f32 0.0, %v4602
  %4604 = vdwg.mxu0
  %4605 = vmatpush.msra.mxu0 0.0
  %4606 = vmatpush.msra.mxu0 0.0
  %4607 = vmatpush.msra.mxu0 0.0
  %4608 = vmatpush.msra.mxu0 0.0
  %4609 = vmatpush.msra.mxu0 0.0
  %4610 = vmatpush.msra.mxu0 0.0
  %4611 = vmatpush.msra.mxu0 0.0
  %4612 = vmatpush.msra.mxu0 0.0
  %v4613 = vand.u32 %v69, 4294901760
  %v4614 = vsub.f32 %v69, %v4613
  %v4615 = vand.u32 %v4614, 4294901760
  %v4616 = vsub.f32 %v4614, %v4615
  %v4617 = vand.u32 %v4616, 4294901760
  %4618 = vmatpush.msra.mxu0 %v4617
  %v4619 = vand.u32 %v67, 4294901760
  %v4620 = vsub.f32 %v67, %v4619
  %v4621 = vand.u32 %v4620, 4294901760
  %v4622 = vsub.f32 %v4620, %v4621
  %v4623 = vand.u32 %v4622, 4294901760
  %4624 = vmatpush.msra.mxu0 %v4623
  %v4625 = vand.u32 %v65, 4294901760
  %v4626 = vsub.f32 %v65, %v4625
  %v4627 = vand.u32 %v4626, 4294901760
  %v4628 = vsub.f32 %v4626, %v4627
  %v4629 = vand.u32 %v4628, 4294901760
  %4630 = vmatpush.msra.mxu0 %v4629
  %v4631 = vand.u32 %v63, 4294901760
  %v4632 = vsub.f32 %v63, %v4631
  %v4633 = vand.u32 %v4632, 4294901760
  %v4634 = vsub.f32 %v4632, %v4633
  %v4635 = vand.u32 %v4634, 4294901760
  %4636 = vmatpush.msra.mxu0 %v4635
  %v4637 = vand.u32 %v61, 4294901760
  %v4638 = vsub.f32 %v61, %v4637
  %v4639 = vand.u32 %v4638, 4294901760
  %v4640 = vsub.f32 %v4638, %v4639
  %v4641 = vand.u32 %v4640, 4294901760
  %4642 = vmatpush.msra.mxu0 %v4641
  %v4643 = vand.u32 %v59, 4294901760
  %v4644 = vsub.f32 %v59, %v4643
  %v4645 = vand.u32 %v4644, 4294901760
  %v4646 = vsub.f32 %v4644, %v4645
  %v4647 = vand.u32 %v4646, 4294901760
  %4648 = vmatpush.msra.mxu0 %v4647
  %v4649 = vand.u32 %v57, 4294901760
  %v4650 = vsub.f32 %v57, %v4649
  %v4651 = vand.u32 %v4650, 4294901760
  %v4652 = vsub.f32 %v4650, %v4651
  %v4653 = vand.u32 %v4652, 4294901760
  %4654 = vmatpush.msra.mxu0 %v4653
  %v4655 = vand.u32 %v55, 4294901760
  %v4656 = vsub.f32 %v55, %v4655
  %v4657 = vand.u32 %v4656, 4294901760
  %v4658 = vsub.f32 %v4656, %v4657
  %v4659 = vand.u32 %v4658, 4294901760
  %4660 = vmatpush.msra.mxu0 %v4659
  %v4661 = vand.u32 %v4570, 4294901760
  %4662 = vmatmul.f32.gmra.mxu0 %v4661
  %v4663 = vpop.f32.mrf.mxu0
  %v4664 = vadd.f32 %v4603, %v4663
  %4665 = vdwg.mxu0
  %4666 = vmatpush.msra.mxu0 0.0
  %4667 = vmatpush.msra.mxu0 0.0
  %4668 = vmatpush.msra.mxu0 0.0
  %4669 = vmatpush.msra.mxu0 0.0
  %4670 = vmatpush.msra.mxu0 0.0
  %4671 = vmatpush.msra.mxu0 0.0
  %4672 = vmatpush.msra.mxu0 0.0
  %4673 = vmatpush.msra.mxu0 0.0
  %v4674 = vand.u32 %v69, 4294901760
  %v4675 = vsub.f32 %v69, %v4674
  %4676 = vmatpush.msra.mxu0 %v4675
  %v4677 = vand.u32 %v67, 4294901760
  %v4678 = vsub.f32 %v67, %v4677
  %4679 = vmatpush.msra.mxu0 %v4678
  %v4680 = vand.u32 %v65, 4294901760
  %v4681 = vsub.f32 %v65, %v4680
  %4682 = vmatpush.msra.mxu0 %v4681
  %v4683 = vand.u32 %v63, 4294901760
  %v4684 = vsub.f32 %v63, %v4683
  %4685 = vmatpush.msra.mxu0 %v4684
  %v4686 = vand.u32 %v61, 4294901760
  %v4687 = vsub.f32 %v61, %v4686
  %4688 = vmatpush.msra.mxu0 %v4687
  %v4689 = vand.u32 %v59, 4294901760
  %v4690 = vsub.f32 %v59, %v4689
  %4691 = vmatpush.msra.mxu0 %v4690
  %v4692 = vand.u32 %v57, 4294901760
  %v4693 = vsub.f32 %v57, %v4692
  %4694 = vmatpush.msra.mxu0 %v4693
  %v4695 = vand.u32 %v55, 4294901760
  %v4696 = vsub.f32 %v55, %v4695
  %4697 = vmatpush.msra.mxu0 %v4696
  %v4698 = vand.u32 %v4570, 4294901760
  %v4699 = vsub.f32 %v4570, %v4698
  %4700 = vmatmul.f32.gmra.mxu0 %v4699
  %v4701 = vpop.f32.mrf.mxu0
  %v4702 = vadd.f32 %v4664, %v4701
  %4703 = vdwg.mxu0
  %4704 = vmatpush.msra.mxu0 0.0
  %4705 = vmatpush.msra.mxu0 0.0
  %4706 = vmatpush.msra.mxu0 0.0
  %4707 = vmatpush.msra.mxu0 0.0
  %4708 = vmatpush.msra.mxu0 0.0
  %4709 = vmatpush.msra.mxu0 0.0
  %4710 = vmatpush.msra.mxu0 0.0
  %4711 = vmatpush.msra.mxu0 0.0
  %v4712 = vand.u32 %v69, 4294901760
  %4713 = vmatpush.msra.mxu0 %v4712
  %v4714 = vand.u32 %v67, 4294901760
  %4715 = vmatpush.msra.mxu0 %v4714
  %v4716 = vand.u32 %v65, 4294901760
  %4717 = vmatpush.msra.mxu0 %v4716
  %v4718 = vand.u32 %v63, 4294901760
  %4719 = vmatpush.msra.mxu0 %v4718
  %v4720 = vand.u32 %v61, 4294901760
  %4721 = vmatpush.msra.mxu0 %v4720
  %v4722 = vand.u32 %v59, 4294901760
  %4723 = vmatpush.msra.mxu0 %v4722
  %v4724 = vand.u32 %v57, 4294901760
  %4725 = vmatpush.msra.mxu0 %v4724
  %v4726 = vand.u32 %v55, 4294901760
  %4727 = vmatpush.msra.mxu0 %v4726
  %v4728 = vand.u32 %v4570, 4294901760
  %v4729 = vsub.f32 %v4570, %v4728
  %v4730 = vand.u32 %v4729, 4294901760
  %4731 = vmatmul.f32.gmra.mxu0 %v4730
  %v4732 = vpop.f32.mrf.mxu0
  %v4733 = vadd.f32 %v4702, %v4732
  %4734 = vdwg.mxu0
  %4735 = vmatpush.msra.mxu0 0.0
  %4736 = vmatpush.msra.mxu0 0.0
  %4737 = vmatpush.msra.mxu0 0.0
  %4738 = vmatpush.msra.mxu0 0.0
  %4739 = vmatpush.msra.mxu0 0.0
  %4740 = vmatpush.msra.mxu0 0.0
  %4741 = vmatpush.msra.mxu0 0.0
  %4742 = vmatpush.msra.mxu0 0.0
  %v4743 = vand.u32 %v69, 4294901760
  %v4744 = vsub.f32 %v69, %v4743
  %v4745 = vand.u32 %v4744, 4294901760
  %4746 = vmatpush.msra.mxu0 %v4745
  %v4747 = vand.u32 %v67, 4294901760
  %v4748 = vsub.f32 %v67, %v4747
  %v4749 = vand.u32 %v4748, 4294901760
  %4750 = vmatpush.msra.mxu0 %v4749
  %v4751 = vand.u32 %v65, 4294901760
  %v4752 = vsub.f32 %v65, %v4751
  %v4753 = vand.u32 %v4752, 4294901760
  %4754 = vmatpush.msra.mxu0 %v4753
  %v4755 = vand.u32 %v63, 4294901760
  %v4756 = vsub.f32 %v63, %v4755
  %v4757 = vand.u32 %v4756, 4294901760
  %4758 = vmatpush.msra.mxu0 %v4757
  %v4759 = vand.u32 %v61, 4294901760
  %v4760 = vsub.f32 %v61, %v4759
  %v4761 = vand.u32 %v4760, 4294901760
  %4762 = vmatpush.msra.mxu0 %v4761
  %v4763 = vand.u32 %v59, 4294901760
  %v4764 = vsub.f32 %v59, %v4763
  %v4765 = vand.u32 %v4764, 4294901760
  %4766 = vmatpush.msra.mxu0 %v4765
  %v4767 = vand.u32 %v57, 4294901760
  %v4768 = vsub.f32 %v57, %v4767
  %v4769 = vand.u32 %v4768, 4294901760
  %4770 = vmatpush.msra.mxu0 %v4769
  %v4771 = vand.u32 %v55, 4294901760
  %v4772 = vsub.f32 %v55, %v4771
  %v4773 = vand.u32 %v4772, 4294901760
  %4774 = vmatpush.msra.mxu0 %v4773
  %v4775 = vand.u32 %v4570, 4294901760
  %4776 = vmatmul.f32.gmra.mxu0 %v4775
  %v4777 = vpop.f32.mrf.mxu0
  %v4778 = vadd.f32 %v4733, %v4777
  %4779 = vdwg.mxu0
  %4780 = vmatpush.msra.mxu0 0.0
  %4781 = vmatpush.msra.mxu0 0.0
  %4782 = vmatpush.msra.mxu0 0.0
  %4783 = vmatpush.msra.mxu0 0.0
  %4784 = vmatpush.msra.mxu0 0.0
  %4785 = vmatpush.msra.mxu0 0.0
  %4786 = vmatpush.msra.mxu0 0.0
  %4787 = vmatpush.msra.mxu0 0.0
  %v4788 = vand.u32 %v69, 4294901760
  %4789 = vmatpush.msra.mxu0 %v4788
  %v4790 = vand.u32 %v67, 4294901760
  %4791 = vmatpush.msra.mxu0 %v4790
  %v4792 = vand.u32 %v65, 4294901760
  %4793 = vmatpush.msra.mxu0 %v4792
  %v4794 = vand.u32 %v63, 4294901760
  %4795 = vmatpush.msra.mxu0 %v4794
  %v4796 = vand.u32 %v61, 4294901760
  %4797 = vmatpush.msra.mxu0 %v4796
  %v4798 = vand.u32 %v59, 4294901760
  %4799 = vmatpush.msra.mxu0 %v4798
  %v4800 = vand.u32 %v57, 4294901760
  %4801 = vmatpush.msra.mxu0 %v4800
  %v4802 = vand.u32 %v55, 4294901760
  %4803 = vmatpush.msra.mxu0 %v4802
  %v4804 = vand.u32 %v4570, 4294901760
  %4805 = vmatmul.f32.gmra.mxu0 %v4804
  %v4806 = vpop.f32.mrf.mxu0
  %v4807 = vadd.f32 %v4778, %v4806
  %4808 = vdwg.mxu0
  %4809 = vmatpush.msra.mxu0 0.0
  %4810 = vmatpush.msra.mxu0 0.0
  %4811 = vmatpush.msra.mxu0 0.0
  %4812 = vmatpush.msra.mxu0 0.0
  %4813 = vmatpush.msra.mxu0 0.0
  %4814 = vmatpush.msra.mxu0 0.0
  %4815 = vmatpush.msra.mxu0 0.0
  %4816 = vmatpush.msra.mxu0 0.0
  %v4817 = vand.u32 %v70, 4294901760
  %4818 = vmatpush.msra.mxu0 %v4817
  %v4819 = vand.u32 %v68, 4294901760
  %4820 = vmatpush.msra.mxu0 %v4819
  %v4821 = vand.u32 %v66, 4294901760
  %4822 = vmatpush.msra.mxu0 %v4821
  %v4823 = vand.u32 %v64, 4294901760
  %4824 = vmatpush.msra.mxu0 %v4823
  %v4825 = vand.u32 %v62, 4294901760
  %4826 = vmatpush.msra.mxu0 %v4825
  %v4827 = vand.u32 %v60, 4294901760
  %4828 = vmatpush.msra.mxu0 %v4827
  %v4829 = vand.u32 %v58, 4294901760
  %4830 = vmatpush.msra.mxu0 %v4829
  %v4831 = vand.u32 %v56, 4294901760
  %4832 = vmatpush.msra.mxu0 %v4831
  %v4833 = vand.u32 %v4570, 4294901760
  %v4834 = vsub.f32 %v4570, %v4833
  %v4835 = vand.u32 %v4834, 4294901760
  %v4836 = vsub.f32 %v4834, %v4835
  %v4837 = vand.u32 %v4836, 4294901760
  %4838 = vmatmul.f32.gmra.mxu0 %v4837
  %v4839 = vpop.f32.mrf.mxu0
  %v4840 = vadd.f32 0.0, %v4839
  %4841 = vdwg.mxu0
  %4842 = vmatpush.msra.mxu0 0.0
  %4843 = vmatpush.msra.mxu0 0.0
  %4844 = vmatpush.msra.mxu0 0.0
  %4845 = vmatpush.msra.mxu0 0.0
  %4846 = vmatpush.msra.mxu0 0.0
  %4847 = vmatpush.msra.mxu0 0.0
  %4848 = vmatpush.msra.mxu0 0.0
  %4849 = vmatpush.msra.mxu0 0.0
  %v4850 = vand.u32 %v70, 4294901760
  %v4851 = vsub.f32 %v70, %v4850
  %v4852 = vand.u32 %v4851, 4294901760
  %v4853 = vsub.f32 %v4851, %v4852
  %v4854 = vand.u32 %v4853, 4294901760
  %4855 = vmatpush.msra.mxu0 %v4854
  %v4856 = vand.u32 %v68, 4294901760
  %v4857 = vsub.f32 %v68, %v4856
  %v4858 = vand.u32 %v4857, 4294901760
  %v4859 = vsub.f32 %v4857, %v4858
  %v4860 = vand.u32 %v4859, 4294901760
  %4861 = vmatpush.msra.mxu0 %v4860
  %v4862 = vand.u32 %v66, 4294901760
  %v4863 = vsub.f32 %v66, %v4862
  %v4864 = vand.u32 %v4863, 4294901760
  %v4865 = vsub.f32 %v4863, %v4864
  %v4866 = vand.u32 %v4865, 4294901760
  %4867 = vmatpush.msra.mxu0 %v4866
  %v4868 = vand.u32 %v64, 4294901760
  %v4869 = vsub.f32 %v64, %v4868
  %v4870 = vand.u32 %v4869, 4294901760
  %v4871 = vsub.f32 %v4869, %v4870
  %v4872 = vand.u32 %v4871, 4294901760
  %4873 = vmatpush.msra.mxu0 %v4872
  %v4874 = vand.u32 %v62, 4294901760
  %v4875 = vsub.f32 %v62, %v4874
  %v4876 = vand.u32 %v4875, 4294901760
  %v4877 = vsub.f32 %v4875, %v4876
  %v4878 = vand.u32 %v4877, 4294901760
  %4879 = vmatpush.msra.mxu0 %v4878
  %v4880 = vand.u32 %v60, 4294901760
  %v4881 = vsub.f32 %v60, %v4880
  %v4882 = vand.u32 %v4881, 4294901760
  %v4883 = vsub.f32 %v4881, %v4882
  %v4884 = vand.u32 %v4883, 4294901760
  %4885 = vmatpush.msra.mxu0 %v4884
  %v4886 = vand.u32 %v58, 4294901760
  %v4887 = vsub.f32 %v58, %v4886
  %v4888 = vand.u32 %v4887, 4294901760
  %v4889 = vsub.f32 %v4887, %v4888
  %v4890 = vand.u32 %v4889, 4294901760
  %4891 = vmatpush.msra.mxu0 %v4890
  %v4892 = vand.u32 %v56, 4294901760
  %v4893 = vsub.f32 %v56, %v4892
  %v4894 = vand.u32 %v4893, 4294901760
  %v4895 = vsub.f32 %v4893, %v4894
  %v4896 = vand.u32 %v4895, 4294901760
  %4897 = vmatpush.msra.mxu0 %v4896
  %v4898 = vand.u32 %v4570, 4294901760
  %4899 = vmatmul.f32.gmra.mxu0 %v4898
  %v4900 = vpop.f32.mrf.mxu0
  %v4901 = vadd.f32 %v4840, %v4900
  %4902 = vdwg.mxu0
  %4903 = vmatpush.msra.mxu0 0.0
  %4904 = vmatpush.msra.mxu0 0.0
  %4905 = vmatpush.msra.mxu0 0.0
  %4906 = vmatpush.msra.mxu0 0.0
  %4907 = vmatpush.msra.mxu0 0.0
  %4908 = vmatpush.msra.mxu0 0.0
  %4909 = vmatpush.msra.mxu0 0.0
  %4910 = vmatpush.msra.mxu0 0.0
  %v4911 = vand.u32 %v70, 4294901760
  %v4912 = vsub.f32 %v70, %v4911
  %4913 = vmatpush.msra.mxu0 %v4912
  %v4914 = vand.u32 %v68, 4294901760
  %v4915 = vsub.f32 %v68, %v4914
  %4916 = vmatpush.msra.mxu0 %v4915
  %v4917 = vand.u32 %v66, 4294901760
  %v4918 = vsub.f32 %v66, %v4917
  %4919 = vmatpush.msra.mxu0 %v4918
  %v4920 = vand.u32 %v64, 4294901760
  %v4921 = vsub.f32 %v64, %v4920
  %4922 = vmatpush.msra.mxu0 %v4921
  %v4923 = vand.u32 %v62, 4294901760
  %v4924 = vsub.f32 %v62, %v4923
  %4925 = vmatpush.msra.mxu0 %v4924
  %v4926 = vand.u32 %v60, 4294901760
  %v4927 = vsub.f32 %v60, %v4926
  %4928 = vmatpush.msra.mxu0 %v4927
  %v4929 = vand.u32 %v58, 4294901760
  %v4930 = vsub.f32 %v58, %v4929
  %4931 = vmatpush.msra.mxu0 %v4930
  %v4932 = vand.u32 %v56, 4294901760
  %v4933 = vsub.f32 %v56, %v4932
  %4934 = vmatpush.msra.mxu0 %v4933
  %v4935 = vand.u32 %v4570, 4294901760
  %v4936 = vsub.f32 %v4570, %v4935
  %4937 = vmatmul.f32.gmra.mxu0 %v4936
  %v4938 = vpop.f32.mrf.mxu0
  %v4939 = vadd.f32 %v4901, %v4938
  %4940 = vdwg.mxu0
  %4941 = vmatpush.msra.mxu0 0.0
  %4942 = vmatpush.msra.mxu0 0.0
  %4943 = vmatpush.msra.mxu0 0.0
  %4944 = vmatpush.msra.mxu0 0.0
  %4945 = vmatpush.msra.mxu0 0.0
  %4946 = vmatpush.msra.mxu0 0.0
  %4947 = vmatpush.msra.mxu0 0.0
  %4948 = vmatpush.msra.mxu0 0.0
  %v4949 = vand.u32 %v70, 4294901760
  %4950 = vmatpush.msra.mxu0 %v4949
  %v4951 = vand.u32 %v68, 4294901760
  %4952 = vmatpush.msra.mxu0 %v4951
  %v4953 = vand.u32 %v66, 4294901760
  %4954 = vmatpush.msra.mxu0 %v4953
  %v4955 = vand.u32 %v64, 4294901760
  %4956 = vmatpush.msra.mxu0 %v4955
  %v4957 = vand.u32 %v62, 4294901760
  %4958 = vmatpush.msra.mxu0 %v4957
  %v4959 = vand.u32 %v60, 4294901760
  %4960 = vmatpush.msra.mxu0 %v4959
  %v4961 = vand.u32 %v58, 4294901760
  %4962 = vmatpush.msra.mxu0 %v4961
  %v4963 = vand.u32 %v56, 4294901760
  %4964 = vmatpush.msra.mxu0 %v4963
  %v4965 = vand.u32 %v4570, 4294901760
  %v4966 = vsub.f32 %v4570, %v4965
  %v4967 = vand.u32 %v4966, 4294901760
  %4968 = vmatmul.f32.gmra.mxu0 %v4967
  %v4969 = vpop.f32.mrf.mxu0
  %v4970 = vadd.f32 %v4939, %v4969
  %4971 = vdwg.mxu0
  %4972 = vmatpush.msra.mxu0 0.0
  %4973 = vmatpush.msra.mxu0 0.0
  %4974 = vmatpush.msra.mxu0 0.0
  %4975 = vmatpush.msra.mxu0 0.0
  %4976 = vmatpush.msra.mxu0 0.0
  %4977 = vmatpush.msra.mxu0 0.0
  %4978 = vmatpush.msra.mxu0 0.0
  %4979 = vmatpush.msra.mxu0 0.0
  %v4980 = vand.u32 %v70, 4294901760
  %v4981 = vsub.f32 %v70, %v4980
  %v4982 = vand.u32 %v4981, 4294901760
  %4983 = vmatpush.msra.mxu0 %v4982
  %v4984 = vand.u32 %v68, 4294901760
  %v4985 = vsub.f32 %v68, %v4984
  %v4986 = vand.u32 %v4985, 4294901760
  %4987 = vmatpush.msra.mxu0 %v4986
  %v4988 = vand.u32 %v66, 4294901760
  %v4989 = vsub.f32 %v66, %v4988
  %v4990 = vand.u32 %v4989, 4294901760
  %4991 = vmatpush.msra.mxu0 %v4990
  %v4992 = vand.u32 %v64, 4294901760
  %v4993 = vsub.f32 %v64, %v4992
  %v4994 = vand.u32 %v4993, 4294901760
  %4995 = vmatpush.msra.mxu0 %v4994
  %v4996 = vand.u32 %v62, 4294901760
  %v4997 = vsub.f32 %v62, %v4996
  %v4998 = vand.u32 %v4997, 4294901760
  %4999 = vmatpush.msra.mxu0 %v4998
  %v5000 = vand.u32 %v60, 4294901760
  %v5001 = vsub.f32 %v60, %v5000
  %v5002 = vand.u32 %v5001, 4294901760
  %5003 = vmatpush.msra.mxu0 %v5002
  %v5004 = vand.u32 %v58, 4294901760
  %v5005 = vsub.f32 %v58, %v5004
  %v5006 = vand.u32 %v5005, 4294901760
  %5007 = vmatpush.msra.mxu0 %v5006
  %v5008 = vand.u32 %v56, 4294901760
  %v5009 = vsub.f32 %v56, %v5008
  %v5010 = vand.u32 %v5009, 4294901760
  %5011 = vmatpush.msra.mxu0 %v5010
  %v5012 = vand.u32 %v4570, 4294901760
  %5013 = vmatmul.f32.gmra.mxu0 %v5012
  %v5014 = vpop.f32.mrf.mxu0
  %v5015 = vadd.f32 %v4970, %v5014
  %5016 = vdwg.mxu0
  %5017 = vmatpush.msra.mxu0 0.0
  %5018 = vmatpush.msra.mxu0 0.0
  %5019 = vmatpush.msra.mxu0 0.0
  %5020 = vmatpush.msra.mxu0 0.0
  %5021 = vmatpush.msra.mxu0 0.0
  %5022 = vmatpush.msra.mxu0 0.0
  %5023 = vmatpush.msra.mxu0 0.0
  %5024 = vmatpush.msra.mxu0 0.0
  %v5025 = vand.u32 %v70, 4294901760
  %5026 = vmatpush.msra.mxu0 %v5025
  %v5027 = vand.u32 %v68, 4294901760
  %5028 = vmatpush.msra.mxu0 %v5027
  %v5029 = vand.u32 %v66, 4294901760
  %5030 = vmatpush.msra.mxu0 %v5029
  %v5031 = vand.u32 %v64, 4294901760
  %5032 = vmatpush.msra.mxu0 %v5031
  %v5033 = vand.u32 %v62, 4294901760
  %5034 = vmatpush.msra.mxu0 %v5033
  %v5035 = vand.u32 %v60, 4294901760
  %5036 = vmatpush.msra.mxu0 %v5035
  %v5037 = vand.u32 %v58, 4294901760
  %5038 = vmatpush.msra.mxu0 %v5037
  %v5039 = vand.u32 %v56, 4294901760
  %5040 = vmatpush.msra.mxu0 %v5039
  %v5041 = vand.u32 %v4570, 4294901760
  %5042 = vmatmul.f32.gmra.mxu0 %v5041
  %v5043 = vpop.f32.mrf.mxu0
  %v5044 = vadd.f32 %v5015, %v5043
  %5045 = vdwg.mxu0
  %v5046 = vadd.f32 %v480, %v4807
  %v5047 = vadd.f32 %v856, %v5044
  %v5048 = vxor.u32 %v5046, 2147483648
  %v5049 = vxor.u32 %v5047, 2147483648
  %v5050 = vmul.f32 %v5048, 1.442695
  %v5051 = vpow.pop %v5050
  %v5052 = vmul.f32 %v5049, 1.442695
  %v5053 = vpow.pop %v5052
  %v5054 = vadd.f32 %v5051, 1.0
  %v5055 = vadd.f32 %v5053, 1.0
  %v5056 = vrcp.pop %v5054
  %v5057 = vmul.f32 %v5054, %v5056
  %v5058 = vsub.f32 1.0, %v5057
  %v5059 = vmul.f32 %v5056, %v5058
  %v5060 = vadd.f32 %v5056, %v5059
  %vm5061 = vweird.f32 %v5054
  %vm5062 = vweird.f32 %v5056
  %vm5063 = vmor %vm5061, %vm5062
  %v5064 = vsel %vm5063, %v5056, %v5060
  %v5065 = vand.u32 2147483647, %v5054
  %vm5066 = vcmp.eq.f32.partialorder %v5065, 8.507059e+37
  %v5067 = vand.u32 %v5054, 2147483648
  %v5068 = vor.u32 1.1754944e-38, %v5067
  %v5069 = vsel %vm5066, %v5068, %v5064
  %v5070 = vmul.f32 1.0, %v5069
  %v5071 = vrcp.pop %v5055
  %v5072 = vmul.f32 %v5055, %v5071
  %v5073 = vsub.f32 1.0, %v5072
  %v5074 = vmul.f32 %v5071, %v5073
  %v5075 = vadd.f32 %v5071, %v5074
  %vm5076 = vweird.f32 %v5055
  %vm5077 = vweird.f32 %v5071
  %vm5078 = vmor %vm5076, %vm5077
  %v5079 = vsel %vm5078, %v5071, %v5075
  %v5080 = vand.u32 2147483647, %v5055
  %vm5081 = vcmp.eq.f32.partialorder %v5080, 8.507059e+37
  %v5082 = vand.u32 %v5055, 2147483648
  %v5083 = vor.u32 1.1754944e-38, %v5082
  %v5084 = vsel %vm5081, %v5083, %v5079
  %v5085 = vmul.f32 1.0, %v5084
  %v5086 = vmul.f32 %v5085, 2.0
  %v5087 = vsub.f32 %v5086, 1.0
  %v5088 = vmul.f32 %v5070, %v4564
  %v5089 = vmul.f32 %v5070, %v5087
  %5091 = vrot.lane.b32.xlu0 %v5089, 64
  %v5092 = vpop.permute.xlu0 %5091
  %v5094 = vadd.f32 %v5088, %v5092
  %v5095 = vtanh.pop %v5094
  %v5096 = vmul.f32 %v5085, %v5095
  %5098 = vrot.lane.b32.xlu0 %v5096, 64
  %v5099 = vpop.permute.xlu0 %5098
  %v5108 = vsel %vm858, %v1389, %v5096
  %v5109 = vsel %vm858, %v1919, %v4566
  %v5110 = vsel %vm858, %v2449, %v4036
  %v5111 = vsel %vm858, %v2979, %v3506
  %v5112 = vsel %vm858, %v3509, %v2976
  %v5113 = vsel %vm858, %v4039, %v2446
  %v5114 = vsel %vm858, %v4569, %v1916
  %v5115 = vsel %vm858, %v5099, %v1386
  %v5116 = vld [vmem:[%s6] sm:$0xff]
  %v5117 = vld [vmem:[%s6 + $0x8] sm:$0xff]
  %v5118 = vld [vmem:[%s6 + $0x10] sm:$0xff]
  %v5119 = vld [vmem:[%s6 + $0x18] sm:$0xff]
  %v5120 = vld [vmem:[%s6 + $0x20] sm:$0xff]
  %v5121 = vld [vmem:[%s6 + $0x28] sm:$0xff]
  %v5122 = vld [vmem:[%s6 + $0x30] sm:$0xff]
  %v5123 = vld [vmem:[%s6 + $0x38] sm:$0xff]
  %v5124 = vld [vmem:[%s6 + $0x40] sm:$0xff]
  %v5125 = vld [vmem:[%s6 + $0x48] sm:$0xff]
  %v5126 = vld [vmem:[%s6 + $0x50] sm:$0xff]
  %v5127 = vld [vmem:[%s6 + $0x58] sm:$0xff]
  %v5128 = vld [vmem:[%s6 + $0x60] sm:$0xff]
  %v5129 = vld [vmem:[%s6 + $0x68] sm:$0xff]
  %v5130 = vld [vmem:[%s6 + $0x70] sm:$0xff]
  %v5131 = vld [vmem:[%s6 + $0x78] sm:$0xff]
  %v5132 = vld [vmem:[%s5] sm:$0xff]
  %v5133 = vld [vmem:[%s5 + $0x8] sm:$0xff]
  %v5134 = vld [vmem:[%s5 + $0x10] sm:$0xff]
  %v5135 = vld [vmem:[%s5 + $0x18] sm:$0xff]
  %v5136 = vld [vmem:[%s5 + $0x20] sm:$0xff]
  %v5137 = vld [vmem:[%s5 + $0x28] sm:$0xff]
  %v5138 = vld [vmem:[%s5 + $0x30] sm:$0xff]
  %v5139 = vld [vmem:[%s5 + $0x38] sm:$0xff]
  %v5140 = vld [vmem:[%s5 + $0x40] sm:$0xff]
  %v5141 = vld [vmem:[%s5 + $0x48] sm:$0xff]
  %v5142 = vld [vmem:[%s5 + $0x50] sm:$0xff]
  %v5143 = vld [vmem:[%s5 + $0x58] sm:$0xff]
  %v5144 = vld [vmem:[%s5 + $0x60] sm:$0xff]
  %v5145 = vld [vmem:[%s5 + $0x68] sm:$0xff]
  %v5146 = vld [vmem:[%s5 + $0x70] sm:$0xff]
  %v5147 = vld [vmem:[%s5 + $0x78] sm:$0xff]
  %v5148 = vld [vmem:[%s5 + $0x80] sm:$0xff]
  %v5149 = vld [vmem:[%s5 + $0x88] sm:$0xff]
  %v5150 = vld [vmem:[%s5 + $0x90] sm:$0xff]
  %v5151 = vld [vmem:[%s5 + $0x98] sm:$0xff]
  %v5152 = vld [vmem:[%s5 + $0xa0] sm:$0xff]
  %v5153 = vld [vmem:[%s5 + $0xa8] sm:$0xff]
  %v5154 = vld [vmem:[%s5 + $0xb0] sm:$0xff]
  %v5155 = vld [vmem:[%s5 + $0xb8] sm:$0xff]
  %v5156 = vld [vmem:[%s5 + $0xc0] sm:$0xff]
  %v5157 = vld [vmem:[%s5 + $0xc8] sm:$0xff]
  %v5158 = vld [vmem:[%s5 + $0xd0] sm:$0xff]
  %v5159 = vld [vmem:[%s5 + $0xd8] sm:$0xff]
  %v5160 = vld [vmem:[%s5 + $0xe0] sm:$0xff]
  %v5161 = vld [vmem:[%s5 + $0xe8] sm:$0xff]
  %v5162 = vld [vmem:[%s5 + $0xf0] sm:$0xff]
  %v5163 = vld [vmem:[%s5 + $0xf8] sm:$0xff]
  %v5164 = vld [vmem:[%s7] sm:$0x3]
  %v5166 = vperm.slane %v5164, 0
  %v5167 = vperm.slane %v5164, 1
  %v5170 = vand.u32 %v5162, 4294901760
  %5171 = vmatpush.msra.mxu0 %v5170
  %v5172 = vand.u32 %v5160, 4294901760
  %5173 = vmatpush.msra.mxu0 %v5172
  %v5174 = vand.u32 %v5158, 4294901760
  %5175 = vmatpush.msra.mxu0 %v5174
  %v5176 = vand.u32 %v5156, 4294901760
  %5177 = vmatpush.msra.mxu0 %v5176
  %v5178 = vand.u32 %v5154, 4294901760
  %5179 = vmatpush.msra.mxu0 %v5178
  %v5180 = vand.u32 %v5152, 4294901760
  %5181 = vmatpush.msra.mxu0 %v5180
  %v5182 = vand.u32 %v5150, 4294901760
  %5183 = vmatpush.msra.mxu0 %v5182
  %v5184 = vand.u32 %v5148, 4294901760
  %5185 = vmatpush.msra.mxu0 %v5184
  %v5186 = vand.u32 %v5146, 4294901760
  %5187 = vmatpush.msra.mxu0 %v5186
  %v5188 = vand.u32 %v5144, 4294901760
  %5189 = vmatpush.msra.mxu0 %v5188
  %v5190 = vand.u32 %v5142, 4294901760
  %5191 = vmatpush.msra.mxu0 %v5190
  %v5192 = vand.u32 %v5140, 4294901760
  %5193 = vmatpush.msra.mxu0 %v5192
  %v5194 = vand.u32 %v5138, 4294901760
  %5195 = vmatpush.msra.mxu0 %v5194
  %v5196 = vand.u32 %v5136, 4294901760
  %5197 = vmatpush.msra.mxu0 %v5196
  %v5198 = vand.u32 %v5134, 4294901760
  %5199 = vmatpush.msra.mxu0 %v5198
  %v5200 = vand.u32 %v5132, 4294901760
  %5201 = vmatpush.msra.mxu0 %v5200
  %v5202 = vand.u32 %v5108, 4294901760
  %v5203 = vsub.f32 %v5108, %v5202
  %v5204 = vand.u32 %v5203, 4294901760
  %v5205 = vsub.f32 %v5203, %v5204
  %v5206 = vand.u32 %v5205, 4294901760
  %5207 = vmatmul.f32.gmra.mxu0 %v5206
  %v5208 = vpop.f32.mrf.mxu0
  %v5209 = vadd.f32 %v5166, %v5208
  %v5210 = vand.u32 %v5109, 4294901760
  %v5211 = vsub.f32 %v5109, %v5210
  %v5212 = vand.u32 %v5211, 4294901760
  %v5213 = vsub.f32 %v5211, %v5212
  %v5214 = vand.u32 %v5213, 4294901760
  %5215 = vmatmul.f32.gmra.mxu0 %v5214
  %v5216 = vpop.f32.mrf.mxu0
  %v5217 = vadd.f32 %v5166, %v5216
  %v5218 = vand.u32 %v5110, 4294901760
  %v5219 = vsub.f32 %v5110, %v5218
  %v5220 = vand.u32 %v5219, 4294901760
  %v5221 = vsub.f32 %v5219, %v5220
  %v5222 = vand.u32 %v5221, 4294901760
  %5223 = vmatmul.f32.gmra.mxu0 %v5222
  %v5224 = vpop.f32.mrf.mxu0
  %v5225 = vadd.f32 %v5166, %v5224
  %v5226 = vand.u32 %v5111, 4294901760
  %v5227 = vsub.f32 %v5111, %v5226
  %v5228 = vand.u32 %v5227, 4294901760
  %v5229 = vsub.f32 %v5227, %v5228
  %v5230 = vand.u32 %v5229, 4294901760
  %5231 = vmatmul.f32.gmra.mxu0 %v5230
  %v5232 = vpop.f32.mrf.mxu0
  %v5233 = vadd.f32 %v5166, %v5232
  %v5234 = vand.u32 %v5112, 4294901760
  %v5235 = vsub.f32 %v5112, %v5234
  %v5236 = vand.u32 %v5235, 4294901760
  %v5237 = vsub.f32 %v5235, %v5236
  %v5238 = vand.u32 %v5237, 4294901760
  %5239 = vmatmul.f32.gmra.mxu0 %v5238
  %v5240 = vpop.f32.mrf.mxu0
  %v5241 = vadd.f32 %v5166, %v5240
  %v5242 = vand.u32 %v5113, 4294901760
  %v5243 = vsub.f32 %v5113, %v5242
  %v5244 = vand.u32 %v5243, 4294901760
  %v5245 = vsub.f32 %v5243, %v5244
  %v5246 = vand.u32 %v5245, 4294901760
  %5247 = vmatmul.f32.gmra.mxu0 %v5246
  %v5248 = vpop.f32.mrf.mxu0
  %v5249 = vadd.f32 %v5166, %v5248
  %v5250 = vand.u32 %v5114, 4294901760
  %v5251 = vsub.f32 %v5114, %v5250
  %v5252 = vand.u32 %v5251, 4294901760
  %v5253 = vsub.f32 %v5251, %v5252
  %v5254 = vand.u32 %v5253, 4294901760
  %5255 = vmatmul.f32.gmra.mxu0 %v5254
  %v5256 = vpop.f32.mrf.mxu0
  %v5257 = vadd.f32 %v5166, %v5256
  %v5258 = vand.u32 %v5115, 4294901760
  %v5259 = vsub.f32 %v5115, %v5258
  %v5260 = vand.u32 %v5259, 4294901760
  %v5261 = vsub.f32 %v5259, %v5260
  %v5262 = vand.u32 %v5261, 4294901760
  %5263 = vmatmul.f32.gmra.mxu0 %v5262
  %v5264 = vpop.f32.mrf.mxu0
  %v5265 = vadd.f32 %v5166, %v5264
  %5266 = vdwg.mxu0
  %v5267 = vand.u32 %v5162, 4294901760
  %v5268 = vsub.f32 %v5162, %v5267
  %v5269 = vand.u32 %v5268, 4294901760
  %v5270 = vsub.f32 %v5268, %v5269
  %v5271 = vand.u32 %v5270, 4294901760
  %5272 = vmatpush.msra.mxu0 %v5271
  %v5273 = vand.u32 %v5160, 4294901760
  %v5274 = vsub.f32 %v5160, %v5273
  %v5275 = vand.u32 %v5274, 4294901760
  %v5276 = vsub.f32 %v5274, %v5275
  %v5277 = vand.u32 %v5276, 4294901760
  %5278 = vmatpush.msra.mxu0 %v5277
  %v5279 = vand.u32 %v5158, 4294901760
  %v5280 = vsub.f32 %v5158, %v5279
  %v5281 = vand.u32 %v5280, 4294901760
  %v5282 = vsub.f32 %v5280, %v5281
  %v5283 = vand.u32 %v5282, 4294901760
  %5284 = vmatpush.msra.mxu0 %v5283
  %v5285 = vand.u32 %v5156, 4294901760
  %v5286 = vsub.f32 %v5156, %v5285
  %v5287 = vand.u32 %v5286, 4294901760
  %v5288 = vsub.f32 %v5286, %v5287
  %v5289 = vand.u32 %v5288, 4294901760
  %5290 = vmatpush.msra.mxu0 %v5289
  %v5291 = vand.u32 %v5154, 4294901760
  %v5292 = vsub.f32 %v5154, %v5291
  %v5293 = vand.u32 %v5292, 4294901760
  %v5294 = vsub.f32 %v5292, %v5293
  %v5295 = vand.u32 %v5294, 4294901760
  %5296 = vmatpush.msra.mxu0 %v5295
  %v5297 = vand.u32 %v5152, 4294901760
  %v5298 = vsub.f32 %v5152, %v5297
  %v5299 = vand.u32 %v5298, 4294901760
  %v5300 = vsub.f32 %v5298, %v5299
  %v5301 = vand.u32 %v5300, 4294901760
  %5302 = vmatpush.msra.mxu0 %v5301
  %v5303 = vand.u32 %v5150, 4294901760
  %v5304 = vsub.f32 %v5150, %v5303
  %v5305 = vand.u32 %v5304, 4294901760
  %v5306 = vsub.f32 %v5304, %v5305
  %v5307 = vand.u32 %v5306, 4294901760
  %5308 = vmatpush.msra.mxu0 %v5307
  %v5309 = vand.u32 %v5148, 4294901760
  %v5310 = vsub.f32 %v5148, %v5309
  %v5311 = vand.u32 %v5310, 4294901760
  %v5312 = vsub.f32 %v5310, %v5311
  %v5313 = vand.u32 %v5312, 4294901760
  %5314 = vmatpush.msra.mxu0 %v5313
  %v5315 = vand.u32 %v5146, 4294901760
  %v5316 = vsub.f32 %v5146, %v5315
  %v5317 = vand.u32 %v5316, 4294901760
  %v5318 = vsub.f32 %v5316, %v5317
  %v5319 = vand.u32 %v5318, 4294901760
  %5320 = vmatpush.msra.mxu0 %v5319
  %v5321 = vand.u32 %v5144, 4294901760
  %v5322 = vsub.f32 %v5144, %v5321
  %v5323 = vand.u32 %v5322, 4294901760
  %v5324 = vsub.f32 %v5322, %v5323
  %v5325 = vand.u32 %v5324, 4294901760
  %5326 = vmatpush.msra.mxu0 %v5325
  %v5327 = vand.u32 %v5142, 4294901760
  %v5328 = vsub.f32 %v5142, %v5327
  %v5329 = vand.u32 %v5328, 4294901760
  %v5330 = vsub.f32 %v5328, %v5329
  %v5331 = vand.u32 %v5330, 4294901760
  %5332 = vmatpush.msra.mxu0 %v5331
  %v5333 = vand.u32 %v5140, 4294901760
  %v5334 = vsub.f32 %v5140, %v5333
  %v5335 = vand.u32 %v5334, 4294901760
  %v5336 = vsub.f32 %v5334, %v5335
  %v5337 = vand.u32 %v5336, 4294901760
  %5338 = vmatpush.msra.mxu0 %v5337
  %v5339 = vand.u32 %v5138, 4294901760
  %v5340 = vsub.f32 %v5138, %v5339
  %v5341 = vand.u32 %v5340, 4294901760
  %v5342 = vsub.f32 %v5340, %v5341
  %v5343 = vand.u32 %v5342, 4294901760
  %5344 = vmatpush.msra.mxu0 %v5343
  %v5345 = vand.u32 %v5136, 4294901760
  %v5346 = vsub.f32 %v5136, %v5345
  %v5347 = vand.u32 %v5346, 4294901760
  %v5348 = vsub.f32 %v5346, %v5347
  %v5349 = vand.u32 %v5348, 4294901760
  %5350 = vmatpush.msra.mxu0 %v5349
  %v5351 = vand.u32 %v5134, 4294901760
  %v5352 = vsub.f32 %v5134, %v5351
  %v5353 = vand.u32 %v5352, 4294901760
  %v5354 = vsub.f32 %v5352, %v5353
  %v5355 = vand.u32 %v5354, 4294901760
  %5356 = vmatpush.msra.mxu0 %v5355
  %v5357 = vand.u32 %v5132, 4294901760
  %v5358 = vsub.f32 %v5132, %v5357
  %v5359 = vand.u32 %v5358, 4294901760
  %v5360 = vsub.f32 %v5358, %v5359
  %v5361 = vand.u32 %v5360, 4294901760
  %5362 = vmatpush.msra.mxu0 %v5361
  %v5363 = vand.u32 %v5108, 4294901760
  %5364 = vmatmul.f32.gmra.mxu0 %v5363
  %v5365 = vpop.f32.mrf.mxu0
  %v5366 = vadd.f32 %v5209, %v5365
  %v5367 = vand.u32 %v5109, 4294901760
  %5368 = vmatmul.f32.gmra.mxu0 %v5367
  %v5369 = vpop.f32.mrf.mxu0
  %v5370 = vadd.f32 %v5217, %v5369
  %v5371 = vand.u32 %v5110, 4294901760
  %5372 = vmatmul.f32.gmra.mxu0 %v5371
  %v5373 = vpop.f32.mrf.mxu0
  %v5374 = vadd.f32 %v5225, %v5373
  %v5375 = vand.u32 %v5111, 4294901760
  %5376 = vmatmul.f32.gmra.mxu0 %v5375
  %v5377 = vpop.f32.mrf.mxu0
  %v5378 = vadd.f32 %v5233, %v5377
  %v5379 = vand.u32 %v5112, 4294901760
  %5380 = vmatmul.f32.gmra.mxu0 %v5379
  %v5381 = vpop.f32.mrf.mxu0
  %v5382 = vadd.f32 %v5241, %v5381
  %v5383 = vand.u32 %v5113, 4294901760
  %5384 = vmatmul.f32.gmra.mxu0 %v5383
  %v5385 = vpop.f32.mrf.mxu0
  %v5386 = vadd.f32 %v5249, %v5385
  %v5387 = vand.u32 %v5114, 4294901760
  %5388 = vmatmul.f32.gmra.mxu0 %v5387
  %v5389 = vpop.f32.mrf.mxu0
  %v5390 = vadd.f32 %v5257, %v5389
  %v5391 = vand.u32 %v5115, 4294901760
  %5392 = vmatmul.f32.gmra.mxu0 %v5391
  %v5393 = vpop.f32.mrf.mxu0
  %v5394 = vadd.f32 %v5265, %v5393
  %5395 = vdwg.mxu0
  %v5396 = vand.u32 %v5162, 4294901760
  %v5397 = vsub.f32 %v5162, %v5396
  %5398 = vmatpush.msra.mxu0 %v5397
  %v5399 = vand.u32 %v5160, 4294901760
  %v5400 = vsub.f32 %v5160, %v5399
  %5401 = vmatpush.msra.mxu0 %v5400
  %v5402 = vand.u32 %v5158, 4294901760
  %v5403 = vsub.f32 %v5158, %v5402
  %5404 = vmatpush.msra.mxu0 %v5403
  %v5405 = vand.u32 %v5156, 4294901760
  %v5406 = vsub.f32 %v5156, %v5405
  %5407 = vmatpush.msra.mxu0 %v5406
  %v5408 = vand.u32 %v5154, 4294901760
  %v5409 = vsub.f32 %v5154, %v5408
  %5410 = vmatpush.msra.mxu0 %v5409
  %v5411 = vand.u32 %v5152, 4294901760
  %v5412 = vsub.f32 %v5152, %v5411
  %5413 = vmatpush.msra.mxu0 %v5412
  %v5414 = vand.u32 %v5150, 4294901760
  %v5415 = vsub.f32 %v5150, %v5414
  %5416 = vmatpush.msra.mxu0 %v5415
  %v5417 = vand.u32 %v5148, 4294901760
  %v5418 = vsub.f32 %v5148, %v5417
  %5419 = vmatpush.msra.mxu0 %v5418
  %v5420 = vand.u32 %v5146, 4294901760
  %v5421 = vsub.f32 %v5146, %v5420
  %5422 = vmatpush.msra.mxu0 %v5421
  %v5423 = vand.u32 %v5144, 4294901760
  %v5424 = vsub.f32 %v5144, %v5423
  %5425 = vmatpush.msra.mxu0 %v5424
  %v5426 = vand.u32 %v5142, 4294901760
  %v5427 = vsub.f32 %v5142, %v5426
  %5428 = vmatpush.msra.mxu0 %v5427
  %v5429 = vand.u32 %v5140, 4294901760
  %v5430 = vsub.f32 %v5140, %v5429
  %5431 = vmatpush.msra.mxu0 %v5430
  %v5432 = vand.u32 %v5138, 4294901760
  %v5433 = vsub.f32 %v5138, %v5432
  %5434 = vmatpush.msra.mxu0 %v5433
  %v5435 = vand.u32 %v5136, 4294901760
  %v5436 = vsub.f32 %v5136, %v5435
  %5437 = vmatpush.msra.mxu0 %v5436
  %v5438 = vand.u32 %v5134, 4294901760
  %v5439 = vsub.f32 %v5134, %v5438
  %5440 = vmatpush.msra.mxu0 %v5439
  %v5441 = vand.u32 %v5132, 4294901760
  %v5442 = vsub.f32 %v5132, %v5441
  %5443 = vmatpush.msra.mxu0 %v5442
  %v5444 = vand.u32 %v5108, 4294901760
  %v5445 = vsub.f32 %v5108, %v5444
  %5446 = vmatmul.f32.gmra.mxu0 %v5445
  %v5447 = vpop.f32.mrf.mxu0
  %v5448 = vadd.f32 %v5366, %v5447
  %v5449 = vand.u32 %v5109, 4294901760
  %v5450 = vsub.f32 %v5109, %v5449
  %5451 = vmatmul.f32.gmra.mxu0 %v5450
  %v5452 = vpop.f32.mrf.mxu0
  %v5453 = vadd.f32 %v5370, %v5452
  %v5454 = vand.u32 %v5110, 4294901760
  %v5455 = vsub.f32 %v5110, %v5454
  %5456 = vmatmul.f32.gmra.mxu0 %v5455
  %v5457 = vpop.f32.mrf.mxu0
  %v5458 = vadd.f32 %v5374, %v5457
  %v5459 = vand.u32 %v5111, 4294901760
  %v5460 = vsub.f32 %v5111, %v5459
  %5461 = vmatmul.f32.gmra.mxu0 %v5460
  %v5462 = vpop.f32.mrf.mxu0
  %v5463 = vadd.f32 %v5378, %v5462
  %v5464 = vand.u32 %v5112, 4294901760
  %v5465 = vsub.f32 %v5112, %v5464
  %5466 = vmatmul.f32.gmra.mxu0 %v5465
  %v5467 = vpop.f32.mrf.mxu0
  %v5468 = vadd.f32 %v5382, %v5467
  %v5469 = vand.u32 %v5113, 4294901760
  %v5470 = vsub.f32 %v5113, %v5469
  %5471 = vmatmul.f32.gmra.mxu0 %v5470
  %v5472 = vpop.f32.mrf.mxu0
  %v5473 = vadd.f32 %v5386, %v5472
  %v5474 = vand.u32 %v5114, 4294901760
  %v5475 = vsub.f32 %v5114, %v5474
  %5476 = vmatmul.f32.gmra.mxu0 %v5475
  %v5477 = vpop.f32.mrf.mxu0
  %v5478 = vadd.f32 %v5390, %v5477
  %v5479 = vand.u32 %v5115, 4294901760
  %v5480 = vsub.f32 %v5115, %v5479
  %5481 = vmatmul.f32.gmra.mxu0 %v5480
  %v5482 = vpop.f32.mrf.mxu0
  %v5483 = vadd.f32 %v5394, %v5482
  %5484 = vdwg.mxu0
  %v5485 = vand.u32 %v5162, 4294901760
  %5486 = vmatpush.msra.mxu0 %v5485
  %v5487 = vand.u32 %v5160, 4294901760
  %5488 = vmatpush.msra.mxu0 %v5487
  %v5489 = vand.u32 %v5158, 4294901760
  %5490 = vmatpush.msra.mxu0 %v5489
  %v5491 = vand.u32 %v5156, 4294901760
  %5492 = vmatpush.msra.mxu0 %v5491
  %v5493 = vand.u32 %v5154, 4294901760
  %5494 = vmatpush.msra.mxu0 %v5493
  %v5495 = vand.u32 %v5152, 4294901760
  %5496 = vmatpush.msra.mxu0 %v5495
  %v5497 = vand.u32 %v5150, 4294901760
  %5498 = vmatpush.msra.mxu0 %v5497
  %v5499 = vand.u32 %v5148, 4294901760
  %5500 = vmatpush.msra.mxu0 %v5499
  %v5501 = vand.u32 %v5146, 4294901760
  %5502 = vmatpush.msra.mxu0 %v5501
  %v5503 = vand.u32 %v5144, 4294901760
  %5504 = vmatpush.msra.mxu0 %v5503
  %v5505 = vand.u32 %v5142, 4294901760
  %5506 = vmatpush.msra.mxu0 %v5505
  %v5507 = vand.u32 %v5140, 4294901760
  %5508 = vmatpush.msra.mxu0 %v5507
  %v5509 = vand.u32 %v5138, 4294901760
  %5510 = vmatpush.msra.mxu0 %v5509
  %v5511 = vand.u32 %v5136, 4294901760
  %5512 = vmatpush.msra.mxu0 %v5511
  %v5513 = vand.u32 %v5134, 4294901760
  %5514 = vmatpush.msra.mxu0 %v5513
  %v5515 = vand.u32 %v5132, 4294901760
  %5516 = vmatpush.msra.mxu0 %v5515
  %v5517 = vand.u32 %v5108, 4294901760
  %v5518 = vsub.f32 %v5108, %v5517
  %v5519 = vand.u32 %v5518, 4294901760
  %5520 = vmatmul.f32.gmra.mxu0 %v5519
  %v5521 = vpop.f32.mrf.mxu0
  %v5522 = vadd.f32 %v5448, %v5521
  %v5523 = vand.u32 %v5109, 4294901760
  %v5524 = vsub.f32 %v5109, %v5523
  %v5525 = vand.u32 %v5524, 4294901760
  %5526 = vmatmul.f32.gmra.mxu0 %v5525
  %v5527 = vpop.f32.mrf.mxu0
  %v5528 = vadd.f32 %v5453, %v5527
  %v5529 = vand.u32 %v5110, 4294901760
  %v5530 = vsub.f32 %v5110, %v5529
  %v5531 = vand.u32 %v5530, 4294901760
  %5532 = vmatmul.f32.gmra.mxu0 %v5531
  %v5533 = vpop.f32.mrf.mxu0
  %v5534 = vadd.f32 %v5458, %v5533
  %v5535 = vand.u32 %v5111, 4294901760
  %v5536 = vsub.f32 %v5111, %v5535
  %v5537 = vand.u32 %v5536, 4294901760
  %5538 = vmatmul.f32.gmra.mxu0 %v5537
  %v5539 = vpop.f32.mrf.mxu0
  %v5540 = vadd.f32 %v5463, %v5539
  %v5541 = vand.u32 %v5112, 4294901760
  %v5542 = vsub.f32 %v5112, %v5541
  %v5543 = vand.u32 %v5542, 4294901760
  %5544 = vmatmul.f32.gmra.mxu0 %v5543
  %v5545 = vpop.f32.mrf.mxu0
  %v5546 = vadd.f32 %v5468, %v5545
  %v5547 = vand.u32 %v5113, 4294901760
  %v5548 = vsub.f32 %v5113, %v5547
  %v5549 = vand.u32 %v5548, 4294901760
  %5550 = vmatmul.f32.gmra.mxu0 %v5549
  %v5551 = vpop.f32.mrf.mxu0
  %v5552 = vadd.f32 %v5473, %v5551
  %v5553 = vand.u32 %v5114, 4294901760
  %v5554 = vsub.f32 %v5114, %v5553
  %v5555 = vand.u32 %v5554, 4294901760
  %5556 = vmatmul.f32.gmra.mxu0 %v5555
  %v5557 = vpop.f32.mrf.mxu0
  %v5558 = vadd.f32 %v5478, %v5557
  %v5559 = vand.u32 %v5115, 4294901760
  %v5560 = vsub.f32 %v5115, %v5559
  %v5561 = vand.u32 %v5560, 4294901760
  %5562 = vmatmul.f32.gmra.mxu0 %v5561
  %v5563 = vpop.f32.mrf.mxu0
  %v5564 = vadd.f32 %v5483, %v5563
  %5565 = vdwg.mxu0
  %v5566 = vand.u32 %v5162, 4294901760
  %v5567 = vsub.f32 %v5162, %v5566
  %v5568 = vand.u32 %v5567, 4294901760
  %5569 = vmatpush.msra.mxu0 %v5568
  %v5570 = vand.u32 %v5160, 4294901760
  %v5571 = vsub.f32 %v5160, %v5570
  %v5572 = vand.u32 %v5571, 4294901760
  %5573 = vmatpush.msra.mxu0 %v5572
  %v5574 = vand.u32 %v5158, 4294901760
  %v5575 = vsub.f32 %v5158, %v5574
  %v5576 = vand.u32 %v5575, 4294901760
  %5577 = vmatpush.msra.mxu0 %v5576
  %v5578 = vand.u32 %v5156, 4294901760
  %v5579 = vsub.f32 %v5156, %v5578
  %v5580 = vand.u32 %v5579, 4294901760
  %5581 = vmatpush.msra.mxu0 %v5580
  %v5582 = vand.u32 %v5154, 4294901760
  %v5583 = vsub.f32 %v5154, %v5582
  %v5584 = vand.u32 %v5583, 4294901760
  %5585 = vmatpush.msra.mxu0 %v5584
  %v5586 = vand.u32 %v5152, 4294901760
  %v5587 = vsub.f32 %v5152, %v5586
  %v5588 = vand.u32 %v5587, 4294901760
  %5589 = vmatpush.msra.mxu0 %v5588
  %v5590 = vand.u32 %v5150, 4294901760
  %v5591 = vsub.f32 %v5150, %v5590
  %v5592 = vand.u32 %v5591, 4294901760
  %5593 = vmatpush.msra.mxu0 %v5592
  %v5594 = vand.u32 %v5148, 4294901760
  %v5595 = vsub.f32 %v5148, %v5594
  %v5596 = vand.u32 %v5595, 4294901760
  %5597 = vmatpush.msra.mxu0 %v5596
  %v5598 = vand.u32 %v5146, 4294901760
  %v5599 = vsub.f32 %v5146, %v5598
  %v5600 = vand.u32 %v5599, 4294901760
  %5601 = vmatpush.msra.mxu0 %v5600
  %v5602 = vand.u32 %v5144, 4294901760
  %v5603 = vsub.f32 %v5144, %v5602
  %v5604 = vand.u32 %v5603, 4294901760
  %5605 = vmatpush.msra.mxu0 %v5604
  %v5606 = vand.u32 %v5142, 4294901760
  %v5607 = vsub.f32 %v5142, %v5606
  %v5608 = vand.u32 %v5607, 4294901760
  %5609 = vmatpush.msra.mxu0 %v5608
  %v5610 = vand.u32 %v5140, 4294901760
  %v5611 = vsub.f32 %v5140, %v5610
  %v5612 = vand.u32 %v5611, 4294901760
  %5613 = vmatpush.msra.mxu0 %v5612
  %v5614 = vand.u32 %v5138, 4294901760
  %v5615 = vsub.f32 %v5138, %v5614
  %v5616 = vand.u32 %v5615, 4294901760
  %5617 = vmatpush.msra.mxu0 %v5616
  %v5618 = vand.u32 %v5136, 4294901760
  %v5619 = vsub.f32 %v5136, %v5618
  %v5620 = vand.u32 %v5619, 4294901760
  %5621 = vmatpush.msra.mxu0 %v5620
  %v5622 = vand.u32 %v5134, 4294901760
  %v5623 = vsub.f32 %v5134, %v5622
  %v5624 = vand.u32 %v5623, 4294901760
  %5625 = vmatpush.msra.mxu0 %v5624
  %v5626 = vand.u32 %v5132, 4294901760
  %v5627 = vsub.f32 %v5132, %v5626
  %v5628 = vand.u32 %v5627, 4294901760
  %5629 = vmatpush.msra.mxu0 %v5628
  %v5630 = vand.u32 %v5108, 4294901760
  %5631 = vmatmul.f32.gmra.mxu0 %v5630
  %v5632 = vpop.f32.mrf.mxu0
  %v5633 = vadd.f32 %v5522, %v5632
  %v5634 = vand.u32 %v5109, 4294901760
  %5635 = vmatmul.f32.gmra.mxu0 %v5634
  %v5636 = vpop.f32.mrf.mxu0
  %v5637 = vadd.f32 %v5528, %v5636
  %v5638 = vand.u32 %v5110, 4294901760
  %5639 = vmatmul.f32.gmra.mxu0 %v5638
  %v5640 = vpop.f32.mrf.mxu0
  %v5641 = vadd.f32 %v5534, %v5640
  %v5642 = vand.u32 %v5111, 4294901760
  %5643 = vmatmul.f32.gmra.mxu0 %v5642
  %v5644 = vpop.f32.mrf.mxu0
  %v5645 = vadd.f32 %v5540, %v5644
  %v5646 = vand.u32 %v5112, 4294901760
  %5647 = vmatmul.f32.gmra.mxu0 %v5646
  %v5648 = vpop.f32.mrf.mxu0
  %v5649 = vadd.f32 %v5546, %v5648
  %v5650 = vand.u32 %v5113, 4294901760
  %5651 = vmatmul.f32.gmra.mxu0 %v5650
  %v5652 = vpop.f32.mrf.mxu0
  %v5653 = vadd.f32 %v5552, %v5652
  %v5654 = vand.u32 %v5114, 4294901760
  %5655 = vmatmul.f32.gmra.mxu0 %v5654
  %v5656 = vpop.f32.mrf.mxu0
  %v5657 = vadd.f32 %v5558, %v5656
  %v5658 = vand.u32 %v5115, 4294901760
  %5659 = vmatmul.f32.gmra.mxu0 %v5658
  %v5660 = vpop.f32.mrf.mxu0
  %v5661 = vadd.f32 %v5564, %v5660
  %5662 = vdwg.mxu0
  %v5663 = vand.u32 %v5162, 4294901760
  %5664 = vmatpush.msra.mxu0 %v5663
  %v5665 = vand.u32 %v5160, 4294901760
  %5666 = vmatpush.msra.mxu0 %v5665
  %v5667 = vand.u32 %v5158, 4294901760
  %5668 = vmatpush.msra.mxu0 %v5667
  %v5669 = vand.u32 %v5156, 4294901760
  %5670 = vmatpush.msra.mxu0 %v5669
  %v5671 = vand.u32 %v5154, 4294901760
  %5672 = vmatpush.msra.mxu0 %v5671
  %v5673 = vand.u32 %v5152, 4294901760
  %5674 = vmatpush.msra.mxu0 %v5673
  %v5675 = vand.u32 %v5150, 4294901760
  %5676 = vmatpush.msra.mxu0 %v5675
  %v5677 = vand.u32 %v5148, 4294901760
  %5678 = vmatpush.msra.mxu0 %v5677
  %v5679 = vand.u32 %v5146, 4294901760
  %5680 = vmatpush.msra.mxu0 %v5679
  %v5681 = vand.u32 %v5144, 4294901760
  %5682 = vmatpush.msra.mxu0 %v5681
  %v5683 = vand.u32 %v5142, 4294901760
  %5684 = vmatpush.msra.mxu0 %v5683
  %v5685 = vand.u32 %v5140, 4294901760
  %5686 = vmatpush.msra.mxu0 %v5685
  %v5687 = vand.u32 %v5138, 4294901760
  %5688 = vmatpush.msra.mxu0 %v5687
  %v5689 = vand.u32 %v5136, 4294901760
  %5690 = vmatpush.msra.mxu0 %v5689
  %v5691 = vand.u32 %v5134, 4294901760
  %5692 = vmatpush.msra.mxu0 %v5691
  %v5693 = vand.u32 %v5132, 4294901760
  %5694 = vmatpush.msra.mxu0 %v5693
  %v5695 = vand.u32 %v5108, 4294901760
  %5696 = vmatmul.f32.gmra.mxu0 %v5695
  %v5697 = vpop.f32.mrf.mxu0
  %v5698 = vadd.f32 %v5633, %v5697
  %v5699 = vand.u32 %v5109, 4294901760
  %5700 = vmatmul.f32.gmra.mxu0 %v5699
  %v5701 = vpop.f32.mrf.mxu0
  %v5702 = vadd.f32 %v5637, %v5701
  %v5703 = vand.u32 %v5110, 4294901760
  %5704 = vmatmul.f32.gmra.mxu0 %v5703
  %v5705 = vpop.f32.mrf.mxu0
  %v5706 = vadd.f32 %v5641, %v5705
  %v5707 = vand.u32 %v5111, 4294901760
  %5708 = vmatmul.f32.gmra.mxu0 %v5707
  %v5709 = vpop.f32.mrf.mxu0
  %v5710 = vadd.f32 %v5645, %v5709
  %v5711 = vand.u32 %v5112, 4294901760
  %5712 = vmatmul.f32.gmra.mxu0 %v5711
  %v5713 = vpop.f32.mrf.mxu0
  %v5714 = vadd.f32 %v5649, %v5713
  %v5715 = vand.u32 %v5113, 4294901760
  %5716 = vmatmul.f32.gmra.mxu0 %v5715
  %v5717 = vpop.f32.mrf.mxu0
  %v5718 = vadd.f32 %v5653, %v5717
  %v5719 = vand.u32 %v5114, 4294901760
  %5720 = vmatmul.f32.gmra.mxu0 %v5719
  %v5721 = vpop.f32.mrf.mxu0
  %v5722 = vadd.f32 %v5657, %v5721
  %v5723 = vand.u32 %v5115, 4294901760
  %5724 = vmatmul.f32.gmra.mxu0 %v5723
  %v5725 = vpop.f32.mrf.mxu0
  %v5726 = vadd.f32 %v5661, %v5725
  %5727 = vdwg.mxu0
  %v5728 = vand.u32 %v5163, 4294901760
  %5729 = vmatpush.msra.mxu0 %v5728
  %v5730 = vand.u32 %v5161, 4294901760
  %5731 = vmatpush.msra.mxu0 %v5730
  %v5732 = vand.u32 %v5159, 4294901760
  %5733 = vmatpush.msra.mxu0 %v5732
  %v5734 = vand.u32 %v5157, 4294901760
  %5735 = vmatpush.msra.mxu0 %v5734
  %v5736 = vand.u32 %v5155, 4294901760
  %5737 = vmatpush.msra.mxu0 %v5736
  %v5738 = vand.u32 %v5153, 4294901760
  %5739 = vmatpush.msra.mxu0 %v5738
  %v5740 = vand.u32 %v5151, 4294901760
  %5741 = vmatpush.msra.mxu0 %v5740
  %v5742 = vand.u32 %v5149, 4294901760
  %5743 = vmatpush.msra.mxu0 %v5742
  %v5744 = vand.u32 %v5147, 4294901760
  %5745 = vmatpush.msra.mxu0 %v5744
  %v5746 = vand.u32 %v5145, 4294901760
  %5747 = vmatpush.msra.mxu0 %v5746
  %v5748 = vand.u32 %v5143, 4294901760
  %5749 = vmatpush.msra.mxu0 %v5748
  %v5750 = vand.u32 %v5141, 4294901760
  %5751 = vmatpush.msra.mxu0 %v5750
  %v5752 = vand.u32 %v5139, 4294901760
  %5753 = vmatpush.msra.mxu0 %v5752
  %v5754 = vand.u32 %v5137, 4294901760
  %5755 = vmatpush.msra.mxu0 %v5754
  %v5756 = vand.u32 %v5135, 4294901760
  %5757 = vmatpush.msra.mxu0 %v5756
  %v5758 = vand.u32 %v5133, 4294901760
  %5759 = vmatpush.msra.mxu0 %v5758
  %v5760 = vand.u32 %v5108, 4294901760
  %v5761 = vsub.f32 %v5108, %v5760
  %v5762 = vand.u32 %v5761, 4294901760
  %v5763 = vsub.f32 %v5761, %v5762
  %v5764 = vand.u32 %v5763, 4294901760
  %5765 = vmatmul.f32.gmra.mxu0 %v5764
  %v5766 = vpop.f32.mrf.mxu0
  %v5767 = vadd.f32 %v5167, %v5766
  %v5768 = vand.u32 %v5109, 4294901760
  %v5769 = vsub.f32 %v5109, %v5768
  %v5770 = vand.u32 %v5769, 4294901760
  %v5771 = vsub.f32 %v5769, %v5770
  %v5772 = vand.u32 %v5771, 4294901760
  %5773 = vmatmul.f32.gmra.mxu0 %v5772
  %v5774 = vpop.f32.mrf.mxu0
  %v5775 = vadd.f32 %v5167, %v5774
  %v5776 = vand.u32 %v5110, 4294901760
  %v5777 = vsub.f32 %v5110, %v5776
  %v5778 = vand.u32 %v5777, 4294901760
  %v5779 = vsub.f32 %v5777, %v5778
  %v5780 = vand.u32 %v5779, 4294901760
  %5781 = vmatmul.f32.gmra.mxu0 %v5780
  %v5782 = vpop.f32.mrf.mxu0
  %v5783 = vadd.f32 %v5167, %v5782
  %v5784 = vand.u32 %v5111, 4294901760
  %v5785 = vsub.f32 %v5111, %v5784
  %v5786 = vand.u32 %v5785, 4294901760
  %v5787 = vsub.f32 %v5785, %v5786
  %v5788 = vand.u32 %v5787, 4294901760
  %5789 = vmatmul.f32.gmra.mxu0 %v5788
  %v5790 = vpop.f32.mrf.mxu0
  %v5791 = vadd.f32 %v5167, %v5790
  %v5792 = vand.u32 %v5112, 4294901760
  %v5793 = vsub.f32 %v5112, %v5792
  %v5794 = vand.u32 %v5793, 4294901760
  %v5795 = vsub.f32 %v5793, %v5794
  %v5796 = vand.u32 %v5795, 4294901760
  %5797 = vmatmul.f32.gmra.mxu0 %v5796
  %v5798 = vpop.f32.mrf.mxu0
  %v5799 = vadd.f32 %v5167, %v5798
  %v5800 = vand.u32 %v5113, 4294901760
  %v5801 = vsub.f32 %v5113, %v5800
  %v5802 = vand.u32 %v5801, 4294901760
  %v5803 = vsub.f32 %v5801, %v5802
  %v5804 = vand.u32 %v5803, 4294901760
  %5805 = vmatmul.f32.gmra.mxu0 %v5804
  %v5806 = vpop.f32.mrf.mxu0
  %v5807 = vadd.f32 %v5167, %v5806
  %v5808 = vand.u32 %v5114, 4294901760
  %v5809 = vsub.f32 %v5114, %v5808
  %v5810 = vand.u32 %v5809, 4294901760
  %v5811 = vsub.f32 %v5809, %v5810
  %v5812 = vand.u32 %v5811, 4294901760
  %5813 = vmatmul.f32.gmra.mxu0 %v5812
  %v5814 = vpop.f32.mrf.mxu0
  %v5815 = vadd.f32 %v5167, %v5814
  %v5816 = vand.u32 %v5115, 4294901760
  %v5817 = vsub.f32 %v5115, %v5816
  %v5818 = vand.u32 %v5817, 4294901760
  %v5819 = vsub.f32 %v5817, %v5818
  %v5820 = vand.u32 %v5819, 4294901760
  %5821 = vmatmul.f32.gmra.mxu0 %v5820
  %v5822 = vpop.f32.mrf.mxu0
  %v5823 = vadd.f32 %v5167, %v5822
  %5824 = vdwg.mxu0
  %v5825 = vand.u32 %v5163, 4294901760
  %v5826 = vsub.f32 %v5163, %v5825
  %v5827 = vand.u32 %v5826, 4294901760
  %v5828 = vsub.f32 %v5826, %v5827
  %v5829 = vand.u32 %v5828, 4294901760
  %5830 = vmatpush.msra.mxu0 %v5829
  %v5831 = vand.u32 %v5161, 4294901760
  %v5832 = vsub.f32 %v5161, %v5831
  %v5833 = vand.u32 %v5832, 4294901760
  %v5834 = vsub.f32 %v5832, %v5833
  %v5835 = vand.u32 %v5834, 4294901760
  %5836 = vmatpush.msra.mxu0 %v5835
  %v5837 = vand.u32 %v5159, 4294901760
  %v5838 = vsub.f32 %v5159, %v5837
  %v5839 = vand.u32 %v5838, 4294901760
  %v5840 = vsub.f32 %v5838, %v5839
  %v5841 = vand.u32 %v5840, 4294901760
  %5842 = vmatpush.msra.mxu0 %v5841
  %v5843 = vand.u32 %v5157, 4294901760
  %v5844 = vsub.f32 %v5157, %v5843
  %v5845 = vand.u32 %v5844, 4294901760
  %v5846 = vsub.f32 %v5844, %v5845
  %v5847 = vand.u32 %v5846, 4294901760
  %5848 = vmatpush.msra.mxu0 %v5847
  %v5849 = vand.u32 %v5155, 4294901760
  %v5850 = vsub.f32 %v5155, %v5849
  %v5851 = vand.u32 %v5850, 4294901760
  %v5852 = vsub.f32 %v5850, %v5851
  %v5853 = vand.u32 %v5852, 4294901760
  %5854 = vmatpush.msra.mxu0 %v5853
  %v5855 = vand.u32 %v5153, 4294901760
  %v5856 = vsub.f32 %v5153, %v5855
  %v5857 = vand.u32 %v5856, 4294901760
  %v5858 = vsub.f32 %v5856, %v5857
  %v5859 = vand.u32 %v5858, 4294901760
  %5860 = vmatpush.msra.mxu0 %v5859
  %v5861 = vand.u32 %v5151, 4294901760
  %v5862 = vsub.f32 %v5151, %v5861
  %v5863 = vand.u32 %v5862, 4294901760
  %v5864 = vsub.f32 %v5862, %v5863
  %v5865 = vand.u32 %v5864, 4294901760
  %5866 = vmatpush.msra.mxu0 %v5865
  %v5867 = vand.u32 %v5149, 4294901760
  %v5868 = vsub.f32 %v5149, %v5867
  %v5869 = vand.u32 %v5868, 4294901760
  %v5870 = vsub.f32 %v5868, %v5869
  %v5871 = vand.u32 %v5870, 4294901760
  %5872 = vmatpush.msra.mxu0 %v5871
  %v5873 = vand.u32 %v5147, 4294901760
  %v5874 = vsub.f32 %v5147, %v5873
  %v5875 = vand.u32 %v5874, 4294901760
  %v5876 = vsub.f32 %v5874, %v5875
  %v5877 = vand.u32 %v5876, 4294901760
  %5878 = vmatpush.msra.mxu0 %v5877
  %v5879 = vand.u32 %v5145, 4294901760
  %v5880 = vsub.f32 %v5145, %v5879
  %v5881 = vand.u32 %v5880, 4294901760
  %v5882 = vsub.f32 %v5880, %v5881
  %v5883 = vand.u32 %v5882, 4294901760
  %5884 = vmatpush.msra.mxu0 %v5883
  %v5885 = vand.u32 %v5143, 4294901760
  %v5886 = vsub.f32 %v5143, %v5885
  %v5887 = vand.u32 %v5886, 4294901760
  %v5888 = vsub.f32 %v5886, %v5887
  %v5889 = vand.u32 %v5888, 4294901760
  %5890 = vmatpush.msra.mxu0 %v5889
  %v5891 = vand.u32 %v5141, 4294901760
  %v5892 = vsub.f32 %v5141, %v5891
  %v5893 = vand.u32 %v5892, 4294901760
  %v5894 = vsub.f32 %v5892, %v5893
  %v5895 = vand.u32 %v5894, 4294901760
  %5896 = vmatpush.msra.mxu0 %v5895
  %v5897 = vand.u32 %v5139, 4294901760
  %v5898 = vsub.f32 %v5139, %v5897
  %v5899 = vand.u32 %v5898, 4294901760
  %v5900 = vsub.f32 %v5898, %v5899
  %v5901 = vand.u32 %v5900, 4294901760
  %5902 = vmatpush.msra.mxu0 %v5901
  %v5903 = vand.u32 %v5137, 4294901760
  %v5904 = vsub.f32 %v5137, %v5903
  %v5905 = vand.u32 %v5904, 4294901760
  %v5906 = vsub.f32 %v5904, %v5905
  %v5907 = vand.u32 %v5906, 4294901760
  %5908 = vmatpush.msra.mxu0 %v5907
  %v5909 = vand.u32 %v5135, 4294901760
  %v5910 = vsub.f32 %v5135, %v5909
  %v5911 = vand.u32 %v5910, 4294901760
  %v5912 = vsub.f32 %v5910, %v5911
  %v5913 = vand.u32 %v5912, 4294901760
  %5914 = vmatpush.msra.mxu0 %v5913
  %v5915 = vand.u32 %v5133, 4294901760
  %v5916 = vsub.f32 %v5133, %v5915
  %v5917 = vand.u32 %v5916, 4294901760
  %v5918 = vsub.f32 %v5916, %v5917
  %v5919 = vand.u32 %v5918, 4294901760
  %5920 = vmatpush.msra.mxu0 %v5919
  %v5921 = vand.u32 %v5108, 4294901760
  %5922 = vmatmul.f32.gmra.mxu0 %v5921
  %v5923 = vpop.f32.mrf.mxu0
  %v5924 = vadd.f32 %v5767, %v5923
  %v5925 = vand.u32 %v5109, 4294901760
  %5926 = vmatmul.f32.gmra.mxu0 %v5925
  %v5927 = vpop.f32.mrf.mxu0
  %v5928 = vadd.f32 %v5775, %v5927
  %v5929 = vand.u32 %v5110, 4294901760
  %5930 = vmatmul.f32.gmra.mxu0 %v5929
  %v5931 = vpop.f32.mrf.mxu0
  %v5932 = vadd.f32 %v5783, %v5931
  %v5933 = vand.u32 %v5111, 4294901760
  %5934 = vmatmul.f32.gmra.mxu0 %v5933
  %v5935 = vpop.f32.mrf.mxu0
  %v5936 = vadd.f32 %v5791, %v5935
  %v5937 = vand.u32 %v5112, 4294901760
  %5938 = vmatmul.f32.gmra.mxu0 %v5937
  %v5939 = vpop.f32.mrf.mxu0
  %v5940 = vadd.f32 %v5799, %v5939
  %v5941 = vand.u32 %v5113, 4294901760
  %5942 = vmatmul.f32.gmra.mxu0 %v5941
  %v5943 = vpop.f32.mrf.mxu0
  %v5944 = vadd.f32 %v5807, %v5943
  %v5945 = vand.u32 %v5114, 4294901760
  %5946 = vmatmul.f32.gmra.mxu0 %v5945
  %v5947 = vpop.f32.mrf.mxu0
  %v5948 = vadd.f32 %v5815, %v5947
  %v5949 = vand.u32 %v5115, 4294901760
  %5950 = vmatmul.f32.gmra.mxu0 %v5949
  %v5951 = vpop.f32.mrf.mxu0
  %v5952 = vadd.f32 %v5823, %v5951
  %5953 = vdwg.mxu0
  %v5954 = vand.u32 %v5163, 4294901760
  %v5955 = vsub.f32 %v5163, %v5954
  %5956 = vmatpush.msra.mxu0 %v5955
  %v5957 = vand.u32 %v5161, 4294901760
  %v5958 = vsub.f32 %v5161, %v5957
  %5959 = vmatpush.msra.mxu0 %v5958
  %v5960 = vand.u32 %v5159, 4294901760
  %v5961 = vsub.f32 %v5159, %v5960
  %5962 = vmatpush.msra.mxu0 %v5961
  %v5963 = vand.u32 %v5157, 4294901760
  %v5964 = vsub.f32 %v5157, %v5963
  %5965 = vmatpush.msra.mxu0 %v5964
  %v5966 = vand.u32 %v5155, 4294901760
  %v5967 = vsub.f32 %v5155, %v5966
  %5968 = vmatpush.msra.mxu0 %v5967
  %v5969 = vand.u32 %v5153, 4294901760
  %v5970 = vsub.f32 %v5153, %v5969
  %5971 = vmatpush.msra.mxu0 %v5970
  %v5972 = vand.u32 %v5151, 4294901760
  %v5973 = vsub.f32 %v5151, %v5972
  %5974 = vmatpush.msra.mxu0 %v5973
  %v5975 = vand.u32 %v5149, 4294901760
  %v5976 = vsub.f32 %v5149, %v5975
  %5977 = vmatpush.msra.mxu0 %v5976
  %v5978 = vand.u32 %v5147, 4294901760
  %v5979 = vsub.f32 %v5147, %v5978
  %5980 = vmatpush.msra.mxu0 %v5979
  %v5981 = vand.u32 %v5145, 4294901760
  %v5982 = vsub.f32 %v5145, %v5981
  %5983 = vmatpush.msra.mxu0 %v5982
  %v5984 = vand.u32 %v5143, 4294901760
  %v5985 = vsub.f32 %v5143, %v5984
  %5986 = vmatpush.msra.mxu0 %v5985
  %v5987 = vand.u32 %v5141, 4294901760
  %v5988 = vsub.f32 %v5141, %v5987
  %5989 = vmatpush.msra.mxu0 %v5988
  %v5990 = vand.u32 %v5139, 4294901760
  %v5991 = vsub.f32 %v5139, %v5990
  %5992 = vmatpush.msra.mxu0 %v5991
  %v5993 = vand.u32 %v5137, 4294901760
  %v5994 = vsub.f32 %v5137, %v5993
  %5995 = vmatpush.msra.mxu0 %v5994
  %v5996 = vand.u32 %v5135, 4294901760
  %v5997 = vsub.f32 %v5135, %v5996
  %5998 = vmatpush.msra.mxu0 %v5997
  %v5999 = vand.u32 %v5133, 4294901760
  %v6000 = vsub.f32 %v5133, %v5999
  %6001 = vmatpush.msra.mxu0 %v6000
  %v6002 = vand.u32 %v5108, 4294901760
  %v6003 = vsub.f32 %v5108, %v6002
  %6004 = vmatmul.f32.gmra.mxu0 %v6003
  %v6005 = vpop.f32.mrf.mxu0
  %v6006 = vadd.f32 %v5924, %v6005
  %v6007 = vand.u32 %v5109, 4294901760
  %v6008 = vsub.f32 %v5109, %v6007
  %6009 = vmatmul.f32.gmra.mxu0 %v6008
  %v6010 = vpop.f32.mrf.mxu0
  %v6011 = vadd.f32 %v5928, %v6010
  %v6012 = vand.u32 %v5110, 4294901760
  %v6013 = vsub.f32 %v5110, %v6012
  %6014 = vmatmul.f32.gmra.mxu0 %v6013
  %v6015 = vpop.f32.mrf.mxu0
  %v6016 = vadd.f32 %v5932, %v6015
  %v6017 = vand.u32 %v5111, 4294901760
  %v6018 = vsub.f32 %v5111, %v6017
  %6019 = vmatmul.f32.gmra.mxu0 %v6018
  %v6020 = vpop.f32.mrf.mxu0
  %v6021 = vadd.f32 %v5936, %v6020
  %v6022 = vand.u32 %v5112, 4294901760
  %v6023 = vsub.f32 %v5112, %v6022
  %6024 = vmatmul.f32.gmra.mxu0 %v6023
  %v6025 = vpop.f32.mrf.mxu0
  %v6026 = vadd.f32 %v5940, %v6025
  %v6027 = vand.u32 %v5113, 4294901760
  %v6028 = vsub.f32 %v5113, %v6027
  %6029 = vmatmul.f32.gmra.mxu0 %v6028
  %v6030 = vpop.f32.mrf.mxu0
  %v6031 = vadd.f32 %v5944, %v6030
  %v6032 = vand.u32 %v5114, 4294901760
  %v6033 = vsub.f32 %v5114, %v6032
  %6034 = vmatmul.f32.gmra.mxu0 %v6033
  %v6035 = vpop.f32.mrf.mxu0
  %v6036 = vadd.f32 %v5948, %v6035
  %v6037 = vand.u32 %v5115, 4294901760
  %v6038 = vsub.f32 %v5115, %v6037
  %6039 = vmatmul.f32.gmra.mxu0 %v6038
  %v6040 = vpop.f32.mrf.mxu0
  %v6041 = vadd.f32 %v5952, %v6040
  %6042 = vdwg.mxu0
  %v6043 = vand.u32 %v5163, 4294901760
  %6044 = vmatpush.msra.mxu0 %v6043
  %v6045 = vand.u32 %v5161, 4294901760
  %6046 = vmatpush.msra.mxu0 %v6045
  %v6047 = vand.u32 %v5159, 4294901760
  %6048 = vmatpush.msra.mxu0 %v6047
  %v6049 = vand.u32 %v5157, 4294901760
  %6050 = vmatpush.msra.mxu0 %v6049
  %v6051 = vand.u32 %v5155, 4294901760
  %6052 = vmatpush.msra.mxu0 %v6051
  %v6053 = vand.u32 %v5153, 4294901760
  %6054 = vmatpush.msra.mxu0 %v6053
  %v6055 = vand.u32 %v5151, 4294901760
  %6056 = vmatpush.msra.mxu0 %v6055
  %v6057 = vand.u32 %v5149, 4294901760
  %6058 = vmatpush.msra.mxu0 %v6057
  %v6059 = vand.u32 %v5147, 4294901760
  %6060 = vmatpush.msra.mxu0 %v6059
  %v6061 = vand.u32 %v5145, 4294901760
  %6062 = vmatpush.msra.mxu0 %v6061
  %v6063 = vand.u32 %v5143, 4294901760
  %6064 = vmatpush.msra.mxu0 %v6063
  %v6065 = vand.u32 %v5141, 4294901760
  %6066 = vmatpush.msra.mxu0 %v6065
  %v6067 = vand.u32 %v5139, 4294901760
  %6068 = vmatpush.msra.mxu0 %v6067
  %v6069 = vand.u32 %v5137, 4294901760
  %6070 = vmatpush.msra.mxu0 %v6069
  %v6071 = vand.u32 %v5135, 4294901760
  %6072 = vmatpush.msra.mxu0 %v6071
  %v6073 = vand.u32 %v5133, 4294901760
  %6074 = vmatpush.msra.mxu0 %v6073
  %v6075 = vand.u32 %v5108, 4294901760
  %v6076 = vsub.f32 %v5108, %v6075
  %v6077 = vand.u32 %v6076, 4294901760
  %6078 = vmatmul.f32.gmra.mxu0 %v6077
  %v6079 = vpop.f32.mrf.mxu0
  %v6080 = vadd.f32 %v6006, %v6079
  %v6081 = vand.u32 %v5109, 4294901760
  %v6082 = vsub.f32 %v5109, %v6081
  %v6083 = vand.u32 %v6082, 4294901760
  %6084 = vmatmul.f32.gmra.mxu0 %v6083
  %v6085 = vpop.f32.mrf.mxu0
  %v6086 = vadd.f32 %v6011, %v6085
  %v6087 = vand.u32 %v5110, 4294901760
  %v6088 = vsub.f32 %v5110, %v6087
  %v6089 = vand.u32 %v6088, 4294901760
  %6090 = vmatmul.f32.gmra.mxu0 %v6089
  %v6091 = vpop.f32.mrf.mxu0
  %v6092 = vadd.f32 %v6016, %v6091
  %v6093 = vand.u32 %v5111, 4294901760
  %v6094 = vsub.f32 %v5111, %v6093
  %v6095 = vand.u32 %v6094, 4294901760
  %6096 = vmatmul.f32.gmra.mxu0 %v6095
  %v6097 = vpop.f32.mrf.mxu0
  %v6098 = vadd.f32 %v6021, %v6097
  %v6099 = vand.u32 %v5112, 4294901760
  %v6100 = vsub.f32 %v5112, %v6099
  %v6101 = vand.u32 %v6100, 4294901760
  %6102 = vmatmul.f32.gmra.mxu0 %v6101
  %v6103 = vpop.f32.mrf.mxu0
  %v6104 = vadd.f32 %v6026, %v6103
  %v6105 = vand.u32 %v5113, 4294901760
  %v6106 = vsub.f32 %v5113, %v6105
  %v6107 = vand.u32 %v6106, 4294901760
  %6108 = vmatmul.f32.gmra.mxu0 %v6107
  %v6109 = vpop.f32.mrf.mxu0
  %v6110 = vadd.f32 %v6031, %v6109
  %v6111 = vand.u32 %v5114, 4294901760
  %v6112 = vsub.f32 %v5114, %v6111
  %v6113 = vand.u32 %v6112, 4294901760
  %6114 = vmatmul.f32.gmra.mxu0 %v6113
  %v6115 = vpop.f32.mrf.mxu0
  %v6116 = vadd.f32 %v6036, %v6115
  %v6117 = vand.u32 %v5115, 4294901760
  %v6118 = vsub.f32 %v5115, %v6117
  %v6119 = vand.u32 %v6118, 4294901760
  %6120 = vmatmul.f32.gmra.mxu0 %v6119
  %v6121 = vpop.f32.mrf.mxu0
  %v6122 = vadd.f32 %v6041, %v6121
  %6123 = vdwg.mxu0
  %v6124 = vand.u32 %v5163, 4294901760
  %v6125 = vsub.f32 %v5163, %v6124
  %v6126 = vand.u32 %v6125, 4294901760
  %6127 = vmatpush.msra.mxu0 %v6126
  %v6128 = vand.u32 %v5161, 4294901760
  %v6129 = vsub.f32 %v5161, %v6128
  %v6130 = vand.u32 %v6129, 4294901760
  %6131 = vmatpush.msra.mxu0 %v6130
  %v6132 = vand.u32 %v5159, 4294901760
  %v6133 = vsub.f32 %v5159, %v6132
  %v6134 = vand.u32 %v6133, 4294901760
  %6135 = vmatpush.msra.mxu0 %v6134
  %v6136 = vand.u32 %v5157, 4294901760
  %v6137 = vsub.f32 %v5157, %v6136
  %v6138 = vand.u32 %v6137, 4294901760
  %6139 = vmatpush.msra.mxu0 %v6138
  %v6140 = vand.u32 %v5155, 4294901760
  %v6141 = vsub.f32 %v5155, %v6140
  %v6142 = vand.u32 %v6141, 4294901760
  %6143 = vmatpush.msra.mxu0 %v6142
  %v6144 = vand.u32 %v5153, 4294901760
  %v6145 = vsub.f32 %v5153, %v6144
  %v6146 = vand.u32 %v6145, 4294901760
  %6147 = vmatpush.msra.mxu0 %v6146
  %v6148 = vand.u32 %v5151, 4294901760
  %v6149 = vsub.f32 %v5151, %v6148
  %v6150 = vand.u32 %v6149, 4294901760
  %6151 = vmatpush.msra.mxu0 %v6150
  %v6152 = vand.u32 %v5149, 4294901760
  %v6153 = vsub.f32 %v5149, %v6152
  %v6154 = vand.u32 %v6153, 4294901760
  %6155 = vmatpush.msra.mxu0 %v6154
  %v6156 = vand.u32 %v5147, 4294901760
  %v6157 = vsub.f32 %v5147, %v6156
  %v6158 = vand.u32 %v6157, 4294901760
  %6159 = vmatpush.msra.mxu0 %v6158
  %v6160 = vand.u32 %v5145, 4294901760
  %v6161 = vsub.f32 %v5145, %v6160
  %v6162 = vand.u32 %v6161, 4294901760
  %6163 = vmatpush.msra.mxu0 %v6162
  %v6164 = vand.u32 %v5143, 4294901760
  %v6165 = vsub.f32 %v5143, %v6164
  %v6166 = vand.u32 %v6165, 4294901760
  %6167 = vmatpush.msra.mxu0 %v6166
  %v6168 = vand.u32 %v5141, 4294901760
  %v6169 = vsub.f32 %v5141, %v6168
  %v6170 = vand.u32 %v6169, 4294901760
  %6171 = vmatpush.msra.mxu0 %v6170
  %v6172 = vand.u32 %v5139, 4294901760
  %v6173 = vsub.f32 %v5139, %v6172
  %v6174 = vand.u32 %v6173, 4294901760
  %6175 = vmatpush.msra.mxu0 %v6174
  %v6176 = vand.u32 %v5137, 4294901760
  %v6177 = vsub.f32 %v5137, %v6176
  %v6178 = vand.u32 %v6177, 4294901760
  %6179 = vmatpush.msra.mxu0 %v6178
  %v6180 = vand.u32 %v5135, 4294901760
  %v6181 = vsub.f32 %v5135, %v6180
  %v6182 = vand.u32 %v6181, 4294901760
  %6183 = vmatpush.msra.mxu0 %v6182
  %v6184 = vand.u32 %v5133, 4294901760
  %v6185 = vsub.f32 %v5133, %v6184
  %v6186 = vand.u32 %v6185, 4294901760
  %6187 = vmatpush.msra.mxu0 %v6186
  %v6188 = vand.u32 %v5108, 4294901760
  %6189 = vmatmul.f32.gmra.mxu0 %v6188
  %v6190 = vpop.f32.mrf.mxu0
  %v6191 = vadd.f32 %v6080, %v6190
  %v6192 = vand.u32 %v5109, 4294901760
  %6193 = vmatmul.f32.gmra.mxu0 %v6192
  %v6194 = vpop.f32.mrf.mxu0
  %v6195 = vadd.f32 %v6086, %v6194
  %v6196 = vand.u32 %v5110, 4294901760
  %6197 = vmatmul.f32.gmra.mxu0 %v6196
  %v6198 = vpop.f32.mrf.mxu0
  %v6199 = vadd.f32 %v6092, %v6198
  %v6200 = vand.u32 %v5111, 4294901760
  %6201 = vmatmul.f32.gmra.mxu0 %v6200
  %v6202 = vpop.f32.mrf.mxu0
  %v6203 = vadd.f32 %v6098, %v6202
  %v6204 = vand.u32 %v5112, 4294901760
  %6205 = vmatmul.f32.gmra.mxu0 %v6204
  %v6206 = vpop.f32.mrf.mxu0
  %v6207 = vadd.f32 %v6104, %v6206
  %v6208 = vand.u32 %v5113, 4294901760
  %6209 = vmatmul.f32.gmra.mxu0 %v6208
  %v6210 = vpop.f32.mrf.mxu0
  %v6211 = vadd.f32 %v6110, %v6210
  %v6212 = vand.u32 %v5114, 4294901760
  %6213 = vmatmul.f32.gmra.mxu0 %v6212
  %v6214 = vpop.f32.mrf.mxu0
  %v6215 = vadd.f32 %v6116, %v6214
  %v6216 = vand.u32 %v5115, 4294901760
  %6217 = vmatmul.f32.gmra.mxu0 %v6216
  %v6218 = vpop.f32.mrf.mxu0
  %v6219 = vadd.f32 %v6122, %v6218
  %6220 = vdwg.mxu0
  %v6221 = vand.u32 %v5163, 4294901760
  %6222 = vmatpush.msra.mxu0 %v6221
  %v6223 = vand.u32 %v5161, 4294901760
  %6224 = vmatpush.msra.mxu0 %v6223
  %v6225 = vand.u32 %v5159, 4294901760
  %6226 = vmatpush.msra.mxu0 %v6225
  %v6227 = vand.u32 %v5157, 4294901760
  %6228 = vmatpush.msra.mxu0 %v6227
  %v6229 = vand.u32 %v5155, 4294901760
  %6230 = vmatpush.msra.mxu0 %v6229
  %v6231 = vand.u32 %v5153, 4294901760
  %6232 = vmatpush.msra.mxu0 %v6231
  %v6233 = vand.u32 %v5151, 4294901760
  %6234 = vmatpush.msra.mxu0 %v6233
  %v6235 = vand.u32 %v5149, 4294901760
  %6236 = vmatpush.msra.mxu0 %v6235
  %v6237 = vand.u32 %v5147, 4294901760
  %6238 = vmatpush.msra.mxu0 %v6237
  %v6239 = vand.u32 %v5145, 4294901760
  %6240 = vmatpush.msra.mxu0 %v6239
  %v6241 = vand.u32 %v5143, 4294901760
  %6242 = vmatpush.msra.mxu0 %v6241
  %v6243 = vand.u32 %v5141, 4294901760
  %6244 = vmatpush.msra.mxu0 %v6243
  %v6245 = vand.u32 %v5139, 4294901760
  %6246 = vmatpush.msra.mxu0 %v6245
  %v6247 = vand.u32 %v5137, 4294901760
  %6248 = vmatpush.msra.mxu0 %v6247
  %v6249 = vand.u32 %v5135, 4294901760
  %6250 = vmatpush.msra.mxu0 %v6249
  %v6251 = vand.u32 %v5133, 4294901760
  %6252 = vmatpush.msra.mxu0 %v6251
  %v6253 = vand.u32 %v5108, 4294901760
  %6254 = vmatmul.f32.gmra.mxu0 %v6253
  %v6255 = vpop.f32.mrf.mxu0
  %v6256 = vadd.f32 %v6191, %v6255
  %v6257 = vand.u32 %v5109, 4294901760
  %6258 = vmatmul.f32.gmra.mxu0 %v6257
  %v6259 = vpop.f32.mrf.mxu0
  %v6260 = vadd.f32 %v6195, %v6259
  %v6261 = vand.u32 %v5110, 4294901760
  %6262 = vmatmul.f32.gmra.mxu0 %v6261
  %v6263 = vpop.f32.mrf.mxu0
  %v6264 = vadd.f32 %v6199, %v6263
  %v6265 = vand.u32 %v5111, 4294901760
  %6266 = vmatmul.f32.gmra.mxu0 %v6265
  %v6267 = vpop.f32.mrf.mxu0
  %v6268 = vadd.f32 %v6203, %v6267
  %v6269 = vand.u32 %v5112, 4294901760
  %6270 = vmatmul.f32.gmra.mxu0 %v6269
  %v6271 = vpop.f32.mrf.mxu0
  %v6272 = vadd.f32 %v6207, %v6271
  %v6273 = vand.u32 %v5113, 4294901760
  %6274 = vmatmul.f32.gmra.mxu0 %v6273
  %v6275 = vpop.f32.mrf.mxu0
  %v6276 = vadd.f32 %v6211, %v6275
  %v6277 = vand.u32 %v5114, 4294901760
  %6278 = vmatmul.f32.gmra.mxu0 %v6277
  %v6279 = vpop.f32.mrf.mxu0
  %v6280 = vadd.f32 %v6215, %v6279
  %v6281 = vand.u32 %v5115, 4294901760
  %6282 = vmatmul.f32.gmra.mxu0 %v6281
  %v6283 = vpop.f32.mrf.mxu0
  %v6284 = vadd.f32 %v6219, %v6283
  %6285 = vdwg.mxu0
  %6286 = vmatpush.msra.mxu0 0.0
  %6287 = vmatpush.msra.mxu0 0.0
  %6288 = vmatpush.msra.mxu0 0.0
  %6289 = vmatpush.msra.mxu0 0.0
  %6290 = vmatpush.msra.mxu0 0.0
  %6291 = vmatpush.msra.mxu0 0.0
  %6292 = vmatpush.msra.mxu0 0.0
  %6293 = vmatpush.msra.mxu0 0.0
  %v6294 = vand.u32 %v5130, 4294901760
  %6295 = vmatpush.msra.mxu0 %v6294
  %v6296 = vand.u32 %v5128, 4294901760
  %6297 = vmatpush.msra.mxu0 %v6296
  %v6298 = vand.u32 %v5126, 4294901760
  %6299 = vmatpush.msra.mxu0 %v6298
  %v6300 = vand.u32 %v5124, 4294901760
  %6301 = vmatpush.msra.mxu0 %v6300
  %v6302 = vand.u32 %v5122, 4294901760
  %6303 = vmatpush.msra.mxu0 %v6302
  %v6304 = vand.u32 %v5120, 4294901760
  %6305 = vmatpush.msra.mxu0 %v6304
  %v6306 = vand.u32 %v5118, 4294901760
  %6307 = vmatpush.msra.mxu0 %v6306
  %v6308 = vand.u32 %v5116, 4294901760
  %6309 = vmatpush.msra.mxu0 %v6308
  %v6310 = vand.u32 %v860, 4294901760
  %v6311 = vsub.f32 %v860, %v6310
  %v6312 = vand.u32 %v6311, 4294901760
  %v6313 = vsub.f32 %v6311, %v6312
  %v6314 = vand.u32 %v6313, 4294901760
  %6315 = vmatmul.f32.gmra.mxu0 %v6314
  %v6316 = vpop.f32.mrf.mxu0
  %v6317 = vadd.f32 0.0, %v6316
  %6318 = vdwg.mxu0
  %6319 = vmatpush.msra.mxu0 0.0
  %6320 = vmatpush.msra.mxu0 0.0
  %6321 = vmatpush.msra.mxu0 0.0
  %6322 = vmatpush.msra.mxu0 0.0
  %6323 = vmatpush.msra.mxu0 0.0
  %6324 = vmatpush.msra.mxu0 0.0
  %6325 = vmatpush.msra.mxu0 0.0
  %6326 = vmatpush.msra.mxu0 0.0
  %v6327 = vand.u32 %v5130, 4294901760
  %v6328 = vsub.f32 %v5130, %v6327
  %v6329 = vand.u32 %v6328, 4294901760
  %v6330 = vsub.f32 %v6328, %v6329
  %v6331 = vand.u32 %v6330, 4294901760
  %6332 = vmatpush.msra.mxu0 %v6331
  %v6333 = vand.u32 %v5128, 4294901760
  %v6334 = vsub.f32 %v5128, %v6333
  %v6335 = vand.u32 %v6334, 4294901760
  %v6336 = vsub.f32 %v6334, %v6335
  %v6337 = vand.u32 %v6336, 4294901760
  %6338 = vmatpush.msra.mxu0 %v6337
  %v6339 = vand.u32 %v5126, 4294901760
  %v6340 = vsub.f32 %v5126, %v6339
  %v6341 = vand.u32 %v6340, 4294901760
  %v6342 = vsub.f32 %v6340, %v6341
  %v6343 = vand.u32 %v6342, 4294901760
  %6344 = vmatpush.msra.mxu0 %v6343
  %v6345 = vand.u32 %v5124, 4294901760
  %v6346 = vsub.f32 %v5124, %v6345
  %v6347 = vand.u32 %v6346, 4294901760
  %v6348 = vsub.f32 %v6346, %v6347
  %v6349 = vand.u32 %v6348, 4294901760
  %6350 = vmatpush.msra.mxu0 %v6349
  %v6351 = vand.u32 %v5122, 4294901760
  %v6352 = vsub.f32 %v5122, %v6351
  %v6353 = vand.u32 %v6352, 4294901760
  %v6354 = vsub.f32 %v6352, %v6353
  %v6355 = vand.u32 %v6354, 4294901760
  %6356 = vmatpush.msra.mxu0 %v6355
  %v6357 = vand.u32 %v5120, 4294901760
  %v6358 = vsub.f32 %v5120, %v6357
  %v6359 = vand.u32 %v6358, 4294901760
  %v6360 = vsub.f32 %v6358, %v6359
  %v6361 = vand.u32 %v6360, 4294901760
  %6362 = vmatpush.msra.mxu0 %v6361
  %v6363 = vand.u32 %v5118, 4294901760
  %v6364 = vsub.f32 %v5118, %v6363
  %v6365 = vand.u32 %v6364, 4294901760
  %v6366 = vsub.f32 %v6364, %v6365
  %v6367 = vand.u32 %v6366, 4294901760
  %6368 = vmatpush.msra.mxu0 %v6367
  %v6369 = vand.u32 %v5116, 4294901760
  %v6370 = vsub.f32 %v5116, %v6369
  %v6371 = vand.u32 %v6370, 4294901760
  %v6372 = vsub.f32 %v6370, %v6371
  %v6373 = vand.u32 %v6372, 4294901760
  %6374 = vmatpush.msra.mxu0 %v6373
  %v6375 = vand.u32 %v860, 4294901760
  %6376 = vmatmul.f32.gmra.mxu0 %v6375
  %v6377 = vpop.f32.mrf.mxu0
  %v6378 = vadd.f32 %v6317, %v6377
  %6379 = vdwg.mxu0
  %6380 = vmatpush.msra.mxu0 0.0
  %6381 = vmatpush.msra.mxu0 0.0
  %6382 = vmatpush.msra.mxu0 0.0
  %6383 = vmatpush.msra.mxu0 0.0
  %6384 = vmatpush.msra.mxu0 0.0
  %6385 = vmatpush.msra.mxu0 0.0
  %6386 = vmatpush.msra.mxu0 0.0
  %6387 = vmatpush.msra.mxu0 0.0
  %v6388 = vand.u32 %v5130, 4294901760
  %v6389 = vsub.f32 %v5130, %v6388
  %6390 = vmatpush.msra.mxu0 %v6389
  %v6391 = vand.u32 %v5128, 4294901760
  %v6392 = vsub.f32 %v5128, %v6391
  %6393 = vmatpush.msra.mxu0 %v6392
  %v6394 = vand.u32 %v5126, 4294901760
  %v6395 = vsub.f32 %v5126, %v6394
  %6396 = vmatpush.msra.mxu0 %v6395
  %v6397 = vand.u32 %v5124, 4294901760
  %v6398 = vsub.f32 %v5124, %v6397
  %6399 = vmatpush.msra.mxu0 %v6398
  %v6400 = vand.u32 %v5122, 4294901760
  %v6401 = vsub.f32 %v5122, %v6400
  %6402 = vmatpush.msra.mxu0 %v6401
  %v6403 = vand.u32 %v5120, 4294901760
  %v6404 = vsub.f32 %v5120, %v6403
  %6405 = vmatpush.msra.mxu0 %v6404
  %v6406 = vand.u32 %v5118, 4294901760
  %v6407 = vsub.f32 %v5118, %v6406
  %6408 = vmatpush.msra.mxu0 %v6407
  %v6409 = vand.u32 %v5116, 4294901760
  %v6410 = vsub.f32 %v5116, %v6409
  %6411 = vmatpush.msra.mxu0 %v6410
  %v6412 = vand.u32 %v860, 4294901760
  %v6413 = vsub.f32 %v860, %v6412
  %6414 = vmatmul.f32.gmra.mxu0 %v6413
  %v6415 = vpop.f32.mrf.mxu0
  %v6416 = vadd.f32 %v6378, %v6415
  %6417 = vdwg.mxu0
  %6418 = vmatpush.msra.mxu0 0.0
  %6419 = vmatpush.msra.mxu0 0.0
  %6420 = vmatpush.msra.mxu0 0.0
  %6421 = vmatpush.msra.mxu0 0.0
  %6422 = vmatpush.msra.mxu0 0.0
  %6423 = vmatpush.msra.mxu0 0.0
  %6424 = vmatpush.msra.mxu0 0.0
  %6425 = vmatpush.msra.mxu0 0.0
  %v6426 = vand.u32 %v5130, 4294901760
  %6427 = vmatpush.msra.mxu0 %v6426
  %v6428 = vand.u32 %v5128, 4294901760
  %6429 = vmatpush.msra.mxu0 %v6428
  %v6430 = vand.u32 %v5126, 4294901760
  %6431 = vmatpush.msra.mxu0 %v6430
  %v6432 = vand.u32 %v5124, 4294901760
  %6433 = vmatpush.msra.mxu0 %v6432
  %v6434 = vand.u32 %v5122, 4294901760
  %6435 = vmatpush.msra.mxu0 %v6434
  %v6436 = vand.u32 %v5120, 4294901760
  %6437 = vmatpush.msra.mxu0 %v6436
  %v6438 = vand.u32 %v5118, 4294901760
  %6439 = vmatpush.msra.mxu0 %v6438
  %v6440 = vand.u32 %v5116, 4294901760
  %6441 = vmatpush.msra.mxu0 %v6440
  %v6442 = vand.u32 %v860, 4294901760
  %v6443 = vsub.f32 %v860, %v6442
  %v6444 = vand.u32 %v6443, 4294901760
  %6445 = vmatmul.f32.gmra.mxu0 %v6444
  %v6446 = vpop.f32.mrf.mxu0
  %v6447 = vadd.f32 %v6416, %v6446
  %6448 = vdwg.mxu0
  %6449 = vmatpush.msra.mxu0 0.0
  %6450 = vmatpush.msra.mxu0 0.0
  %6451 = vmatpush.msra.mxu0 0.0
  %6452 = vmatpush.msra.mxu0 0.0
  %6453 = vmatpush.msra.mxu0 0.0
  %6454 = vmatpush.msra.mxu0 0.0
  %6455 = vmatpush.msra.mxu0 0.0
  %6456 = vmatpush.msra.mxu0 0.0
  %v6457 = vand.u32 %v5130, 4294901760
  %v6458 = vsub.f32 %v5130, %v6457
  %v6459 = vand.u32 %v6458, 4294901760
  %6460 = vmatpush.msra.mxu0 %v6459
  %v6461 = vand.u32 %v5128, 4294901760
  %v6462 = vsub.f32 %v5128, %v6461
  %v6463 = vand.u32 %v6462, 4294901760
  %6464 = vmatpush.msra.mxu0 %v6463
  %v6465 = vand.u32 %v5126, 4294901760
  %v6466 = vsub.f32 %v5126, %v6465
  %v6467 = vand.u32 %v6466, 4294901760
  %6468 = vmatpush.msra.mxu0 %v6467
  %v6469 = vand.u32 %v5124, 4294901760
  %v6470 = vsub.f32 %v5124, %v6469
  %v6471 = vand.u32 %v6470, 4294901760
  %6472 = vmatpush.msra.mxu0 %v6471
  %v6473 = vand.u32 %v5122, 4294901760
  %v6474 = vsub.f32 %v5122, %v6473
  %v6475 = vand.u32 %v6474, 4294901760
  %6476 = vmatpush.msra.mxu0 %v6475
  %v6477 = vand.u32 %v5120, 4294901760
  %v6478 = vsub.f32 %v5120, %v6477
  %v6479 = vand.u32 %v6478, 4294901760
  %6480 = vmatpush.msra.mxu0 %v6479
  %v6481 = vand.u32 %v5118, 4294901760
  %v6482 = vsub.f32 %v5118, %v6481
  %v6483 = vand.u32 %v6482, 4294901760
  %6484 = vmatpush.msra.mxu0 %v6483
  %v6485 = vand.u32 %v5116, 4294901760
  %v6486 = vsub.f32 %v5116, %v6485
  %v6487 = vand.u32 %v6486, 4294901760
  %6488 = vmatpush.msra.mxu0 %v6487
  %v6489 = vand.u32 %v860, 4294901760
  %6490 = vmatmul.f32.gmra.mxu0 %v6489
  %v6491 = vpop.f32.mrf.mxu0
  %v6492 = vadd.f32 %v6447, %v6491
  %6493 = vdwg.mxu0
  %6494 = vmatpush.msra.mxu0 0.0
  %6495 = vmatpush.msra.mxu0 0.0
  %6496 = vmatpush.msra.mxu0 0.0
  %6497 = vmatpush.msra.mxu0 0.0
  %6498 = vmatpush.msra.mxu0 0.0
  %6499 = vmatpush.msra.mxu0 0.0
  %6500 = vmatpush.msra.mxu0 0.0
  %6501 = vmatpush.msra.mxu0 0.0
  %v6502 = vand.u32 %v5130, 4294901760
  %6503 = vmatpush.msra.mxu0 %v6502
  %v6504 = vand.u32 %v5128, 4294901760
  %6505 = vmatpush.msra.mxu0 %v6504
  %v6506 = vand.u32 %v5126, 4294901760
  %6507 = vmatpush.msra.mxu0 %v6506
  %v6508 = vand.u32 %v5124, 4294901760
  %6509 = vmatpush.msra.mxu0 %v6508
  %v6510 = vand.u32 %v5122, 4294901760
  %6511 = vmatpush.msra.mxu0 %v6510
  %v6512 = vand.u32 %v5120, 4294901760
  %6513 = vmatpush.msra.mxu0 %v6512
  %v6514 = vand.u32 %v5118, 4294901760
  %6515 = vmatpush.msra.mxu0 %v6514
  %v6516 = vand.u32 %v5116, 4294901760
  %6517 = vmatpush.msra.mxu0 %v6516
  %v6518 = vand.u32 %v860, 4294901760
  %6519 = vmatmul.f32.gmra.mxu0 %v6518
  %v6520 = vpop.f32.mrf.mxu0
  %v6521 = vadd.f32 %v6492, %v6520
  %6522 = vdwg.mxu0
  %6523 = vmatpush.msra.mxu0 0.0
  %6524 = vmatpush.msra.mxu0 0.0
  %6525 = vmatpush.msra.mxu0 0.0
  %6526 = vmatpush.msra.mxu0 0.0
  %6527 = vmatpush.msra.mxu0 0.0
  %6528 = vmatpush.msra.mxu0 0.0
  %6529 = vmatpush.msra.mxu0 0.0
  %6530 = vmatpush.msra.mxu0 0.0
  %v6531 = vand.u32 %v5131, 4294901760
  %6532 = vmatpush.msra.mxu0 %v6531
  %v6533 = vand.u32 %v5129, 4294901760
  %6534 = vmatpush.msra.mxu0 %v6533
  %v6535 = vand.u32 %v5127, 4294901760
  %6536 = vmatpush.msra.mxu0 %v6535
  %v6537 = vand.u32 %v5125, 4294901760
  %6538 = vmatpush.msra.mxu0 %v6537
  %v6539 = vand.u32 %v5123, 4294901760
  %6540 = vmatpush.msra.mxu0 %v6539
  %v6541 = vand.u32 %v5121, 4294901760
  %6542 = vmatpush.msra.mxu0 %v6541
  %v6543 = vand.u32 %v5119, 4294901760
  %6544 = vmatpush.msra.mxu0 %v6543
  %v6545 = vand.u32 %v5117, 4294901760
  %6546 = vmatpush.msra.mxu0 %v6545
  %v6547 = vand.u32 %v860, 4294901760
  %v6548 = vsub.f32 %v860, %v6547
  %v6549 = vand.u32 %v6548, 4294901760
  %v6550 = vsub.f32 %v6548, %v6549
  %v6551 = vand.u32 %v6550, 4294901760
  %6552 = vmatmul.f32.gmra.mxu0 %v6551
  %v6553 = vpop.f32.mrf.mxu0
  %v6554 = vadd.f32 0.0, %v6553
  %6555 = vdwg.mxu0
  %6556 = vmatpush.msra.mxu0 0.0
  %6557 = vmatpush.msra.mxu0 0.0
  %6558 = vmatpush.msra.mxu0 0.0
  %6559 = vmatpush.msra.mxu0 0.0
  %6560 = vmatpush.msra.mxu0 0.0
  %6561 = vmatpush.msra.mxu0 0.0
  %6562 = vmatpush.msra.mxu0 0.0
  %6563 = vmatpush.msra.mxu0 0.0
  %v6564 = vand.u32 %v5131, 4294901760
  %v6565 = vsub.f32 %v5131, %v6564
  %v6566 = vand.u32 %v6565, 4294901760
  %v6567 = vsub.f32 %v6565, %v6566
  %v6568 = vand.u32 %v6567, 4294901760
  %6569 = vmatpush.msra.mxu0 %v6568
  %v6570 = vand.u32 %v5129, 4294901760
  %v6571 = vsub.f32 %v5129, %v6570
  %v6572 = vand.u32 %v6571, 4294901760
  %v6573 = vsub.f32 %v6571, %v6572
  %v6574 = vand.u32 %v6573, 4294901760
  %6575 = vmatpush.msra.mxu0 %v6574
  %v6576 = vand.u32 %v5127, 4294901760
  %v6577 = vsub.f32 %v5127, %v6576
  %v6578 = vand.u32 %v6577, 4294901760
  %v6579 = vsub.f32 %v6577, %v6578
  %v6580 = vand.u32 %v6579, 4294901760
  %6581 = vmatpush.msra.mxu0 %v6580
  %v6582 = vand.u32 %v5125, 4294901760
  %v6583 = vsub.f32 %v5125, %v6582
  %v6584 = vand.u32 %v6583, 4294901760
  %v6585 = vsub.f32 %v6583, %v6584
  %v6586 = vand.u32 %v6585, 4294901760
  %6587 = vmatpush.msra.mxu0 %v6586
  %v6588 = vand.u32 %v5123, 4294901760
  %v6589 = vsub.f32 %v5123, %v6588
  %v6590 = vand.u32 %v6589, 4294901760
  %v6591 = vsub.f32 %v6589, %v6590
  %v6592 = vand.u32 %v6591, 4294901760
  %6593 = vmatpush.msra.mxu0 %v6592
  %v6594 = vand.u32 %v5121, 4294901760
  %v6595 = vsub.f32 %v5121, %v6594
  %v6596 = vand.u32 %v6595, 4294901760
  %v6597 = vsub.f32 %v6595, %v6596
  %v6598 = vand.u32 %v6597, 4294901760
  %6599 = vmatpush.msra.mxu0 %v6598
  %v6600 = vand.u32 %v5119, 4294901760
  %v6601 = vsub.f32 %v5119, %v6600
  %v6602 = vand.u32 %v6601, 4294901760
  %v6603 = vsub.f32 %v6601, %v6602
  %v6604 = vand.u32 %v6603, 4294901760
  %6605 = vmatpush.msra.mxu0 %v6604
  %v6606 = vand.u32 %v5117, 4294901760
  %v6607 = vsub.f32 %v5117, %v6606
  %v6608 = vand.u32 %v6607, 4294901760
  %v6609 = vsub.f32 %v6607, %v6608
  %v6610 = vand.u32 %v6609, 4294901760
  %6611 = vmatpush.msra.mxu0 %v6610
  %v6612 = vand.u32 %v860, 4294901760
  %6613 = vmatmul.f32.gmra.mxu0 %v6612
  %v6614 = vpop.f32.mrf.mxu0
  %v6615 = vadd.f32 %v6554, %v6614
  %6616 = vdwg.mxu0
  %6617 = vmatpush.msra.mxu0 0.0
  %6618 = vmatpush.msra.mxu0 0.0
  %6619 = vmatpush.msra.mxu0 0.0
  %6620 = vmatpush.msra.mxu0 0.0
  %6621 = vmatpush.msra.mxu0 0.0
  %6622 = vmatpush.msra.mxu0 0.0
  %6623 = vmatpush.msra.mxu0 0.0
  %6624 = vmatpush.msra.mxu0 0.0
  %v6625 = vand.u32 %v5131, 4294901760
  %v6626 = vsub.f32 %v5131, %v6625
  %6627 = vmatpush.msra.mxu0 %v6626
  %v6628 = vand.u32 %v5129, 4294901760
  %v6629 = vsub.f32 %v5129, %v6628
  %6630 = vmatpush.msra.mxu0 %v6629
  %v6631 = vand.u32 %v5127, 4294901760
  %v6632 = vsub.f32 %v5127, %v6631
  %6633 = vmatpush.msra.mxu0 %v6632
  %v6634 = vand.u32 %v5125, 4294901760
  %v6635 = vsub.f32 %v5125, %v6634
  %6636 = vmatpush.msra.mxu0 %v6635
  %v6637 = vand.u32 %v5123, 4294901760
  %v6638 = vsub.f32 %v5123, %v6637
  %6639 = vmatpush.msra.mxu0 %v6638
  %v6640 = vand.u32 %v5121, 4294901760
  %v6641 = vsub.f32 %v5121, %v6640
  %6642 = vmatpush.msra.mxu0 %v6641
  %v6643 = vand.u32 %v5119, 4294901760
  %v6644 = vsub.f32 %v5119, %v6643
  %6645 = vmatpush.msra.mxu0 %v6644
  %v6646 = vand.u32 %v5117, 4294901760
  %v6647 = vsub.f32 %v5117, %v6646
  %6648 = vmatpush.msra.mxu0 %v6647
  %v6649 = vand.u32 %v860, 4294901760
  %v6650 = vsub.f32 %v860, %v6649
  %6651 = vmatmul.f32.gmra.mxu0 %v6650
  %v6652 = vpop.f32.mrf.mxu0
  %v6653 = vadd.f32 %v6615, %v6652
  %6654 = vdwg.mxu0
  %6655 = vmatpush.msra.mxu0 0.0
  %6656 = vmatpush.msra.mxu0 0.0
  %6657 = vmatpush.msra.mxu0 0.0
  %6658 = vmatpush.msra.mxu0 0.0
  %6659 = vmatpush.msra.mxu0 0.0
  %6660 = vmatpush.msra.mxu0 0.0
  %6661 = vmatpush.msra.mxu0 0.0
  %6662 = vmatpush.msra.mxu0 0.0
  %v6663 = vand.u32 %v5131, 4294901760
  %6664 = vmatpush.msra.mxu0 %v6663
  %v6665 = vand.u32 %v5129, 4294901760
  %6666 = vmatpush.msra.mxu0 %v6665
  %v6667 = vand.u32 %v5127, 4294901760
  %6668 = vmatpush.msra.mxu0 %v6667
  %v6669 = vand.u32 %v5125, 4294901760
  %6670 = vmatpush.msra.mxu0 %v6669
  %v6671 = vand.u32 %v5123, 4294901760
  %6672 = vmatpush.msra.mxu0 %v6671
  %v6673 = vand.u32 %v5121, 4294901760
  %6674 = vmatpush.msra.mxu0 %v6673
  %v6675 = vand.u32 %v5119, 4294901760
  %6676 = vmatpush.msra.mxu0 %v6675
  %v6677 = vand.u32 %v5117, 4294901760
  %6678 = vmatpush.msra.mxu0 %v6677
  %v6679 = vand.u32 %v860, 4294901760
  %v6680 = vsub.f32 %v860, %v6679
  %v6681 = vand.u32 %v6680, 4294901760
  %6682 = vmatmul.f32.gmra.mxu0 %v6681
  %v6683 = vpop.f32.mrf.mxu0
  %v6684 = vadd.f32 %v6653, %v6683
  %6685 = vdwg.mxu0
  %6686 = vmatpush.msra.mxu0 0.0
  %6687 = vmatpush.msra.mxu0 0.0
  %6688 = vmatpush.msra.mxu0 0.0
  %6689 = vmatpush.msra.mxu0 0.0
  %6690 = vmatpush.msra.mxu0 0.0
  %6691 = vmatpush.msra.mxu0 0.0
  %6692 = vmatpush.msra.mxu0 0.0
  %6693 = vmatpush.msra.mxu0 0.0
  %v6694 = vand.u32 %v5131, 4294901760
  %v6695 = vsub.f32 %v5131, %v6694
  %v6696 = vand.u32 %v6695, 4294901760
  %6697 = vmatpush.msra.mxu0 %v6696
  %v6698 = vand.u32 %v5129, 4294901760
  %v6699 = vsub.f32 %v5129, %v6698
  %v6700 = vand.u32 %v6699, 4294901760
  %6701 = vmatpush.msra.mxu0 %v6700
  %v6702 = vand.u32 %v5127, 4294901760
  %v6703 = vsub.f32 %v5127, %v6702
  %v6704 = vand.u32 %v6703, 4294901760
  %6705 = vmatpush.msra.mxu0 %v6704
  %v6706 = vand.u32 %v5125, 4294901760
  %v6707 = vsub.f32 %v5125, %v6706
  %v6708 = vand.u32 %v6707, 4294901760
  %6709 = vmatpush.msra.mxu0 %v6708
  %v6710 = vand.u32 %v5123, 4294901760
  %v6711 = vsub.f32 %v5123, %v6710
  %v6712 = vand.u32 %v6711, 4294901760
  %6713 = vmatpush.msra.mxu0 %v6712
  %v6714 = vand.u32 %v5121, 4294901760
  %v6715 = vsub.f32 %v5121, %v6714
  %v6716 = vand.u32 %v6715, 4294901760
  %6717 = vmatpush.msra.mxu0 %v6716
  %v6718 = vand.u32 %v5119, 4294901760
  %v6719 = vsub.f32 %v5119, %v6718
  %v6720 = vand.u32 %v6719, 4294901760
  %6721 = vmatpush.msra.mxu0 %v6720
  %v6722 = vand.u32 %v5117, 4294901760
  %v6723 = vsub.f32 %v5117, %v6722
  %v6724 = vand.u32 %v6723, 4294901760
  %6725 = vmatpush.msra.mxu0 %v6724
  %v6726 = vand.u32 %v860, 4294901760
  %6727 = vmatmul.f32.gmra.mxu0 %v6726
  %v6728 = vpop.f32.mrf.mxu0
  %v6729 = vadd.f32 %v6684, %v6728
  %6730 = vdwg.mxu0
  %6731 = vmatpush.msra.mxu0 0.0
  %6732 = vmatpush.msra.mxu0 0.0
  %6733 = vmatpush.msra.mxu0 0.0
  %6734 = vmatpush.msra.mxu0 0.0
  %6735 = vmatpush.msra.mxu0 0.0
  %6736 = vmatpush.msra.mxu0 0.0
  %6737 = vmatpush.msra.mxu0 0.0
  %6738 = vmatpush.msra.mxu0 0.0
  %v6739 = vand.u32 %v5131, 4294901760
  %6740 = vmatpush.msra.mxu0 %v6739
  %v6741 = vand.u32 %v5129, 4294901760
  %6742 = vmatpush.msra.mxu0 %v6741
  %v6743 = vand.u32 %v5127, 4294901760
  %6744 = vmatpush.msra.mxu0 %v6743
  %v6745 = vand.u32 %v5125, 4294901760
  %6746 = vmatpush.msra.mxu0 %v6745
  %v6747 = vand.u32 %v5123, 4294901760
  %6748 = vmatpush.msra.mxu0 %v6747
  %v6749 = vand.u32 %v5121, 4294901760
  %6750 = vmatpush.msra.mxu0 %v6749
  %v6751 = vand.u32 %v5119, 4294901760
  %6752 = vmatpush.msra.mxu0 %v6751
  %v6753 = vand.u32 %v5117, 4294901760
  %6754 = vmatpush.msra.mxu0 %v6753
  %v6755 = vand.u32 %v860, 4294901760
  %6756 = vmatmul.f32.gmra.mxu0 %v6755
  %v6757 = vpop.f32.mrf.mxu0
  %v6758 = vadd.f32 %v6729, %v6757
  %6759 = vdwg.mxu0
  %v6760 = vadd.f32 %v5698, %v6521
  %v6761 = vadd.f32 %v6256, %v6758
  %v6762 = vxor.u32 %v6760, 2147483648
  %v6763 = vxor.u32 %v6761, 2147483648
  %v6764 = vmul.f32 %v6762, 1.442695
  %v6765 = vpow.pop %v6764
  %v6766 = vmul.f32 %v6763, 1.442695
  %v6767 = vpow.pop %v6766
  %v6768 = vadd.f32 %v6765, 1.0
  %v6769 = vadd.f32 %v6767, 1.0
  %v6770 = vrcp.pop %v6768
  %v6771 = vmul.f32 %v6768, %v6770
  %v6772 = vsub.f32 1.0, %v6771
  %v6773 = vmul.f32 %v6770, %v6772
  %v6774 = vadd.f32 %v6770, %v6773
  %vm6775 = vweird.f32 %v6768
  %vm6776 = vweird.f32 %v6770
  %vm6777 = vmor %vm6775, %vm6776
  %v6778 = vsel %vm6777, %v6770, %v6774
  %v6779 = vand.u32 2147483647, %v6768
  %vm6780 = vcmp.eq.f32.partialorder %v6779, 8.507059e+37
  %v6781 = vand.u32 %v6768, 2147483648
  %v6782 = vor.u32 1.1754944e-38, %v6781
  %v6783 = vsel %vm6780, %v6782, %v6778
  %v6784 = vmul.f32 1.0, %v6783
  %v6785 = vrcp.pop %v6769
  %v6786 = vmul.f32 %v6769, %v6785
  %v6787 = vsub.f32 1.0, %v6786
  %v6788 = vmul.f32 %v6785, %v6787
  %v6789 = vadd.f32 %v6785, %v6788
  %vm6790 = vweird.f32 %v6769
  %vm6791 = vweird.f32 %v6785
  %vm6792 = vmor %vm6790, %vm6791
  %v6793 = vsel %vm6792, %v6785, %v6789
  %v6794 = vand.u32 2147483647, %v6769
  %vm6795 = vcmp.eq.f32.partialorder %v6794, 8.507059e+37
  %v6796 = vand.u32 %v6769, 2147483648
  %v6797 = vor.u32 1.1754944e-38, %v6796
  %v6798 = vsel %vm6795, %v6797, %v6793
  %v6799 = vmul.f32 1.0, %v6798
  %v6800 = vmul.f32 %v6799, 2.0
  %v6801 = vsub.f32 %v6800, 1.0
  %v6802 = vmul.f32 %v6784, 0.0
  %v6803 = vmul.f32 %v6784, %v6801
  %6805 = vrot.lane.b32.xlu0 %v6803, 64
  %v6806 = vpop.permute.xlu0 %6805
  %v6808 = vadd.f32 %v6802, %v6806
  %v6809 = vtanh.pop %v6808
  %v6810 = vmul.f32 %v6799, %v6809
  %6812 = vrot.lane.b32.xlu0 %v6810, 64
  %v6813 = vpop.permute.xlu0 %6812
  %v6814 = vsel %vm858, %v6813, 0
  %6816 = vmatpush.msra.mxu0 0.0
  %6817 = vmatpush.msra.mxu0 0.0
  %6818 = vmatpush.msra.mxu0 0.0
  %6819 = vmatpush.msra.mxu0 0.0
  %6820 = vmatpush.msra.mxu0 0.0
  %6821 = vmatpush.msra.mxu0 0.0
  %6822 = vmatpush.msra.mxu0 0.0
  %6823 = vmatpush.msra.mxu0 0.0
  %v6824 = vand.u32 %v5130, 4294901760
  %6825 = vmatpush.msra.mxu0 %v6824
  %v6826 = vand.u32 %v5128, 4294901760
  %6827 = vmatpush.msra.mxu0 %v6826
  %v6828 = vand.u32 %v5126, 4294901760
  %6829 = vmatpush.msra.mxu0 %v6828
  %v6830 = vand.u32 %v5124, 4294901760
  %6831 = vmatpush.msra.mxu0 %v6830
  %v6832 = vand.u32 %v5122, 4294901760
  %6833 = vmatpush.msra.mxu0 %v6832
  %v6834 = vand.u32 %v5120, 4294901760
  %6835 = vmatpush.msra.mxu0 %v6834
  %v6836 = vand.u32 %v5118, 4294901760
  %6837 = vmatpush.msra.mxu0 %v6836
  %v6838 = vand.u32 %v5116, 4294901760
  %6839 = vmatpush.msra.mxu0 %v6838
  %v6840 = vand.u32 %v6814, 4294901760
  %v6841 = vsub.f32 %v6814, %v6840
  %v6842 = vand.u32 %v6841, 4294901760
  %v6843 = vsub.f32 %v6841, %v6842
  %v6844 = vand.u32 %v6843, 4294901760
  %6845 = vmatmul.f32.gmra.mxu0 %v6844
  %v6846 = vpop.f32.mrf.mxu0
  %v6847 = vadd.f32 0.0, %v6846
  %6848 = vdwg.mxu0
  %6849 = vmatpush.msra.mxu0 0.0
  %6850 = vmatpush.msra.mxu0 0.0
  %6851 = vmatpush.msra.mxu0 0.0
  %6852 = vmatpush.msra.mxu0 0.0
  %6853 = vmatpush.msra.mxu0 0.0
  %6854 = vmatpush.msra.mxu0 0.0
  %6855 = vmatpush.msra.mxu0 0.0
  %6856 = vmatpush.msra.mxu0 0.0
  %v6857 = vand.u32 %v5130, 4294901760
  %v6858 = vsub.f32 %v5130, %v6857
  %v6859 = vand.u32 %v6858, 4294901760
  %v6860 = vsub.f32 %v6858, %v6859
  %v6861 = vand.u32 %v6860, 4294901760
  %6862 = vmatpush.msra.mxu0 %v6861
  %v6863 = vand.u32 %v5128, 4294901760
  %v6864 = vsub.f32 %v5128, %v6863
  %v6865 = vand.u32 %v6864, 4294901760
  %v6866 = vsub.f32 %v6864, %v6865
  %v6867 = vand.u32 %v6866, 4294901760
  %6868 = vmatpush.msra.mxu0 %v6867
  %v6869 = vand.u32 %v5126, 4294901760
  %v6870 = vsub.f32 %v5126, %v6869
  %v6871 = vand.u32 %v6870, 4294901760
  %v6872 = vsub.f32 %v6870, %v6871
  %v6873 = vand.u32 %v6872, 4294901760
  %6874 = vmatpush.msra.mxu0 %v6873
  %v6875 = vand.u32 %v5124, 4294901760
  %v6876 = vsub.f32 %v5124, %v6875
  %v6877 = vand.u32 %v6876, 4294901760
  %v6878 = vsub.f32 %v6876, %v6877
  %v6879 = vand.u32 %v6878, 4294901760
  %6880 = vmatpush.msra.mxu0 %v6879
  %v6881 = vand.u32 %v5122, 4294901760
  %v6882 = vsub.f32 %v5122, %v6881
  %v6883 = vand.u32 %v6882, 4294901760
  %v6884 = vsub.f32 %v6882, %v6883
  %v6885 = vand.u32 %v6884, 4294901760
  %6886 = vmatpush.msra.mxu0 %v6885
  %v6887 = vand.u32 %v5120, 4294901760
  %v6888 = vsub.f32 %v5120, %v6887
  %v6889 = vand.u32 %v6888, 4294901760
  %v6890 = vsub.f32 %v6888, %v6889
  %v6891 = vand.u32 %v6890, 4294901760
  %6892 = vmatpush.msra.mxu0 %v6891
  %v6893 = vand.u32 %v5118, 4294901760
  %v6894 = vsub.f32 %v5118, %v6893
  %v6895 = vand.u32 %v6894, 4294901760
  %v6896 = vsub.f32 %v6894, %v6895
  %v6897 = vand.u32 %v6896, 4294901760
  %6898 = vmatpush.msra.mxu0 %v6897
  %v6899 = vand.u32 %v5116, 4294901760
  %v6900 = vsub.f32 %v5116, %v6899
  %v6901 = vand.u32 %v6900, 4294901760
  %v6902 = vsub.f32 %v6900, %v6901
  %v6903 = vand.u32 %v6902, 4294901760
  %6904 = vmatpush.msra.mxu0 %v6903
  %v6905 = vand.u32 %v6814, 4294901760
  %6906 = vmatmul.f32.gmra.mxu0 %v6905
  %v6907 = vpop.f32.mrf.mxu0
  %v6908 = vadd.f32 %v6847, %v6907
  %6909 = vdwg.mxu0
  %6910 = vmatpush.msra.mxu0 0.0
  %6911 = vmatpush.msra.mxu0 0.0
  %6912 = vmatpush.msra.mxu0 0.0
  %6913 = vmatpush.msra.mxu0 0.0
  %6914 = vmatpush.msra.mxu0 0.0
  %6915 = vmatpush.msra.mxu0 0.0
  %6916 = vmatpush.msra.mxu0 0.0
  %6917 = vmatpush.msra.mxu0 0.0
  %v6918 = vand.u32 %v5130, 4294901760
  %v6919 = vsub.f32 %v5130, %v6918
  %6920 = vmatpush.msra.mxu0 %v6919
  %v6921 = vand.u32 %v5128, 4294901760
  %v6922 = vsub.f32 %v5128, %v6921
  %6923 = vmatpush.msra.mxu0 %v6922
  %v6924 = vand.u32 %v5126, 4294901760
  %v6925 = vsub.f32 %v5126, %v6924
  %6926 = vmatpush.msra.mxu0 %v6925
  %v6927 = vand.u32 %v5124, 4294901760
  %v6928 = vsub.f32 %v5124, %v6927
  %6929 = vmatpush.msra.mxu0 %v6928
  %v6930 = vand.u32 %v5122, 4294901760
  %v6931 = vsub.f32 %v5122, %v6930
  %6932 = vmatpush.msra.mxu0 %v6931
  %v6933 = vand.u32 %v5120, 4294901760
  %v6934 = vsub.f32 %v5120, %v6933
  %6935 = vmatpush.msra.mxu0 %v6934
  %v6936 = vand.u32 %v5118, 4294901760
  %v6937 = vsub.f32 %v5118, %v6936
  %6938 = vmatpush.msra.mxu0 %v6937
  %v6939 = vand.u32 %v5116, 4294901760
  %v6940 = vsub.f32 %v5116, %v6939
  %6941 = vmatpush.msra.mxu0 %v6940
  %v6942 = vand.u32 %v6814, 4294901760
  %v6943 = vsub.f32 %v6814, %v6942
  %6944 = vmatmul.f32.gmra.mxu0 %v6943
  %v6945 = vpop.f32.mrf.mxu0
  %v6946 = vadd.f32 %v6908, %v6945
  %6947 = vdwg.mxu0
  %6948 = vmatpush.msra.mxu0 0.0
  %6949 = vmatpush.msra.mxu0 0.0
  %6950 = vmatpush.msra.mxu0 0.0
  %6951 = vmatpush.msra.mxu0 0.0
  %6952 = vmatpush.msra.mxu0 0.0
  %6953 = vmatpush.msra.mxu0 0.0
  %6954 = vmatpush.msra.mxu0 0.0
  %6955 = vmatpush.msra.mxu0 0.0
  %v6956 = vand.u32 %v5130, 4294901760
  %6957 = vmatpush.msra.mxu0 %v6956
  %v6958 = vand.u32 %v5128, 4294901760
  %6959 = vmatpush.msra.mxu0 %v6958
  %v6960 = vand.u32 %v5126, 4294901760
  %6961 = vmatpush.msra.mxu0 %v6960
  %v6962 = vand.u32 %v5124, 4294901760
  %6963 = vmatpush.msra.mxu0 %v6962
  %v6964 = vand.u32 %v5122, 4294901760
  %6965 = vmatpush.msra.mxu0 %v6964
  %v6966 = vand.u32 %v5120, 4294901760
  %6967 = vmatpush.msra.mxu0 %v6966
  %v6968 = vand.u32 %v5118, 4294901760
  %6969 = vmatpush.msra.mxu0 %v6968
  %v6970 = vand.u32 %v5116, 4294901760
  %6971 = vmatpush.msra.mxu0 %v6970
  %v6972 = vand.u32 %v6814, 4294901760
  %v6973 = vsub.f32 %v6814, %v6972
  %v6974 = vand.u32 %v6973, 4294901760
  %6975 = vmatmul.f32.gmra.mxu0 %v6974
  %v6976 = vpop.f32.mrf.mxu0
  %v6977 = vadd.f32 %v6946, %v6976
  %6978 = vdwg.mxu0
  %6979 = vmatpush.msra.mxu0 0.0
  %6980 = vmatpush.msra.mxu0 0.0
  %6981 = vmatpush.msra.mxu0 0.0
  %6982 = vmatpush.msra.mxu0 0.0
  %6983 = vmatpush.msra.mxu0 0.0
  %6984 = vmatpush.msra.mxu0 0.0
  %6985 = vmatpush.msra.mxu0 0.0
  %6986 = vmatpush.msra.mxu0 0.0
  %v6987 = vand.u32 %v5130, 4294901760
  %v6988 = vsub.f32 %v5130, %v6987
  %v6989 = vand.u32 %v6988, 4294901760
  %6990 = vmatpush.msra.mxu0 %v6989
  %v6991 = vand.u32 %v5128, 4294901760
  %v6992 = vsub.f32 %v5128, %v6991
  %v6993 = vand.u32 %v6992, 4294901760
  %6994 = vmatpush.msra.mxu0 %v6993
  %v6995 = vand.u32 %v5126, 4294901760
  %v6996 = vsub.f32 %v5126, %v6995
  %v6997 = vand.u32 %v6996, 4294901760
  %6998 = vmatpush.msra.mxu0 %v6997
  %v6999 = vand.u32 %v5124, 4294901760
  %v7000 = vsub.f32 %v5124, %v6999
  %v7001 = vand.u32 %v7000, 4294901760
  %7002 = vmatpush.msra.mxu0 %v7001
  %v7003 = vand.u32 %v5122, 4294901760
  %v7004 = vsub.f32 %v5122, %v7003
  %v7005 = vand.u32 %v7004, 4294901760
  %7006 = vmatpush.msra.mxu0 %v7005
  %v7007 = vand.u32 %v5120, 4294901760
  %v7008 = vsub.f32 %v5120, %v7007
  %v7009 = vand.u32 %v7008, 4294901760
  %7010 = vmatpush.msra.mxu0 %v7009
  %v7011 = vand.u32 %v5118, 4294901760
  %v7012 = vsub.f32 %v5118, %v7011
  %v7013 = vand.u32 %v7012, 4294901760
  %7014 = vmatpush.msra.mxu0 %v7013
  %v7015 = vand.u32 %v5116, 4294901760
  %v7016 = vsub.f32 %v5116, %v7015
  %v7017 = vand.u32 %v7016, 4294901760
  %7018 = vmatpush.msra.mxu0 %v7017
  %v7019 = vand.u32 %v6814, 4294901760
  %7020 = vmatmul.f32.gmra.mxu0 %v7019
  %v7021 = vpop.f32.mrf.mxu0
  %v7022 = vadd.f32 %v6977, %v7021
  %7023 = vdwg.mxu0
  %7024 = vmatpush.msra.mxu0 0.0
  %7025 = vmatpush.msra.mxu0 0.0
  %7026 = vmatpush.msra.mxu0 0.0
  %7027 = vmatpush.msra.mxu0 0.0
  %7028 = vmatpush.msra.mxu0 0.0
  %7029 = vmatpush.msra.mxu0 0.0
  %7030 = vmatpush.msra.mxu0 0.0
  %7031 = vmatpush.msra.mxu0 0.0
  %v7032 = vand.u32 %v5130, 4294901760
  %7033 = vmatpush.msra.mxu0 %v7032
  %v7034 = vand.u32 %v5128, 4294901760
  %7035 = vmatpush.msra.mxu0 %v7034
  %v7036 = vand.u32 %v5126, 4294901760
  %7037 = vmatpush.msra.mxu0 %v7036
  %v7038 = vand.u32 %v5124, 4294901760
  %7039 = vmatpush.msra.mxu0 %v7038
  %v7040 = vand.u32 %v5122, 4294901760
  %7041 = vmatpush.msra.mxu0 %v7040
  %v7042 = vand.u32 %v5120, 4294901760
  %7043 = vmatpush.msra.mxu0 %v7042
  %v7044 = vand.u32 %v5118, 4294901760
  %7045 = vmatpush.msra.mxu0 %v7044
  %v7046 = vand.u32 %v5116, 4294901760
  %7047 = vmatpush.msra.mxu0 %v7046
  %v7048 = vand.u32 %v6814, 4294901760
  %7049 = vmatmul.f32.gmra.mxu0 %v7048
  %v7050 = vpop.f32.mrf.mxu0
  %v7051 = vadd.f32 %v7022, %v7050
  %7052 = vdwg.mxu0
  %7053 = vmatpush.msra.mxu0 0.0
  %7054 = vmatpush.msra.mxu0 0.0
  %7055 = vmatpush.msra.mxu0 0.0
  %7056 = vmatpush.msra.mxu0 0.0
  %7057 = vmatpush.msra.mxu0 0.0
  %7058 = vmatpush.msra.mxu0 0.0
  %7059 = vmatpush.msra.mxu0 0.0
  %7060 = vmatpush.msra.mxu0 0.0
  %v7061 = vand.u32 %v5131, 4294901760
  %7062 = vmatpush.msra.mxu0 %v7061
  %v7063 = vand.u32 %v5129, 4294901760
  %7064 = vmatpush.msra.mxu0 %v7063
  %v7065 = vand.u32 %v5127, 4294901760
  %7066 = vmatpush.msra.mxu0 %v7065
  %v7067 = vand.u32 %v5125, 4294901760
  %7068 = vmatpush.msra.mxu0 %v7067
  %v7069 = vand.u32 %v5123, 4294901760
  %7070 = vmatpush.msra.mxu0 %v7069
  %v7071 = vand.u32 %v5121, 4294901760
  %7072 = vmatpush.msra.mxu0 %v7071
  %v7073 = vand.u32 %v5119, 4294901760
  %7074 = vmatpush.msra.mxu0 %v7073
  %v7075 = vand.u32 %v5117, 4294901760
  %7076 = vmatpush.msra.mxu0 %v7075
  %v7077 = vand.u32 %v6814, 4294901760
  %v7078 = vsub.f32 %v6814, %v7077
  %v7079 = vand.u32 %v7078, 4294901760
  %v7080 = vsub.f32 %v7078, %v7079
  %v7081 = vand.u32 %v7080, 4294901760
  %7082 = vmatmul.f32.gmra.mxu0 %v7081
  %v7083 = vpop.f32.mrf.mxu0
  %v7084 = vadd.f32 0.0, %v7083
  %7085 = vdwg.mxu0
  %7086 = vmatpush.msra.mxu0 0.0
  %7087 = vmatpush.msra.mxu0 0.0
  %7088 = vmatpush.msra.mxu0 0.0
  %7089 = vmatpush.msra.mxu0 0.0
  %7090 = vmatpush.msra.mxu0 0.0
  %7091 = vmatpush.msra.mxu0 0.0
  %7092 = vmatpush.msra.mxu0 0.0
  %7093 = vmatpush.msra.mxu0 0.0
  %v7094 = vand.u32 %v5131, 4294901760
  %v7095 = vsub.f32 %v5131, %v7094
  %v7096 = vand.u32 %v7095, 4294901760
  %v7097 = vsub.f32 %v7095, %v7096
  %v7098 = vand.u32 %v7097, 4294901760
  %7099 = vmatpush.msra.mxu0 %v7098
  %v7100 = vand.u32 %v5129, 4294901760
  %v7101 = vsub.f32 %v5129, %v7100
  %v7102 = vand.u32 %v7101, 4294901760
  %v7103 = vsub.f32 %v7101, %v7102
  %v7104 = vand.u32 %v7103, 4294901760
  %7105 = vmatpush.msra.mxu0 %v7104
  %v7106 = vand.u32 %v5127, 4294901760
  %v7107 = vsub.f32 %v5127, %v7106
  %v7108 = vand.u32 %v7107, 4294901760
  %v7109 = vsub.f32 %v7107, %v7108
  %v7110 = vand.u32 %v7109, 4294901760
  %7111 = vmatpush.msra.mxu0 %v7110
  %v7112 = vand.u32 %v5125, 4294901760
  %v7113 = vsub.f32 %v5125, %v7112
  %v7114 = vand.u32 %v7113, 4294901760
  %v7115 = vsub.f32 %v7113, %v7114
  %v7116 = vand.u32 %v7115, 4294901760
  %7117 = vmatpush.msra.mxu0 %v7116
  %v7118 = vand.u32 %v5123, 4294901760
  %v7119 = vsub.f32 %v5123, %v7118
  %v7120 = vand.u32 %v7119, 4294901760
  %v7121 = vsub.f32 %v7119, %v7120
  %v7122 = vand.u32 %v7121, 4294901760
  %7123 = vmatpush.msra.mxu0 %v7122
  %v7124 = vand.u32 %v5121, 4294901760
  %v7125 = vsub.f32 %v5121, %v7124
  %v7126 = vand.u32 %v7125, 4294901760
  %v7127 = vsub.f32 %v7125, %v7126
  %v7128 = vand.u32 %v7127, 4294901760
  %7129 = vmatpush.msra.mxu0 %v7128
  %v7130 = vand.u32 %v5119, 4294901760
  %v7131 = vsub.f32 %v5119, %v7130
  %v7132 = vand.u32 %v7131, 4294901760
  %v7133 = vsub.f32 %v7131, %v7132
  %v7134 = vand.u32 %v7133, 4294901760
  %7135 = vmatpush.msra.mxu0 %v7134
  %v7136 = vand.u32 %v5117, 4294901760
  %v7137 = vsub.f32 %v5117, %v7136
  %v7138 = vand.u32 %v7137, 4294901760
  %v7139 = vsub.f32 %v7137, %v7138
  %v7140 = vand.u32 %v7139, 4294901760
  %7141 = vmatpush.msra.mxu0 %v7140
  %v7142 = vand.u32 %v6814, 4294901760
  %7143 = vmatmul.f32.gmra.mxu0 %v7142
  %v7144 = vpop.f32.mrf.mxu0
  %v7145 = vadd.f32 %v7084, %v7144
  %7146 = vdwg.mxu0
  %7147 = vmatpush.msra.mxu0 0.0
  %7148 = vmatpush.msra.mxu0 0.0
  %7149 = vmatpush.msra.mxu0 0.0
  %7150 = vmatpush.msra.mxu0 0.0
  %7151 = vmatpush.msra.mxu0 0.0
  %7152 = vmatpush.msra.mxu0 0.0
  %7153 = vmatpush.msra.mxu0 0.0
  %7154 = vmatpush.msra.mxu0 0.0
  %v7155 = vand.u32 %v5131, 4294901760
  %v7156 = vsub.f32 %v5131, %v7155
  %7157 = vmatpush.msra.mxu0 %v7156
  %v7158 = vand.u32 %v5129, 4294901760
  %v7159 = vsub.f32 %v5129, %v7158
  %7160 = vmatpush.msra.mxu0 %v7159
  %v7161 = vand.u32 %v5127, 4294901760
  %v7162 = vsub.f32 %v5127, %v7161
  %7163 = vmatpush.msra.mxu0 %v7162
  %v7164 = vand.u32 %v5125, 4294901760
  %v7165 = vsub.f32 %v5125, %v7164
  %7166 = vmatpush.msra.mxu0 %v7165
  %v7167 = vand.u32 %v5123, 4294901760
  %v7168 = vsub.f32 %v5123, %v7167
  %7169 = vmatpush.msra.mxu0 %v7168
  %v7170 = vand.u32 %v5121, 4294901760
  %v7171 = vsub.f32 %v5121, %v7170
  %7172 = vmatpush.msra.mxu0 %v7171
  %v7173 = vand.u32 %v5119, 4294901760
  %v7174 = vsub.f32 %v5119, %v7173
  %7175 = vmatpush.msra.mxu0 %v7174
  %v7176 = vand.u32 %v5117, 4294901760
  %v7177 = vsub.f32 %v5117, %v7176
  %7178 = vmatpush.msra.mxu0 %v7177
  %v7179 = vand.u32 %v6814, 4294901760
  %v7180 = vsub.f32 %v6814, %v7179
  %7181 = vmatmul.f32.gmra.mxu0 %v7180
  %v7182 = vpop.f32.mrf.mxu0
  %v7183 = vadd.f32 %v7145, %v7182
  %7184 = vdwg.mxu0
  %7185 = vmatpush.msra.mxu0 0.0
  %7186 = vmatpush.msra.mxu0 0.0
  %7187 = vmatpush.msra.mxu0 0.0
  %7188 = vmatpush.msra.mxu0 0.0
  %7189 = vmatpush.msra.mxu0 0.0
  %7190 = vmatpush.msra.mxu0 0.0
  %7191 = vmatpush.msra.mxu0 0.0
  %7192 = vmatpush.msra.mxu0 0.0
  %v7193 = vand.u32 %v5131, 4294901760
  %7194 = vmatpush.msra.mxu0 %v7193
  %v7195 = vand.u32 %v5129, 4294901760
  %7196 = vmatpush.msra.mxu0 %v7195
  %v7197 = vand.u32 %v5127, 4294901760
  %7198 = vmatpush.msra.mxu0 %v7197
  %v7199 = vand.u32 %v5125, 4294901760
  %7200 = vmatpush.msra.mxu0 %v7199
  %v7201 = vand.u32 %v5123, 4294901760
  %7202 = vmatpush.msra.mxu0 %v7201
  %v7203 = vand.u32 %v5121, 4294901760
  %7204 = vmatpush.msra.mxu0 %v7203
  %v7205 = vand.u32 %v5119, 4294901760
  %7206 = vmatpush.msra.mxu0 %v7205
  %v7207 = vand.u32 %v5117, 4294901760
  %7208 = vmatpush.msra.mxu0 %v7207
  %v7209 = vand.u32 %v6814, 4294901760
  %v7210 = vsub.f32 %v6814, %v7209
  %v7211 = vand.u32 %v7210, 4294901760
  %7212 = vmatmul.f32.gmra.mxu0 %v7211
  %v7213 = vpop.f32.mrf.mxu0
  %v7214 = vadd.f32 %v7183, %v7213
  %7215 = vdwg.mxu0
  %7216 = vmatpush.msra.mxu0 0.0
  %7217 = vmatpush.msra.mxu0 0.0
  %7218 = vmatpush.msra.mxu0 0.0
  %7219 = vmatpush.msra.mxu0 0.0
  %7220 = vmatpush.msra.mxu0 0.0
  %7221 = vmatpush.msra.mxu0 0.0
  %7222 = vmatpush.msra.mxu0 0.0
  %7223 = vmatpush.msra.mxu0 0.0
  %v7224 = vand.u32 %v5131, 4294901760
  %v7225 = vsub.f32 %v5131, %v7224
  %v7226 = vand.u32 %v7225, 4294901760
  %7227 = vmatpush.msra.mxu0 %v7226
  %v7228 = vand.u32 %v5129, 4294901760
  %v7229 = vsub.f32 %v5129, %v7228
  %v7230 = vand.u32 %v7229, 4294901760
  %7231 = vmatpush.msra.mxu0 %v7230
  %v7232 = vand.u32 %v5127, 4294901760
  %v7233 = vsub.f32 %v5127, %v7232
  %v7234 = vand.u32 %v7233, 4294901760
  %7235 = vmatpush.msra.mxu0 %v7234
  %v7236 = vand.u32 %v5125, 4294901760
  %v7237 = vsub.f32 %v5125, %v7236
  %v7238 = vand.u32 %v7237, 4294901760
  %7239 = vmatpush.msra.mxu0 %v7238
  %v7240 = vand.u32 %v5123, 4294901760
  %v7241 = vsub.f32 %v5123, %v7240
  %v7242 = vand.u32 %v7241, 4294901760
  %7243 = vmatpush.msra.mxu0 %v7242
  %v7244 = vand.u32 %v5121, 4294901760
  %v7245 = vsub.f32 %v5121, %v7244
  %v7246 = vand.u32 %v7245, 4294901760
  %7247 = vmatpush.msra.mxu0 %v7246
  %v7248 = vand.u32 %v5119, 4294901760
  %v7249 = vsub.f32 %v5119, %v7248
  %v7250 = vand.u32 %v7249, 4294901760
  %7251 = vmatpush.msra.mxu0 %v7250
  %v7252 = vand.u32 %v5117, 4294901760
  %v7253 = vsub.f32 %v5117, %v7252
  %v7254 = vand.u32 %v7253, 4294901760
  %7255 = vmatpush.msra.mxu0 %v7254
  %v7256 = vand.u32 %v6814, 4294901760
  %7257 = vmatmul.f32.gmra.mxu0 %v7256
  %v7258 = vpop.f32.mrf.mxu0
  %v7259 = vadd.f32 %v7214, %v7258
  %7260 = vdwg.mxu0
  %7261 = vmatpush.msra.mxu0 0.0
  %7262 = vmatpush.msra.mxu0 0.0
  %7263 = vmatpush.msra.mxu0 0.0
  %7264 = vmatpush.msra.mxu0 0.0
  %7265 = vmatpush.msra.mxu0 0.0
  %7266 = vmatpush.msra.mxu0 0.0
  %7267 = vmatpush.msra.mxu0 0.0
  %7268 = vmatpush.msra.mxu0 0.0
  %v7269 = vand.u32 %v5131, 4294901760
  %7270 = vmatpush.msra.mxu0 %v7269
  %v7271 = vand.u32 %v5129, 4294901760
  %7272 = vmatpush.msra.mxu0 %v7271
  %v7273 = vand.u32 %v5127, 4294901760
  %7274 = vmatpush.msra.mxu0 %v7273
  %v7275 = vand.u32 %v5125, 4294901760
  %7276 = vmatpush.msra.mxu0 %v7275
  %v7277 = vand.u32 %v5123, 4294901760
  %7278 = vmatpush.msra.mxu0 %v7277
  %v7279 = vand.u32 %v5121, 4294901760
  %7280 = vmatpush.msra.mxu0 %v7279
  %v7281 = vand.u32 %v5119, 4294901760
  %7282 = vmatpush.msra.mxu0 %v7281
  %v7283 = vand.u32 %v5117, 4294901760
  %7284 = vmatpush.msra.mxu0 %v7283
  %v7285 = vand.u32 %v6814, 4294901760
  %7286 = vmatmul.f32.gmra.mxu0 %v7285
  %v7287 = vpop.f32.mrf.mxu0
  %v7288 = vadd.f32 %v7259, %v7287
  %7289 = vdwg.mxu0
  %v7290 = vadd.f32 %v5702, %v7051
  %v7291 = vadd.f32 %v6260, %v7288
  %v7292 = vxor.u32 %v7290, 2147483648
  %v7293 = vxor.u32 %v7291, 2147483648
  %v7294 = vmul.f32 %v7292, 1.442695
  %v7295 = vpow.pop %v7294
  %v7296 = vmul.f32 %v7293, 1.442695
  %v7297 = vpow.pop %v7296
  %v7298 = vadd.f32 %v7295, 1.0
  %v7299 = vadd.f32 %v7297, 1.0
  %v7300 = vrcp.pop %v7298
  %v7301 = vmul.f32 %v7298, %v7300
  %v7302 = vsub.f32 1.0, %v7301
  %v7303 = vmul.f32 %v7300, %v7302
  %v7304 = vadd.f32 %v7300, %v7303
  %vm7305 = vweird.f32 %v7298
  %vm7306 = vweird.f32 %v7300
  %vm7307 = vmor %vm7305, %vm7306
  %v7308 = vsel %vm7307, %v7300, %v7304
  %v7309 = vand.u32 2147483647, %v7298
  %vm7310 = vcmp.eq.f32.partialorder %v7309, 8.507059e+37
  %v7311 = vand.u32 %v7298, 2147483648
  %v7312 = vor.u32 1.1754944e-38, %v7311
  %v7313 = vsel %vm7310, %v7312, %v7308
  %v7314 = vmul.f32 1.0, %v7313
  %v7315 = vrcp.pop %v7299
  %v7316 = vmul.f32 %v7299, %v7315
  %v7317 = vsub.f32 1.0, %v7316
  %v7318 = vmul.f32 %v7315, %v7317
  %v7319 = vadd.f32 %v7315, %v7318
  %vm7320 = vweird.f32 %v7299
  %vm7321 = vweird.f32 %v7315
  %vm7322 = vmor %vm7320, %vm7321
  %v7323 = vsel %vm7322, %v7315, %v7319
  %v7324 = vand.u32 2147483647, %v7299
  %vm7325 = vcmp.eq.f32.partialorder %v7324, 8.507059e+37
  %v7326 = vand.u32 %v7299, 2147483648
  %v7327 = vor.u32 1.1754944e-38, %v7326
  %v7328 = vsel %vm7325, %v7327, %v7323
  %v7329 = vmul.f32 1.0, %v7328
  %v7330 = vmul.f32 %v7329, 2.0
  %v7331 = vsub.f32 %v7330, 1.0
  %v7332 = vmul.f32 %v7314, %v6808
  %v7333 = vmul.f32 %v7314, %v7331
  %7335 = vrot.lane.b32.xlu0 %v7333, 64
  %v7336 = vpop.permute.xlu0 %7335
  %v7338 = vadd.f32 %v7332, %v7336
  %v7339 = vtanh.pop %v7338
  %v7340 = vmul.f32 %v7329, %v7339
  %7342 = vrot.lane.b32.xlu0 %v7340, 64
  %v7343 = vpop.permute.xlu0 %7342
  %v7344 = vsel %vm858, %v7343, 0
  %7346 = vmatpush.msra.mxu0 0.0
  %7347 = vmatpush.msra.mxu0 0.0
  %7348 = vmatpush.msra.mxu0 0.0
  %7349 = vmatpush.msra.mxu0 0.0
  %7350 = vmatpush.msra.mxu0 0.0
  %7351 = vmatpush.msra.mxu0 0.0
  %7352 = vmatpush.msra.mxu0 0.0
  %7353 = vmatpush.msra.mxu0 0.0
  %v7354 = vand.u32 %v5130, 4294901760
  %7355 = vmatpush.msra.mxu0 %v7354
  %v7356 = vand.u32 %v5128, 4294901760
  %7357 = vmatpush.msra.mxu0 %v7356
  %v7358 = vand.u32 %v5126, 4294901760
  %7359 = vmatpush.msra.mxu0 %v7358
  %v7360 = vand.u32 %v5124, 4294901760
  %7361 = vmatpush.msra.mxu0 %v7360
  %v7362 = vand.u32 %v5122, 4294901760
  %7363 = vmatpush.msra.mxu0 %v7362
  %v7364 = vand.u32 %v5120, 4294901760
  %7365 = vmatpush.msra.mxu0 %v7364
  %v7366 = vand.u32 %v5118, 4294901760
  %7367 = vmatpush.msra.mxu0 %v7366
  %v7368 = vand.u32 %v5116, 4294901760
  %7369 = vmatpush.msra.mxu0 %v7368
  %v7370 = vand.u32 %v7344, 4294901760
  %v7371 = vsub.f32 %v7344, %v7370
  %v7372 = vand.u32 %v7371, 4294901760
  %v7373 = vsub.f32 %v7371, %v7372
  %v7374 = vand.u32 %v7373, 4294901760
  %7375 = vmatmul.f32.gmra.mxu0 %v7374
  %v7376 = vpop.f32.mrf.mxu0
  %v7377 = vadd.f32 0.0, %v7376
  %7378 = vdwg.mxu0
  %7379 = vmatpush.msra.mxu0 0.0
  %7380 = vmatpush.msra.mxu0 0.0
  %7381 = vmatpush.msra.mxu0 0.0
  %7382 = vmatpush.msra.mxu0 0.0
  %7383 = vmatpush.msra.mxu0 0.0
  %7384 = vmatpush.msra.mxu0 0.0
  %7385 = vmatpush.msra.mxu0 0.0
  %7386 = vmatpush.msra.mxu0 0.0
  %v7387 = vand.u32 %v5130, 4294901760
  %v7388 = vsub.f32 %v5130, %v7387
  %v7389 = vand.u32 %v7388, 4294901760
  %v7390 = vsub.f32 %v7388, %v7389
  %v7391 = vand.u32 %v7390, 4294901760
  %7392 = vmatpush.msra.mxu0 %v7391
  %v7393 = vand.u32 %v5128, 4294901760
  %v7394 = vsub.f32 %v5128, %v7393
  %v7395 = vand.u32 %v7394, 4294901760
  %v7396 = vsub.f32 %v7394, %v7395
  %v7397 = vand.u32 %v7396, 4294901760
  %7398 = vmatpush.msra.mxu0 %v7397
  %v7399 = vand.u32 %v5126, 4294901760
  %v7400 = vsub.f32 %v5126, %v7399
  %v7401 = vand.u32 %v7400, 4294901760
  %v7402 = vsub.f32 %v7400, %v7401
  %v7403 = vand.u32 %v7402, 4294901760
  %7404 = vmatpush.msra.mxu0 %v7403
  %v7405 = vand.u32 %v5124, 4294901760
  %v7406 = vsub.f32 %v5124, %v7405
  %v7407 = vand.u32 %v7406, 4294901760
  %v7408 = vsub.f32 %v7406, %v7407
  %v7409 = vand.u32 %v7408, 4294901760
  %7410 = vmatpush.msra.mxu0 %v7409
  %v7411 = vand.u32 %v5122, 4294901760
  %v7412 = vsub.f32 %v5122, %v7411
  %v7413 = vand.u32 %v7412, 4294901760
  %v7414 = vsub.f32 %v7412, %v7413
  %v7415 = vand.u32 %v7414, 4294901760
  %7416 = vmatpush.msra.mxu0 %v7415
  %v7417 = vand.u32 %v5120, 4294901760
  %v7418 = vsub.f32 %v5120, %v7417
  %v7419 = vand.u32 %v7418, 4294901760
  %v7420 = vsub.f32 %v7418, %v7419
  %v7421 = vand.u32 %v7420, 4294901760
  %7422 = vmatpush.msra.mxu0 %v7421
  %v7423 = vand.u32 %v5118, 4294901760
  %v7424 = vsub.f32 %v5118, %v7423
  %v7425 = vand.u32 %v7424, 4294901760
  %v7426 = vsub.f32 %v7424, %v7425
  %v7427 = vand.u32 %v7426, 4294901760
  %7428 = vmatpush.msra.mxu0 %v7427
  %v7429 = vand.u32 %v5116, 4294901760
  %v7430 = vsub.f32 %v5116, %v7429
  %v7431 = vand.u32 %v7430, 4294901760
  %v7432 = vsub.f32 %v7430, %v7431
  %v7433 = vand.u32 %v7432, 4294901760
  %7434 = vmatpush.msra.mxu0 %v7433
  %v7435 = vand.u32 %v7344, 4294901760
  %7436 = vmatmul.f32.gmra.mxu0 %v7435
  %v7437 = vpop.f32.mrf.mxu0
  %v7438 = vadd.f32 %v7377, %v7437
  %7439 = vdwg.mxu0
  %7440 = vmatpush.msra.mxu0 0.0
  %7441 = vmatpush.msra.mxu0 0.0
  %7442 = vmatpush.msra.mxu0 0.0
  %7443 = vmatpush.msra.mxu0 0.0
  %7444 = vmatpush.msra.mxu0 0.0
  %7445 = vmatpush.msra.mxu0 0.0
  %7446 = vmatpush.msra.mxu0 0.0
  %7447 = vmatpush.msra.mxu0 0.0
  %v7448 = vand.u32 %v5130, 4294901760
  %v7449 = vsub.f32 %v5130, %v7448
  %7450 = vmatpush.msra.mxu0 %v7449
  %v7451 = vand.u32 %v5128, 4294901760
  %v7452 = vsub.f32 %v5128, %v7451
  %7453 = vmatpush.msra.mxu0 %v7452
  %v7454 = vand.u32 %v5126, 4294901760
  %v7455 = vsub.f32 %v5126, %v7454
  %7456 = vmatpush.msra.mxu0 %v7455
  %v7457 = vand.u32 %v5124, 4294901760
  %v7458 = vsub.f32 %v5124, %v7457
  %7459 = vmatpush.msra.mxu0 %v7458
  %v7460 = vand.u32 %v5122, 4294901760
  %v7461 = vsub.f32 %v5122, %v7460
  %7462 = vmatpush.msra.mxu0 %v7461
  %v7463 = vand.u32 %v5120, 4294901760
  %v7464 = vsub.f32 %v5120, %v7463
  %7465 = vmatpush.msra.mxu0 %v7464
  %v7466 = vand.u32 %v5118, 4294901760
  %v7467 = vsub.f32 %v5118, %v7466
  %7468 = vmatpush.msra.mxu0 %v7467
  %v7469 = vand.u32 %v5116, 4294901760
  %v7470 = vsub.f32 %v5116, %v7469
  %7471 = vmatpush.msra.mxu0 %v7470
  %v7472 = vand.u32 %v7344, 4294901760
  %v7473 = vsub.f32 %v7344, %v7472
  %7474 = vmatmul.f32.gmra.mxu0 %v7473
  %v7475 = vpop.f32.mrf.mxu0
  %v7476 = vadd.f32 %v7438, %v7475
  %7477 = vdwg.mxu0
  %7478 = vmatpush.msra.mxu0 0.0
  %7479 = vmatpush.msra.mxu0 0.0
  %7480 = vmatpush.msra.mxu0 0.0
  %7481 = vmatpush.msra.mxu0 0.0
  %7482 = vmatpush.msra.mxu0 0.0
  %7483 = vmatpush.msra.mxu0 0.0
  %7484 = vmatpush.msra.mxu0 0.0
  %7485 = vmatpush.msra.mxu0 0.0
  %v7486 = vand.u32 %v5130, 4294901760
  %7487 = vmatpush.msra.mxu0 %v7486
  %v7488 = vand.u32 %v5128, 4294901760
  %7489 = vmatpush.msra.mxu0 %v7488
  %v7490 = vand.u32 %v5126, 4294901760
  %7491 = vmatpush.msra.mxu0 %v7490
  %v7492 = vand.u32 %v5124, 4294901760
  %7493 = vmatpush.msra.mxu0 %v7492
  %v7494 = vand.u32 %v5122, 4294901760
  %7495 = vmatpush.msra.mxu0 %v7494
  %v7496 = vand.u32 %v5120, 4294901760
  %7497 = vmatpush.msra.mxu0 %v7496
  %v7498 = vand.u32 %v5118, 4294901760
  %7499 = vmatpush.msra.mxu0 %v7498
  %v7500 = vand.u32 %v5116, 4294901760
  %7501 = vmatpush.msra.mxu0 %v7500
  %v7502 = vand.u32 %v7344, 4294901760
  %v7503 = vsub.f32 %v7344, %v7502
  %v7504 = vand.u32 %v7503, 4294901760
  %7505 = vmatmul.f32.gmra.mxu0 %v7504
  %v7506 = vpop.f32.mrf.mxu0
  %v7507 = vadd.f32 %v7476, %v7506
  %7508 = vdwg.mxu0
  %7509 = vmatpush.msra.mxu0 0.0
  %7510 = vmatpush.msra.mxu0 0.0
  %7511 = vmatpush.msra.mxu0 0.0
  %7512 = vmatpush.msra.mxu0 0.0
  %7513 = vmatpush.msra.mxu0 0.0
  %7514 = vmatpush.msra.mxu0 0.0
  %7515 = vmatpush.msra.mxu0 0.0
  %7516 = vmatpush.msra.mxu0 0.0
  %v7517 = vand.u32 %v5130, 4294901760
  %v7518 = vsub.f32 %v5130, %v7517
  %v7519 = vand.u32 %v7518, 4294901760
  %7520 = vmatpush.msra.mxu0 %v7519
  %v7521 = vand.u32 %v5128, 4294901760
  %v7522 = vsub.f32 %v5128, %v7521
  %v7523 = vand.u32 %v7522, 4294901760
  %7524 = vmatpush.msra.mxu0 %v7523
  %v7525 = vand.u32 %v5126, 4294901760
  %v7526 = vsub.f32 %v5126, %v7525
  %v7527 = vand.u32 %v7526, 4294901760
  %7528 = vmatpush.msra.mxu0 %v7527
  %v7529 = vand.u32 %v5124, 4294901760
  %v7530 = vsub.f32 %v5124, %v7529
  %v7531 = vand.u32 %v7530, 4294901760
  %7532 = vmatpush.msra.mxu0 %v7531
  %v7533 = vand.u32 %v5122, 4294901760
  %v7534 = vsub.f32 %v5122, %v7533
  %v7535 = vand.u32 %v7534, 4294901760
  %7536 = vmatpush.msra.mxu0 %v7535
  %v7537 = vand.u32 %v5120, 4294901760
  %v7538 = vsub.f32 %v5120, %v7537
  %v7539 = vand.u32 %v7538, 4294901760
  %7540 = vmatpush.msra.mxu0 %v7539
  %v7541 = vand.u32 %v5118, 4294901760
  %v7542 = vsub.f32 %v5118, %v7541
  %v7543 = vand.u32 %v7542, 4294901760
  %7544 = vmatpush.msra.mxu0 %v7543
  %v7545 = vand.u32 %v5116, 4294901760
  %v7546 = vsub.f32 %v5116, %v7545
  %v7547 = vand.u32 %v7546, 4294901760
  %7548 = vmatpush.msra.mxu0 %v7547
  %v7549 = vand.u32 %v7344, 4294901760
  %7550 = vmatmul.f32.gmra.mxu0 %v7549
  %v7551 = vpop.f32.mrf.mxu0
  %v7552 = vadd.f32 %v7507, %v7551
  %7553 = vdwg.mxu0
  %7554 = vmatpush.msra.mxu0 0.0
  %7555 = vmatpush.msra.mxu0 0.0
  %7556 = vmatpush.msra.mxu0 0.0
  %7557 = vmatpush.msra.mxu0 0.0
  %7558 = vmatpush.msra.mxu0 0.0
  %7559 = vmatpush.msra.mxu0 0.0
  %7560 = vmatpush.msra.mxu0 0.0
  %7561 = vmatpush.msra.mxu0 0.0
  %v7562 = vand.u32 %v5130, 4294901760
  %7563 = vmatpush.msra.mxu0 %v7562
  %v7564 = vand.u32 %v5128, 4294901760
  %7565 = vmatpush.msra.mxu0 %v7564
  %v7566 = vand.u32 %v5126, 4294901760
  %7567 = vmatpush.msra.mxu0 %v7566
  %v7568 = vand.u32 %v5124, 4294901760
  %7569 = vmatpush.msra.mxu0 %v7568
  %v7570 = vand.u32 %v5122, 4294901760
  %7571 = vmatpush.msra.mxu0 %v7570
  %v7572 = vand.u32 %v5120, 4294901760
  %7573 = vmatpush.msra.mxu0 %v7572
  %v7574 = vand.u32 %v5118, 4294901760
  %7575 = vmatpush.msra.mxu0 %v7574
  %v7576 = vand.u32 %v5116, 4294901760
  %7577 = vmatpush.msra.mxu0 %v7576
  %v7578 = vand.u32 %v7344, 4294901760
  %7579 = vmatmul.f32.gmra.mxu0 %v7578
  %v7580 = vpop.f32.mrf.mxu0
  %v7581 = vadd.f32 %v7552, %v7580
  %7582 = vdwg.mxu0
  %7583 = vmatpush.msra.mxu0 0.0
  %7584 = vmatpush.msra.mxu0 0.0
  %7585 = vmatpush.msra.mxu0 0.0
  %7586 = vmatpush.msra.mxu0 0.0
  %7587 = vmatpush.msra.mxu0 0.0
  %7588 = vmatpush.msra.mxu0 0.0
  %7589 = vmatpush.msra.mxu0 0.0
  %7590 = vmatpush.msra.mxu0 0.0
  %v7591 = vand.u32 %v5131, 4294901760
  %7592 = vmatpush.msra.mxu0 %v7591
  %v7593 = vand.u32 %v5129, 4294901760
  %7594 = vmatpush.msra.mxu0 %v7593
  %v7595 = vand.u32 %v5127, 4294901760
  %7596 = vmatpush.msra.mxu0 %v7595
  %v7597 = vand.u32 %v5125, 4294901760
  %7598 = vmatpush.msra.mxu0 %v7597
  %v7599 = vand.u32 %v5123, 4294901760
  %7600 = vmatpush.msra.mxu0 %v7599
  %v7601 = vand.u32 %v5121, 4294901760
  %7602 = vmatpush.msra.mxu0 %v7601
  %v7603 = vand.u32 %v5119, 4294901760
  %7604 = vmatpush.msra.mxu0 %v7603
  %v7605 = vand.u32 %v5117, 4294901760
  %7606 = vmatpush.msra.mxu0 %v7605
  %v7607 = vand.u32 %v7344, 4294901760
  %v7608 = vsub.f32 %v7344, %v7607
  %v7609 = vand.u32 %v7608, 4294901760
  %v7610 = vsub.f32 %v7608, %v7609
  %v7611 = vand.u32 %v7610, 4294901760
  %7612 = vmatmul.f32.gmra.mxu0 %v7611
  %v7613 = vpop.f32.mrf.mxu0
  %v7614 = vadd.f32 0.0, %v7613
  %7615 = vdwg.mxu0
  %7616 = vmatpush.msra.mxu0 0.0
  %7617 = vmatpush.msra.mxu0 0.0
  %7618 = vmatpush.msra.mxu0 0.0
  %7619 = vmatpush.msra.mxu0 0.0
  %7620 = vmatpush.msra.mxu0 0.0
  %7621 = vmatpush.msra.mxu0 0.0
  %7622 = vmatpush.msra.mxu0 0.0
  %7623 = vmatpush.msra.mxu0 0.0
  %v7624 = vand.u32 %v5131, 4294901760
  %v7625 = vsub.f32 %v5131, %v7624
  %v7626 = vand.u32 %v7625, 4294901760
  %v7627 = vsub.f32 %v7625, %v7626
  %v7628 = vand.u32 %v7627, 4294901760
  %7629 = vmatpush.msra.mxu0 %v7628
  %v7630 = vand.u32 %v5129, 4294901760
  %v7631 = vsub.f32 %v5129, %v7630
  %v7632 = vand.u32 %v7631, 4294901760
  %v7633 = vsub.f32 %v7631, %v7632
  %v7634 = vand.u32 %v7633, 4294901760
  %7635 = vmatpush.msra.mxu0 %v7634
  %v7636 = vand.u32 %v5127, 4294901760
  %v7637 = vsub.f32 %v5127, %v7636
  %v7638 = vand.u32 %v7637, 4294901760
  %v7639 = vsub.f32 %v7637, %v7638
  %v7640 = vand.u32 %v7639, 4294901760
  %7641 = vmatpush.msra.mxu0 %v7640
  %v7642 = vand.u32 %v5125, 4294901760
  %v7643 = vsub.f32 %v5125, %v7642
  %v7644 = vand.u32 %v7643, 4294901760
  %v7645 = vsub.f32 %v7643, %v7644
  %v7646 = vand.u32 %v7645, 4294901760
  %7647 = vmatpush.msra.mxu0 %v7646
  %v7648 = vand.u32 %v5123, 4294901760
  %v7649 = vsub.f32 %v5123, %v7648
  %v7650 = vand.u32 %v7649, 4294901760
  %v7651 = vsub.f32 %v7649, %v7650
  %v7652 = vand.u32 %v7651, 4294901760
  %7653 = vmatpush.msra.mxu0 %v7652
  %v7654 = vand.u32 %v5121, 4294901760
  %v7655 = vsub.f32 %v5121, %v7654
  %v7656 = vand.u32 %v7655, 4294901760
  %v7657 = vsub.f32 %v7655, %v7656
  %v7658 = vand.u32 %v7657, 4294901760
  %7659 = vmatpush.msra.mxu0 %v7658
  %v7660 = vand.u32 %v5119, 4294901760
  %v7661 = vsub.f32 %v5119, %v7660
  %v7662 = vand.u32 %v7661, 4294901760
  %v7663 = vsub.f32 %v7661, %v7662
  %v7664 = vand.u32 %v7663, 4294901760
  %7665 = vmatpush.msra.mxu0 %v7664
  %v7666 = vand.u32 %v5117, 4294901760
  %v7667 = vsub.f32 %v5117, %v7666
  %v7668 = vand.u32 %v7667, 4294901760
  %v7669 = vsub.f32 %v7667, %v7668
  %v7670 = vand.u32 %v7669, 4294901760
  %7671 = vmatpush.msra.mxu0 %v7670
  %v7672 = vand.u32 %v7344, 4294901760
  %7673 = vmatmul.f32.gmra.mxu0 %v7672
  %v7674 = vpop.f32.mrf.mxu0
  %v7675 = vadd.f32 %v7614, %v7674
  %7676 = vdwg.mxu0
  %7677 = vmatpush.msra.mxu0 0.0
  %7678 = vmatpush.msra.mxu0 0.0
  %7679 = vmatpush.msra.mxu0 0.0
  %7680 = vmatpush.msra.mxu0 0.0
  %7681 = vmatpush.msra.mxu0 0.0
  %7682 = vmatpush.msra.mxu0 0.0
  %7683 = vmatpush.msra.mxu0 0.0
  %7684 = vmatpush.msra.mxu0 0.0
  %v7685 = vand.u32 %v5131, 4294901760
  %v7686 = vsub.f32 %v5131, %v7685
  %7687 = vmatpush.msra.mxu0 %v7686
  %v7688 = vand.u32 %v5129, 4294901760
  %v7689 = vsub.f32 %v5129, %v7688
  %7690 = vmatpush.msra.mxu0 %v7689
  %v7691 = vand.u32 %v5127, 4294901760
  %v7692 = vsub.f32 %v5127, %v7691
  %7693 = vmatpush.msra.mxu0 %v7692
  %v7694 = vand.u32 %v5125, 4294901760
  %v7695 = vsub.f32 %v5125, %v7694
  %7696 = vmatpush.msra.mxu0 %v7695
  %v7697 = vand.u32 %v5123, 4294901760
  %v7698 = vsub.f32 %v5123, %v7697
  %7699 = vmatpush.msra.mxu0 %v7698
  %v7700 = vand.u32 %v5121, 4294901760
  %v7701 = vsub.f32 %v5121, %v7700
  %7702 = vmatpush.msra.mxu0 %v7701
  %v7703 = vand.u32 %v5119, 4294901760
  %v7704 = vsub.f32 %v5119, %v7703
  %7705 = vmatpush.msra.mxu0 %v7704
  %v7706 = vand.u32 %v5117, 4294901760
  %v7707 = vsub.f32 %v5117, %v7706
  %7708 = vmatpush.msra.mxu0 %v7707
  %v7709 = vand.u32 %v7344, 4294901760
  %v7710 = vsub.f32 %v7344, %v7709
  %7711 = vmatmul.f32.gmra.mxu0 %v7710
  %v7712 = vpop.f32.mrf.mxu0
  %v7713 = vadd.f32 %v7675, %v7712
  %7714 = vdwg.mxu0
  %7715 = vmatpush.msra.mxu0 0.0
  %7716 = vmatpush.msra.mxu0 0.0
  %7717 = vmatpush.msra.mxu0 0.0
  %7718 = vmatpush.msra.mxu0 0.0
  %7719 = vmatpush.msra.mxu0 0.0
  %7720 = vmatpush.msra.mxu0 0.0
  %7721 = vmatpush.msra.mxu0 0.0
  %7722 = vmatpush.msra.mxu0 0.0
  %v7723 = vand.u32 %v5131, 4294901760
  %7724 = vmatpush.msra.mxu0 %v7723
  %v7725 = vand.u32 %v5129, 4294901760
  %7726 = vmatpush.msra.mxu0 %v7725
  %v7727 = vand.u32 %v5127, 4294901760
  %7728 = vmatpush.msra.mxu0 %v7727
  %v7729 = vand.u32 %v5125, 4294901760
  %7730 = vmatpush.msra.mxu0 %v7729
  %v7731 = vand.u32 %v5123, 4294901760
  %7732 = vmatpush.msra.mxu0 %v7731
  %v7733 = vand.u32 %v5121, 4294901760
  %7734 = vmatpush.msra.mxu0 %v7733
  %v7735 = vand.u32 %v5119, 4294901760
  %7736 = vmatpush.msra.mxu0 %v7735
  %v7737 = vand.u32 %v5117, 4294901760
  %7738 = vmatpush.msra.mxu0 %v7737
  %v7739 = vand.u32 %v7344, 4294901760
  %v7740 = vsub.f32 %v7344, %v7739
  %v7741 = vand.u32 %v7740, 4294901760
  %7742 = vmatmul.f32.gmra.mxu0 %v7741
  %v7743 = vpop.f32.mrf.mxu0
  %v7744 = vadd.f32 %v7713, %v7743
  %7745 = vdwg.mxu0
  %7746 = vmatpush.msra.mxu0 0.0
  %7747 = vmatpush.msra.mxu0 0.0
  %7748 = vmatpush.msra.mxu0 0.0
  %7749 = vmatpush.msra.mxu0 0.0
  %7750 = vmatpush.msra.mxu0 0.0
  %7751 = vmatpush.msra.mxu0 0.0
  %7752 = vmatpush.msra.mxu0 0.0
  %7753 = vmatpush.msra.mxu0 0.0
  %v7754 = vand.u32 %v5131, 4294901760
  %v7755 = vsub.f32 %v5131, %v7754
  %v7756 = vand.u32 %v7755, 4294901760
  %7757 = vmatpush.msra.mxu0 %v7756
  %v7758 = vand.u32 %v5129, 4294901760
  %v7759 = vsub.f32 %v5129, %v7758
  %v7760 = vand.u32 %v7759, 4294901760
  %7761 = vmatpush.msra.mxu0 %v7760
  %v7762 = vand.u32 %v5127, 4294901760
  %v7763 = vsub.f32 %v5127, %v7762
  %v7764 = vand.u32 %v7763, 4294901760
  %7765 = vmatpush.msra.mxu0 %v7764
  %v7766 = vand.u32 %v5125, 4294901760
  %v7767 = vsub.f32 %v5125, %v7766
  %v7768 = vand.u32 %v7767, 4294901760
  %7769 = vmatpush.msra.mxu0 %v7768
  %v7770 = vand.u32 %v5123, 4294901760
  %v7771 = vsub.f32 %v5123, %v7770
  %v7772 = vand.u32 %v7771, 4294901760
  %7773 = vmatpush.msra.mxu0 %v7772
  %v7774 = vand.u32 %v5121, 4294901760
  %v7775 = vsub.f32 %v5121, %v7774
  %v7776 = vand.u32 %v7775, 4294901760
  %7777 = vmatpush.msra.mxu0 %v7776
  %v7778 = vand.u32 %v5119, 4294901760
  %v7779 = vsub.f32 %v5119, %v7778
  %v7780 = vand.u32 %v7779, 4294901760
  %7781 = vmatpush.msra.mxu0 %v7780
  %v7782 = vand.u32 %v5117, 4294901760
  %v7783 = vsub.f32 %v5117, %v7782
  %v7784 = vand.u32 %v7783, 4294901760
  %7785 = vmatpush.msra.mxu0 %v7784
  %v7786 = vand.u32 %v7344, 4294901760
  %7787 = vmatmul.f32.gmra.mxu0 %v7786
  %v7788 = vpop.f32.mrf.mxu0
  %v7789 = vadd.f32 %v7744, %v7788
  %7790 = vdwg.mxu0
  %7791 = vmatpush.msra.mxu0 0.0
  %7792 = vmatpush.msra.mxu0 0.0
  %7793 = vmatpush.msra.mxu0 0.0
  %7794 = vmatpush.msra.mxu0 0.0
  %7795 = vmatpush.msra.mxu0 0.0
  %7796 = vmatpush.msra.mxu0 0.0
  %7797 = vmatpush.msra.mxu0 0.0
  %7798 = vmatpush.msra.mxu0 0.0
  %v7799 = vand.u32 %v5131, 4294901760
  %7800 = vmatpush.msra.mxu0 %v7799
  %v7801 = vand.u32 %v5129, 4294901760
  %7802 = vmatpush.msra.mxu0 %v7801
  %v7803 = vand.u32 %v5127, 4294901760
  %7804 = vmatpush.msra.mxu0 %v7803
  %v7805 = vand.u32 %v5125, 4294901760
  %7806 = vmatpush.msra.mxu0 %v7805
  %v7807 = vand.u32 %v5123, 4294901760
  %7808 = vmatpush.msra.mxu0 %v7807
  %v7809 = vand.u32 %v5121, 4294901760
  %7810 = vmatpush.msra.mxu0 %v7809
  %v7811 = vand.u32 %v5119, 4294901760
  %7812 = vmatpush.msra.mxu0 %v7811
  %v7813 = vand.u32 %v5117, 4294901760
  %7814 = vmatpush.msra.mxu0 %v7813
  %v7815 = vand.u32 %v7344, 4294901760
  %7816 = vmatmul.f32.gmra.mxu0 %v7815
  %v7817 = vpop.f32.mrf.mxu0
  %v7818 = vadd.f32 %v7789, %v7817
  %7819 = vdwg.mxu0
  %v7820 = vadd.f32 %v5706, %v7581
  %v7821 = vadd.f32 %v6264, %v7818
  %v7822 = vxor.u32 %v7820, 2147483648
  %v7823 = vxor.u32 %v7821, 2147483648
  %v7824 = vmul.f32 %v7822, 1.442695
  %v7825 = vpow.pop %v7824
  %v7826 = vmul.f32 %v7823, 1.442695
  %v7827 = vpow.pop %v7826
  %v7828 = vadd.f32 %v7825, 1.0
  %v7829 = vadd.f32 %v7827, 1.0
  %v7830 = vrcp.pop %v7828
  %v7831 = vmul.f32 %v7828, %v7830
  %v7832 = vsub.f32 1.0, %v7831
  %v7833 = vmul.f32 %v7830, %v7832
  %v7834 = vadd.f32 %v7830, %v7833
  %vm7835 = vweird.f32 %v7828
  %vm7836 = vweird.f32 %v7830
  %vm7837 = vmor %vm7835, %vm7836
  %v7838 = vsel %vm7837, %v7830, %v7834
  %v7839 = vand.u32 2147483647, %v7828
  %vm7840 = vcmp.eq.f32.partialorder %v7839, 8.507059e+37
  %v7841 = vand.u32 %v7828, 2147483648
  %v7842 = vor.u32 1.1754944e-38, %v7841
  %v7843 = vsel %vm7840, %v7842, %v7838
  %v7844 = vmul.f32 1.0, %v7843
  %v7845 = vrcp.pop %v7829
  %v7846 = vmul.f32 %v7829, %v7845
  %v7847 = vsub.f32 1.0, %v7846
  %v7848 = vmul.f32 %v7845, %v7847
  %v7849 = vadd.f32 %v7845, %v7848
  %vm7850 = vweird.f32 %v7829
  %vm7851 = vweird.f32 %v7845
  %vm7852 = vmor %vm7850, %vm7851
  %v7853 = vsel %vm7852, %v7845, %v7849
  %v7854 = vand.u32 2147483647, %v7829
  %vm7855 = vcmp.eq.f32.partialorder %v7854, 8.507059e+37
  %v7856 = vand.u32 %v7829, 2147483648
  %v7857 = vor.u32 1.1754944e-38, %v7856
  %v7858 = vsel %vm7855, %v7857, %v7853
  %v7859 = vmul.f32 1.0, %v7858
  %v7860 = vmul.f32 %v7859, 2.0
  %v7861 = vsub.f32 %v7860, 1.0
  %v7862 = vmul.f32 %v7844, %v7338
  %v7863 = vmul.f32 %v7844, %v7861
  %7865 = vrot.lane.b32.xlu0 %v7863, 64
  %v7866 = vpop.permute.xlu0 %7865
  %v7868 = vadd.f32 %v7862, %v7866
  %v7869 = vtanh.pop %v7868
  %v7870 = vmul.f32 %v7859, %v7869
  %7872 = vrot.lane.b32.xlu0 %v7870, 64
  %v7873 = vpop.permute.xlu0 %7872
  %v7874 = vsel %vm858, %v7873, 0
  %7876 = vmatpush.msra.mxu0 0.0
  %7877 = vmatpush.msra.mxu0 0.0
  %7878 = vmatpush.msra.mxu0 0.0
  %7879 = vmatpush.msra.mxu0 0.0
  %7880 = vmatpush.msra.mxu0 0.0
  %7881 = vmatpush.msra.mxu0 0.0
  %7882 = vmatpush.msra.mxu0 0.0
  %7883 = vmatpush.msra.mxu0 0.0
  %v7884 = vand.u32 %v5130, 4294901760
  %7885 = vmatpush.msra.mxu0 %v7884
  %v7886 = vand.u32 %v5128, 4294901760
  %7887 = vmatpush.msra.mxu0 %v7886
  %v7888 = vand.u32 %v5126, 4294901760
  %7889 = vmatpush.msra.mxu0 %v7888
  %v7890 = vand.u32 %v5124, 4294901760
  %7891 = vmatpush.msra.mxu0 %v7890
  %v7892 = vand.u32 %v5122, 4294901760
  %7893 = vmatpush.msra.mxu0 %v7892
  %v7894 = vand.u32 %v5120, 4294901760
  %7895 = vmatpush.msra.mxu0 %v7894
  %v7896 = vand.u32 %v5118, 4294901760
  %7897 = vmatpush.msra.mxu0 %v7896
  %v7898 = vand.u32 %v5116, 4294901760
  %7899 = vmatpush.msra.mxu0 %v7898
  %v7900 = vand.u32 %v7874, 4294901760
  %v7901 = vsub.f32 %v7874, %v7900
  %v7902 = vand.u32 %v7901, 4294901760
  %v7903 = vsub.f32 %v7901, %v7902
  %v7904 = vand.u32 %v7903, 4294901760
  %7905 = vmatmul.f32.gmra.mxu0 %v7904
  %v7906 = vpop.f32.mrf.mxu0
  %v7907 = vadd.f32 0.0, %v7906
  %7908 = vdwg.mxu0
  %7909 = vmatpush.msra.mxu0 0.0
  %7910 = vmatpush.msra.mxu0 0.0
  %7911 = vmatpush.msra.mxu0 0.0
  %7912 = vmatpush.msra.mxu0 0.0
  %7913 = vmatpush.msra.mxu0 0.0
  %7914 = vmatpush.msra.mxu0 0.0
  %7915 = vmatpush.msra.mxu0 0.0
  %7916 = vmatpush.msra.mxu0 0.0
  %v7917 = vand.u32 %v5130, 4294901760
  %v7918 = vsub.f32 %v5130, %v7917
  %v7919 = vand.u32 %v7918, 4294901760
  %v7920 = vsub.f32 %v7918, %v7919
  %v7921 = vand.u32 %v7920, 4294901760
  %7922 = vmatpush.msra.mxu0 %v7921
  %v7923 = vand.u32 %v5128, 4294901760
  %v7924 = vsub.f32 %v5128, %v7923
  %v7925 = vand.u32 %v7924, 4294901760
  %v7926 = vsub.f32 %v7924, %v7925
  %v7927 = vand.u32 %v7926, 4294901760
  %7928 = vmatpush.msra.mxu0 %v7927
  %v7929 = vand.u32 %v5126, 4294901760
  %v7930 = vsub.f32 %v5126, %v7929
  %v7931 = vand.u32 %v7930, 4294901760
  %v7932 = vsub.f32 %v7930, %v7931
  %v7933 = vand.u32 %v7932, 4294901760
  %7934 = vmatpush.msra.mxu0 %v7933
  %v7935 = vand.u32 %v5124, 4294901760
  %v7936 = vsub.f32 %v5124, %v7935
  %v7937 = vand.u32 %v7936, 4294901760
  %v7938 = vsub.f32 %v7936, %v7937
  %v7939 = vand.u32 %v7938, 4294901760
  %7940 = vmatpush.msra.mxu0 %v7939
  %v7941 = vand.u32 %v5122, 4294901760
  %v7942 = vsub.f32 %v5122, %v7941
  %v7943 = vand.u32 %v7942, 4294901760
  %v7944 = vsub.f32 %v7942, %v7943
  %v7945 = vand.u32 %v7944, 4294901760
  %7946 = vmatpush.msra.mxu0 %v7945
  %v7947 = vand.u32 %v5120, 4294901760
  %v7948 = vsub.f32 %v5120, %v7947
  %v7949 = vand.u32 %v7948, 4294901760
  %v7950 = vsub.f32 %v7948, %v7949
  %v7951 = vand.u32 %v7950, 4294901760
  %7952 = vmatpush.msra.mxu0 %v7951
  %v7953 = vand.u32 %v5118, 4294901760
  %v7954 = vsub.f32 %v5118, %v7953
  %v7955 = vand.u32 %v7954, 4294901760
  %v7956 = vsub.f32 %v7954, %v7955
  %v7957 = vand.u32 %v7956, 4294901760
  %7958 = vmatpush.msra.mxu0 %v7957
  %v7959 = vand.u32 %v5116, 4294901760
  %v7960 = vsub.f32 %v5116, %v7959
  %v7961 = vand.u32 %v7960, 4294901760
  %v7962 = vsub.f32 %v7960, %v7961
  %v7963 = vand.u32 %v7962, 4294901760
  %7964 = vmatpush.msra.mxu0 %v7963
  %v7965 = vand.u32 %v7874, 4294901760
  %7966 = vmatmul.f32.gmra.mxu0 %v7965
  %v7967 = vpop.f32.mrf.mxu0
  %v7968 = vadd.f32 %v7907, %v7967
  %7969 = vdwg.mxu0
  %7970 = vmatpush.msra.mxu0 0.0
  %7971 = vmatpush.msra.mxu0 0.0
  %7972 = vmatpush.msra.mxu0 0.0
  %7973 = vmatpush.msra.mxu0 0.0
  %7974 = vmatpush.msra.mxu0 0.0
  %7975 = vmatpush.msra.mxu0 0.0
  %7976 = vmatpush.msra.mxu0 0.0
  %7977 = vmatpush.msra.mxu0 0.0
  %v7978 = vand.u32 %v5130, 4294901760
  %v7979 = vsub.f32 %v5130, %v7978
  %7980 = vmatpush.msra.mxu0 %v7979
  %v7981 = vand.u32 %v5128, 4294901760
  %v7982 = vsub.f32 %v5128, %v7981
  %7983 = vmatpush.msra.mxu0 %v7982
  %v7984 = vand.u32 %v5126, 4294901760
  %v7985 = vsub.f32 %v5126, %v7984
  %7986 = vmatpush.msra.mxu0 %v7985
  %v7987 = vand.u32 %v5124, 4294901760
  %v7988 = vsub.f32 %v5124, %v7987
  %7989 = vmatpush.msra.mxu0 %v7988
  %v7990 = vand.u32 %v5122, 4294901760
  %v7991 = vsub.f32 %v5122, %v7990
  %7992 = vmatpush.msra.mxu0 %v7991
  %v7993 = vand.u32 %v5120, 4294901760
  %v7994 = vsub.f32 %v5120, %v7993
  %7995 = vmatpush.msra.mxu0 %v7994
  %v7996 = vand.u32 %v5118, 4294901760
  %v7997 = vsub.f32 %v5118, %v7996
  %7998 = vmatpush.msra.mxu0 %v7997
  %v7999 = vand.u32 %v5116, 4294901760
  %v8000 = vsub.f32 %v5116, %v7999
  %8001 = vmatpush.msra.mxu0 %v8000
  %v8002 = vand.u32 %v7874, 4294901760
  %v8003 = vsub.f32 %v7874, %v8002
  %8004 = vmatmul.f32.gmra.mxu0 %v8003
  %v8005 = vpop.f32.mrf.mxu0
  %v8006 = vadd.f32 %v7968, %v8005
  %8007 = vdwg.mxu0
  %8008 = vmatpush.msra.mxu0 0.0
  %8009 = vmatpush.msra.mxu0 0.0
  %8010 = vmatpush.msra.mxu0 0.0
  %8011 = vmatpush.msra.mxu0 0.0
  %8012 = vmatpush.msra.mxu0 0.0
  %8013 = vmatpush.msra.mxu0 0.0
  %8014 = vmatpush.msra.mxu0 0.0
  %8015 = vmatpush.msra.mxu0 0.0
  %v8016 = vand.u32 %v5130, 4294901760
  %8017 = vmatpush.msra.mxu0 %v8016
  %v8018 = vand.u32 %v5128, 4294901760
  %8019 = vmatpush.msra.mxu0 %v8018
  %v8020 = vand.u32 %v5126, 4294901760
  %8021 = vmatpush.msra.mxu0 %v8020
  %v8022 = vand.u32 %v5124, 4294901760
  %8023 = vmatpush.msra.mxu0 %v8022
  %v8024 = vand.u32 %v5122, 4294901760
  %8025 = vmatpush.msra.mxu0 %v8024
  %v8026 = vand.u32 %v5120, 4294901760
  %8027 = vmatpush.msra.mxu0 %v8026
  %v8028 = vand.u32 %v5118, 4294901760
  %8029 = vmatpush.msra.mxu0 %v8028
  %v8030 = vand.u32 %v5116, 4294901760
  %8031 = vmatpush.msra.mxu0 %v8030
  %v8032 = vand.u32 %v7874, 4294901760
  %v8033 = vsub.f32 %v7874, %v8032
  %v8034 = vand.u32 %v8033, 4294901760
  %8035 = vmatmul.f32.gmra.mxu0 %v8034
  %v8036 = vpop.f32.mrf.mxu0
  %v8037 = vadd.f32 %v8006, %v8036
  %8038 = vdwg.mxu0
  %8039 = vmatpush.msra.mxu0 0.0
  %8040 = vmatpush.msra.mxu0 0.0
  %8041 = vmatpush.msra.mxu0 0.0
  %8042 = vmatpush.msra.mxu0 0.0
  %8043 = vmatpush.msra.mxu0 0.0
  %8044 = vmatpush.msra.mxu0 0.0
  %8045 = vmatpush.msra.mxu0 0.0
  %8046 = vmatpush.msra.mxu0 0.0
  %v8047 = vand.u32 %v5130, 4294901760
  %v8048 = vsub.f32 %v5130, %v8047
  %v8049 = vand.u32 %v8048, 4294901760
  %8050 = vmatpush.msra.mxu0 %v8049
  %v8051 = vand.u32 %v5128, 4294901760
  %v8052 = vsub.f32 %v5128, %v8051
  %v8053 = vand.u32 %v8052, 4294901760
  %8054 = vmatpush.msra.mxu0 %v8053
  %v8055 = vand.u32 %v5126, 4294901760
  %v8056 = vsub.f32 %v5126, %v8055
  %v8057 = vand.u32 %v8056, 4294901760
  %8058 = vmatpush.msra.mxu0 %v8057
  %v8059 = vand.u32 %v5124, 4294901760
  %v8060 = vsub.f32 %v5124, %v8059
  %v8061 = vand.u32 %v8060, 4294901760
  %8062 = vmatpush.msra.mxu0 %v8061
  %v8063 = vand.u32 %v5122, 4294901760
  %v8064 = vsub.f32 %v5122, %v8063
  %v8065 = vand.u32 %v8064, 4294901760
  %8066 = vmatpush.msra.mxu0 %v8065
  %v8067 = vand.u32 %v5120, 4294901760
  %v8068 = vsub.f32 %v5120, %v8067
  %v8069 = vand.u32 %v8068, 4294901760
  %8070 = vmatpush.msra.mxu0 %v8069
  %v8071 = vand.u32 %v5118, 4294901760
  %v8072 = vsub.f32 %v5118, %v8071
  %v8073 = vand.u32 %v8072, 4294901760
  %8074 = vmatpush.msra.mxu0 %v8073
  %v8075 = vand.u32 %v5116, 4294901760
  %v8076 = vsub.f32 %v5116, %v8075
  %v8077 = vand.u32 %v8076, 4294901760
  %8078 = vmatpush.msra.mxu0 %v8077
  %v8079 = vand.u32 %v7874, 4294901760
  %8080 = vmatmul.f32.gmra.mxu0 %v8079
  %v8081 = vpop.f32.mrf.mxu0
  %v8082 = vadd.f32 %v8037, %v8081
  %8083 = vdwg.mxu0
  %8084 = vmatpush.msra.mxu0 0.0
  %8085 = vmatpush.msra.mxu0 0.0
  %8086 = vmatpush.msra.mxu0 0.0
  %8087 = vmatpush.msra.mxu0 0.0
  %8088 = vmatpush.msra.mxu0 0.0
  %8089 = vmatpush.msra.mxu0 0.0
  %8090 = vmatpush.msra.mxu0 0.0
  %8091 = vmatpush.msra.mxu0 0.0
  %v8092 = vand.u32 %v5130, 4294901760
  %8093 = vmatpush.msra.mxu0 %v8092
  %v8094 = vand.u32 %v5128, 4294901760
  %8095 = vmatpush.msra.mxu0 %v8094
  %v8096 = vand.u32 %v5126, 4294901760
  %8097 = vmatpush.msra.mxu0 %v8096
  %v8098 = vand.u32 %v5124, 4294901760
  %8099 = vmatpush.msra.mxu0 %v8098
  %v8100 = vand.u32 %v5122, 4294901760
  %8101 = vmatpush.msra.mxu0 %v8100
  %v8102 = vand.u32 %v5120, 4294901760
  %8103 = vmatpush.msra.mxu0 %v8102
  %v8104 = vand.u32 %v5118, 4294901760
  %8105 = vmatpush.msra.mxu0 %v8104
  %v8106 = vand.u32 %v5116, 4294901760
  %8107 = vmatpush.msra.mxu0 %v8106
  %v8108 = vand.u32 %v7874, 4294901760
  %8109 = vmatmul.f32.gmra.mxu0 %v8108
  %v8110 = vpop.f32.mrf.mxu0
  %v8111 = vadd.f32 %v8082, %v8110
  %8112 = vdwg.mxu0
  %8113 = vmatpush.msra.mxu0 0.0
  %8114 = vmatpush.msra.mxu0 0.0
  %8115 = vmatpush.msra.mxu0 0.0
  %8116 = vmatpush.msra.mxu0 0.0
  %8117 = vmatpush.msra.mxu0 0.0
  %8118 = vmatpush.msra.mxu0 0.0
  %8119 = vmatpush.msra.mxu0 0.0
  %8120 = vmatpush.msra.mxu0 0.0
  %v8121 = vand.u32 %v5131, 4294901760
  %8122 = vmatpush.msra.mxu0 %v8121
  %v8123 = vand.u32 %v5129, 4294901760
  %8124 = vmatpush.msra.mxu0 %v8123
  %v8125 = vand.u32 %v5127, 4294901760
  %8126 = vmatpush.msra.mxu0 %v8125
  %v8127 = vand.u32 %v5125, 4294901760
  %8128 = vmatpush.msra.mxu0 %v8127
  %v8129 = vand.u32 %v5123, 4294901760
  %8130 = vmatpush.msra.mxu0 %v8129
  %v8131 = vand.u32 %v5121, 4294901760
  %8132 = vmatpush.msra.mxu0 %v8131
  %v8133 = vand.u32 %v5119, 4294901760
  %8134 = vmatpush.msra.mxu0 %v8133
  %v8135 = vand.u32 %v5117, 4294901760
  %8136 = vmatpush.msra.mxu0 %v8135
  %v8137 = vand.u32 %v7874, 4294901760
  %v8138 = vsub.f32 %v7874, %v8137
  %v8139 = vand.u32 %v8138, 4294901760
  %v8140 = vsub.f32 %v8138, %v8139
  %v8141 = vand.u32 %v8140, 4294901760
  %8142 = vmatmul.f32.gmra.mxu0 %v8141
  %v8143 = vpop.f32.mrf.mxu0
  %v8144 = vadd.f32 0.0, %v8143
  %8145 = vdwg.mxu0
  %8146 = vmatpush.msra.mxu0 0.0
  %8147 = vmatpush.msra.mxu0 0.0
  %8148 = vmatpush.msra.mxu0 0.0
  %8149 = vmatpush.msra.mxu0 0.0
  %8150 = vmatpush.msra.mxu0 0.0
  %8151 = vmatpush.msra.mxu0 0.0
  %8152 = vmatpush.msra.mxu0 0.0
  %8153 = vmatpush.msra.mxu0 0.0
  %v8154 = vand.u32 %v5131, 4294901760
  %v8155 = vsub.f32 %v5131, %v8154
  %v8156 = vand.u32 %v8155, 4294901760
  %v8157 = vsub.f32 %v8155, %v8156
  %v8158 = vand.u32 %v8157, 4294901760
  %8159 = vmatpush.msra.mxu0 %v8158
  %v8160 = vand.u32 %v5129, 4294901760
  %v8161 = vsub.f32 %v5129, %v8160
  %v8162 = vand.u32 %v8161, 4294901760
  %v8163 = vsub.f32 %v8161, %v8162
  %v8164 = vand.u32 %v8163, 4294901760
  %8165 = vmatpush.msra.mxu0 %v8164
  %v8166 = vand.u32 %v5127, 4294901760
  %v8167 = vsub.f32 %v5127, %v8166
  %v8168 = vand.u32 %v8167, 4294901760
  %v8169 = vsub.f32 %v8167, %v8168
  %v8170 = vand.u32 %v8169, 4294901760
  %8171 = vmatpush.msra.mxu0 %v8170
  %v8172 = vand.u32 %v5125, 4294901760
  %v8173 = vsub.f32 %v5125, %v8172
  %v8174 = vand.u32 %v8173, 4294901760
  %v8175 = vsub.f32 %v8173, %v8174
  %v8176 = vand.u32 %v8175, 4294901760
  %8177 = vmatpush.msra.mxu0 %v8176
  %v8178 = vand.u32 %v5123, 4294901760
  %v8179 = vsub.f32 %v5123, %v8178
  %v8180 = vand.u32 %v8179, 4294901760
  %v8181 = vsub.f32 %v8179, %v8180
  %v8182 = vand.u32 %v8181, 4294901760
  %8183 = vmatpush.msra.mxu0 %v8182
  %v8184 = vand.u32 %v5121, 4294901760
  %v8185 = vsub.f32 %v5121, %v8184
  %v8186 = vand.u32 %v8185, 4294901760
  %v8187 = vsub.f32 %v8185, %v8186
  %v8188 = vand.u32 %v8187, 4294901760
  %8189 = vmatpush.msra.mxu0 %v8188
  %v8190 = vand.u32 %v5119, 4294901760
  %v8191 = vsub.f32 %v5119, %v8190
  %v8192 = vand.u32 %v8191, 4294901760
  %v8193 = vsub.f32 %v8191, %v8192
  %v8194 = vand.u32 %v8193, 4294901760
  %8195 = vmatpush.msra.mxu0 %v8194
  %v8196 = vand.u32 %v5117, 4294901760
  %v8197 = vsub.f32 %v5117, %v8196
  %v8198 = vand.u32 %v8197, 4294901760
  %v8199 = vsub.f32 %v8197, %v8198
  %v8200 = vand.u32 %v8199, 4294901760
  %8201 = vmatpush.msra.mxu0 %v8200
  %v8202 = vand.u32 %v7874, 4294901760
  %8203 = vmatmul.f32.gmra.mxu0 %v8202
  %v8204 = vpop.f32.mrf.mxu0
  %v8205 = vadd.f32 %v8144, %v8204
  %8206 = vdwg.mxu0
  %8207 = vmatpush.msra.mxu0 0.0
  %8208 = vmatpush.msra.mxu0 0.0
  %8209 = vmatpush.msra.mxu0 0.0
  %8210 = vmatpush.msra.mxu0 0.0
  %8211 = vmatpush.msra.mxu0 0.0
  %8212 = vmatpush.msra.mxu0 0.0
  %8213 = vmatpush.msra.mxu0 0.0
  %8214 = vmatpush.msra.mxu0 0.0
  %v8215 = vand.u32 %v5131, 4294901760
  %v8216 = vsub.f32 %v5131, %v8215
  %8217 = vmatpush.msra.mxu0 %v8216
  %v8218 = vand.u32 %v5129, 4294901760
  %v8219 = vsub.f32 %v5129, %v8218
  %8220 = vmatpush.msra.mxu0 %v8219
  %v8221 = vand.u32 %v5127, 4294901760
  %v8222 = vsub.f32 %v5127, %v8221
  %8223 = vmatpush.msra.mxu0 %v8222
  %v8224 = vand.u32 %v5125, 4294901760
  %v8225 = vsub.f32 %v5125, %v8224
  %8226 = vmatpush.msra.mxu0 %v8225
  %v8227 = vand.u32 %v5123, 4294901760
  %v8228 = vsub.f32 %v5123, %v8227
  %8229 = vmatpush.msra.mxu0 %v8228
  %v8230 = vand.u32 %v5121, 4294901760
  %v8231 = vsub.f32 %v5121, %v8230
  %8232 = vmatpush.msra.mxu0 %v8231
  %v8233 = vand.u32 %v5119, 4294901760
  %v8234 = vsub.f32 %v5119, %v8233
  %8235 = vmatpush.msra.mxu0 %v8234
  %v8236 = vand.u32 %v5117, 4294901760
  %v8237 = vsub.f32 %v5117, %v8236
  %8238 = vmatpush.msra.mxu0 %v8237
  %v8239 = vand.u32 %v7874, 4294901760
  %v8240 = vsub.f32 %v7874, %v8239
  %8241 = vmatmul.f32.gmra.mxu0 %v8240
  %v8242 = vpop.f32.mrf.mxu0
  %v8243 = vadd.f32 %v8205, %v8242
  %8244 = vdwg.mxu0
  %8245 = vmatpush.msra.mxu0 0.0
  %8246 = vmatpush.msra.mxu0 0.0
  %8247 = vmatpush.msra.mxu0 0.0
  %8248 = vmatpush.msra.mxu0 0.0
  %8249 = vmatpush.msra.mxu0 0.0
  %8250 = vmatpush.msra.mxu0 0.0
  %8251 = vmatpush.msra.mxu0 0.0
  %8252 = vmatpush.msra.mxu0 0.0
  %v8253 = vand.u32 %v5131, 4294901760
  %8254 = vmatpush.msra.mxu0 %v8253
  %v8255 = vand.u32 %v5129, 4294901760
  %8256 = vmatpush.msra.mxu0 %v8255
  %v8257 = vand.u32 %v5127, 4294901760
  %8258 = vmatpush.msra.mxu0 %v8257
  %v8259 = vand.u32 %v5125, 4294901760
  %8260 = vmatpush.msra.mxu0 %v8259
  %v8261 = vand.u32 %v5123, 4294901760
  %8262 = vmatpush.msra.mxu0 %v8261
  %v8263 = vand.u32 %v5121, 4294901760
  %8264 = vmatpush.msra.mxu0 %v8263
  %v8265 = vand.u32 %v5119, 4294901760
  %8266 = vmatpush.msra.mxu0 %v8265
  %v8267 = vand.u32 %v5117, 4294901760
  %8268 = vmatpush.msra.mxu0 %v8267
  %v8269 = vand.u32 %v7874, 4294901760
  %v8270 = vsub.f32 %v7874, %v8269
  %v8271 = vand.u32 %v8270, 4294901760
  %8272 = vmatmul.f32.gmra.mxu0 %v8271
  %v8273 = vpop.f32.mrf.mxu0
  %v8274 = vadd.f32 %v8243, %v8273
  %8275 = vdwg.mxu0
  %8276 = vmatpush.msra.mxu0 0.0
  %8277 = vmatpush.msra.mxu0 0.0
  %8278 = vmatpush.msra.mxu0 0.0
  %8279 = vmatpush.msra.mxu0 0.0
  %8280 = vmatpush.msra.mxu0 0.0
  %8281 = vmatpush.msra.mxu0 0.0
  %8282 = vmatpush.msra.mxu0 0.0
  %8283 = vmatpush.msra.mxu0 0.0
  %v8284 = vand.u32 %v5131, 4294901760
  %v8285 = vsub.f32 %v5131, %v8284
  %v8286 = vand.u32 %v8285, 4294901760
  %8287 = vmatpush.msra.mxu0 %v8286
  %v8288 = vand.u32 %v5129, 4294901760
  %v8289 = vsub.f32 %v5129, %v8288
  %v8290 = vand.u32 %v8289, 4294901760
  %8291 = vmatpush.msra.mxu0 %v8290
  %v8292 = vand.u32 %v5127, 4294901760
  %v8293 = vsub.f32 %v5127, %v8292
  %v8294 = vand.u32 %v8293, 4294901760
  %8295 = vmatpush.msra.mxu0 %v8294
  %v8296 = vand.u32 %v5125, 4294901760
  %v8297 = vsub.f32 %v5125, %v8296
  %v8298 = vand.u32 %v8297, 4294901760
  %8299 = vmatpush.msra.mxu0 %v8298
  %v8300 = vand.u32 %v5123, 4294901760
  %v8301 = vsub.f32 %v5123, %v8300
  %v8302 = vand.u32 %v8301, 4294901760
  %8303 = vmatpush.msra.mxu0 %v8302
  %v8304 = vand.u32 %v5121, 4294901760
  %v8305 = vsub.f32 %v5121, %v8304
  %v8306 = vand.u32 %v8305, 4294901760
  %8307 = vmatpush.msra.mxu0 %v8306
  %v8308 = vand.u32 %v5119, 4294901760
  %v8309 = vsub.f32 %v5119, %v8308
  %v8310 = vand.u32 %v8309, 4294901760
  %8311 = vmatpush.msra.mxu0 %v8310
  %v8312 = vand.u32 %v5117, 4294901760
  %v8313 = vsub.f32 %v5117, %v8312
  %v8314 = vand.u32 %v8313, 4294901760
  %8315 = vmatpush.msra.mxu0 %v8314
  %v8316 = vand.u32 %v7874, 4294901760
  %8317 = vmatmul.f32.gmra.mxu0 %v8316
  %v8318 = vpop.f32.mrf.mxu0
  %v8319 = vadd.f32 %v8274, %v8318
  %8320 = vdwg.mxu0
  %8321 = vmatpush.msra.mxu0 0.0
  %8322 = vmatpush.msra.mxu0 0.0
  %8323 = vmatpush.msra.mxu0 0.0
  %8324 = vmatpush.msra.mxu0 0.0
  %8325 = vmatpush.msra.mxu0 0.0
  %8326 = vmatpush.msra.mxu0 0.0
  %8327 = vmatpush.msra.mxu0 0.0
  %8328 = vmatpush.msra.mxu0 0.0
  %v8329 = vand.u32 %v5131, 4294901760
  %8330 = vmatpush.msra.mxu0 %v8329
  %v8331 = vand.u32 %v5129, 4294901760
  %8332 = vmatpush.msra.mxu0 %v8331
  %v8333 = vand.u32 %v5127, 4294901760
  %8334 = vmatpush.msra.mxu0 %v8333
  %v8335 = vand.u32 %v5125, 4294901760
  %8336 = vmatpush.msra.mxu0 %v8335
  %v8337 = vand.u32 %v5123, 4294901760
  %8338 = vmatpush.msra.mxu0 %v8337
  %v8339 = vand.u32 %v5121, 4294901760
  %8340 = vmatpush.msra.mxu0 %v8339
  %v8341 = vand.u32 %v5119, 4294901760
  %8342 = vmatpush.msra.mxu0 %v8341
  %v8343 = vand.u32 %v5117, 4294901760
  %8344 = vmatpush.msra.mxu0 %v8343
  %v8345 = vand.u32 %v7874, 4294901760
  %8346 = vmatmul.f32.gmra.mxu0 %v8345
  %v8347 = vpop.f32.mrf.mxu0
  %v8348 = vadd.f32 %v8319, %v8347
  %8349 = vdwg.mxu0
  %v8350 = vadd.f32 %v5710, %v8111
  %v8351 = vadd.f32 %v6268, %v8348
  %v8352 = vxor.u32 %v8350, 2147483648
  %v8353 = vxor.u32 %v8351, 2147483648
  %v8354 = vmul.f32 %v8352, 1.442695
  %v8355 = vpow.pop %v8354
  %v8356 = vmul.f32 %v8353, 1.442695
  %v8357 = vpow.pop %v8356
  %v8358 = vadd.f32 %v8355, 1.0
  %v8359 = vadd.f32 %v8357, 1.0
  %v8360 = vrcp.pop %v8358
  %v8361 = vmul.f32 %v8358, %v8360
  %v8362 = vsub.f32 1.0, %v8361
  %v8363 = vmul.f32 %v8360, %v8362
  %v8364 = vadd.f32 %v8360, %v8363
  %vm8365 = vweird.f32 %v8358
  %vm8366 = vweird.f32 %v8360
  %vm8367 = vmor %vm8365, %vm8366
  %v8368 = vsel %vm8367, %v8360, %v8364
  %v8369 = vand.u32 2147483647, %v8358
  %vm8370 = vcmp.eq.f32.partialorder %v8369, 8.507059e+37
  %v8371 = vand.u32 %v8358, 2147483648
  %v8372 = vor.u32 1.1754944e-38, %v8371
  %v8373 = vsel %vm8370, %v8372, %v8368
  %v8374 = vmul.f32 1.0, %v8373
  %v8375 = vrcp.pop %v8359
  %v8376 = vmul.f32 %v8359, %v8375
  %v8377 = vsub.f32 1.0, %v8376
  %v8378 = vmul.f32 %v8375, %v8377
  %v8379 = vadd.f32 %v8375, %v8378
  %vm8380 = vweird.f32 %v8359
  %vm8381 = vweird.f32 %v8375
  %vm8382 = vmor %vm8380, %vm8381
  %v8383 = vsel %vm8382, %v8375, %v8379
  %v8384 = vand.u32 2147483647, %v8359
  %vm8385 = vcmp.eq.f32.partialorder %v8384, 8.507059e+37
  %v8386 = vand.u32 %v8359, 2147483648
  %v8387 = vor.u32 1.1754944e-38, %v8386
  %v8388 = vsel %vm8385, %v8387, %v8383
  %v8389 = vmul.f32 1.0, %v8388
  %v8390 = vmul.f32 %v8389, 2.0
  %v8391 = vsub.f32 %v8390, 1.0
  %v8392 = vmul.f32 %v8374, %v7868
  %v8393 = vmul.f32 %v8374, %v8391
  %8395 = vrot.lane.b32.xlu0 %v8393, 64
  %v8396 = vpop.permute.xlu0 %8395
  %v8398 = vadd.f32 %v8392, %v8396
  %v8399 = vtanh.pop %v8398
  %v8400 = vmul.f32 %v8389, %v8399
  %8402 = vrot.lane.b32.xlu0 %v8400, 64
  %v8403 = vpop.permute.xlu0 %8402
  %v8404 = vsel %vm858, %v8403, 0
  %8406 = vmatpush.msra.mxu0 0.0
  %8407 = vmatpush.msra.mxu0 0.0
  %8408 = vmatpush.msra.mxu0 0.0
  %8409 = vmatpush.msra.mxu0 0.0
  %8410 = vmatpush.msra.mxu0 0.0
  %8411 = vmatpush.msra.mxu0 0.0
  %8412 = vmatpush.msra.mxu0 0.0
  %8413 = vmatpush.msra.mxu0 0.0
  %v8414 = vand.u32 %v5130, 4294901760
  %8415 = vmatpush.msra.mxu0 %v8414
  %v8416 = vand.u32 %v5128, 4294901760
  %8417 = vmatpush.msra.mxu0 %v8416
  %v8418 = vand.u32 %v5126, 4294901760
  %8419 = vmatpush.msra.mxu0 %v8418
  %v8420 = vand.u32 %v5124, 4294901760
  %8421 = vmatpush.msra.mxu0 %v8420
  %v8422 = vand.u32 %v5122, 4294901760
  %8423 = vmatpush.msra.mxu0 %v8422
  %v8424 = vand.u32 %v5120, 4294901760
  %8425 = vmatpush.msra.mxu0 %v8424
  %v8426 = vand.u32 %v5118, 4294901760
  %8427 = vmatpush.msra.mxu0 %v8426
  %v8428 = vand.u32 %v5116, 4294901760
  %8429 = vmatpush.msra.mxu0 %v8428
  %v8430 = vand.u32 %v8404, 4294901760
  %v8431 = vsub.f32 %v8404, %v8430
  %v8432 = vand.u32 %v8431, 4294901760
  %v8433 = vsub.f32 %v8431, %v8432
  %v8434 = vand.u32 %v8433, 4294901760
  %8435 = vmatmul.f32.gmra.mxu0 %v8434
  %v8436 = vpop.f32.mrf.mxu0
  %v8437 = vadd.f32 0.0, %v8436
  %8438 = vdwg.mxu0
  %8439 = vmatpush.msra.mxu0 0.0
  %8440 = vmatpush.msra.mxu0 0.0
  %8441 = vmatpush.msra.mxu0 0.0
  %8442 = vmatpush.msra.mxu0 0.0
  %8443 = vmatpush.msra.mxu0 0.0
  %8444 = vmatpush.msra.mxu0 0.0
  %8445 = vmatpush.msra.mxu0 0.0
  %8446 = vmatpush.msra.mxu0 0.0
  %v8447 = vand.u32 %v5130, 4294901760
  %v8448 = vsub.f32 %v5130, %v8447
  %v8449 = vand.u32 %v8448, 4294901760
  %v8450 = vsub.f32 %v8448, %v8449
  %v8451 = vand.u32 %v8450, 4294901760
  %8452 = vmatpush.msra.mxu0 %v8451
  %v8453 = vand.u32 %v5128, 4294901760
  %v8454 = vsub.f32 %v5128, %v8453
  %v8455 = vand.u32 %v8454, 4294901760
  %v8456 = vsub.f32 %v8454, %v8455
  %v8457 = vand.u32 %v8456, 4294901760
  %8458 = vmatpush.msra.mxu0 %v8457
  %v8459 = vand.u32 %v5126, 4294901760
  %v8460 = vsub.f32 %v5126, %v8459
  %v8461 = vand.u32 %v8460, 4294901760
  %v8462 = vsub.f32 %v8460, %v8461
  %v8463 = vand.u32 %v8462, 4294901760
  %8464 = vmatpush.msra.mxu0 %v8463
  %v8465 = vand.u32 %v5124, 4294901760
  %v8466 = vsub.f32 %v5124, %v8465
  %v8467 = vand.u32 %v8466, 4294901760
  %v8468 = vsub.f32 %v8466, %v8467
  %v8469 = vand.u32 %v8468, 4294901760
  %8470 = vmatpush.msra.mxu0 %v8469
  %v8471 = vand.u32 %v5122, 4294901760
  %v8472 = vsub.f32 %v5122, %v8471
  %v8473 = vand.u32 %v8472, 4294901760
  %v8474 = vsub.f32 %v8472, %v8473
  %v8475 = vand.u32 %v8474, 4294901760
  %8476 = vmatpush.msra.mxu0 %v8475
  %v8477 = vand.u32 %v5120, 4294901760
  %v8478 = vsub.f32 %v5120, %v8477
  %v8479 = vand.u32 %v8478, 4294901760
  %v8480 = vsub.f32 %v8478, %v8479
  %v8481 = vand.u32 %v8480, 4294901760
  %8482 = vmatpush.msra.mxu0 %v8481
  %v8483 = vand.u32 %v5118, 4294901760
  %v8484 = vsub.f32 %v5118, %v8483
  %v8485 = vand.u32 %v8484, 4294901760
  %v8486 = vsub.f32 %v8484, %v8485
  %v8487 = vand.u32 %v8486, 4294901760
  %8488 = vmatpush.msra.mxu0 %v8487
  %v8489 = vand.u32 %v5116, 4294901760
  %v8490 = vsub.f32 %v5116, %v8489
  %v8491 = vand.u32 %v8490, 4294901760
  %v8492 = vsub.f32 %v8490, %v8491
  %v8493 = vand.u32 %v8492, 4294901760
  %8494 = vmatpush.msra.mxu0 %v8493
  %v8495 = vand.u32 %v8404, 4294901760
  %8496 = vmatmul.f32.gmra.mxu0 %v8495
  %v8497 = vpop.f32.mrf.mxu0
  %v8498 = vadd.f32 %v8437, %v8497
  %8499 = vdwg.mxu0
  %8500 = vmatpush.msra.mxu0 0.0
  %8501 = vmatpush.msra.mxu0 0.0
  %8502 = vmatpush.msra.mxu0 0.0
  %8503 = vmatpush.msra.mxu0 0.0
  %8504 = vmatpush.msra.mxu0 0.0
  %8505 = vmatpush.msra.mxu0 0.0
  %8506 = vmatpush.msra.mxu0 0.0
  %8507 = vmatpush.msra.mxu0 0.0
  %v8508 = vand.u32 %v5130, 4294901760
  %v8509 = vsub.f32 %v5130, %v8508
  %8510 = vmatpush.msra.mxu0 %v8509
  %v8511 = vand.u32 %v5128, 4294901760
  %v8512 = vsub.f32 %v5128, %v8511
  %8513 = vmatpush.msra.mxu0 %v8512
  %v8514 = vand.u32 %v5126, 4294901760
  %v8515 = vsub.f32 %v5126, %v8514
  %8516 = vmatpush.msra.mxu0 %v8515
  %v8517 = vand.u32 %v5124, 4294901760
  %v8518 = vsub.f32 %v5124, %v8517
  %8519 = vmatpush.msra.mxu0 %v8518
  %v8520 = vand.u32 %v5122, 4294901760
  %v8521 = vsub.f32 %v5122, %v8520
  %8522 = vmatpush.msra.mxu0 %v8521
  %v8523 = vand.u32 %v5120, 4294901760
  %v8524 = vsub.f32 %v5120, %v8523
  %8525 = vmatpush.msra.mxu0 %v8524
  %v8526 = vand.u32 %v5118, 4294901760
  %v8527 = vsub.f32 %v5118, %v8526
  %8528 = vmatpush.msra.mxu0 %v8527
  %v8529 = vand.u32 %v5116, 4294901760
  %v8530 = vsub.f32 %v5116, %v8529
  %8531 = vmatpush.msra.mxu0 %v8530
  %v8532 = vand.u32 %v8404, 4294901760
  %v8533 = vsub.f32 %v8404, %v8532
  %8534 = vmatmul.f32.gmra.mxu0 %v8533
  %v8535 = vpop.f32.mrf.mxu0
  %v8536 = vadd.f32 %v8498, %v8535
  %8537 = vdwg.mxu0
  %8538 = vmatpush.msra.mxu0 0.0
  %8539 = vmatpush.msra.mxu0 0.0
  %8540 = vmatpush.msra.mxu0 0.0
  %8541 = vmatpush.msra.mxu0 0.0
  %8542 = vmatpush.msra.mxu0 0.0
  %8543 = vmatpush.msra.mxu0 0.0
  %8544 = vmatpush.msra.mxu0 0.0
  %8545 = vmatpush.msra.mxu0 0.0
  %v8546 = vand.u32 %v5130, 4294901760
  %8547 = vmatpush.msra.mxu0 %v8546
  %v8548 = vand.u32 %v5128, 4294901760
  %8549 = vmatpush.msra.mxu0 %v8548
  %v8550 = vand.u32 %v5126, 4294901760
  %8551 = vmatpush.msra.mxu0 %v8550
  %v8552 = vand.u32 %v5124, 4294901760
  %8553 = vmatpush.msra.mxu0 %v8552
  %v8554 = vand.u32 %v5122, 4294901760
  %8555 = vmatpush.msra.mxu0 %v8554
  %v8556 = vand.u32 %v5120, 4294901760
  %8557 = vmatpush.msra.mxu0 %v8556
  %v8558 = vand.u32 %v5118, 4294901760
  %8559 = vmatpush.msra.mxu0 %v8558
  %v8560 = vand.u32 %v5116, 4294901760
  %8561 = vmatpush.msra.mxu0 %v8560
  %v8562 = vand.u32 %v8404, 4294901760
  %v8563 = vsub.f32 %v8404, %v8562
  %v8564 = vand.u32 %v8563, 4294901760
  %8565 = vmatmul.f32.gmra.mxu0 %v8564
  %v8566 = vpop.f32.mrf.mxu0
  %v8567 = vadd.f32 %v8536, %v8566
  %8568 = vdwg.mxu0
  %8569 = vmatpush.msra.mxu0 0.0
  %8570 = vmatpush.msra.mxu0 0.0
  %8571 = vmatpush.msra.mxu0 0.0
  %8572 = vmatpush.msra.mxu0 0.0
  %8573 = vmatpush.msra.mxu0 0.0
  %8574 = vmatpush.msra.mxu0 0.0
  %8575 = vmatpush.msra.mxu0 0.0
  %8576 = vmatpush.msra.mxu0 0.0
  %v8577 = vand.u32 %v5130, 4294901760
  %v8578 = vsub.f32 %v5130, %v8577
  %v8579 = vand.u32 %v8578, 4294901760
  %8580 = vmatpush.msra.mxu0 %v8579
  %v8581 = vand.u32 %v5128, 4294901760
  %v8582 = vsub.f32 %v5128, %v8581
  %v8583 = vand.u32 %v8582, 4294901760
  %8584 = vmatpush.msra.mxu0 %v8583
  %v8585 = vand.u32 %v5126, 4294901760
  %v8586 = vsub.f32 %v5126, %v8585
  %v8587 = vand.u32 %v8586, 4294901760
  %8588 = vmatpush.msra.mxu0 %v8587
  %v8589 = vand.u32 %v5124, 4294901760
  %v8590 = vsub.f32 %v5124, %v8589
  %v8591 = vand.u32 %v8590, 4294901760
  %8592 = vmatpush.msra.mxu0 %v8591
  %v8593 = vand.u32 %v5122, 4294901760
  %v8594 = vsub.f32 %v5122, %v8593
  %v8595 = vand.u32 %v8594, 4294901760
  %8596 = vmatpush.msra.mxu0 %v8595
  %v8597 = vand.u32 %v5120, 4294901760
  %v8598 = vsub.f32 %v5120, %v8597
  %v8599 = vand.u32 %v8598, 4294901760
  %8600 = vmatpush.msra.mxu0 %v8599
  %v8601 = vand.u32 %v5118, 4294901760
  %v8602 = vsub.f32 %v5118, %v8601
  %v8603 = vand.u32 %v8602, 4294901760
  %8604 = vmatpush.msra.mxu0 %v8603
  %v8605 = vand.u32 %v5116, 4294901760
  %v8606 = vsub.f32 %v5116, %v8605
  %v8607 = vand.u32 %v8606, 4294901760
  %8608 = vmatpush.msra.mxu0 %v8607
  %v8609 = vand.u32 %v8404, 4294901760
  %8610 = vmatmul.f32.gmra.mxu0 %v8609
  %v8611 = vpop.f32.mrf.mxu0
  %v8612 = vadd.f32 %v8567, %v8611
  %8613 = vdwg.mxu0
  %8614 = vmatpush.msra.mxu0 0.0
  %8615 = vmatpush.msra.mxu0 0.0
  %8616 = vmatpush.msra.mxu0 0.0
  %8617 = vmatpush.msra.mxu0 0.0
  %8618 = vmatpush.msra.mxu0 0.0
  %8619 = vmatpush.msra.mxu0 0.0
  %8620 = vmatpush.msra.mxu0 0.0
  %8621 = vmatpush.msra.mxu0 0.0
  %v8622 = vand.u32 %v5130, 4294901760
  %8623 = vmatpush.msra.mxu0 %v8622
  %v8624 = vand.u32 %v5128, 4294901760
  %8625 = vmatpush.msra.mxu0 %v8624
  %v8626 = vand.u32 %v5126, 4294901760
  %8627 = vmatpush.msra.mxu0 %v8626
  %v8628 = vand.u32 %v5124, 4294901760
  %8629 = vmatpush.msra.mxu0 %v8628
  %v8630 = vand.u32 %v5122, 4294901760
  %8631 = vmatpush.msra.mxu0 %v8630
  %v8632 = vand.u32 %v5120, 4294901760
  %8633 = vmatpush.msra.mxu0 %v8632
  %v8634 = vand.u32 %v5118, 4294901760
  %8635 = vmatpush.msra.mxu0 %v8634
  %v8636 = vand.u32 %v5116, 4294901760
  %8637 = vmatpush.msra.mxu0 %v8636
  %v8638 = vand.u32 %v8404, 4294901760
  %8639 = vmatmul.f32.gmra.mxu0 %v8638
  %v8640 = vpop.f32.mrf.mxu0
  %v8641 = vadd.f32 %v8612, %v8640
  %8642 = vdwg.mxu0
  %8643 = vmatpush.msra.mxu0 0.0
  %8644 = vmatpush.msra.mxu0 0.0
  %8645 = vmatpush.msra.mxu0 0.0
  %8646 = vmatpush.msra.mxu0 0.0
  %8647 = vmatpush.msra.mxu0 0.0
  %8648 = vmatpush.msra.mxu0 0.0
  %8649 = vmatpush.msra.mxu0 0.0
  %8650 = vmatpush.msra.mxu0 0.0
  %v8651 = vand.u32 %v5131, 4294901760
  %8652 = vmatpush.msra.mxu0 %v8651
  %v8653 = vand.u32 %v5129, 4294901760
  %8654 = vmatpush.msra.mxu0 %v8653
  %v8655 = vand.u32 %v5127, 4294901760
  %8656 = vmatpush.msra.mxu0 %v8655
  %v8657 = vand.u32 %v5125, 4294901760
  %8658 = vmatpush.msra.mxu0 %v8657
  %v8659 = vand.u32 %v5123, 4294901760
  %8660 = vmatpush.msra.mxu0 %v8659
  %v8661 = vand.u32 %v5121, 4294901760
  %8662 = vmatpush.msra.mxu0 %v8661
  %v8663 = vand.u32 %v5119, 4294901760
  %8664 = vmatpush.msra.mxu0 %v8663
  %v8665 = vand.u32 %v5117, 4294901760
  %8666 = vmatpush.msra.mxu0 %v8665
  %v8667 = vand.u32 %v8404, 4294901760
  %v8668 = vsub.f32 %v8404, %v8667
  %v8669 = vand.u32 %v8668, 4294901760
  %v8670 = vsub.f32 %v8668, %v8669
  %v8671 = vand.u32 %v8670, 4294901760
  %8672 = vmatmul.f32.gmra.mxu0 %v8671
  %v8673 = vpop.f32.mrf.mxu0
  %v8674 = vadd.f32 0.0, %v8673
  %8675 = vdwg.mxu0
  %8676 = vmatpush.msra.mxu0 0.0
  %8677 = vmatpush.msra.mxu0 0.0
  %8678 = vmatpush.msra.mxu0 0.0
  %8679 = vmatpush.msra.mxu0 0.0
  %8680 = vmatpush.msra.mxu0 0.0
  %8681 = vmatpush.msra.mxu0 0.0
  %8682 = vmatpush.msra.mxu0 0.0
  %8683 = vmatpush.msra.mxu0 0.0
  %v8684 = vand.u32 %v5131, 4294901760
  %v8685 = vsub.f32 %v5131, %v8684
  %v8686 = vand.u32 %v8685, 4294901760
  %v8687 = vsub.f32 %v8685, %v8686
  %v8688 = vand.u32 %v8687, 4294901760
  %8689 = vmatpush.msra.mxu0 %v8688
  %v8690 = vand.u32 %v5129, 4294901760
  %v8691 = vsub.f32 %v5129, %v8690
  %v8692 = vand.u32 %v8691, 4294901760
  %v8693 = vsub.f32 %v8691, %v8692
  %v8694 = vand.u32 %v8693, 4294901760
  %8695 = vmatpush.msra.mxu0 %v8694
  %v8696 = vand.u32 %v5127, 4294901760
  %v8697 = vsub.f32 %v5127, %v8696
  %v8698 = vand.u32 %v8697, 4294901760
  %v8699 = vsub.f32 %v8697, %v8698
  %v8700 = vand.u32 %v8699, 4294901760
  %8701 = vmatpush.msra.mxu0 %v8700
  %v8702 = vand.u32 %v5125, 4294901760
  %v8703 = vsub.f32 %v5125, %v8702
  %v8704 = vand.u32 %v8703, 4294901760
  %v8705 = vsub.f32 %v8703, %v8704
  %v8706 = vand.u32 %v8705, 4294901760
  %8707 = vmatpush.msra.mxu0 %v8706
  %v8708 = vand.u32 %v5123, 4294901760
  %v8709 = vsub.f32 %v5123, %v8708
  %v8710 = vand.u32 %v8709, 4294901760
  %v8711 = vsub.f32 %v8709, %v8710
  %v8712 = vand.u32 %v8711, 4294901760
  %8713 = vmatpush.msra.mxu0 %v8712
  %v8714 = vand.u32 %v5121, 4294901760
  %v8715 = vsub.f32 %v5121, %v8714
  %v8716 = vand.u32 %v8715, 4294901760
  %v8717 = vsub.f32 %v8715, %v8716
  %v8718 = vand.u32 %v8717, 4294901760
  %8719 = vmatpush.msra.mxu0 %v8718
  %v8720 = vand.u32 %v5119, 4294901760
  %v8721 = vsub.f32 %v5119, %v8720
  %v8722 = vand.u32 %v8721, 4294901760
  %v8723 = vsub.f32 %v8721, %v8722
  %v8724 = vand.u32 %v8723, 4294901760
  %8725 = vmatpush.msra.mxu0 %v8724
  %v8726 = vand.u32 %v5117, 4294901760
  %v8727 = vsub.f32 %v5117, %v8726
  %v8728 = vand.u32 %v8727, 4294901760
  %v8729 = vsub.f32 %v8727, %v8728
  %v8730 = vand.u32 %v8729, 4294901760
  %8731 = vmatpush.msra.mxu0 %v8730
  %v8732 = vand.u32 %v8404, 4294901760
  %8733 = vmatmul.f32.gmra.mxu0 %v8732
  %v8734 = vpop.f32.mrf.mxu0
  %v8735 = vadd.f32 %v8674, %v8734
  %8736 = vdwg.mxu0
  %8737 = vmatpush.msra.mxu0 0.0
  %8738 = vmatpush.msra.mxu0 0.0
  %8739 = vmatpush.msra.mxu0 0.0
  %8740 = vmatpush.msra.mxu0 0.0
  %8741 = vmatpush.msra.mxu0 0.0
  %8742 = vmatpush.msra.mxu0 0.0
  %8743 = vmatpush.msra.mxu0 0.0
  %8744 = vmatpush.msra.mxu0 0.0
  %v8745 = vand.u32 %v5131, 4294901760
  %v8746 = vsub.f32 %v5131, %v8745
  %8747 = vmatpush.msra.mxu0 %v8746
  %v8748 = vand.u32 %v5129, 4294901760
  %v8749 = vsub.f32 %v5129, %v8748
  %8750 = vmatpush.msra.mxu0 %v8749
  %v8751 = vand.u32 %v5127, 4294901760
  %v8752 = vsub.f32 %v5127, %v8751
  %8753 = vmatpush.msra.mxu0 %v8752
  %v8754 = vand.u32 %v5125, 4294901760
  %v8755 = vsub.f32 %v5125, %v8754
  %8756 = vmatpush.msra.mxu0 %v8755
  %v8757 = vand.u32 %v5123, 4294901760
  %v8758 = vsub.f32 %v5123, %v8757
  %8759 = vmatpush.msra.mxu0 %v8758
  %v8760 = vand.u32 %v5121, 4294901760
  %v8761 = vsub.f32 %v5121, %v8760
  %8762 = vmatpush.msra.mxu0 %v8761
  %v8763 = vand.u32 %v5119, 4294901760
  %v8764 = vsub.f32 %v5119, %v8763
  %8765 = vmatpush.msra.mxu0 %v8764
  %v8766 = vand.u32 %v5117, 4294901760
  %v8767 = vsub.f32 %v5117, %v8766
  %8768 = vmatpush.msra.mxu0 %v8767
  %v8769 = vand.u32 %v8404, 4294901760
  %v8770 = vsub.f32 %v8404, %v8769
  %8771 = vmatmul.f32.gmra.mxu0 %v8770
  %v8772 = vpop.f32.mrf.mxu0
  %v8773 = vadd.f32 %v8735, %v8772
  %8774 = vdwg.mxu0
  %8775 = vmatpush.msra.mxu0 0.0
  %8776 = vmatpush.msra.mxu0 0.0
  %8777 = vmatpush.msra.mxu0 0.0
  %8778 = vmatpush.msra.mxu0 0.0
  %8779 = vmatpush.msra.mxu0 0.0
  %8780 = vmatpush.msra.mxu0 0.0
  %8781 = vmatpush.msra.mxu0 0.0
  %8782 = vmatpush.msra.mxu0 0.0
  %v8783 = vand.u32 %v5131, 4294901760
  %8784 = vmatpush.msra.mxu0 %v8783
  %v8785 = vand.u32 %v5129, 4294901760
  %8786 = vmatpush.msra.mxu0 %v8785
  %v8787 = vand.u32 %v5127, 4294901760
  %8788 = vmatpush.msra.mxu0 %v8787
  %v8789 = vand.u32 %v5125, 4294901760
  %8790 = vmatpush.msra.mxu0 %v8789
  %v8791 = vand.u32 %v5123, 4294901760
  %8792 = vmatpush.msra.mxu0 %v8791
  %v8793 = vand.u32 %v5121, 4294901760
  %8794 = vmatpush.msra.mxu0 %v8793
  %v8795 = vand.u32 %v5119, 4294901760
  %8796 = vmatpush.msra.mxu0 %v8795
  %v8797 = vand.u32 %v5117, 4294901760
  %8798 = vmatpush.msra.mxu0 %v8797
  %v8799 = vand.u32 %v8404, 4294901760
  %v8800 = vsub.f32 %v8404, %v8799
  %v8801 = vand.u32 %v8800, 4294901760
  %8802 = vmatmul.f32.gmra.mxu0 %v8801
  %v8803 = vpop.f32.mrf.mxu0
  %v8804 = vadd.f32 %v8773, %v8803
  %8805 = vdwg.mxu0
  %8806 = vmatpush.msra.mxu0 0.0
  %8807 = vmatpush.msra.mxu0 0.0
  %8808 = vmatpush.msra.mxu0 0.0
  %8809 = vmatpush.msra.mxu0 0.0
  %8810 = vmatpush.msra.mxu0 0.0
  %8811 = vmatpush.msra.mxu0 0.0
  %8812 = vmatpush.msra.mxu0 0.0
  %8813 = vmatpush.msra.mxu0 0.0
  %v8814 = vand.u32 %v5131, 4294901760
  %v8815 = vsub.f32 %v5131, %v8814
  %v8816 = vand.u32 %v8815, 4294901760
  %8817 = vmatpush.msra.mxu0 %v8816
  %v8818 = vand.u32 %v5129, 4294901760
  %v8819 = vsub.f32 %v5129, %v8818
  %v8820 = vand.u32 %v8819, 4294901760
  %8821 = vmatpush.msra.mxu0 %v8820
  %v8822 = vand.u32 %v5127, 4294901760
  %v8823 = vsub.f32 %v5127, %v8822
  %v8824 = vand.u32 %v8823, 4294901760
  %8825 = vmatpush.msra.mxu0 %v8824
  %v8826 = vand.u32 %v5125, 4294901760
  %v8827 = vsub.f32 %v5125, %v8826
  %v8828 = vand.u32 %v8827, 4294901760
  %8829 = vmatpush.msra.mxu0 %v8828
  %v8830 = vand.u32 %v5123, 4294901760
  %v8831 = vsub.f32 %v5123, %v8830
  %v8832 = vand.u32 %v8831, 4294901760
  %8833 = vmatpush.msra.mxu0 %v8832
  %v8834 = vand.u32 %v5121, 4294901760
  %v8835 = vsub.f32 %v5121, %v8834
  %v8836 = vand.u32 %v8835, 4294901760
  %8837 = vmatpush.msra.mxu0 %v8836
  %v8838 = vand.u32 %v5119, 4294901760
  %v8839 = vsub.f32 %v5119, %v8838
  %v8840 = vand.u32 %v8839, 4294901760
  %8841 = vmatpush.msra.mxu0 %v8840
  %v8842 = vand.u32 %v5117, 4294901760
  %v8843 = vsub.f32 %v5117, %v8842
  %v8844 = vand.u32 %v8843, 4294901760
  %8845 = vmatpush.msra.mxu0 %v8844
  %v8846 = vand.u32 %v8404, 4294901760
  %8847 = vmatmul.f32.gmra.mxu0 %v8846
  %v8848 = vpop.f32.mrf.mxu0
  %v8849 = vadd.f32 %v8804, %v8848
  %8850 = vdwg.mxu0
  %8851 = vmatpush.msra.mxu0 0.0
  %8852 = vmatpush.msra.mxu0 0.0
  %8853 = vmatpush.msra.mxu0 0.0
  %8854 = vmatpush.msra.mxu0 0.0
  %8855 = vmatpush.msra.mxu0 0.0
  %8856 = vmatpush.msra.mxu0 0.0
  %8857 = vmatpush.msra.mxu0 0.0
  %8858 = vmatpush.msra.mxu0 0.0
  %v8859 = vand.u32 %v5131, 4294901760
  %8860 = vmatpush.msra.mxu0 %v8859
  %v8861 = vand.u32 %v5129, 4294901760
  %8862 = vmatpush.msra.mxu0 %v8861
  %v8863 = vand.u32 %v5127, 4294901760
  %8864 = vmatpush.msra.mxu0 %v8863
  %v8865 = vand.u32 %v5125, 4294901760
  %8866 = vmatpush.msra.mxu0 %v8865
  %v8867 = vand.u32 %v5123, 4294901760
  %8868 = vmatpush.msra.mxu0 %v8867
  %v8869 = vand.u32 %v5121, 4294901760
  %8870 = vmatpush.msra.mxu0 %v8869
  %v8871 = vand.u32 %v5119, 4294901760
  %8872 = vmatpush.msra.mxu0 %v8871
  %v8873 = vand.u32 %v5117, 4294901760
  %8874 = vmatpush.msra.mxu0 %v8873
  %v8875 = vand.u32 %v8404, 4294901760
  %8876 = vmatmul.f32.gmra.mxu0 %v8875
  %v8877 = vpop.f32.mrf.mxu0
  %v8878 = vadd.f32 %v8849, %v8877
  %8879 = vdwg.mxu0
  %v8880 = vadd.f32 %v5714, %v8641
  %v8881 = vadd.f32 %v6272, %v8878
  %v8882 = vxor.u32 %v8880, 2147483648
  %v8883 = vxor.u32 %v8881, 2147483648
  %v8884 = vmul.f32 %v8882, 1.442695
  %v8885 = vpow.pop %v8884
  %v8886 = vmul.f32 %v8883, 1.442695
  %v8887 = vpow.pop %v8886
  %v8888 = vadd.f32 %v8885, 1.0
  %v8889 = vadd.f32 %v8887, 1.0
  %v8890 = vrcp.pop %v8888
  %v8891 = vmul.f32 %v8888, %v8890
  %v8892 = vsub.f32 1.0, %v8891
  %v8893 = vmul.f32 %v8890, %v8892
  %v8894 = vadd.f32 %v8890, %v8893
  %vm8895 = vweird.f32 %v8888
  %vm8896 = vweird.f32 %v8890
  %vm8897 = vmor %vm8895, %vm8896
  %v8898 = vsel %vm8897, %v8890, %v8894
  %v8899 = vand.u32 2147483647, %v8888
  %vm8900 = vcmp.eq.f32.partialorder %v8899, 8.507059e+37
  %v8901 = vand.u32 %v8888, 2147483648
  %v8902 = vor.u32 1.1754944e-38, %v8901
  %v8903 = vsel %vm8900, %v8902, %v8898
  %v8904 = vmul.f32 1.0, %v8903
  %v8905 = vrcp.pop %v8889
  %v8906 = vmul.f32 %v8889, %v8905
  %v8907 = vsub.f32 1.0, %v8906
  %v8908 = vmul.f32 %v8905, %v8907
  %v8909 = vadd.f32 %v8905, %v8908
  %vm8910 = vweird.f32 %v8889
  %vm8911 = vweird.f32 %v8905
  %vm8912 = vmor %vm8910, %vm8911
  %v8913 = vsel %vm8912, %v8905, %v8909
  %v8914 = vand.u32 2147483647, %v8889
  %vm8915 = vcmp.eq.f32.partialorder %v8914, 8.507059e+37
  %v8916 = vand.u32 %v8889, 2147483648
  %v8917 = vor.u32 1.1754944e-38, %v8916
  %v8918 = vsel %vm8915, %v8917, %v8913
  %v8919 = vmul.f32 1.0, %v8918
  %v8920 = vmul.f32 %v8919, 2.0
  %v8921 = vsub.f32 %v8920, 1.0
  %v8922 = vmul.f32 %v8904, %v8398
  %v8923 = vmul.f32 %v8904, %v8921
  %8925 = vrot.lane.b32.xlu0 %v8923, 64
  %v8926 = vpop.permute.xlu0 %8925
  %v8928 = vadd.f32 %v8922, %v8926
  %v8929 = vtanh.pop %v8928
  %v8930 = vmul.f32 %v8919, %v8929
  %8932 = vrot.lane.b32.xlu0 %v8930, 64
  %v8933 = vpop.permute.xlu0 %8932
  %v8934 = vsel %vm858, %v8933, 0
  %8936 = vmatpush.msra.mxu0 0.0
  %8937 = vmatpush.msra.mxu0 0.0
  %8938 = vmatpush.msra.mxu0 0.0
  %8939 = vmatpush.msra.mxu0 0.0
  %8940 = vmatpush.msra.mxu0 0.0
  %8941 = vmatpush.msra.mxu0 0.0
  %8942 = vmatpush.msra.mxu0 0.0
  %8943 = vmatpush.msra.mxu0 0.0
  %v8944 = vand.u32 %v5130, 4294901760
  %8945 = vmatpush.msra.mxu0 %v8944
  %v8946 = vand.u32 %v5128, 4294901760
  %8947 = vmatpush.msra.mxu0 %v8946
  %v8948 = vand.u32 %v5126, 4294901760
  %8949 = vmatpush.msra.mxu0 %v8948
  %v8950 = vand.u32 %v5124, 4294901760
  %8951 = vmatpush.msra.mxu0 %v8950
  %v8952 = vand.u32 %v5122, 4294901760
  %8953 = vmatpush.msra.mxu0 %v8952
  %v8954 = vand.u32 %v5120, 4294901760
  %8955 = vmatpush.msra.mxu0 %v8954
  %v8956 = vand.u32 %v5118, 4294901760
  %8957 = vmatpush.msra.mxu0 %v8956
  %v8958 = vand.u32 %v5116, 4294901760
  %8959 = vmatpush.msra.mxu0 %v8958
  %v8960 = vand.u32 %v8934, 4294901760
  %v8961 = vsub.f32 %v8934, %v8960
  %v8962 = vand.u32 %v8961, 4294901760
  %v8963 = vsub.f32 %v8961, %v8962
  %v8964 = vand.u32 %v8963, 4294901760
  %8965 = vmatmul.f32.gmra.mxu0 %v8964
  %v8966 = vpop.f32.mrf.mxu0
  %v8967 = vadd.f32 0.0, %v8966
  %8968 = vdwg.mxu0
  %8969 = vmatpush.msra.mxu0 0.0
  %8970 = vmatpush.msra.mxu0 0.0
  %8971 = vmatpush.msra.mxu0 0.0
  %8972 = vmatpush.msra.mxu0 0.0
  %8973 = vmatpush.msra.mxu0 0.0
  %8974 = vmatpush.msra.mxu0 0.0
  %8975 = vmatpush.msra.mxu0 0.0
  %8976 = vmatpush.msra.mxu0 0.0
  %v8977 = vand.u32 %v5130, 4294901760
  %v8978 = vsub.f32 %v5130, %v8977
  %v8979 = vand.u32 %v8978, 4294901760
  %v8980 = vsub.f32 %v8978, %v8979
  %v8981 = vand.u32 %v8980, 4294901760
  %8982 = vmatpush.msra.mxu0 %v8981
  %v8983 = vand.u32 %v5128, 4294901760
  %v8984 = vsub.f32 %v5128, %v8983
  %v8985 = vand.u32 %v8984, 4294901760
  %v8986 = vsub.f32 %v8984, %v8985
  %v8987 = vand.u32 %v8986, 4294901760
  %8988 = vmatpush.msra.mxu0 %v8987
  %v8989 = vand.u32 %v5126, 4294901760
  %v8990 = vsub.f32 %v5126, %v8989
  %v8991 = vand.u32 %v8990, 4294901760
  %v8992 = vsub.f32 %v8990, %v8991
  %v8993 = vand.u32 %v8992, 4294901760
  %8994 = vmatpush.msra.mxu0 %v8993
  %v8995 = vand.u32 %v5124, 4294901760
  %v8996 = vsub.f32 %v5124, %v8995
  %v8997 = vand.u32 %v8996, 4294901760
  %v8998 = vsub.f32 %v8996, %v8997
  %v8999 = vand.u32 %v8998, 4294901760
  %9000 = vmatpush.msra.mxu0 %v8999
  %v9001 = vand.u32 %v5122, 4294901760
  %v9002 = vsub.f32 %v5122, %v9001
  %v9003 = vand.u32 %v9002, 4294901760
  %v9004 = vsub.f32 %v9002, %v9003
  %v9005 = vand.u32 %v9004, 4294901760
  %9006 = vmatpush.msra.mxu0 %v9005
  %v9007 = vand.u32 %v5120, 4294901760
  %v9008 = vsub.f32 %v5120, %v9007
  %v9009 = vand.u32 %v9008, 4294901760
  %v9010 = vsub.f32 %v9008, %v9009
  %v9011 = vand.u32 %v9010, 4294901760
  %9012 = vmatpush.msra.mxu0 %v9011
  %v9013 = vand.u32 %v5118, 4294901760
  %v9014 = vsub.f32 %v5118, %v9013
  %v9015 = vand.u32 %v9014, 4294901760
  %v9016 = vsub.f32 %v9014, %v9015
  %v9017 = vand.u32 %v9016, 4294901760
  %9018 = vmatpush.msra.mxu0 %v9017
  %v9019 = vand.u32 %v5116, 4294901760
  %v9020 = vsub.f32 %v5116, %v9019
  %v9021 = vand.u32 %v9020, 4294901760
  %v9022 = vsub.f32 %v9020, %v9021
  %v9023 = vand.u32 %v9022, 4294901760
  %9024 = vmatpush.msra.mxu0 %v9023
  %v9025 = vand.u32 %v8934, 4294901760
  %9026 = vmatmul.f32.gmra.mxu0 %v9025
  %v9027 = vpop.f32.mrf.mxu0
  %v9028 = vadd.f32 %v8967, %v9027
  %9029 = vdwg.mxu0
  %9030 = vmatpush.msra.mxu0 0.0
  %9031 = vmatpush.msra.mxu0 0.0
  %9032 = vmatpush.msra.mxu0 0.0
  %9033 = vmatpush.msra.mxu0 0.0
  %9034 = vmatpush.msra.mxu0 0.0
  %9035 = vmatpush.msra.mxu0 0.0
  %9036 = vmatpush.msra.mxu0 0.0
  %9037 = vmatpush.msra.mxu0 0.0
  %v9038 = vand.u32 %v5130, 4294901760
  %v9039 = vsub.f32 %v5130, %v9038
  %9040 = vmatpush.msra.mxu0 %v9039
  %v9041 = vand.u32 %v5128, 4294901760
  %v9042 = vsub.f32 %v5128, %v9041
  %9043 = vmatpush.msra.mxu0 %v9042
  %v9044 = vand.u32 %v5126, 4294901760
  %v9045 = vsub.f32 %v5126, %v9044
  %9046 = vmatpush.msra.mxu0 %v9045
  %v9047 = vand.u32 %v5124, 4294901760
  %v9048 = vsub.f32 %v5124, %v9047
  %9049 = vmatpush.msra.mxu0 %v9048
  %v9050 = vand.u32 %v5122, 4294901760
  %v9051 = vsub.f32 %v5122, %v9050
  %9052 = vmatpush.msra.mxu0 %v9051
  %v9053 = vand.u32 %v5120, 4294901760
  %v9054 = vsub.f32 %v5120, %v9053
  %9055 = vmatpush.msra.mxu0 %v9054
  %v9056 = vand.u32 %v5118, 4294901760
  %v9057 = vsub.f32 %v5118, %v9056
  %9058 = vmatpush.msra.mxu0 %v9057
  %v9059 = vand.u32 %v5116, 4294901760
  %v9060 = vsub.f32 %v5116, %v9059
  %9061 = vmatpush.msra.mxu0 %v9060
  %v9062 = vand.u32 %v8934, 4294901760
  %v9063 = vsub.f32 %v8934, %v9062
  %9064 = vmatmul.f32.gmra.mxu0 %v9063
  %v9065 = vpop.f32.mrf.mxu0
  %v9066 = vadd.f32 %v9028, %v9065
  %9067 = vdwg.mxu0
  %9068 = vmatpush.msra.mxu0 0.0
  %9069 = vmatpush.msra.mxu0 0.0
  %9070 = vmatpush.msra.mxu0 0.0
  %9071 = vmatpush.msra.mxu0 0.0
  %9072 = vmatpush.msra.mxu0 0.0
  %9073 = vmatpush.msra.mxu0 0.0
  %9074 = vmatpush.msra.mxu0 0.0
  %9075 = vmatpush.msra.mxu0 0.0
  %v9076 = vand.u32 %v5130, 4294901760
  %9077 = vmatpush.msra.mxu0 %v9076
  %v9078 = vand.u32 %v5128, 4294901760
  %9079 = vmatpush.msra.mxu0 %v9078
  %v9080 = vand.u32 %v5126, 4294901760
  %9081 = vmatpush.msra.mxu0 %v9080
  %v9082 = vand.u32 %v5124, 4294901760
  %9083 = vmatpush.msra.mxu0 %v9082
  %v9084 = vand.u32 %v5122, 4294901760
  %9085 = vmatpush.msra.mxu0 %v9084
  %v9086 = vand.u32 %v5120, 4294901760
  %9087 = vmatpush.msra.mxu0 %v9086
  %v9088 = vand.u32 %v5118, 4294901760
  %9089 = vmatpush.msra.mxu0 %v9088
  %v9090 = vand.u32 %v5116, 4294901760
  %9091 = vmatpush.msra.mxu0 %v9090
  %v9092 = vand.u32 %v8934, 4294901760
  %v9093 = vsub.f32 %v8934, %v9092
  %v9094 = vand.u32 %v9093, 4294901760
  %9095 = vmatmul.f32.gmra.mxu0 %v9094
  %v9096 = vpop.f32.mrf.mxu0
  %v9097 = vadd.f32 %v9066, %v9096
  %9098 = vdwg.mxu0
  %9099 = vmatpush.msra.mxu0 0.0
  %9100 = vmatpush.msra.mxu0 0.0
  %9101 = vmatpush.msra.mxu0 0.0
  %9102 = vmatpush.msra.mxu0 0.0
  %9103 = vmatpush.msra.mxu0 0.0
  %9104 = vmatpush.msra.mxu0 0.0
  %9105 = vmatpush.msra.mxu0 0.0
  %9106 = vmatpush.msra.mxu0 0.0
  %v9107 = vand.u32 %v5130, 4294901760
  %v9108 = vsub.f32 %v5130, %v9107
  %v9109 = vand.u32 %v9108, 4294901760
  %9110 = vmatpush.msra.mxu0 %v9109
  %v9111 = vand.u32 %v5128, 4294901760
  %v9112 = vsub.f32 %v5128, %v9111
  %v9113 = vand.u32 %v9112, 4294901760
  %9114 = vmatpush.msra.mxu0 %v9113
  %v9115 = vand.u32 %v5126, 4294901760
  %v9116 = vsub.f32 %v5126, %v9115
  %v9117 = vand.u32 %v9116, 4294901760
  %9118 = vmatpush.msra.mxu0 %v9117
  %v9119 = vand.u32 %v5124, 4294901760
  %v9120 = vsub.f32 %v5124, %v9119
  %v9121 = vand.u32 %v9120, 4294901760
  %9122 = vmatpush.msra.mxu0 %v9121
  %v9123 = vand.u32 %v5122, 4294901760
  %v9124 = vsub.f32 %v5122, %v9123
  %v9125 = vand.u32 %v9124, 4294901760
  %9126 = vmatpush.msra.mxu0 %v9125
  %v9127 = vand.u32 %v5120, 4294901760
  %v9128 = vsub.f32 %v5120, %v9127
  %v9129 = vand.u32 %v9128, 4294901760
  %9130 = vmatpush.msra.mxu0 %v9129
  %v9131 = vand.u32 %v5118, 4294901760
  %v9132 = vsub.f32 %v5118, %v9131
  %v9133 = vand.u32 %v9132, 4294901760
  %9134 = vmatpush.msra.mxu0 %v9133
  %v9135 = vand.u32 %v5116, 4294901760
  %v9136 = vsub.f32 %v5116, %v9135
  %v9137 = vand.u32 %v9136, 4294901760
  %9138 = vmatpush.msra.mxu0 %v9137
  %v9139 = vand.u32 %v8934, 4294901760
  %9140 = vmatmul.f32.gmra.mxu0 %v9139
  %v9141 = vpop.f32.mrf.mxu0
  %v9142 = vadd.f32 %v9097, %v9141
  %9143 = vdwg.mxu0
  %9144 = vmatpush.msra.mxu0 0.0
  %9145 = vmatpush.msra.mxu0 0.0
  %9146 = vmatpush.msra.mxu0 0.0
  %9147 = vmatpush.msra.mxu0 0.0
  %9148 = vmatpush.msra.mxu0 0.0
  %9149 = vmatpush.msra.mxu0 0.0
  %9150 = vmatpush.msra.mxu0 0.0
  %9151 = vmatpush.msra.mxu0 0.0
  %v9152 = vand.u32 %v5130, 4294901760
  %9153 = vmatpush.msra.mxu0 %v9152
  %v9154 = vand.u32 %v5128, 4294901760
  %9155 = vmatpush.msra.mxu0 %v9154
  %v9156 = vand.u32 %v5126, 4294901760
  %9157 = vmatpush.msra.mxu0 %v9156
  %v9158 = vand.u32 %v5124, 4294901760
  %9159 = vmatpush.msra.mxu0 %v9158
  %v9160 = vand.u32 %v5122, 4294901760
  %9161 = vmatpush.msra.mxu0 %v9160
  %v9162 = vand.u32 %v5120, 4294901760
  %9163 = vmatpush.msra.mxu0 %v9162
  %v9164 = vand.u32 %v5118, 4294901760
  %9165 = vmatpush.msra.mxu0 %v9164
  %v9166 = vand.u32 %v5116, 4294901760
  %9167 = vmatpush.msra.mxu0 %v9166
  %v9168 = vand.u32 %v8934, 4294901760
  %9169 = vmatmul.f32.gmra.mxu0 %v9168
  %v9170 = vpop.f32.mrf.mxu0
  %v9171 = vadd.f32 %v9142, %v9170
  %9172 = vdwg.mxu0
  %9173 = vmatpush.msra.mxu0 0.0
  %9174 = vmatpush.msra.mxu0 0.0
  %9175 = vmatpush.msra.mxu0 0.0
  %9176 = vmatpush.msra.mxu0 0.0
  %9177 = vmatpush.msra.mxu0 0.0
  %9178 = vmatpush.msra.mxu0 0.0
  %9179 = vmatpush.msra.mxu0 0.0
  %9180 = vmatpush.msra.mxu0 0.0
  %v9181 = vand.u32 %v5131, 4294901760
  %9182 = vmatpush.msra.mxu0 %v9181
  %v9183 = vand.u32 %v5129, 4294901760
  %9184 = vmatpush.msra.mxu0 %v9183
  %v9185 = vand.u32 %v5127, 4294901760
  %9186 = vmatpush.msra.mxu0 %v9185
  %v9187 = vand.u32 %v5125, 4294901760
  %9188 = vmatpush.msra.mxu0 %v9187
  %v9189 = vand.u32 %v5123, 4294901760
  %9190 = vmatpush.msra.mxu0 %v9189
  %v9191 = vand.u32 %v5121, 4294901760
  %9192 = vmatpush.msra.mxu0 %v9191
  %v9193 = vand.u32 %v5119, 4294901760
  %9194 = vmatpush.msra.mxu0 %v9193
  %v9195 = vand.u32 %v5117, 4294901760
  %9196 = vmatpush.msra.mxu0 %v9195
  %v9197 = vand.u32 %v8934, 4294901760
  %v9198 = vsub.f32 %v8934, %v9197
  %v9199 = vand.u32 %v9198, 4294901760
  %v9200 = vsub.f32 %v9198, %v9199
  %v9201 = vand.u32 %v9200, 4294901760
  %9202 = vmatmul.f32.gmra.mxu0 %v9201
  %v9203 = vpop.f32.mrf.mxu0
  %v9204 = vadd.f32 0.0, %v9203
  %9205 = vdwg.mxu0
  %9206 = vmatpush.msra.mxu0 0.0
  %9207 = vmatpush.msra.mxu0 0.0
  %9208 = vmatpush.msra.mxu0 0.0
  %9209 = vmatpush.msra.mxu0 0.0
  %9210 = vmatpush.msra.mxu0 0.0
  %9211 = vmatpush.msra.mxu0 0.0
  %9212 = vmatpush.msra.mxu0 0.0
  %9213 = vmatpush.msra.mxu0 0.0
  %v9214 = vand.u32 %v5131, 4294901760
  %v9215 = vsub.f32 %v5131, %v9214
  %v9216 = vand.u32 %v9215, 4294901760
  %v9217 = vsub.f32 %v9215, %v9216
  %v9218 = vand.u32 %v9217, 4294901760
  %9219 = vmatpush.msra.mxu0 %v9218
  %v9220 = vand.u32 %v5129, 4294901760
  %v9221 = vsub.f32 %v5129, %v9220
  %v9222 = vand.u32 %v9221, 4294901760
  %v9223 = vsub.f32 %v9221, %v9222
  %v9224 = vand.u32 %v9223, 4294901760
  %9225 = vmatpush.msra.mxu0 %v9224
  %v9226 = vand.u32 %v5127, 4294901760
  %v9227 = vsub.f32 %v5127, %v9226
  %v9228 = vand.u32 %v9227, 4294901760
  %v9229 = vsub.f32 %v9227, %v9228
  %v9230 = vand.u32 %v9229, 4294901760
  %9231 = vmatpush.msra.mxu0 %v9230
  %v9232 = vand.u32 %v5125, 4294901760
  %v9233 = vsub.f32 %v5125, %v9232
  %v9234 = vand.u32 %v9233, 4294901760
  %v9235 = vsub.f32 %v9233, %v9234
  %v9236 = vand.u32 %v9235, 4294901760
  %9237 = vmatpush.msra.mxu0 %v9236
  %v9238 = vand.u32 %v5123, 4294901760
  %v9239 = vsub.f32 %v5123, %v9238
  %v9240 = vand.u32 %v9239, 4294901760
  %v9241 = vsub.f32 %v9239, %v9240
  %v9242 = vand.u32 %v9241, 4294901760
  %9243 = vmatpush.msra.mxu0 %v9242
  %v9244 = vand.u32 %v5121, 4294901760
  %v9245 = vsub.f32 %v5121, %v9244
  %v9246 = vand.u32 %v9245, 4294901760
  %v9247 = vsub.f32 %v9245, %v9246
  %v9248 = vand.u32 %v9247, 4294901760
  %9249 = vmatpush.msra.mxu0 %v9248
  %v9250 = vand.u32 %v5119, 4294901760
  %v9251 = vsub.f32 %v5119, %v9250
  %v9252 = vand.u32 %v9251, 4294901760
  %v9253 = vsub.f32 %v9251, %v9252
  %v9254 = vand.u32 %v9253, 4294901760
  %9255 = vmatpush.msra.mxu0 %v9254
  %v9256 = vand.u32 %v5117, 4294901760
  %v9257 = vsub.f32 %v5117, %v9256
  %v9258 = vand.u32 %v9257, 4294901760
  %v9259 = vsub.f32 %v9257, %v9258
  %v9260 = vand.u32 %v9259, 4294901760
  %9261 = vmatpush.msra.mxu0 %v9260
  %v9262 = vand.u32 %v8934, 4294901760
  %9263 = vmatmul.f32.gmra.mxu0 %v9262
  %v9264 = vpop.f32.mrf.mxu0
  %v9265 = vadd.f32 %v9204, %v9264
  %9266 = vdwg.mxu0
  %9267 = vmatpush.msra.mxu0 0.0
  %9268 = vmatpush.msra.mxu0 0.0
  %9269 = vmatpush.msra.mxu0 0.0
  %9270 = vmatpush.msra.mxu0 0.0
  %9271 = vmatpush.msra.mxu0 0.0
  %9272 = vmatpush.msra.mxu0 0.0
  %9273 = vmatpush.msra.mxu0 0.0
  %9274 = vmatpush.msra.mxu0 0.0
  %v9275 = vand.u32 %v5131, 4294901760
  %v9276 = vsub.f32 %v5131, %v9275
  %9277 = vmatpush.msra.mxu0 %v9276
  %v9278 = vand.u32 %v5129, 4294901760
  %v9279 = vsub.f32 %v5129, %v9278
  %9280 = vmatpush.msra.mxu0 %v9279
  %v9281 = vand.u32 %v5127, 4294901760
  %v9282 = vsub.f32 %v5127, %v9281
  %9283 = vmatpush.msra.mxu0 %v9282
  %v9284 = vand.u32 %v5125, 4294901760
  %v9285 = vsub.f32 %v5125, %v9284
  %9286 = vmatpush.msra.mxu0 %v9285
  %v9287 = vand.u32 %v5123, 4294901760
  %v9288 = vsub.f32 %v5123, %v9287
  %9289 = vmatpush.msra.mxu0 %v9288
  %v9290 = vand.u32 %v5121, 4294901760
  %v9291 = vsub.f32 %v5121, %v9290
  %9292 = vmatpush.msra.mxu0 %v9291
  %v9293 = vand.u32 %v5119, 4294901760
  %v9294 = vsub.f32 %v5119, %v9293
  %9295 = vmatpush.msra.mxu0 %v9294
  %v9296 = vand.u32 %v5117, 4294901760
  %v9297 = vsub.f32 %v5117, %v9296
  %9298 = vmatpush.msra.mxu0 %v9297
  %v9299 = vand.u32 %v8934, 4294901760
  %v9300 = vsub.f32 %v8934, %v9299
  %9301 = vmatmul.f32.gmra.mxu0 %v9300
  %v9302 = vpop.f32.mrf.mxu0
  %v9303 = vadd.f32 %v9265, %v9302
  %9304 = vdwg.mxu0
  %9305 = vmatpush.msra.mxu0 0.0
  %9306 = vmatpush.msra.mxu0 0.0
  %9307 = vmatpush.msra.mxu0 0.0
  %9308 = vmatpush.msra.mxu0 0.0
  %9309 = vmatpush.msra.mxu0 0.0
  %9310 = vmatpush.msra.mxu0 0.0
  %9311 = vmatpush.msra.mxu0 0.0
  %9312 = vmatpush.msra.mxu0 0.0
  %v9313 = vand.u32 %v5131, 4294901760
  %9314 = vmatpush.msra.mxu0 %v9313
  %v9315 = vand.u32 %v5129, 4294901760
  %9316 = vmatpush.msra.mxu0 %v9315
  %v9317 = vand.u32 %v5127, 4294901760
  %9318 = vmatpush.msra.mxu0 %v9317
  %v9319 = vand.u32 %v5125, 4294901760
  %9320 = vmatpush.msra.mxu0 %v9319
  %v9321 = vand.u32 %v5123, 4294901760
  %9322 = vmatpush.msra.mxu0 %v9321
  %v9323 = vand.u32 %v5121, 4294901760
  %9324 = vmatpush.msra.mxu0 %v9323
  %v9325 = vand.u32 %v5119, 4294901760
  %9326 = vmatpush.msra.mxu0 %v9325
  %v9327 = vand.u32 %v5117, 4294901760
  %9328 = vmatpush.msra.mxu0 %v9327
  %v9329 = vand.u32 %v8934, 4294901760
  %v9330 = vsub.f32 %v8934, %v9329
  %v9331 = vand.u32 %v9330, 4294901760
  %9332 = vmatmul.f32.gmra.mxu0 %v9331
  %v9333 = vpop.f32.mrf.mxu0
  %v9334 = vadd.f32 %v9303, %v9333
  %9335 = vdwg.mxu0
  %9336 = vmatpush.msra.mxu0 0.0
  %9337 = vmatpush.msra.mxu0 0.0
  %9338 = vmatpush.msra.mxu0 0.0
  %9339 = vmatpush.msra.mxu0 0.0
  %9340 = vmatpush.msra.mxu0 0.0
  %9341 = vmatpush.msra.mxu0 0.0
  %9342 = vmatpush.msra.mxu0 0.0
  %9343 = vmatpush.msra.mxu0 0.0
  %v9344 = vand.u32 %v5131, 4294901760
  %v9345 = vsub.f32 %v5131, %v9344
  %v9346 = vand.u32 %v9345, 4294901760
  %9347 = vmatpush.msra.mxu0 %v9346
  %v9348 = vand.u32 %v5129, 4294901760
  %v9349 = vsub.f32 %v5129, %v9348
  %v9350 = vand.u32 %v9349, 4294901760
  %9351 = vmatpush.msra.mxu0 %v9350
  %v9352 = vand.u32 %v5127, 4294901760
  %v9353 = vsub.f32 %v5127, %v9352
  %v9354 = vand.u32 %v9353, 4294901760
  %9355 = vmatpush.msra.mxu0 %v9354
  %v9356 = vand.u32 %v5125, 4294901760
  %v9357 = vsub.f32 %v5125, %v9356
  %v9358 = vand.u32 %v9357, 4294901760
  %9359 = vmatpush.msra.mxu0 %v9358
  %v9360 = vand.u32 %v5123, 4294901760
  %v9361 = vsub.f32 %v5123, %v9360
  %v9362 = vand.u32 %v9361, 4294901760
  %9363 = vmatpush.msra.mxu0 %v9362
  %v9364 = vand.u32 %v5121, 4294901760
  %v9365 = vsub.f32 %v5121, %v9364
  %v9366 = vand.u32 %v9365, 4294901760
  %9367 = vmatpush.msra.mxu0 %v9366
  %v9368 = vand.u32 %v5119, 4294901760
  %v9369 = vsub.f32 %v5119, %v9368
  %v9370 = vand.u32 %v9369, 4294901760
  %9371 = vmatpush.msra.mxu0 %v9370
  %v9372 = vand.u32 %v5117, 4294901760
  %v9373 = vsub.f32 %v5117, %v9372
  %v9374 = vand.u32 %v9373, 4294901760
  %9375 = vmatpush.msra.mxu0 %v9374
  %v9376 = vand.u32 %v8934, 4294901760
  %9377 = vmatmul.f32.gmra.mxu0 %v9376
  %v9378 = vpop.f32.mrf.mxu0
  %v9379 = vadd.f32 %v9334, %v9378
  %9380 = vdwg.mxu0
  %9381 = vmatpush.msra.mxu0 0.0
  %9382 = vmatpush.msra.mxu0 0.0
  %9383 = vmatpush.msra.mxu0 0.0
  %9384 = vmatpush.msra.mxu0 0.0
  %9385 = vmatpush.msra.mxu0 0.0
  %9386 = vmatpush.msra.mxu0 0.0
  %9387 = vmatpush.msra.mxu0 0.0
  %9388 = vmatpush.msra.mxu0 0.0
  %v9389 = vand.u32 %v5131, 4294901760
  %9390 = vmatpush.msra.mxu0 %v9389
  %v9391 = vand.u32 %v5129, 4294901760
  %9392 = vmatpush.msra.mxu0 %v9391
  %v9393 = vand.u32 %v5127, 4294901760
  %9394 = vmatpush.msra.mxu0 %v9393
  %v9395 = vand.u32 %v5125, 4294901760
  %9396 = vmatpush.msra.mxu0 %v9395
  %v9397 = vand.u32 %v5123, 4294901760
  %9398 = vmatpush.msra.mxu0 %v9397
  %v9399 = vand.u32 %v5121, 4294901760
  %9400 = vmatpush.msra.mxu0 %v9399
  %v9401 = vand.u32 %v5119, 4294901760
  %9402 = vmatpush.msra.mxu0 %v9401
  %v9403 = vand.u32 %v5117, 4294901760
  %9404 = vmatpush.msra.mxu0 %v9403
  %v9405 = vand.u32 %v8934, 4294901760
  %9406 = vmatmul.f32.gmra.mxu0 %v9405
  %v9407 = vpop.f32.mrf.mxu0
  %v9408 = vadd.f32 %v9379, %v9407
  %9409 = vdwg.mxu0
  %v9410 = vadd.f32 %v5718, %v9171
  %v9411 = vadd.f32 %v6276, %v9408
  %v9412 = vxor.u32 %v9410, 2147483648
  %v9413 = vxor.u32 %v9411, 2147483648
  %v9414 = vmul.f32 %v9412, 1.442695
  %v9415 = vpow.pop %v9414
  %v9416 = vmul.f32 %v9413, 1.442695
  %v9417 = vpow.pop %v9416
  %v9418 = vadd.f32 %v9415, 1.0
  %v9419 = vadd.f32 %v9417, 1.0
  %v9420 = vrcp.pop %v9418
  %v9421 = vmul.f32 %v9418, %v9420
  %v9422 = vsub.f32 1.0, %v9421
  %v9423 = vmul.f32 %v9420, %v9422
  %v9424 = vadd.f32 %v9420, %v9423
  %vm9425 = vweird.f32 %v9418
  %vm9426 = vweird.f32 %v9420
  %vm9427 = vmor %vm9425, %vm9426
  %v9428 = vsel %vm9427, %v9420, %v9424
  %v9429 = vand.u32 2147483647, %v9418
  %vm9430 = vcmp.eq.f32.partialorder %v9429, 8.507059e+37
  %v9431 = vand.u32 %v9418, 2147483648
  %v9432 = vor.u32 1.1754944e-38, %v9431
  %v9433 = vsel %vm9430, %v9432, %v9428
  %v9434 = vmul.f32 1.0, %v9433
  %v9435 = vrcp.pop %v9419
  %v9436 = vmul.f32 %v9419, %v9435
  %v9437 = vsub.f32 1.0, %v9436
  %v9438 = vmul.f32 %v9435, %v9437
  %v9439 = vadd.f32 %v9435, %v9438
  %vm9440 = vweird.f32 %v9419
  %vm9441 = vweird.f32 %v9435
  %vm9442 = vmor %vm9440, %vm9441
  %v9443 = vsel %vm9442, %v9435, %v9439
  %v9444 = vand.u32 2147483647, %v9419
  %vm9445 = vcmp.eq.f32.partialorder %v9444, 8.507059e+37
  %v9446 = vand.u32 %v9419, 2147483648
  %v9447 = vor.u32 1.1754944e-38, %v9446
  %v9448 = vsel %vm9445, %v9447, %v9443
  %v9449 = vmul.f32 1.0, %v9448
  %v9450 = vmul.f32 %v9449, 2.0
  %v9451 = vsub.f32 %v9450, 1.0
  %v9452 = vmul.f32 %v9434, %v8928
  %v9453 = vmul.f32 %v9434, %v9451
  %9455 = vrot.lane.b32.xlu0 %v9453, 64
  %v9456 = vpop.permute.xlu0 %9455
  %v9458 = vadd.f32 %v9452, %v9456
  %v9459 = vtanh.pop %v9458
  %v9460 = vmul.f32 %v9449, %v9459
  %9462 = vrot.lane.b32.xlu0 %v9460, 64
  %v9463 = vpop.permute.xlu0 %9462
  %v9464 = vsel %vm858, %v9463, 0
  %9466 = vmatpush.msra.mxu0 0.0
  %9467 = vmatpush.msra.mxu0 0.0
  %9468 = vmatpush.msra.mxu0 0.0
  %9469 = vmatpush.msra.mxu0 0.0
  %9470 = vmatpush.msra.mxu0 0.0
  %9471 = vmatpush.msra.mxu0 0.0
  %9472 = vmatpush.msra.mxu0 0.0
  %9473 = vmatpush.msra.mxu0 0.0
  %v9474 = vand.u32 %v5130, 4294901760
  %9475 = vmatpush.msra.mxu0 %v9474
  %v9476 = vand.u32 %v5128, 4294901760
  %9477 = vmatpush.msra.mxu0 %v9476
  %v9478 = vand.u32 %v5126, 4294901760
  %9479 = vmatpush.msra.mxu0 %v9478
  %v9480 = vand.u32 %v5124, 4294901760
  %9481 = vmatpush.msra.mxu0 %v9480
  %v9482 = vand.u32 %v5122, 4294901760
  %9483 = vmatpush.msra.mxu0 %v9482
  %v9484 = vand.u32 %v5120, 4294901760
  %9485 = vmatpush.msra.mxu0 %v9484
  %v9486 = vand.u32 %v5118, 4294901760
  %9487 = vmatpush.msra.mxu0 %v9486
  %v9488 = vand.u32 %v5116, 4294901760
  %9489 = vmatpush.msra.mxu0 %v9488
  %v9490 = vand.u32 %v9464, 4294901760
  %v9491 = vsub.f32 %v9464, %v9490
  %v9492 = vand.u32 %v9491, 4294901760
  %v9493 = vsub.f32 %v9491, %v9492
  %v9494 = vand.u32 %v9493, 4294901760
  %9495 = vmatmul.f32.gmra.mxu0 %v9494
  %v9496 = vpop.f32.mrf.mxu0
  %v9497 = vadd.f32 0.0, %v9496
  %9498 = vdwg.mxu0
  %9499 = vmatpush.msra.mxu0 0.0
  %9500 = vmatpush.msra.mxu0 0.0
  %9501 = vmatpush.msra.mxu0 0.0
  %9502 = vmatpush.msra.mxu0 0.0
  %9503 = vmatpush.msra.mxu0 0.0
  %9504 = vmatpush.msra.mxu0 0.0
  %9505 = vmatpush.msra.mxu0 0.0
  %9506 = vmatpush.msra.mxu0 0.0
  %v9507 = vand.u32 %v5130, 4294901760
  %v9508 = vsub.f32 %v5130, %v9507
  %v9509 = vand.u32 %v9508, 4294901760
  %v9510 = vsub.f32 %v9508, %v9509
  %v9511 = vand.u32 %v9510, 4294901760
  %9512 = vmatpush.msra.mxu0 %v9511
  %v9513 = vand.u32 %v5128, 4294901760
  %v9514 = vsub.f32 %v5128, %v9513
  %v9515 = vand.u32 %v9514, 4294901760
  %v9516 = vsub.f32 %v9514, %v9515
  %v9517 = vand.u32 %v9516, 4294901760
  %9518 = vmatpush.msra.mxu0 %v9517
  %v9519 = vand.u32 %v5126, 4294901760
  %v9520 = vsub.f32 %v5126, %v9519
  %v9521 = vand.u32 %v9520, 4294901760
  %v9522 = vsub.f32 %v9520, %v9521
  %v9523 = vand.u32 %v9522, 4294901760
  %9524 = vmatpush.msra.mxu0 %v9523
  %v9525 = vand.u32 %v5124, 4294901760
  %v9526 = vsub.f32 %v5124, %v9525
  %v9527 = vand.u32 %v9526, 4294901760
  %v9528 = vsub.f32 %v9526, %v9527
  %v9529 = vand.u32 %v9528, 4294901760
  %9530 = vmatpush.msra.mxu0 %v9529
  %v9531 = vand.u32 %v5122, 4294901760
  %v9532 = vsub.f32 %v5122, %v9531
  %v9533 = vand.u32 %v9532, 4294901760
  %v9534 = vsub.f32 %v9532, %v9533
  %v9535 = vand.u32 %v9534, 4294901760
  %9536 = vmatpush.msra.mxu0 %v9535
  %v9537 = vand.u32 %v5120, 4294901760
  %v9538 = vsub.f32 %v5120, %v9537
  %v9539 = vand.u32 %v9538, 4294901760
  %v9540 = vsub.f32 %v9538, %v9539
  %v9541 = vand.u32 %v9540, 4294901760
  %9542 = vmatpush.msra.mxu0 %v9541
  %v9543 = vand.u32 %v5118, 4294901760
  %v9544 = vsub.f32 %v5118, %v9543
  %v9545 = vand.u32 %v9544, 4294901760
  %v9546 = vsub.f32 %v9544, %v9545
  %v9547 = vand.u32 %v9546, 4294901760
  %9548 = vmatpush.msra.mxu0 %v9547
  %v9549 = vand.u32 %v5116, 4294901760
  %v9550 = vsub.f32 %v5116, %v9549
  %v9551 = vand.u32 %v9550, 4294901760
  %v9552 = vsub.f32 %v9550, %v9551
  %v9553 = vand.u32 %v9552, 4294901760
  %9554 = vmatpush.msra.mxu0 %v9553
  %v9555 = vand.u32 %v9464, 4294901760
  %9556 = vmatmul.f32.gmra.mxu0 %v9555
  %v9557 = vpop.f32.mrf.mxu0
  %v9558 = vadd.f32 %v9497, %v9557
  %9559 = vdwg.mxu0
  %9560 = vmatpush.msra.mxu0 0.0
  %9561 = vmatpush.msra.mxu0 0.0
  %9562 = vmatpush.msra.mxu0 0.0
  %9563 = vmatpush.msra.mxu0 0.0
  %9564 = vmatpush.msra.mxu0 0.0
  %9565 = vmatpush.msra.mxu0 0.0
  %9566 = vmatpush.msra.mxu0 0.0
  %9567 = vmatpush.msra.mxu0 0.0
  %v9568 = vand.u32 %v5130, 4294901760
  %v9569 = vsub.f32 %v5130, %v9568
  %9570 = vmatpush.msra.mxu0 %v9569
  %v9571 = vand.u32 %v5128, 4294901760
  %v9572 = vsub.f32 %v5128, %v9571
  %9573 = vmatpush.msra.mxu0 %v9572
  %v9574 = vand.u32 %v5126, 4294901760
  %v9575 = vsub.f32 %v5126, %v9574
  %9576 = vmatpush.msra.mxu0 %v9575
  %v9577 = vand.u32 %v5124, 4294901760
  %v9578 = vsub.f32 %v5124, %v9577
  %9579 = vmatpush.msra.mxu0 %v9578
  %v9580 = vand.u32 %v5122, 4294901760
  %v9581 = vsub.f32 %v5122, %v9580
  %9582 = vmatpush.msra.mxu0 %v9581
  %v9583 = vand.u32 %v5120, 4294901760
  %v9584 = vsub.f32 %v5120, %v9583
  %9585 = vmatpush.msra.mxu0 %v9584
  %v9586 = vand.u32 %v5118, 4294901760
  %v9587 = vsub.f32 %v5118, %v9586
  %9588 = vmatpush.msra.mxu0 %v9587
  %v9589 = vand.u32 %v5116, 4294901760
  %v9590 = vsub.f32 %v5116, %v9589
  %9591 = vmatpush.msra.mxu0 %v9590
  %v9592 = vand.u32 %v9464, 4294901760
  %v9593 = vsub.f32 %v9464, %v9592
  %9594 = vmatmul.f32.gmra.mxu0 %v9593
  %v9595 = vpop.f32.mrf.mxu0
  %v9596 = vadd.f32 %v9558, %v9595
  %9597 = vdwg.mxu0
  %9598 = vmatpush.msra.mxu0 0.0
  %9599 = vmatpush.msra.mxu0 0.0
  %9600 = vmatpush.msra.mxu0 0.0
  %9601 = vmatpush.msra.mxu0 0.0
  %9602 = vmatpush.msra.mxu0 0.0
  %9603 = vmatpush.msra.mxu0 0.0
  %9604 = vmatpush.msra.mxu0 0.0
  %9605 = vmatpush.msra.mxu0 0.0
  %v9606 = vand.u32 %v5130, 4294901760
  %9607 = vmatpush.msra.mxu0 %v9606
  %v9608 = vand.u32 %v5128, 4294901760
  %9609 = vmatpush.msra.mxu0 %v9608
  %v9610 = vand.u32 %v5126, 4294901760
  %9611 = vmatpush.msra.mxu0 %v9610
  %v9612 = vand.u32 %v5124, 4294901760
  %9613 = vmatpush.msra.mxu0 %v9612
  %v9614 = vand.u32 %v5122, 4294901760
  %9615 = vmatpush.msra.mxu0 %v9614
  %v9616 = vand.u32 %v5120, 4294901760
  %9617 = vmatpush.msra.mxu0 %v9616
  %v9618 = vand.u32 %v5118, 4294901760
  %9619 = vmatpush.msra.mxu0 %v9618
  %v9620 = vand.u32 %v5116, 4294901760
  %9621 = vmatpush.msra.mxu0 %v9620
  %v9622 = vand.u32 %v9464, 4294901760
  %v9623 = vsub.f32 %v9464, %v9622
  %v9624 = vand.u32 %v9623, 4294901760
  %9625 = vmatmul.f32.gmra.mxu0 %v9624
  %v9626 = vpop.f32.mrf.mxu0
  %v9627 = vadd.f32 %v9596, %v9626
  %9628 = vdwg.mxu0
  %9629 = vmatpush.msra.mxu0 0.0
  %9630 = vmatpush.msra.mxu0 0.0
  %9631 = vmatpush.msra.mxu0 0.0
  %9632 = vmatpush.msra.mxu0 0.0
  %9633 = vmatpush.msra.mxu0 0.0
  %9634 = vmatpush.msra.mxu0 0.0
  %9635 = vmatpush.msra.mxu0 0.0
  %9636 = vmatpush.msra.mxu0 0.0
  %v9637 = vand.u32 %v5130, 4294901760
  %v9638 = vsub.f32 %v5130, %v9637
  %v9639 = vand.u32 %v9638, 4294901760
  %9640 = vmatpush.msra.mxu0 %v9639
  %v9641 = vand.u32 %v5128, 4294901760
  %v9642 = vsub.f32 %v5128, %v9641
  %v9643 = vand.u32 %v9642, 4294901760
  %9644 = vmatpush.msra.mxu0 %v9643
  %v9645 = vand.u32 %v5126, 4294901760
  %v9646 = vsub.f32 %v5126, %v9645
  %v9647 = vand.u32 %v9646, 4294901760
  %9648 = vmatpush.msra.mxu0 %v9647
  %v9649 = vand.u32 %v5124, 4294901760
  %v9650 = vsub.f32 %v5124, %v9649
  %v9651 = vand.u32 %v9650, 4294901760
  %9652 = vmatpush.msra.mxu0 %v9651
  %v9653 = vand.u32 %v5122, 4294901760
  %v9654 = vsub.f32 %v5122, %v9653
  %v9655 = vand.u32 %v9654, 4294901760
  %9656 = vmatpush.msra.mxu0 %v9655
  %v9657 = vand.u32 %v5120, 4294901760
  %v9658 = vsub.f32 %v5120, %v9657
  %v9659 = vand.u32 %v9658, 4294901760
  %9660 = vmatpush.msra.mxu0 %v9659
  %v9661 = vand.u32 %v5118, 4294901760
  %v9662 = vsub.f32 %v5118, %v9661
  %v9663 = vand.u32 %v9662, 4294901760
  %9664 = vmatpush.msra.mxu0 %v9663
  %v9665 = vand.u32 %v5116, 4294901760
  %v9666 = vsub.f32 %v5116, %v9665
  %v9667 = vand.u32 %v9666, 4294901760
  %9668 = vmatpush.msra.mxu0 %v9667
  %v9669 = vand.u32 %v9464, 4294901760
  %9670 = vmatmul.f32.gmra.mxu0 %v9669
  %v9671 = vpop.f32.mrf.mxu0
  %v9672 = vadd.f32 %v9627, %v9671
  %9673 = vdwg.mxu0
  %9674 = vmatpush.msra.mxu0 0.0
  %9675 = vmatpush.msra.mxu0 0.0
  %9676 = vmatpush.msra.mxu0 0.0
  %9677 = vmatpush.msra.mxu0 0.0
  %9678 = vmatpush.msra.mxu0 0.0
  %9679 = vmatpush.msra.mxu0 0.0
  %9680 = vmatpush.msra.mxu0 0.0
  %9681 = vmatpush.msra.mxu0 0.0
  %v9682 = vand.u32 %v5130, 4294901760
  %9683 = vmatpush.msra.mxu0 %v9682
  %v9684 = vand.u32 %v5128, 4294901760
  %9685 = vmatpush.msra.mxu0 %v9684
  %v9686 = vand.u32 %v5126, 4294901760
  %9687 = vmatpush.msra.mxu0 %v9686
  %v9688 = vand.u32 %v5124, 4294901760
  %9689 = vmatpush.msra.mxu0 %v9688
  %v9690 = vand.u32 %v5122, 4294901760
  %9691 = vmatpush.msra.mxu0 %v9690
  %v9692 = vand.u32 %v5120, 4294901760
  %9693 = vmatpush.msra.mxu0 %v9692
  %v9694 = vand.u32 %v5118, 4294901760
  %9695 = vmatpush.msra.mxu0 %v9694
  %v9696 = vand.u32 %v5116, 4294901760
  %9697 = vmatpush.msra.mxu0 %v9696
  %v9698 = vand.u32 %v9464, 4294901760
  %9699 = vmatmul.f32.gmra.mxu0 %v9698
  %v9700 = vpop.f32.mrf.mxu0
  %v9701 = vadd.f32 %v9672, %v9700
  %9702 = vdwg.mxu0
  %9703 = vmatpush.msra.mxu0 0.0
  %9704 = vmatpush.msra.mxu0 0.0
  %9705 = vmatpush.msra.mxu0 0.0
  %9706 = vmatpush.msra.mxu0 0.0
  %9707 = vmatpush.msra.mxu0 0.0
  %9708 = vmatpush.msra.mxu0 0.0
  %9709 = vmatpush.msra.mxu0 0.0
  %9710 = vmatpush.msra.mxu0 0.0
  %v9711 = vand.u32 %v5131, 4294901760
  %9712 = vmatpush.msra.mxu0 %v9711
  %v9713 = vand.u32 %v5129, 4294901760
  %9714 = vmatpush.msra.mxu0 %v9713
  %v9715 = vand.u32 %v5127, 4294901760
  %9716 = vmatpush.msra.mxu0 %v9715
  %v9717 = vand.u32 %v5125, 4294901760
  %9718 = vmatpush.msra.mxu0 %v9717
  %v9719 = vand.u32 %v5123, 4294901760
  %9720 = vmatpush.msra.mxu0 %v9719
  %v9721 = vand.u32 %v5121, 4294901760
  %9722 = vmatpush.msra.mxu0 %v9721
  %v9723 = vand.u32 %v5119, 4294901760
  %9724 = vmatpush.msra.mxu0 %v9723
  %v9725 = vand.u32 %v5117, 4294901760
  %9726 = vmatpush.msra.mxu0 %v9725
  %v9727 = vand.u32 %v9464, 4294901760
  %v9728 = vsub.f32 %v9464, %v9727
  %v9729 = vand.u32 %v9728, 4294901760
  %v9730 = vsub.f32 %v9728, %v9729
  %v9731 = vand.u32 %v9730, 4294901760
  %9732 = vmatmul.f32.gmra.mxu0 %v9731
  %v9733 = vpop.f32.mrf.mxu0
  %v9734 = vadd.f32 0.0, %v9733
  %9735 = vdwg.mxu0
  %9736 = vmatpush.msra.mxu0 0.0
  %9737 = vmatpush.msra.mxu0 0.0
  %9738 = vmatpush.msra.mxu0 0.0
  %9739 = vmatpush.msra.mxu0 0.0
  %9740 = vmatpush.msra.mxu0 0.0
  %9741 = vmatpush.msra.mxu0 0.0
  %9742 = vmatpush.msra.mxu0 0.0
  %9743 = vmatpush.msra.mxu0 0.0
  %v9744 = vand.u32 %v5131, 4294901760
  %v9745 = vsub.f32 %v5131, %v9744
  %v9746 = vand.u32 %v9745, 4294901760
  %v9747 = vsub.f32 %v9745, %v9746
  %v9748 = vand.u32 %v9747, 4294901760
  %9749 = vmatpush.msra.mxu0 %v9748
  %v9750 = vand.u32 %v5129, 4294901760
  %v9751 = vsub.f32 %v5129, %v9750
  %v9752 = vand.u32 %v9751, 4294901760
  %v9753 = vsub.f32 %v9751, %v9752
  %v9754 = vand.u32 %v9753, 4294901760
  %9755 = vmatpush.msra.mxu0 %v9754
  %v9756 = vand.u32 %v5127, 4294901760
  %v9757 = vsub.f32 %v5127, %v9756
  %v9758 = vand.u32 %v9757, 4294901760
  %v9759 = vsub.f32 %v9757, %v9758
  %v9760 = vand.u32 %v9759, 4294901760
  %9761 = vmatpush.msra.mxu0 %v9760
  %v9762 = vand.u32 %v5125, 4294901760
  %v9763 = vsub.f32 %v5125, %v9762
  %v9764 = vand.u32 %v9763, 4294901760
  %v9765 = vsub.f32 %v9763, %v9764
  %v9766 = vand.u32 %v9765, 4294901760
  %9767 = vmatpush.msra.mxu0 %v9766
  %v9768 = vand.u32 %v5123, 4294901760
  %v9769 = vsub.f32 %v5123, %v9768
  %v9770 = vand.u32 %v9769, 4294901760
  %v9771 = vsub.f32 %v9769, %v9770
  %v9772 = vand.u32 %v9771, 4294901760
  %9773 = vmatpush.msra.mxu0 %v9772
  %v9774 = vand.u32 %v5121, 4294901760
  %v9775 = vsub.f32 %v5121, %v9774
  %v9776 = vand.u32 %v9775, 4294901760
  %v9777 = vsub.f32 %v9775, %v9776
  %v9778 = vand.u32 %v9777, 4294901760
  %9779 = vmatpush.msra.mxu0 %v9778
  %v9780 = vand.u32 %v5119, 4294901760
  %v9781 = vsub.f32 %v5119, %v9780
  %v9782 = vand.u32 %v9781, 4294901760
  %v9783 = vsub.f32 %v9781, %v9782
  %v9784 = vand.u32 %v9783, 4294901760
  %9785 = vmatpush.msra.mxu0 %v9784
  %v9786 = vand.u32 %v5117, 4294901760
  %v9787 = vsub.f32 %v5117, %v9786
  %v9788 = vand.u32 %v9787, 4294901760
  %v9789 = vsub.f32 %v9787, %v9788
  %v9790 = vand.u32 %v9789, 4294901760
  %9791 = vmatpush.msra.mxu0 %v9790
  %v9792 = vand.u32 %v9464, 4294901760
  %9793 = vmatmul.f32.gmra.mxu0 %v9792
  %v9794 = vpop.f32.mrf.mxu0
  %v9795 = vadd.f32 %v9734, %v9794
  %9796 = vdwg.mxu0
  %9797 = vmatpush.msra.mxu0 0.0
  %9798 = vmatpush.msra.mxu0 0.0
  %9799 = vmatpush.msra.mxu0 0.0
  %9800 = vmatpush.msra.mxu0 0.0
  %9801 = vmatpush.msra.mxu0 0.0
  %9802 = vmatpush.msra.mxu0 0.0
  %9803 = vmatpush.msra.mxu0 0.0
  %9804 = vmatpush.msra.mxu0 0.0
  %v9805 = vand.u32 %v5131, 4294901760
  %v9806 = vsub.f32 %v5131, %v9805
  %9807 = vmatpush.msra.mxu0 %v9806
  %v9808 = vand.u32 %v5129, 4294901760
  %v9809 = vsub.f32 %v5129, %v9808
  %9810 = vmatpush.msra.mxu0 %v9809
  %v9811 = vand.u32 %v5127, 4294901760
  %v9812 = vsub.f32 %v5127, %v9811
  %9813 = vmatpush.msra.mxu0 %v9812
  %v9814 = vand.u32 %v5125, 4294901760
  %v9815 = vsub.f32 %v5125, %v9814
  %9816 = vmatpush.msra.mxu0 %v9815
  %v9817 = vand.u32 %v5123, 4294901760
  %v9818 = vsub.f32 %v5123, %v9817
  %9819 = vmatpush.msra.mxu0 %v9818
  %v9820 = vand.u32 %v5121, 4294901760
  %v9821 = vsub.f32 %v5121, %v9820
  %9822 = vmatpush.msra.mxu0 %v9821
  %v9823 = vand.u32 %v5119, 4294901760
  %v9824 = vsub.f32 %v5119, %v9823
  %9825 = vmatpush.msra.mxu0 %v9824
  %v9826 = vand.u32 %v5117, 4294901760
  %v9827 = vsub.f32 %v5117, %v9826
  %9828 = vmatpush.msra.mxu0 %v9827
  %v9829 = vand.u32 %v9464, 4294901760
  %v9830 = vsub.f32 %v9464, %v9829
  %9831 = vmatmul.f32.gmra.mxu0 %v9830
  %v9832 = vpop.f32.mrf.mxu0
  %v9833 = vadd.f32 %v9795, %v9832
  %9834 = vdwg.mxu0
  %9835 = vmatpush.msra.mxu0 0.0
  %9836 = vmatpush.msra.mxu0 0.0
  %9837 = vmatpush.msra.mxu0 0.0
  %9838 = vmatpush.msra.mxu0 0.0
  %9839 = vmatpush.msra.mxu0 0.0
  %9840 = vmatpush.msra.mxu0 0.0
  %9841 = vmatpush.msra.mxu0 0.0
  %9842 = vmatpush.msra.mxu0 0.0
  %v9843 = vand.u32 %v5131, 4294901760
  %9844 = vmatpush.msra.mxu0 %v9843
  %v9845 = vand.u32 %v5129, 4294901760
  %9846 = vmatpush.msra.mxu0 %v9845
  %v9847 = vand.u32 %v5127, 4294901760
  %9848 = vmatpush.msra.mxu0 %v9847
  %v9849 = vand.u32 %v5125, 4294901760
  %9850 = vmatpush.msra.mxu0 %v9849
  %v9851 = vand.u32 %v5123, 4294901760
  %9852 = vmatpush.msra.mxu0 %v9851
  %v9853 = vand.u32 %v5121, 4294901760
  %9854 = vmatpush.msra.mxu0 %v9853
  %v9855 = vand.u32 %v5119, 4294901760
  %9856 = vmatpush.msra.mxu0 %v9855
  %v9857 = vand.u32 %v5117, 4294901760
  %9858 = vmatpush.msra.mxu0 %v9857
  %v9859 = vand.u32 %v9464, 4294901760
  %v9860 = vsub.f32 %v9464, %v9859
  %v9861 = vand.u32 %v9860, 4294901760
  %9862 = vmatmul.f32.gmra.mxu0 %v9861
  %v9863 = vpop.f32.mrf.mxu0
  %v9864 = vadd.f32 %v9833, %v9863
  %9865 = vdwg.mxu0
  %9866 = vmatpush.msra.mxu0 0.0
  %9867 = vmatpush.msra.mxu0 0.0
  %9868 = vmatpush.msra.mxu0 0.0
  %9869 = vmatpush.msra.mxu0 0.0
  %9870 = vmatpush.msra.mxu0 0.0
  %9871 = vmatpush.msra.mxu0 0.0
  %9872 = vmatpush.msra.mxu0 0.0
  %9873 = vmatpush.msra.mxu0 0.0
  %v9874 = vand.u32 %v5131, 4294901760
  %v9875 = vsub.f32 %v5131, %v9874
  %v9876 = vand.u32 %v9875, 4294901760
  %9877 = vmatpush.msra.mxu0 %v9876
  %v9878 = vand.u32 %v5129, 4294901760
  %v9879 = vsub.f32 %v5129, %v9878
  %v9880 = vand.u32 %v9879, 4294901760
  %9881 = vmatpush.msra.mxu0 %v9880
  %v9882 = vand.u32 %v5127, 4294901760
  %v9883 = vsub.f32 %v5127, %v9882
  %v9884 = vand.u32 %v9883, 4294901760
  %9885 = vmatpush.msra.mxu0 %v9884
  %v9886 = vand.u32 %v5125, 4294901760
  %v9887 = vsub.f32 %v5125, %v9886
  %v9888 = vand.u32 %v9887, 4294901760
  %9889 = vmatpush.msra.mxu0 %v9888
  %v9890 = vand.u32 %v5123, 4294901760
  %v9891 = vsub.f32 %v5123, %v9890
  %v9892 = vand.u32 %v9891, 4294901760
  %9893 = vmatpush.msra.mxu0 %v9892
  %v9894 = vand.u32 %v5121, 4294901760
  %v9895 = vsub.f32 %v5121, %v9894
  %v9896 = vand.u32 %v9895, 4294901760
  %9897 = vmatpush.msra.mxu0 %v9896
  %v9898 = vand.u32 %v5119, 4294901760
  %v9899 = vsub.f32 %v5119, %v9898
  %v9900 = vand.u32 %v9899, 4294901760
  %9901 = vmatpush.msra.mxu0 %v9900
  %v9902 = vand.u32 %v5117, 4294901760
  %v9903 = vsub.f32 %v5117, %v9902
  %v9904 = vand.u32 %v9903, 4294901760
  %9905 = vmatpush.msra.mxu0 %v9904
  %v9906 = vand.u32 %v9464, 4294901760
  %9907 = vmatmul.f32.gmra.mxu0 %v9906
  %v9908 = vpop.f32.mrf.mxu0
  %v9909 = vadd.f32 %v9864, %v9908
  %9910 = vdwg.mxu0
  %9911 = vmatpush.msra.mxu0 0.0
  %9912 = vmatpush.msra.mxu0 0.0
  %9913 = vmatpush.msra.mxu0 0.0
  %9914 = vmatpush.msra.mxu0 0.0
  %9915 = vmatpush.msra.mxu0 0.0
  %9916 = vmatpush.msra.mxu0 0.0
  %9917 = vmatpush.msra.mxu0 0.0
  %9918 = vmatpush.msra.mxu0 0.0
  %v9919 = vand.u32 %v5131, 4294901760
  %9920 = vmatpush.msra.mxu0 %v9919
  %v9921 = vand.u32 %v5129, 4294901760
  %9922 = vmatpush.msra.mxu0 %v9921
  %v9923 = vand.u32 %v5127, 4294901760
  %9924 = vmatpush.msra.mxu0 %v9923
  %v9925 = vand.u32 %v5125, 4294901760
  %9926 = vmatpush.msra.mxu0 %v9925
  %v9927 = vand.u32 %v5123, 4294901760
  %9928 = vmatpush.msra.mxu0 %v9927
  %v9929 = vand.u32 %v5121, 4294901760
  %9930 = vmatpush.msra.mxu0 %v9929
  %v9931 = vand.u32 %v5119, 4294901760
  %9932 = vmatpush.msra.mxu0 %v9931
  %v9933 = vand.u32 %v5117, 4294901760
  %9934 = vmatpush.msra.mxu0 %v9933
  %v9935 = vand.u32 %v9464, 4294901760
  %9936 = vmatmul.f32.gmra.mxu0 %v9935
  %v9937 = vpop.f32.mrf.mxu0
  %v9938 = vadd.f32 %v9909, %v9937
  %9939 = vdwg.mxu0
  %v9940 = vadd.f32 %v5722, %v9701
  %v9941 = vadd.f32 %v6280, %v9938
  %v9942 = vxor.u32 %v9940, 2147483648
  %v9943 = vxor.u32 %v9941, 2147483648
  %v9944 = vmul.f32 %v9942, 1.442695
  %v9945 = vpow.pop %v9944
  %v9946 = vmul.f32 %v9943, 1.442695
  %v9947 = vpow.pop %v9946
  %v9948 = vadd.f32 %v9945, 1.0
  %v9949 = vadd.f32 %v9947, 1.0
  %v9950 = vrcp.pop %v9948
  %v9951 = vmul.f32 %v9948, %v9950
  %v9952 = vsub.f32 1.0, %v9951
  %v9953 = vmul.f32 %v9950, %v9952
  %v9954 = vadd.f32 %v9950, %v9953
  %vm9955 = vweird.f32 %v9948
  %vm9956 = vweird.f32 %v9950
  %vm9957 = vmor %vm9955, %vm9956
  %v9958 = vsel %vm9957, %v9950, %v9954
  %v9959 = vand.u32 2147483647, %v9948
  %vm9960 = vcmp.eq.f32.partialorder %v9959, 8.507059e+37
  %v9961 = vand.u32 %v9948, 2147483648
  %v9962 = vor.u32 1.1754944e-38, %v9961
  %v9963 = vsel %vm9960, %v9962, %v9958
  %v9964 = vmul.f32 1.0, %v9963
  %v9965 = vrcp.pop %v9949
  %v9966 = vmul.f32 %v9949, %v9965
  %v9967 = vsub.f32 1.0, %v9966
  %v9968 = vmul.f32 %v9965, %v9967
  %v9969 = vadd.f32 %v9965, %v9968
  %vm9970 = vweird.f32 %v9949
  %vm9971 = vweird.f32 %v9965
  %vm9972 = vmor %vm9970, %vm9971
  %v9973 = vsel %vm9972, %v9965, %v9969
  %v9974 = vand.u32 2147483647, %v9949
  %vm9975 = vcmp.eq.f32.partialorder %v9974, 8.507059e+37
  %v9976 = vand.u32 %v9949, 2147483648
  %v9977 = vor.u32 1.1754944e-38, %v9976
  %v9978 = vsel %vm9975, %v9977, %v9973
  %v9979 = vmul.f32 1.0, %v9978
  %v9980 = vmul.f32 %v9979, 2.0
  %v9981 = vsub.f32 %v9980, 1.0
  %v9982 = vmul.f32 %v9964, %v9458
  %v9983 = vmul.f32 %v9964, %v9981
  %9985 = vrot.lane.b32.xlu0 %v9983, 64
  %v9986 = vpop.permute.xlu0 %9985
  %v9988 = vadd.f32 %v9982, %v9986
  %v9989 = vtanh.pop %v9988
  %v9990 = vmul.f32 %v9979, %v9989
  %9992 = vrot.lane.b32.xlu0 %v9990, 64
  %v9993 = vpop.permute.xlu0 %9992
  %v9994 = vsel %vm858, %v9993, 0
  %9996 = vmatpush.msra.mxu0 0.0
  %9997 = vmatpush.msra.mxu0 0.0
  %9998 = vmatpush.msra.mxu0 0.0
  %9999 = vmatpush.msra.mxu0 0.0
  %10000 = vmatpush.msra.mxu0 0.0
  %10001 = vmatpush.msra.mxu0 0.0
  %10002 = vmatpush.msra.mxu0 0.0
  %10003 = vmatpush.msra.mxu0 0.0
  %v10004 = vand.u32 %v5130, 4294901760
  %10005 = vmatpush.msra.mxu0 %v10004
  %v10006 = vand.u32 %v5128, 4294901760
  %10007 = vmatpush.msra.mxu0 %v10006
  %v10008 = vand.u32 %v5126, 4294901760
  %10009 = vmatpush.msra.mxu0 %v10008
  %v10010 = vand.u32 %v5124, 4294901760
  %10011 = vmatpush.msra.mxu0 %v10010
  %v10012 = vand.u32 %v5122, 4294901760
  %10013 = vmatpush.msra.mxu0 %v10012
  %v10014 = vand.u32 %v5120, 4294901760
  %10015 = vmatpush.msra.mxu0 %v10014
  %v10016 = vand.u32 %v5118, 4294901760
  %10017 = vmatpush.msra.mxu0 %v10016
  %v10018 = vand.u32 %v5116, 4294901760
  %10019 = vmatpush.msra.mxu0 %v10018
  %v10020 = vand.u32 %v9994, 4294901760
  %v10021 = vsub.f32 %v9994, %v10020
  %v10022 = vand.u32 %v10021, 4294901760
  %v10023 = vsub.f32 %v10021, %v10022
  %v10024 = vand.u32 %v10023, 4294901760
  %10025 = vmatmul.f32.gmra.mxu0 %v10024
  %v10026 = vpop.f32.mrf.mxu0
  %v10027 = vadd.f32 0.0, %v10026
  %10028 = vdwg.mxu0
  %10029 = vmatpush.msra.mxu0 0.0
  %10030 = vmatpush.msra.mxu0 0.0
  %10031 = vmatpush.msra.mxu0 0.0
  %10032 = vmatpush.msra.mxu0 0.0
  %10033 = vmatpush.msra.mxu0 0.0
  %10034 = vmatpush.msra.mxu0 0.0
  %10035 = vmatpush.msra.mxu0 0.0
  %10036 = vmatpush.msra.mxu0 0.0
  %v10037 = vand.u32 %v5130, 4294901760
  %v10038 = vsub.f32 %v5130, %v10037
  %v10039 = vand.u32 %v10038, 4294901760
  %v10040 = vsub.f32 %v10038, %v10039
  %v10041 = vand.u32 %v10040, 4294901760
  %10042 = vmatpush.msra.mxu0 %v10041
  %v10043 = vand.u32 %v5128, 4294901760
  %v10044 = vsub.f32 %v5128, %v10043
  %v10045 = vand.u32 %v10044, 4294901760
  %v10046 = vsub.f32 %v10044, %v10045
  %v10047 = vand.u32 %v10046, 4294901760
  %10048 = vmatpush.msra.mxu0 %v10047
  %v10049 = vand.u32 %v5126, 4294901760
  %v10050 = vsub.f32 %v5126, %v10049
  %v10051 = vand.u32 %v10050, 4294901760
  %v10052 = vsub.f32 %v10050, %v10051
  %v10053 = vand.u32 %v10052, 4294901760
  %10054 = vmatpush.msra.mxu0 %v10053
  %v10055 = vand.u32 %v5124, 4294901760
  %v10056 = vsub.f32 %v5124, %v10055
  %v10057 = vand.u32 %v10056, 4294901760
  %v10058 = vsub.f32 %v10056, %v10057
  %v10059 = vand.u32 %v10058, 4294901760
  %10060 = vmatpush.msra.mxu0 %v10059
  %v10061 = vand.u32 %v5122, 4294901760
  %v10062 = vsub.f32 %v5122, %v10061
  %v10063 = vand.u32 %v10062, 4294901760
  %v10064 = vsub.f32 %v10062, %v10063
  %v10065 = vand.u32 %v10064, 4294901760
  %10066 = vmatpush.msra.mxu0 %v10065
  %v10067 = vand.u32 %v5120, 4294901760
  %v10068 = vsub.f32 %v5120, %v10067
  %v10069 = vand.u32 %v10068, 4294901760
  %v10070 = vsub.f32 %v10068, %v10069
  %v10071 = vand.u32 %v10070, 4294901760
  %10072 = vmatpush.msra.mxu0 %v10071
  %v10073 = vand.u32 %v5118, 4294901760
  %v10074 = vsub.f32 %v5118, %v10073
  %v10075 = vand.u32 %v10074, 4294901760
  %v10076 = vsub.f32 %v10074, %v10075
  %v10077 = vand.u32 %v10076, 4294901760
  %10078 = vmatpush.msra.mxu0 %v10077
  %v10079 = vand.u32 %v5116, 4294901760
  %v10080 = vsub.f32 %v5116, %v10079
  %v10081 = vand.u32 %v10080, 4294901760
  %v10082 = vsub.f32 %v10080, %v10081
  %v10083 = vand.u32 %v10082, 4294901760
  %10084 = vmatpush.msra.mxu0 %v10083
  %v10085 = vand.u32 %v9994, 4294901760
  %10086 = vmatmul.f32.gmra.mxu0 %v10085
  %v10087 = vpop.f32.mrf.mxu0
  %v10088 = vadd.f32 %v10027, %v10087
  %10089 = vdwg.mxu0
  %10090 = vmatpush.msra.mxu0 0.0
  %10091 = vmatpush.msra.mxu0 0.0
  %10092 = vmatpush.msra.mxu0 0.0
  %10093 = vmatpush.msra.mxu0 0.0
  %10094 = vmatpush.msra.mxu0 0.0
  %10095 = vmatpush.msra.mxu0 0.0
  %10096 = vmatpush.msra.mxu0 0.0
  %10097 = vmatpush.msra.mxu0 0.0
  %v10098 = vand.u32 %v5130, 4294901760
  %v10099 = vsub.f32 %v5130, %v10098
  %10100 = vmatpush.msra.mxu0 %v10099
  %v10101 = vand.u32 %v5128, 4294901760
  %v10102 = vsub.f32 %v5128, %v10101
  %10103 = vmatpush.msra.mxu0 %v10102
  %v10104 = vand.u32 %v5126, 4294901760
  %v10105 = vsub.f32 %v5126, %v10104
  %10106 = vmatpush.msra.mxu0 %v10105
  %v10107 = vand.u32 %v5124, 4294901760
  %v10108 = vsub.f32 %v5124, %v10107
  %10109 = vmatpush.msra.mxu0 %v10108
  %v10110 = vand.u32 %v5122, 4294901760
  %v10111 = vsub.f32 %v5122, %v10110
  %10112 = vmatpush.msra.mxu0 %v10111
  %v10113 = vand.u32 %v5120, 4294901760
  %v10114 = vsub.f32 %v5120, %v10113
  %10115 = vmatpush.msra.mxu0 %v10114
  %v10116 = vand.u32 %v5118, 4294901760
  %v10117 = vsub.f32 %v5118, %v10116
  %10118 = vmatpush.msra.mxu0 %v10117
  %v10119 = vand.u32 %v5116, 4294901760
  %v10120 = vsub.f32 %v5116, %v10119
  %10121 = vmatpush.msra.mxu0 %v10120
  %v10122 = vand.u32 %v9994, 4294901760
  %v10123 = vsub.f32 %v9994, %v10122
  %10124 = vmatmul.f32.gmra.mxu0 %v10123
  %v10125 = vpop.f32.mrf.mxu0
  %v10126 = vadd.f32 %v10088, %v10125
  %10127 = vdwg.mxu0
  %10128 = vmatpush.msra.mxu0 0.0
  %10129 = vmatpush.msra.mxu0 0.0
  %10130 = vmatpush.msra.mxu0 0.0
  %10131 = vmatpush.msra.mxu0 0.0
  %10132 = vmatpush.msra.mxu0 0.0
  %10133 = vmatpush.msra.mxu0 0.0
  %10134 = vmatpush.msra.mxu0 0.0
  %10135 = vmatpush.msra.mxu0 0.0
  %v10136 = vand.u32 %v5130, 4294901760
  %10137 = vmatpush.msra.mxu0 %v10136
  %v10138 = vand.u32 %v5128, 4294901760
  %10139 = vmatpush.msra.mxu0 %v10138
  %v10140 = vand.u32 %v5126, 4294901760
  %10141 = vmatpush.msra.mxu0 %v10140
  %v10142 = vand.u32 %v5124, 4294901760
  %10143 = vmatpush.msra.mxu0 %v10142
  %v10144 = vand.u32 %v5122, 4294901760
  %10145 = vmatpush.msra.mxu0 %v10144
  %v10146 = vand.u32 %v5120, 4294901760
  %10147 = vmatpush.msra.mxu0 %v10146
  %v10148 = vand.u32 %v5118, 4294901760
  %10149 = vmatpush.msra.mxu0 %v10148
  %v10150 = vand.u32 %v5116, 4294901760
  %10151 = vmatpush.msra.mxu0 %v10150
  %v10152 = vand.u32 %v9994, 4294901760
  %v10153 = vsub.f32 %v9994, %v10152
  %v10154 = vand.u32 %v10153, 4294901760
  %10155 = vmatmul.f32.gmra.mxu0 %v10154
  %v10156 = vpop.f32.mrf.mxu0
  %v10157 = vadd.f32 %v10126, %v10156
  %10158 = vdwg.mxu0
  %10159 = vmatpush.msra.mxu0 0.0
  %10160 = vmatpush.msra.mxu0 0.0
  %10161 = vmatpush.msra.mxu0 0.0
  %10162 = vmatpush.msra.mxu0 0.0
  %10163 = vmatpush.msra.mxu0 0.0
  %10164 = vmatpush.msra.mxu0 0.0
  %10165 = vmatpush.msra.mxu0 0.0
  %10166 = vmatpush.msra.mxu0 0.0
  %v10167 = vand.u32 %v5130, 4294901760
  %v10168 = vsub.f32 %v5130, %v10167
  %v10169 = vand.u32 %v10168, 4294901760
  %10170 = vmatpush.msra.mxu0 %v10169
  %v10171 = vand.u32 %v5128, 4294901760
  %v10172 = vsub.f32 %v5128, %v10171
  %v10173 = vand.u32 %v10172, 4294901760
  %10174 = vmatpush.msra.mxu0 %v10173
  %v10175 = vand.u32 %v5126, 4294901760
  %v10176 = vsub.f32 %v5126, %v10175
  %v10177 = vand.u32 %v10176, 4294901760
  %10178 = vmatpush.msra.mxu0 %v10177
  %v10179 = vand.u32 %v5124, 4294901760
  %v10180 = vsub.f32 %v5124, %v10179
  %v10181 = vand.u32 %v10180, 4294901760
  %10182 = vmatpush.msra.mxu0 %v10181
  %v10183 = vand.u32 %v5122, 4294901760
  %v10184 = vsub.f32 %v5122, %v10183
  %v10185 = vand.u32 %v10184, 4294901760
  %10186 = vmatpush.msra.mxu0 %v10185
  %v10187 = vand.u32 %v5120, 4294901760
  %v10188 = vsub.f32 %v5120, %v10187
  %v10189 = vand.u32 %v10188, 4294901760
  %10190 = vmatpush.msra.mxu0 %v10189
  %v10191 = vand.u32 %v5118, 4294901760
  %v10192 = vsub.f32 %v5118, %v10191
  %v10193 = vand.u32 %v10192, 4294901760
  %10194 = vmatpush.msra.mxu0 %v10193
  %v10195 = vand.u32 %v5116, 4294901760
  %v10196 = vsub.f32 %v5116, %v10195
  %v10197 = vand.u32 %v10196, 4294901760
  %10198 = vmatpush.msra.mxu0 %v10197
  %v10199 = vand.u32 %v9994, 4294901760
  %10200 = vmatmul.f32.gmra.mxu0 %v10199
  %v10201 = vpop.f32.mrf.mxu0
  %v10202 = vadd.f32 %v10157, %v10201
  %10203 = vdwg.mxu0
  %10204 = vmatpush.msra.mxu0 0.0
  %10205 = vmatpush.msra.mxu0 0.0
  %10206 = vmatpush.msra.mxu0 0.0
  %10207 = vmatpush.msra.mxu0 0.0
  %10208 = vmatpush.msra.mxu0 0.0
  %10209 = vmatpush.msra.mxu0 0.0
  %10210 = vmatpush.msra.mxu0 0.0
  %10211 = vmatpush.msra.mxu0 0.0
  %v10212 = vand.u32 %v5130, 4294901760
  %10213 = vmatpush.msra.mxu0 %v10212
  %v10214 = vand.u32 %v5128, 4294901760
  %10215 = vmatpush.msra.mxu0 %v10214
  %v10216 = vand.u32 %v5126, 4294901760
  %10217 = vmatpush.msra.mxu0 %v10216
  %v10218 = vand.u32 %v5124, 4294901760
  %10219 = vmatpush.msra.mxu0 %v10218
  %v10220 = vand.u32 %v5122, 4294901760
  %10221 = vmatpush.msra.mxu0 %v10220
  %v10222 = vand.u32 %v5120, 4294901760
  %10223 = vmatpush.msra.mxu0 %v10222
  %v10224 = vand.u32 %v5118, 4294901760
  %10225 = vmatpush.msra.mxu0 %v10224
  %v10226 = vand.u32 %v5116, 4294901760
  %10227 = vmatpush.msra.mxu0 %v10226
  %v10228 = vand.u32 %v9994, 4294901760
  %10229 = vmatmul.f32.gmra.mxu0 %v10228
  %v10230 = vpop.f32.mrf.mxu0
  %v10231 = vadd.f32 %v10202, %v10230
  %10232 = vdwg.mxu0
  %10233 = vmatpush.msra.mxu0 0.0
  %10234 = vmatpush.msra.mxu0 0.0
  %10235 = vmatpush.msra.mxu0 0.0
  %10236 = vmatpush.msra.mxu0 0.0
  %10237 = vmatpush.msra.mxu0 0.0
  %10238 = vmatpush.msra.mxu0 0.0
  %10239 = vmatpush.msra.mxu0 0.0
  %10240 = vmatpush.msra.mxu0 0.0
  %v10241 = vand.u32 %v5131, 4294901760
  %10242 = vmatpush.msra.mxu0 %v10241
  %v10243 = vand.u32 %v5129, 4294901760
  %10244 = vmatpush.msra.mxu0 %v10243
  %v10245 = vand.u32 %v5127, 4294901760
  %10246 = vmatpush.msra.mxu0 %v10245
  %v10247 = vand.u32 %v5125, 4294901760
  %10248 = vmatpush.msra.mxu0 %v10247
  %v10249 = vand.u32 %v5123, 4294901760
  %10250 = vmatpush.msra.mxu0 %v10249
  %v10251 = vand.u32 %v5121, 4294901760
  %10252 = vmatpush.msra.mxu0 %v10251
  %v10253 = vand.u32 %v5119, 4294901760
  %10254 = vmatpush.msra.mxu0 %v10253
  %v10255 = vand.u32 %v5117, 4294901760
  %10256 = vmatpush.msra.mxu0 %v10255
  %v10257 = vand.u32 %v9994, 4294901760
  %v10258 = vsub.f32 %v9994, %v10257
  %v10259 = vand.u32 %v10258, 4294901760
  %v10260 = vsub.f32 %v10258, %v10259
  %v10261 = vand.u32 %v10260, 4294901760
  %10262 = vmatmul.f32.gmra.mxu0 %v10261
  %v10263 = vpop.f32.mrf.mxu0
  %v10264 = vadd.f32 0.0, %v10263
  %10265 = vdwg.mxu0
  %10266 = vmatpush.msra.mxu0 0.0
  %10267 = vmatpush.msra.mxu0 0.0
  %10268 = vmatpush.msra.mxu0 0.0
  %10269 = vmatpush.msra.mxu0 0.0
  %10270 = vmatpush.msra.mxu0 0.0
  %10271 = vmatpush.msra.mxu0 0.0
  %10272 = vmatpush.msra.mxu0 0.0
  %10273 = vmatpush.msra.mxu0 0.0
  %v10274 = vand.u32 %v5131, 4294901760
  %v10275 = vsub.f32 %v5131, %v10274
  %v10276 = vand.u32 %v10275, 4294901760
  %v10277 = vsub.f32 %v10275, %v10276
  %v10278 = vand.u32 %v10277, 4294901760
  %10279 = vmatpush.msra.mxu0 %v10278
  %v10280 = vand.u32 %v5129, 4294901760
  %v10281 = vsub.f32 %v5129, %v10280
  %v10282 = vand.u32 %v10281, 4294901760
  %v10283 = vsub.f32 %v10281, %v10282
  %v10284 = vand.u32 %v10283, 4294901760
  %10285 = vmatpush.msra.mxu0 %v10284
  %v10286 = vand.u32 %v5127, 4294901760
  %v10287 = vsub.f32 %v5127, %v10286
  %v10288 = vand.u32 %v10287, 4294901760
  %v10289 = vsub.f32 %v10287, %v10288
  %v10290 = vand.u32 %v10289, 4294901760
  %10291 = vmatpush.msra.mxu0 %v10290
  %v10292 = vand.u32 %v5125, 4294901760
  %v10293 = vsub.f32 %v5125, %v10292
  %v10294 = vand.u32 %v10293, 4294901760
  %v10295 = vsub.f32 %v10293, %v10294
  %v10296 = vand.u32 %v10295, 4294901760
  %10297 = vmatpush.msra.mxu0 %v10296
  %v10298 = vand.u32 %v5123, 4294901760
  %v10299 = vsub.f32 %v5123, %v10298
  %v10300 = vand.u32 %v10299, 4294901760
  %v10301 = vsub.f32 %v10299, %v10300
  %v10302 = vand.u32 %v10301, 4294901760
  %10303 = vmatpush.msra.mxu0 %v10302
  %v10304 = vand.u32 %v5121, 4294901760
  %v10305 = vsub.f32 %v5121, %v10304
  %v10306 = vand.u32 %v10305, 4294901760
  %v10307 = vsub.f32 %v10305, %v10306
  %v10308 = vand.u32 %v10307, 4294901760
  %10309 = vmatpush.msra.mxu0 %v10308
  %v10310 = vand.u32 %v5119, 4294901760
  %v10311 = vsub.f32 %v5119, %v10310
  %v10312 = vand.u32 %v10311, 4294901760
  %v10313 = vsub.f32 %v10311, %v10312
  %v10314 = vand.u32 %v10313, 4294901760
  %10315 = vmatpush.msra.mxu0 %v10314
  %v10316 = vand.u32 %v5117, 4294901760
  %v10317 = vsub.f32 %v5117, %v10316
  %v10318 = vand.u32 %v10317, 4294901760
  %v10319 = vsub.f32 %v10317, %v10318
  %v10320 = vand.u32 %v10319, 4294901760
  %10321 = vmatpush.msra.mxu0 %v10320
  %v10322 = vand.u32 %v9994, 4294901760
  %10323 = vmatmul.f32.gmra.mxu0 %v10322
  %v10324 = vpop.f32.mrf.mxu0
  %v10325 = vadd.f32 %v10264, %v10324
  %10326 = vdwg.mxu0
  %10327 = vmatpush.msra.mxu0 0.0
  %10328 = vmatpush.msra.mxu0 0.0
  %10329 = vmatpush.msra.mxu0 0.0
  %10330 = vmatpush.msra.mxu0 0.0
  %10331 = vmatpush.msra.mxu0 0.0
  %10332 = vmatpush.msra.mxu0 0.0
  %10333 = vmatpush.msra.mxu0 0.0
  %10334 = vmatpush.msra.mxu0 0.0
  %v10335 = vand.u32 %v5131, 4294901760
  %v10336 = vsub.f32 %v5131, %v10335
  %10337 = vmatpush.msra.mxu0 %v10336
  %v10338 = vand.u32 %v5129, 4294901760
  %v10339 = vsub.f32 %v5129, %v10338
  %10340 = vmatpush.msra.mxu0 %v10339
  %v10341 = vand.u32 %v5127, 4294901760
  %v10342 = vsub.f32 %v5127, %v10341
  %10343 = vmatpush.msra.mxu0 %v10342
  %v10344 = vand.u32 %v5125, 4294901760
  %v10345 = vsub.f32 %v5125, %v10344
  %10346 = vmatpush.msra.mxu0 %v10345
  %v10347 = vand.u32 %v5123, 4294901760
  %v10348 = vsub.f32 %v5123, %v10347
  %10349 = vmatpush.msra.mxu0 %v10348
  %v10350 = vand.u32 %v5121, 4294901760
  %v10351 = vsub.f32 %v5121, %v10350
  %10352 = vmatpush.msra.mxu0 %v10351
  %v10353 = vand.u32 %v5119, 4294901760
  %v10354 = vsub.f32 %v5119, %v10353
  %10355 = vmatpush.msra.mxu0 %v10354
  %v10356 = vand.u32 %v5117, 4294901760
  %v10357 = vsub.f32 %v5117, %v10356
  %10358 = vmatpush.msra.mxu0 %v10357
  %v10359 = vand.u32 %v9994, 4294901760
  %v10360 = vsub.f32 %v9994, %v10359
  %10361 = vmatmul.f32.gmra.mxu0 %v10360
  %v10362 = vpop.f32.mrf.mxu0
  %v10363 = vadd.f32 %v10325, %v10362
  %10364 = vdwg.mxu0
  %10365 = vmatpush.msra.mxu0 0.0
  %10366 = vmatpush.msra.mxu0 0.0
  %10367 = vmatpush.msra.mxu0 0.0
  %10368 = vmatpush.msra.mxu0 0.0
  %10369 = vmatpush.msra.mxu0 0.0
  %10370 = vmatpush.msra.mxu0 0.0
  %10371 = vmatpush.msra.mxu0 0.0
  %10372 = vmatpush.msra.mxu0 0.0
  %v10373 = vand.u32 %v5131, 4294901760
  %10374 = vmatpush.msra.mxu0 %v10373
  %v10375 = vand.u32 %v5129, 4294901760
  %10376 = vmatpush.msra.mxu0 %v10375
  %v10377 = vand.u32 %v5127, 4294901760
  %10378 = vmatpush.msra.mxu0 %v10377
  %v10379 = vand.u32 %v5125, 4294901760
  %10380 = vmatpush.msra.mxu0 %v10379
  %v10381 = vand.u32 %v5123, 4294901760
  %10382 = vmatpush.msra.mxu0 %v10381
  %v10383 = vand.u32 %v5121, 4294901760
  %10384 = vmatpush.msra.mxu0 %v10383
  %v10385 = vand.u32 %v5119, 4294901760
  %10386 = vmatpush.msra.mxu0 %v10385
  %v10387 = vand.u32 %v5117, 4294901760
  %10388 = vmatpush.msra.mxu0 %v10387
  %v10389 = vand.u32 %v9994, 4294901760
  %v10390 = vsub.f32 %v9994, %v10389
  %v10391 = vand.u32 %v10390, 4294901760
  %10392 = vmatmul.f32.gmra.mxu0 %v10391
  %v10393 = vpop.f32.mrf.mxu0
  %v10394 = vadd.f32 %v10363, %v10393
  %10395 = vdwg.mxu0
  %10396 = vmatpush.msra.mxu0 0.0
  %10397 = vmatpush.msra.mxu0 0.0
  %10398 = vmatpush.msra.mxu0 0.0
  %10399 = vmatpush.msra.mxu0 0.0
  %10400 = vmatpush.msra.mxu0 0.0
  %10401 = vmatpush.msra.mxu0 0.0
  %10402 = vmatpush.msra.mxu0 0.0
  %10403 = vmatpush.msra.mxu0 0.0
  %v10404 = vand.u32 %v5131, 4294901760
  %v10405 = vsub.f32 %v5131, %v10404
  %v10406 = vand.u32 %v10405, 4294901760
  %10407 = vmatpush.msra.mxu0 %v10406
  %v10408 = vand.u32 %v5129, 4294901760
  %v10409 = vsub.f32 %v5129, %v10408
  %v10410 = vand.u32 %v10409, 4294901760
  %10411 = vmatpush.msra.mxu0 %v10410
  %v10412 = vand.u32 %v5127, 4294901760
  %v10413 = vsub.f32 %v5127, %v10412
  %v10414 = vand.u32 %v10413, 4294901760
  %10415 = vmatpush.msra.mxu0 %v10414
  %v10416 = vand.u32 %v5125, 4294901760
  %v10417 = vsub.f32 %v5125, %v10416
  %v10418 = vand.u32 %v10417, 4294901760
  %10419 = vmatpush.msra.mxu0 %v10418
  %v10420 = vand.u32 %v5123, 4294901760
  %v10421 = vsub.f32 %v5123, %v10420
  %v10422 = vand.u32 %v10421, 4294901760
  %10423 = vmatpush.msra.mxu0 %v10422
  %v10424 = vand.u32 %v5121, 4294901760
  %v10425 = vsub.f32 %v5121, %v10424
  %v10426 = vand.u32 %v10425, 4294901760
  %10427 = vmatpush.msra.mxu0 %v10426
  %v10428 = vand.u32 %v5119, 4294901760
  %v10429 = vsub.f32 %v5119, %v10428
  %v10430 = vand.u32 %v10429, 4294901760
  %10431 = vmatpush.msra.mxu0 %v10430
  %v10432 = vand.u32 %v5117, 4294901760
  %v10433 = vsub.f32 %v5117, %v10432
  %v10434 = vand.u32 %v10433, 4294901760
  %10435 = vmatpush.msra.mxu0 %v10434
  %v10436 = vand.u32 %v9994, 4294901760
  %10437 = vmatmul.f32.gmra.mxu0 %v10436
  %v10438 = vpop.f32.mrf.mxu0
  %v10439 = vadd.f32 %v10394, %v10438
  %10440 = vdwg.mxu0
  %10441 = vmatpush.msra.mxu0 0.0
  %10442 = vmatpush.msra.mxu0 0.0
  %10443 = vmatpush.msra.mxu0 0.0
  %10444 = vmatpush.msra.mxu0 0.0
  %10445 = vmatpush.msra.mxu0 0.0
  %10446 = vmatpush.msra.mxu0 0.0
  %10447 = vmatpush.msra.mxu0 0.0
  %10448 = vmatpush.msra.mxu0 0.0
  %v10449 = vand.u32 %v5131, 4294901760
  %10450 = vmatpush.msra.mxu0 %v10449
  %v10451 = vand.u32 %v5129, 4294901760
  %10452 = vmatpush.msra.mxu0 %v10451
  %v10453 = vand.u32 %v5127, 4294901760
  %10454 = vmatpush.msra.mxu0 %v10453
  %v10455 = vand.u32 %v5125, 4294901760
  %10456 = vmatpush.msra.mxu0 %v10455
  %v10457 = vand.u32 %v5123, 4294901760
  %10458 = vmatpush.msra.mxu0 %v10457
  %v10459 = vand.u32 %v5121, 4294901760
  %10460 = vmatpush.msra.mxu0 %v10459
  %v10461 = vand.u32 %v5119, 4294901760
  %10462 = vmatpush.msra.mxu0 %v10461
  %v10463 = vand.u32 %v5117, 4294901760
  %10464 = vmatpush.msra.mxu0 %v10463
  %v10465 = vand.u32 %v9994, 4294901760
  %10466 = vmatmul.f32.gmra.mxu0 %v10465
  %v10467 = vpop.f32.mrf.mxu0
  %v10468 = vadd.f32 %v10439, %v10467
  %10469 = vdwg.mxu0
  %v10470 = vadd.f32 %v5726, %v10231
  %v10471 = vadd.f32 %v6284, %v10468
  %v10472 = vxor.u32 %v10470, 2147483648
  %v10473 = vxor.u32 %v10471, 2147483648
  %v10474 = vmul.f32 %v10472, 1.442695
  %v10475 = vpow.pop %v10474
  %v10476 = vmul.f32 %v10473, 1.442695
  %v10477 = vpow.pop %v10476
  %v10478 = vadd.f32 %v10475, 1.0
  %v10479 = vadd.f32 %v10477, 1.0
  %v10480 = vrcp.pop %v10478
  %v10481 = vmul.f32 %v10478, %v10480
  %v10482 = vsub.f32 1.0, %v10481
  %v10483 = vmul.f32 %v10480, %v10482
  %v10484 = vadd.f32 %v10480, %v10483
  %vm10485 = vweird.f32 %v10478
  %vm10486 = vweird.f32 %v10480
  %vm10487 = vmor %vm10485, %vm10486
  %v10488 = vsel %vm10487, %v10480, %v10484
  %v10489 = vand.u32 2147483647, %v10478
  %vm10490 = vcmp.eq.f32.partialorder %v10489, 8.507059e+37
  %v10491 = vand.u32 %v10478, 2147483648
  %v10492 = vor.u32 1.1754944e-38, %v10491
  %v10493 = vsel %vm10490, %v10492, %v10488
  %v10494 = vmul.f32 1.0, %v10493
  %v10495 = vrcp.pop %v10479
  %v10496 = vmul.f32 %v10479, %v10495
  %v10497 = vsub.f32 1.0, %v10496
  %v10498 = vmul.f32 %v10495, %v10497
  %v10499 = vadd.f32 %v10495, %v10498
  %vm10500 = vweird.f32 %v10479
  %vm10501 = vweird.f32 %v10495
  %vm10502 = vmor %vm10500, %vm10501
  %v10503 = vsel %vm10502, %v10495, %v10499
  %v10504 = vand.u32 2147483647, %v10479
  %vm10505 = vcmp.eq.f32.partialorder %v10504, 8.507059e+37
  %v10506 = vand.u32 %v10479, 2147483648
  %v10507 = vor.u32 1.1754944e-38, %v10506
  %v10508 = vsel %vm10505, %v10507, %v10503
  %v10509 = vmul.f32 1.0, %v10508
  %v10510 = vmul.f32 %v10509, 2.0
  %v10511 = vsub.f32 %v10510, 1.0
  %v10512 = vmul.f32 %v10494, %v9988
  %v10513 = vmul.f32 %v10494, %v10511
  %10515 = vrot.lane.b32.xlu0 %v10513, 64
  %v10516 = vpop.permute.xlu0 %10515
  %v10518 = vadd.f32 %v10512, %v10516
  %v10519 = vtanh.pop %v10518
  %v10520 = vmul.f32 %v10509, %v10519
  %v10521 = vld [vmem:[%s8] sm:$0xff]
  %v10522 = vld [vmem:[%s8 + $0x8] sm:$0xff]
  %v10523 = vld [vmem:[%s8 + $0x10] sm:$0xff]
  %v10524 = vld [vmem:[%s8 + $0x18] sm:$0xff]
  %v10525 = vld [vmem:[%s8 + $0x20] sm:$0xff]
  %v10526 = vld [vmem:[%s8 + $0x28] sm:$0xff]
  %v10527 = vld [vmem:[%s8 + $0x30] sm:$0xff]
  %v10528 = vld [vmem:[%s8 + $0x38] sm:$0xff]
  %10529 = vrot.lane.b32.xlu0 %v6810, 32
  %v10530 = vpop.permute.xlu0 %10529
  %vm10531 = vcmask 261120
  %v10532 = vsel %vm10531, %v10530, 0
  %10534 = vmatpush.msra.mxu0 0.0
  %10535 = vmatpush.msra.mxu0 0.0
  %10536 = vmatpush.msra.mxu0 0.0
  %10537 = vmatpush.msra.mxu0 0.0
  %10538 = vmatpush.msra.mxu0 0.0
  %10539 = vmatpush.msra.mxu0 0.0
  %10540 = vmatpush.msra.mxu0 0.0
  %10541 = vmatpush.msra.mxu0 0.0
  %10542 = vmatpush.msra.mxu0 0.0
  %10543 = vmatpush.msra.mxu0 0.0
  %10544 = vmatpush.msra.mxu0 0.0
  %10545 = vmatpush.msra.mxu0 0.0
  %v10546 = vand.u32 %v10528, 4294901760
  %10547 = vmatpush.msra.mxu0 %v10546
  %v10548 = vand.u32 %v10527, 4294901760
  %10549 = vmatpush.msra.mxu0 %v10548
  %v10550 = vand.u32 %v10526, 4294901760
  %10551 = vmatpush.msra.mxu0 %v10550
  %v10552 = vand.u32 %v10525, 4294901760
  %10553 = vmatpush.msra.mxu0 %v10552
  %v10554 = vand.u32 %v10532, 4294901760
  %v10555 = vsub.f32 %v10532, %v10554
  %v10556 = vand.u32 %v10555, 4294901760
  %v10557 = vsub.f32 %v10555, %v10556
  %v10558 = vand.u32 %v10557, 4294901760
  %10559 = vmatmul.f32.gmra.mxu0 %v10558
  %v10560 = vpop.f32.mrf.mxu0
  %v10561 = vadd.f32 0.0, %v10560
  %10562 = vdwg.mxu0
  %10563 = vmatpush.msra.mxu0 0.0
  %10564 = vmatpush.msra.mxu0 0.0
  %10565 = vmatpush.msra.mxu0 0.0
  %10566 = vmatpush.msra.mxu0 0.0
  %10567 = vmatpush.msra.mxu0 0.0
  %10568 = vmatpush.msra.mxu0 0.0
  %10569 = vmatpush.msra.mxu0 0.0
  %10570 = vmatpush.msra.mxu0 0.0
  %10571 = vmatpush.msra.mxu0 0.0
  %10572 = vmatpush.msra.mxu0 0.0
  %10573 = vmatpush.msra.mxu0 0.0
  %10574 = vmatpush.msra.mxu0 0.0
  %v10575 = vand.u32 %v10528, 4294901760
  %v10576 = vsub.f32 %v10528, %v10575
  %v10577 = vand.u32 %v10576, 4294901760
  %v10578 = vsub.f32 %v10576, %v10577
  %v10579 = vand.u32 %v10578, 4294901760
  %10580 = vmatpush.msra.mxu0 %v10579
  %v10581 = vand.u32 %v10527, 4294901760
  %v10582 = vsub.f32 %v10527, %v10581
  %v10583 = vand.u32 %v10582, 4294901760
  %v10584 = vsub.f32 %v10582, %v10583
  %v10585 = vand.u32 %v10584, 4294901760
  %10586 = vmatpush.msra.mxu0 %v10585
  %v10587 = vand.u32 %v10526, 4294901760
  %v10588 = vsub.f32 %v10526, %v10587
  %v10589 = vand.u32 %v10588, 4294901760
  %v10590 = vsub.f32 %v10588, %v10589
  %v10591 = vand.u32 %v10590, 4294901760
  %10592 = vmatpush.msra.mxu0 %v10591
  %v10593 = vand.u32 %v10525, 4294901760
  %v10594 = vsub.f32 %v10525, %v10593
  %v10595 = vand.u32 %v10594, 4294901760
  %v10596 = vsub.f32 %v10594, %v10595
  %v10597 = vand.u32 %v10596, 4294901760
  %10598 = vmatpush.msra.mxu0 %v10597
  %v10599 = vand.u32 %v10532, 4294901760
  %10600 = vmatmul.f32.gmra.mxu0 %v10599
  %v10601 = vpop.f32.mrf.mxu0
  %v10602 = vadd.f32 %v10561, %v10601
  %10603 = vdwg.mxu0
  %10604 = vmatpush.msra.mxu0 0.0
  %10605 = vmatpush.msra.mxu0 0.0
  %10606 = vmatpush.msra.mxu0 0.0
  %10607 = vmatpush.msra.mxu0 0.0
  %10608 = vmatpush.msra.mxu0 0.0
  %10609 = vmatpush.msra.mxu0 0.0
  %10610 = vmatpush.msra.mxu0 0.0
  %10611 = vmatpush.msra.mxu0 0.0
  %10612 = vmatpush.msra.mxu0 0.0
  %10613 = vmatpush.msra.mxu0 0.0
  %10614 = vmatpush.msra.mxu0 0.0
  %10615 = vmatpush.msra.mxu0 0.0
  %v10616 = vand.u32 %v10528, 4294901760
  %v10617 = vsub.f32 %v10528, %v10616
  %10618 = vmatpush.msra.mxu0 %v10617
  %v10619 = vand.u32 %v10527, 4294901760
  %v10620 = vsub.f32 %v10527, %v10619
  %10621 = vmatpush.msra.mxu0 %v10620
  %v10622 = vand.u32 %v10526, 4294901760
  %v10623 = vsub.f32 %v10526, %v10622
  %10624 = vmatpush.msra.mxu0 %v10623
  %v10625 = vand.u32 %v10525, 4294901760
  %v10626 = vsub.f32 %v10525, %v10625
  %10627 = vmatpush.msra.mxu0 %v10626
  %v10628 = vand.u32 %v10532, 4294901760
  %v10629 = vsub.f32 %v10532, %v10628
  %10630 = vmatmul.f32.gmra.mxu0 %v10629
  %v10631 = vpop.f32.mrf.mxu0
  %v10632 = vadd.f32 %v10602, %v10631
  %10633 = vdwg.mxu0
  %10634 = vmatpush.msra.mxu0 0.0
  %10635 = vmatpush.msra.mxu0 0.0
  %10636 = vmatpush.msra.mxu0 0.0
  %10637 = vmatpush.msra.mxu0 0.0
  %10638 = vmatpush.msra.mxu0 0.0
  %10639 = vmatpush.msra.mxu0 0.0
  %10640 = vmatpush.msra.mxu0 0.0
  %10641 = vmatpush.msra.mxu0 0.0
  %10642 = vmatpush.msra.mxu0 0.0
  %10643 = vmatpush.msra.mxu0 0.0
  %10644 = vmatpush.msra.mxu0 0.0
  %10645 = vmatpush.msra.mxu0 0.0
  %v10646 = vand.u32 %v10528, 4294901760
  %10647 = vmatpush.msra.mxu0 %v10646
  %v10648 = vand.u32 %v10527, 4294901760
  %10649 = vmatpush.msra.mxu0 %v10648
  %v10650 = vand.u32 %v10526, 4294901760
  %10651 = vmatpush.msra.mxu0 %v10650
  %v10652 = vand.u32 %v10525, 4294901760
  %10653 = vmatpush.msra.mxu0 %v10652
  %v10654 = vand.u32 %v10532, 4294901760
  %v10655 = vsub.f32 %v10532, %v10654
  %v10656 = vand.u32 %v10655, 4294901760
  %10657 = vmatmul.f32.gmra.mxu0 %v10656
  %v10658 = vpop.f32.mrf.mxu0
  %v10659 = vadd.f32 %v10632, %v10658
  %10660 = vdwg.mxu0
  %10661 = vmatpush.msra.mxu0 0.0
  %10662 = vmatpush.msra.mxu0 0.0
  %10663 = vmatpush.msra.mxu0 0.0
  %10664 = vmatpush.msra.mxu0 0.0
  %10665 = vmatpush.msra.mxu0 0.0
  %10666 = vmatpush.msra.mxu0 0.0
  %10667 = vmatpush.msra.mxu0 0.0
  %10668 = vmatpush.msra.mxu0 0.0
  %10669 = vmatpush.msra.mxu0 0.0
  %10670 = vmatpush.msra.mxu0 0.0
  %10671 = vmatpush.msra.mxu0 0.0
  %10672 = vmatpush.msra.mxu0 0.0
  %v10673 = vand.u32 %v10528, 4294901760
  %v10674 = vsub.f32 %v10528, %v10673
  %v10675 = vand.u32 %v10674, 4294901760
  %10676 = vmatpush.msra.mxu0 %v10675
  %v10677 = vand.u32 %v10527, 4294901760
  %v10678 = vsub.f32 %v10527, %v10677
  %v10679 = vand.u32 %v10678, 4294901760
  %10680 = vmatpush.msra.mxu0 %v10679
  %v10681 = vand.u32 %v10526, 4294901760
  %v10682 = vsub.f32 %v10526, %v10681
  %v10683 = vand.u32 %v10682, 4294901760
  %10684 = vmatpush.msra.mxu0 %v10683
  %v10685 = vand.u32 %v10525, 4294901760
  %v10686 = vsub.f32 %v10525, %v10685
  %v10687 = vand.u32 %v10686, 4294901760
  %10688 = vmatpush.msra.mxu0 %v10687
  %v10689 = vand.u32 %v10532, 4294901760
  %10690 = vmatmul.f32.gmra.mxu0 %v10689
  %v10691 = vpop.f32.mrf.mxu0
  %v10692 = vadd.f32 %v10659, %v10691
  %10693 = vdwg.mxu0
  %10694 = vmatpush.msra.mxu0 0.0
  %10695 = vmatpush.msra.mxu0 0.0
  %10696 = vmatpush.msra.mxu0 0.0
  %10697 = vmatpush.msra.mxu0 0.0
  %10698 = vmatpush.msra.mxu0 0.0
  %10699 = vmatpush.msra.mxu0 0.0
  %10700 = vmatpush.msra.mxu0 0.0
  %10701 = vmatpush.msra.mxu0 0.0
  %10702 = vmatpush.msra.mxu0 0.0
  %10703 = vmatpush.msra.mxu0 0.0
  %10704 = vmatpush.msra.mxu0 0.0
  %10705 = vmatpush.msra.mxu0 0.0
  %v10706 = vand.u32 %v10528, 4294901760
  %10707 = vmatpush.msra.mxu0 %v10706
  %v10708 = vand.u32 %v10527, 4294901760
  %10709 = vmatpush.msra.mxu0 %v10708
  %v10710 = vand.u32 %v10526, 4294901760
  %10711 = vmatpush.msra.mxu0 %v10710
  %v10712 = vand.u32 %v10525, 4294901760
  %10713 = vmatpush.msra.mxu0 %v10712
  %v10714 = vand.u32 %v10532, 4294901760
  %10715 = vmatmul.f32.gmra.mxu0 %v10714
  %v10716 = vpop.f32.mrf.mxu0
  %v10717 = vadd.f32 %v10692, %v10716
  %10718 = vdwg.mxu0
  %10720 = vrot.lane.b32.xlu0 %v10520, 64
  %v10721 = vpop.permute.xlu0 %10720
  %v10722 = vsel %vm10531, %v10721, 0
  %10724 = vmatpush.msra.mxu0 0.0
  %10725 = vmatpush.msra.mxu0 0.0
  %10726 = vmatpush.msra.mxu0 0.0
  %10727 = vmatpush.msra.mxu0 0.0
  %10728 = vmatpush.msra.mxu0 0.0
  %10729 = vmatpush.msra.mxu0 0.0
  %10730 = vmatpush.msra.mxu0 0.0
  %10731 = vmatpush.msra.mxu0 0.0
  %10732 = vmatpush.msra.mxu0 0.0
  %10733 = vmatpush.msra.mxu0 0.0
  %10734 = vmatpush.msra.mxu0 0.0
  %10735 = vmatpush.msra.mxu0 0.0
  %v10736 = vand.u32 %v10524, 4294901760
  %10737 = vmatpush.msra.mxu0 %v10736
  %v10738 = vand.u32 %v10523, 4294901760
  %10739 = vmatpush.msra.mxu0 %v10738
  %v10740 = vand.u32 %v10522, 4294901760
  %10741 = vmatpush.msra.mxu0 %v10740
  %v10742 = vand.u32 %v10521, 4294901760
  %10743 = vmatpush.msra.mxu0 %v10742
  %v10744 = vand.u32 %v10722, 4294901760
  %v10745 = vsub.f32 %v10722, %v10744
  %v10746 = vand.u32 %v10745, 4294901760
  %v10747 = vsub.f32 %v10745, %v10746
  %v10748 = vand.u32 %v10747, 4294901760
  %10749 = vmatmul.f32.gmra.mxu0 %v10748
  %v10750 = vpop.f32.mrf.mxu0
  %v10751 = vadd.f32 %v10717, %v10750
  %10752 = vdwg.mxu0
  %10753 = vmatpush.msra.mxu0 0.0
  %10754 = vmatpush.msra.mxu0 0.0
  %10755 = vmatpush.msra.mxu0 0.0
  %10756 = vmatpush.msra.mxu0 0.0
  %10757 = vmatpush.msra.mxu0 0.0
  %10758 = vmatpush.msra.mxu0 0.0
  %10759 = vmatpush.msra.mxu0 0.0
  %10760 = vmatpush.msra.mxu0 0.0
  %10761 = vmatpush.msra.mxu0 0.0
  %10762 = vmatpush.msra.mxu0 0.0
  %10763 = vmatpush.msra.mxu0 0.0
  %10764 = vmatpush.msra.mxu0 0.0
  %v10765 = vand.u32 %v10524, 4294901760
  %v10766 = vsub.f32 %v10524, %v10765
  %v10767 = vand.u32 %v10766, 4294901760
  %v10768 = vsub.f32 %v10766, %v10767
  %v10769 = vand.u32 %v10768, 4294901760
  %10770 = vmatpush.msra.mxu0 %v10769
  %v10771 = vand.u32 %v10523, 4294901760
  %v10772 = vsub.f32 %v10523, %v10771
  %v10773 = vand.u32 %v10772, 4294901760
  %v10774 = vsub.f32 %v10772, %v10773
  %v10775 = vand.u32 %v10774, 4294901760
  %10776 = vmatpush.msra.mxu0 %v10775
  %v10777 = vand.u32 %v10522, 4294901760
  %v10778 = vsub.f32 %v10522, %v10777
  %v10779 = vand.u32 %v10778, 4294901760
  %v10780 = vsub.f32 %v10778, %v10779
  %v10781 = vand.u32 %v10780, 4294901760
  %10782 = vmatpush.msra.mxu0 %v10781
  %v10783 = vand.u32 %v10521, 4294901760
  %v10784 = vsub.f32 %v10521, %v10783
  %v10785 = vand.u32 %v10784, 4294901760
  %v10786 = vsub.f32 %v10784, %v10785
  %v10787 = vand.u32 %v10786, 4294901760
  %10788 = vmatpush.msra.mxu0 %v10787
  %v10789 = vand.u32 %v10722, 4294901760
  %10790 = vmatmul.f32.gmra.mxu0 %v10789
  %v10791 = vpop.f32.mrf.mxu0
  %v10792 = vadd.f32 %v10751, %v10791
  %10793 = vdwg.mxu0
  %10794 = vmatpush.msra.mxu0 0.0
  %10795 = vmatpush.msra.mxu0 0.0
  %10796 = vmatpush.msra.mxu0 0.0
  %10797 = vmatpush.msra.mxu0 0.0
  %10798 = vmatpush.msra.mxu0 0.0
  %10799 = vmatpush.msra.mxu0 0.0
  %10800 = vmatpush.msra.mxu0 0.0
  %10801 = vmatpush.msra.mxu0 0.0
  %10802 = vmatpush.msra.mxu0 0.0
  %10803 = vmatpush.msra.mxu0 0.0
  %10804 = vmatpush.msra.mxu0 0.0
  %10805 = vmatpush.msra.mxu0 0.0
  %v10806 = vand.u32 %v10524, 4294901760
  %v10807 = vsub.f32 %v10524, %v10806
  %10808 = vmatpush.msra.mxu0 %v10807
  %v10809 = vand.u32 %v10523, 4294901760
  %v10810 = vsub.f32 %v10523, %v10809
  %10811 = vmatpush.msra.mxu0 %v10810
  %v10812 = vand.u32 %v10522, 4294901760
  %v10813 = vsub.f32 %v10522, %v10812
  %10814 = vmatpush.msra.mxu0 %v10813
  %v10815 = vand.u32 %v10521, 4294901760
  %v10816 = vsub.f32 %v10521, %v10815
  %10817 = vmatpush.msra.mxu0 %v10816
  %v10818 = vand.u32 %v10722, 4294901760
  %v10819 = vsub.f32 %v10722, %v10818
  %10820 = vmatmul.f32.gmra.mxu0 %v10819
  %v10821 = vpop.f32.mrf.mxu0
  %v10822 = vadd.f32 %v10792, %v10821
  %10823 = vdwg.mxu0
  %10824 = vmatpush.msra.mxu0 0.0
  %10825 = vmatpush.msra.mxu0 0.0
  %10826 = vmatpush.msra.mxu0 0.0
  %10827 = vmatpush.msra.mxu0 0.0
  %10828 = vmatpush.msra.mxu0 0.0
  %10829 = vmatpush.msra.mxu0 0.0
  %10830 = vmatpush.msra.mxu0 0.0
  %10831 = vmatpush.msra.mxu0 0.0
  %10832 = vmatpush.msra.mxu0 0.0
  %10833 = vmatpush.msra.mxu0 0.0
  %10834 = vmatpush.msra.mxu0 0.0
  %10835 = vmatpush.msra.mxu0 0.0
  %v10836 = vand.u32 %v10524, 4294901760
  %10837 = vmatpush.msra.mxu0 %v10836
  %v10838 = vand.u32 %v10523, 4294901760
  %10839 = vmatpush.msra.mxu0 %v10838
  %v10840 = vand.u32 %v10522, 4294901760
  %10841 = vmatpush.msra.mxu0 %v10840
  %v10842 = vand.u32 %v10521, 4294901760
  %10843 = vmatpush.msra.mxu0 %v10842
  %v10844 = vand.u32 %v10722, 4294901760
  %v10845 = vsub.f32 %v10722, %v10844
  %v10846 = vand.u32 %v10845, 4294901760
  %10847 = vmatmul.f32.gmra.mxu0 %v10846
  %v10848 = vpop.f32.mrf.mxu0
  %v10849 = vadd.f32 %v10822, %v10848
  %10850 = vdwg.mxu0
  %10851 = vmatpush.msra.mxu0 0.0
  %10852 = vmatpush.msra.mxu0 0.0
  %10853 = vmatpush.msra.mxu0 0.0
  %10854 = vmatpush.msra.mxu0 0.0
  %10855 = vmatpush.msra.mxu0 0.0
  %10856 = vmatpush.msra.mxu0 0.0
  %10857 = vmatpush.msra.mxu0 0.0
  %10858 = vmatpush.msra.mxu0 0.0
  %10859 = vmatpush.msra.mxu0 0.0
  %10860 = vmatpush.msra.mxu0 0.0
  %10861 = vmatpush.msra.mxu0 0.0
  %10862 = vmatpush.msra.mxu0 0.0
  %v10863 = vand.u32 %v10524, 4294901760
  %v10864 = vsub.f32 %v10524, %v10863
  %v10865 = vand.u32 %v10864, 4294901760
  %10866 = vmatpush.msra.mxu0 %v10865
  %v10867 = vand.u32 %v10523, 4294901760
  %v10868 = vsub.f32 %v10523, %v10867
  %v10869 = vand.u32 %v10868, 4294901760
  %10870 = vmatpush.msra.mxu0 %v10869
  %v10871 = vand.u32 %v10522, 4294901760
  %v10872 = vsub.f32 %v10522, %v10871
  %v10873 = vand.u32 %v10872, 4294901760
  %10874 = vmatpush.msra.mxu0 %v10873
  %v10875 = vand.u32 %v10521, 4294901760
  %v10876 = vsub.f32 %v10521, %v10875
  %v10877 = vand.u32 %v10876, 4294901760
  %10878 = vmatpush.msra.mxu0 %v10877
  %v10879 = vand.u32 %v10722, 4294901760
  %10880 = vmatmul.f32.gmra.mxu0 %v10879
  %v10881 = vpop.f32.mrf.mxu0
  %v10882 = vadd.f32 %v10849, %v10881
  %10883 = vdwg.mxu0
  %10884 = vmatpush.msra.mxu0 0.0
  %10885 = vmatpush.msra.mxu0 0.0
  %10886 = vmatpush.msra.mxu0 0.0
  %10887 = vmatpush.msra.mxu0 0.0
  %10888 = vmatpush.msra.mxu0 0.0
  %10889 = vmatpush.msra.mxu0 0.0
  %10890 = vmatpush.msra.mxu0 0.0
  %10891 = vmatpush.msra.mxu0 0.0
  %10892 = vmatpush.msra.mxu0 0.0
  %10893 = vmatpush.msra.mxu0 0.0
  %10894 = vmatpush.msra.mxu0 0.0
  %10895 = vmatpush.msra.mxu0 0.0
  %v10896 = vand.u32 %v10524, 4294901760
  %10897 = vmatpush.msra.mxu0 %v10896
  %v10898 = vand.u32 %v10523, 4294901760
  %10899 = vmatpush.msra.mxu0 %v10898
  %v10900 = vand.u32 %v10522, 4294901760
  %10901 = vmatpush.msra.mxu0 %v10900
  %v10902 = vand.u32 %v10521, 4294901760
  %10903 = vmatpush.msra.mxu0 %v10902
  %v10904 = vand.u32 %v10722, 4294901760
  %10905 = vmatmul.f32.gmra.mxu0 %v10904
  %v10906 = vpop.f32.mrf.mxu0
  %v10907 = vadd.f32 %v10882, %v10906
  %10908 = vdwg.mxu0
  %v10909 = vld [vmem:[%s9] sm:$0x1]
  %v10911 = vperm.slane %v10909, 0
  %v10913 = vadd.f32 %v10907, %v10911
  %v10914 = vmax.f32 %v10913, 0.0
  %v10915 = vld [vmem:[%s10] sm:$0xff]
  %v10916 = vld [vmem:[%s10 + $0x8] sm:$0xff]
  %v10917 = vld [vmem:[%s10 + $0x10] sm:$0xff]
  %v10918 = vld [vmem:[%s10 + $0x18] sm:$0xff]
  %v10919 = vld [vmem:[%s11] sm:$0x1]
  %v10921 = vperm.slane %v10919, 0
  %v10924 = vsel %vm10531, %v10914, 0
  %10926 = vmatpush.msra.mxu0 0.0
  %10927 = vmatpush.msra.mxu0 0.0
  %10928 = vmatpush.msra.mxu0 0.0
  %10929 = vmatpush.msra.mxu0 0.0
  %10930 = vmatpush.msra.mxu0 0.0
  %10931 = vmatpush.msra.mxu0 0.0
  %10932 = vmatpush.msra.mxu0 0.0
  %10933 = vmatpush.msra.mxu0 0.0
  %10934 = vmatpush.msra.mxu0 0.0
  %10935 = vmatpush.msra.mxu0 0.0
  %10936 = vmatpush.msra.mxu0 0.0
  %10937 = vmatpush.msra.mxu0 0.0
  %v10938 = vand.u32 %v10918, 4294901760
  %10939 = vmatpush.msra.mxu0 %v10938
  %v10940 = vand.u32 %v10917, 4294901760
  %10941 = vmatpush.msra.mxu0 %v10940
  %v10942 = vand.u32 %v10916, 4294901760
  %10943 = vmatpush.msra.mxu0 %v10942
  %v10944 = vand.u32 %v10915, 4294901760
  %10945 = vmatpush.msra.mxu0 %v10944
  %v10946 = vand.u32 %v10924, 4294901760
  %v10947 = vsub.f32 %v10924, %v10946
  %v10948 = vand.u32 %v10947, 4294901760
  %v10949 = vsub.f32 %v10947, %v10948
  %v10950 = vand.u32 %v10949, 4294901760
  %10951 = vmatmul.f32.gmra.mxu0 %v10950
  %v10952 = vpop.f32.mrf.mxu0
  %v10953 = vadd.f32 %v10921, %v10952
  %10954 = vdwg.mxu0
  %10955 = vmatpush.msra.mxu0 0.0
  %10956 = vmatpush.msra.mxu0 0.0
  %10957 = vmatpush.msra.mxu0 0.0
  %10958 = vmatpush.msra.mxu0 0.0
  %10959 = vmatpush.msra.mxu0 0.0
  %10960 = vmatpush.msra.mxu0 0.0
  %10961 = vmatpush.msra.mxu0 0.0
  %10962 = vmatpush.msra.mxu0 0.0
  %10963 = vmatpush.msra.mxu0 0.0
  %10964 = vmatpush.msra.mxu0 0.0
  %10965 = vmatpush.msra.mxu0 0.0
  %10966 = vmatpush.msra.mxu0 0.0
  %v10967 = vand.u32 %v10918, 4294901760
  %v10968 = vsub.f32 %v10918, %v10967
  %v10969 = vand.u32 %v10968, 4294901760
  %v10970 = vsub.f32 %v10968, %v10969
  %v10971 = vand.u32 %v10970, 4294901760
  %10972 = vmatpush.msra.mxu0 %v10971
  %v10973 = vand.u32 %v10917, 4294901760
  %v10974 = vsub.f32 %v10917, %v10973
  %v10975 = vand.u32 %v10974, 4294901760
  %v10976 = vsub.f32 %v10974, %v10975
  %v10977 = vand.u32 %v10976, 4294901760
  %10978 = vmatpush.msra.mxu0 %v10977
  %v10979 = vand.u32 %v10916, 4294901760
  %v10980 = vsub.f32 %v10916, %v10979
  %v10981 = vand.u32 %v10980, 4294901760
  %v10982 = vsub.f32 %v10980, %v10981
  %v10983 = vand.u32 %v10982, 4294901760
  %10984 = vmatpush.msra.mxu0 %v10983
  %v10985 = vand.u32 %v10915, 4294901760
  %v10986 = vsub.f32 %v10915, %v10985
  %v10987 = vand.u32 %v10986, 4294901760
  %v10988 = vsub.f32 %v10986, %v10987
  %v10989 = vand.u32 %v10988, 4294901760
  %10990 = vmatpush.msra.mxu0 %v10989
  %v10991 = vand.u32 %v10924, 4294901760
  %10992 = vmatmul.f32.gmra.mxu0 %v10991
  %v10993 = vpop.f32.mrf.mxu0
  %v10994 = vadd.f32 %v10953, %v10993
  %10995 = vdwg.mxu0
  %10996 = vmatpush.msra.mxu0 0.0
  %10997 = vmatpush.msra.mxu0 0.0
  %10998 = vmatpush.msra.mxu0 0.0
  %10999 = vmatpush.msra.mxu0 0.0
  %11000 = vmatpush.msra.mxu0 0.0
  %11001 = vmatpush.msra.mxu0 0.0
  %11002 = vmatpush.msra.mxu0 0.0
  %11003 = vmatpush.msra.mxu0 0.0
  %11004 = vmatpush.msra.mxu0 0.0
  %11005 = vmatpush.msra.mxu0 0.0
  %11006 = vmatpush.msra.mxu0 0.0
  %11007 = vmatpush.msra.mxu0 0.0
  %v11008 = vand.u32 %v10918, 4294901760
  %v11009 = vsub.f32 %v10918, %v11008
  %11010 = vmatpush.msra.mxu0 %v11009
  %v11011 = vand.u32 %v10917, 4294901760
  %v11012 = vsub.f32 %v10917, %v11011
  %11013 = vmatpush.msra.mxu0 %v11012
  %v11014 = vand.u32 %v10916, 4294901760
  %v11015 = vsub.f32 %v10916, %v11014
  %11016 = vmatpush.msra.mxu0 %v11015
  %v11017 = vand.u32 %v10915, 4294901760
  %v11018 = vsub.f32 %v10915, %v11017
  %11019 = vmatpush.msra.mxu0 %v11018
  %v11020 = vand.u32 %v10924, 4294901760
  %v11021 = vsub.f32 %v10924, %v11020
  %11022 = vmatmul.f32.gmra.mxu0 %v11021
  %v11023 = vpop.f32.mrf.mxu0
  %v11024 = vadd.f32 %v10994, %v11023
  %11025 = vdwg.mxu0
  %11026 = vmatpush.msra.mxu0 0.0
  %11027 = vmatpush.msra.mxu0 0.0
  %11028 = vmatpush.msra.mxu0 0.0
  %11029 = vmatpush.msra.mxu0 0.0
  %11030 = vmatpush.msra.mxu0 0.0
  %11031 = vmatpush.msra.mxu0 0.0
  %11032 = vmatpush.msra.mxu0 0.0
  %11033 = vmatpush.msra.mxu0 0.0
  %11034 = vmatpush.msra.mxu0 0.0
  %11035 = vmatpush.msra.mxu0 0.0
  %11036 = vmatpush.msra.mxu0 0.0
  %11037 = vmatpush.msra.mxu0 0.0
  %v11038 = vand.u32 %v10918, 4294901760
  %11039 = vmatpush.msra.mxu0 %v11038
  %v11040 = vand.u32 %v10917, 4294901760
  %11041 = vmatpush.msra.mxu0 %v11040
  %v11042 = vand.u32 %v10916, 4294901760
  %11043 = vmatpush.msra.mxu0 %v11042
  %v11044 = vand.u32 %v10915, 4294901760
  %11045 = vmatpush.msra.mxu0 %v11044
  %v11046 = vand.u32 %v10924, 4294901760
  %v11047 = vsub.f32 %v10924, %v11046
  %v11048 = vand.u32 %v11047, 4294901760
  %11049 = vmatmul.f32.gmra.mxu0 %v11048
  %v11050 = vpop.f32.mrf.mxu0
  %v11051 = vadd.f32 %v11024, %v11050
  %11052 = vdwg.mxu0
  %11053 = vmatpush.msra.mxu0 0.0
  %11054 = vmatpush.msra.mxu0 0.0
  %11055 = vmatpush.msra.mxu0 0.0
  %11056 = vmatpush.msra.mxu0 0.0
  %11057 = vmatpush.msra.mxu0 0.0
  %11058 = vmatpush.msra.mxu0 0.0
  %11059 = vmatpush.msra.mxu0 0.0
  %11060 = vmatpush.msra.mxu0 0.0
  %11061 = vmatpush.msra.mxu0 0.0
  %11062 = vmatpush.msra.mxu0 0.0
  %11063 = vmatpush.msra.mxu0 0.0
  %11064 = vmatpush.msra.mxu0 0.0
  %v11065 = vand.u32 %v10918, 4294901760
  %v11066 = vsub.f32 %v10918, %v11065
  %v11067 = vand.u32 %v11066, 4294901760
  %11068 = vmatpush.msra.mxu0 %v11067
  %v11069 = vand.u32 %v10917, 4294901760
  %v11070 = vsub.f32 %v10917, %v11069
  %v11071 = vand.u32 %v11070, 4294901760
  %11072 = vmatpush.msra.mxu0 %v11071
  %v11073 = vand.u32 %v10916, 4294901760
  %v11074 = vsub.f32 %v10916, %v11073
  %v11075 = vand.u32 %v11074, 4294901760
  %11076 = vmatpush.msra.mxu0 %v11075
  %v11077 = vand.u32 %v10915, 4294901760
  %v11078 = vsub.f32 %v10915, %v11077
  %v11079 = vand.u32 %v11078, 4294901760
  %11080 = vmatpush.msra.mxu0 %v11079
  %v11081 = vand.u32 %v10924, 4294901760
  %11082 = vmatmul.f32.gmra.mxu0 %v11081
  %v11083 = vpop.f32.mrf.mxu0
  %v11084 = vadd.f32 %v11051, %v11083
  %11085 = vdwg.mxu0
  %11086 = vmatpush.msra.mxu0 0.0
  %11087 = vmatpush.msra.mxu0 0.0
  %11088 = vmatpush.msra.mxu0 0.0
  %11089 = vmatpush.msra.mxu0 0.0
  %11090 = vmatpush.msra.mxu0 0.0
  %11091 = vmatpush.msra.mxu0 0.0
  %11092 = vmatpush.msra.mxu0 0.0
  %11093 = vmatpush.msra.mxu0 0.0
  %11094 = vmatpush.msra.mxu0 0.0
  %11095 = vmatpush.msra.mxu0 0.0
  %11096 = vmatpush.msra.mxu0 0.0
  %11097 = vmatpush.msra.mxu0 0.0
  %v11098 = vand.u32 %v10918, 4294901760
  %11099 = vmatpush.msra.mxu0 %v11098
  %v11100 = vand.u32 %v10917, 4294901760
  %11101 = vmatpush.msra.mxu0 %v11100
  %v11102 = vand.u32 %v10916, 4294901760
  %11103 = vmatpush.msra.mxu0 %v11102
  %v11104 = vand.u32 %v10915, 4294901760
  %11105 = vmatpush.msra.mxu0 %v11104
  %v11106 = vand.u32 %v10924, 4294901760
  %11107 = vmatmul.f32.gmra.mxu0 %v11106
  %v11108 = vpop.f32.mrf.mxu0
  %v11109 = vadd.f32 %v11084, %v11108
  %11110 = vdwg.mxu0
  %v11111 = vmax.f32 %v11109, 0.0
  %v11112 = vld [vmem:[%s12] sm:$0xff]
  %v11113 = vld [vmem:[%s12 + $0x8] sm:$0xff]
  %v11114 = vld [vmem:[%s13] sm:$0x1]
  %v11116 = vperm.slane %v11114, 0
  %v11119 = vsel %vm81, %v11111, 0
  %11121 = vmatpush.msra.mxu0 0.0
  %11122 = vmatpush.msra.mxu0 0.0
  %11123 = vmatpush.msra.mxu0 0.0
  %11124 = vmatpush.msra.mxu0 0.0
  %11125 = vmatpush.msra.mxu0 0.0
  %11126 = vmatpush.msra.mxu0 0.0
  %11127 = vmatpush.msra.mxu0 0.0
  %11128 = vmatpush.msra.mxu0 0.0
  %11129 = vmatpush.msra.mxu0 0.0
  %11130 = vmatpush.msra.mxu0 0.0
  %11131 = vmatpush.msra.mxu0 0.0
  %11132 = vmatpush.msra.mxu0 0.0
  %11133 = vmatpush.msra.mxu0 0.0
  %11134 = vmatpush.msra.mxu0 0.0
  %v11135 = vand.u32 %v11113, 4294901760
  %11136 = vmatpush.msra.mxu0 %v11135
  %v11137 = vand.u32 %v11112, 4294901760
  %11138 = vmatpush.msra.mxu0 %v11137
  %v11139 = vand.u32 %v11119, 4294901760
  %v11140 = vsub.f32 %v11119, %v11139
  %v11141 = vand.u32 %v11140, 4294901760
  %v11142 = vsub.f32 %v11140, %v11141
  %v11143 = vand.u32 %v11142, 4294901760
  %11144 = vmatmul.f32.gmra.mxu0 %v11143
  %v11145 = vpop.f32.mrf.mxu0
  %v11146 = vadd.f32 %v11116, %v11145
  %11147 = vdwg.mxu0
  %11148 = vmatpush.msra.mxu0 0.0
  %11149 = vmatpush.msra.mxu0 0.0
  %11150 = vmatpush.msra.mxu0 0.0
  %11151 = vmatpush.msra.mxu0 0.0
  %11152 = vmatpush.msra.mxu0 0.0
  %11153 = vmatpush.msra.mxu0 0.0
  %11154 = vmatpush.msra.mxu0 0.0
  %11155 = vmatpush.msra.mxu0 0.0
  %11156 = vmatpush.msra.mxu0 0.0
  %11157 = vmatpush.msra.mxu0 0.0
  %11158 = vmatpush.msra.mxu0 0.0
  %11159 = vmatpush.msra.mxu0 0.0
  %11160 = vmatpush.msra.mxu0 0.0
  %11161 = vmatpush.msra.mxu0 0.0
  %v11162 = vand.u32 %v11113, 4294901760
  %v11163 = vsub.f32 %v11113, %v11162
  %v11164 = vand.u32 %v11163, 4294901760
  %v11165 = vsub.f32 %v11163, %v11164
  %v11166 = vand.u32 %v11165, 4294901760
  %11167 = vmatpush.msra.mxu0 %v11166
  %v11168 = vand.u32 %v11112, 4294901760
  %v11169 = vsub.f32 %v11112, %v11168
  %v11170 = vand.u32 %v11169, 4294901760
  %v11171 = vsub.f32 %v11169, %v11170
  %v11172 = vand.u32 %v11171, 4294901760
  %11173 = vmatpush.msra.mxu0 %v11172
  %v11174 = vand.u32 %v11119, 4294901760
  %11175 = vmatmul.f32.gmra.mxu0 %v11174
  %v11176 = vpop.f32.mrf.mxu0
  %v11177 = vadd.f32 %v11146, %v11176
  %11178 = vdwg.mxu0
  %11179 = vmatpush.msra.mxu0 0.0
  %11180 = vmatpush.msra.mxu0 0.0
  %11181 = vmatpush.msra.mxu0 0.0
  %11182 = vmatpush.msra.mxu0 0.0
  %11183 = vmatpush.msra.mxu0 0.0
  %11184 = vmatpush.msra.mxu0 0.0
  %11185 = vmatpush.msra.mxu0 0.0
  %11186 = vmatpush.msra.mxu0 0.0
  %11187 = vmatpush.msra.mxu0 0.0
  %11188 = vmatpush.msra.mxu0 0.0
  %11189 = vmatpush.msra.mxu0 0.0
  %11190 = vmatpush.msra.mxu0 0.0
  %11191 = vmatpush.msra.mxu0 0.0
  %11192 = vmatpush.msra.mxu0 0.0
  %v11193 = vand.u32 %v11113, 4294901760
  %v11194 = vsub.f32 %v11113, %v11193
  %11195 = vmatpush.msra.mxu0 %v11194
  %v11196 = vand.u32 %v11112, 4294901760
  %v11197 = vsub.f32 %v11112, %v11196
  %11198 = vmatpush.msra.mxu0 %v11197
  %v11199 = vand.u32 %v11119, 4294901760
  %v11200 = vsub.f32 %v11119, %v11199
  %11201 = vmatmul.f32.gmra.mxu0 %v11200
  %v11202 = vpop.f32.mrf.mxu0
  %v11203 = vadd.f32 %v11177, %v11202
  %11204 = vdwg.mxu0
  %11205 = vmatpush.msra.mxu0 0.0
  %11206 = vmatpush.msra.mxu0 0.0
  %11207 = vmatpush.msra.mxu0 0.0
  %11208 = vmatpush.msra.mxu0 0.0
  %11209 = vmatpush.msra.mxu0 0.0
  %11210 = vmatpush.msra.mxu0 0.0
  %11211 = vmatpush.msra.mxu0 0.0
  %11212 = vmatpush.msra.mxu0 0.0
  %11213 = vmatpush.msra.mxu0 0.0
  %11214 = vmatpush.msra.mxu0 0.0
  %11215 = vmatpush.msra.mxu0 0.0
  %11216 = vmatpush.msra.mxu0 0.0
  %11217 = vmatpush.msra.mxu0 0.0
  %11218 = vmatpush.msra.mxu0 0.0
  %v11219 = vand.u32 %v11113, 4294901760
  %11220 = vmatpush.msra.mxu0 %v11219
  %v11221 = vand.u32 %v11112, 4294901760
  %11222 = vmatpush.msra.mxu0 %v11221
  %v11223 = vand.u32 %v11119, 4294901760
  %v11224 = vsub.f32 %v11119, %v11223
  %v11225 = vand.u32 %v11224, 4294901760
  %11226 = vmatmul.f32.gmra.mxu0 %v11225
  %v11227 = vpop.f32.mrf.mxu0
  %v11228 = vadd.f32 %v11203, %v11227
  %11229 = vdwg.mxu0
  %11230 = vmatpush.msra.mxu0 0.0
  %11231 = vmatpush.msra.mxu0 0.0
  %11232 = vmatpush.msra.mxu0 0.0
  %11233 = vmatpush.msra.mxu0 0.0
  %11234 = vmatpush.msra.mxu0 0.0
  %11235 = vmatpush.msra.mxu0 0.0
  %11236 = vmatpush.msra.mxu0 0.0
  %11237 = vmatpush.msra.mxu0 0.0
  %11238 = vmatpush.msra.mxu0 0.0
  %11239 = vmatpush.msra.mxu0 0.0
  %11240 = vmatpush.msra.mxu0 0.0
  %11241 = vmatpush.msra.mxu0 0.0
  %11242 = vmatpush.msra.mxu0 0.0
  %11243 = vmatpush.msra.mxu0 0.0
  %v11244 = vand.u32 %v11113, 4294901760
  %v11245 = vsub.f32 %v11113, %v11244
  %v11246 = vand.u32 %v11245, 4294901760
  %11247 = vmatpush.msra.mxu0 %v11246
  %v11248 = vand.u32 %v11112, 4294901760
  %v11249 = vsub.f32 %v11112, %v11248
  %v11250 = vand.u32 %v11249, 4294901760
  %11251 = vmatpush.msra.mxu0 %v11250
  %v11252 = vand.u32 %v11119, 4294901760
  %11253 = vmatmul.f32.gmra.mxu0 %v11252
  %v11254 = vpop.f32.mrf.mxu0
  %v11255 = vadd.f32 %v11228, %v11254
  %11256 = vdwg.mxu0
  %11257 = vmatpush.msra.mxu0 0.0
  %11258 = vmatpush.msra.mxu0 0.0
  %11259 = vmatpush.msra.mxu0 0.0
  %11260 = vmatpush.msra.mxu0 0.0
  %11261 = vmatpush.msra.mxu0 0.0
  %11262 = vmatpush.msra.mxu0 0.0
  %11263 = vmatpush.msra.mxu0 0.0
  %11264 = vmatpush.msra.mxu0 0.0
  %11265 = vmatpush.msra.mxu0 0.0
  %11266 = vmatpush.msra.mxu0 0.0
  %11267 = vmatpush.msra.mxu0 0.0
  %11268 = vmatpush.msra.mxu0 0.0
  %11269 = vmatpush.msra.mxu0 0.0
  %11270 = vmatpush.msra.mxu0 0.0
  %v11271 = vand.u32 %v11113, 4294901760
  %11272 = vmatpush.msra.mxu0 %v11271
  %v11273 = vand.u32 %v11112, 4294901760
  %11274 = vmatpush.msra.mxu0 %v11273
  %v11275 = vand.u32 %v11119, 4294901760
  %11276 = vmatmul.f32.gmra.mxu0 %v11275
  %v11277 = vpop.f32.mrf.mxu0
  %v11278 = vadd.f32 %v11255, %v11277
  %11279 = vdwg.mxu0
  %v11280 = vmax.f32 %v11278, 0.0
  %v11281 = vld [vmem:[%s1] sm:$0xff]
  %v11282 = vmul.f32 %v11280, %v11281
  %vm11283 = vcmask 23552
  %11284 = vst.msk [vmem:[%s14] sm:$0xff] %vm11283, %v11282
  // Predicated region
  $region58: #{enhanced_usage_lstm_forward.1} parent=0 // pred_check
    _
  $region59: #{enhanced_usage_lstm_forward.1} parent=0 // pred_check_branch
    %11286 = sbr.rel (0) target = $region61
  $region60: #{enhanced_usage_lstm_forward.1} parent=0 // pred_region
    _
  $region61: #{enhanced_usage_lstm_forward.1} parent=0 // pred_fallthru
    _
  // Predicated region
  $region62: #{enhanced_usage_lstm_forward.1} parent=0 // pred_check
    _
  $region63: #{enhanced_usage_lstm_forward.1} parent=0 // pred_check_branch
    %11288 = sbr.rel (0) target = $region65
  $region64: #{enhanced_usage_lstm_forward.1} parent=0 // pred_region
    _
  $region65: #{enhanced_usage_lstm_forward.1} parent=0 // pred_fallthru
    _

</llo_original>
